<compile_context>
chip_gen: v7x
topology: tpu7x:2x2x1
jax: 0.10.0
libtpu: 0.0.40
codegen_flags: <defaults>
</compile_context>

<pallas_src>
from functools import partial

import numpy as np
import jax
import jax.numpy as jnp
from jax import lax
from jax.experimental import pallas as pl
from jax.experimental.pallas import tpu as pltpu

NEG_SLOPE = 0.2
BN_EPS = 1e-5
LANES = 128
N_LAYERS = 4


def _round_up(v, m):
    return ((v + m - 1) // m) * m


def _batch_chunk(batch):
    # one grid step per chunk of <= 8 samples; chunks map to separate TCs on v7x
    return batch if batch <= 8 else 8


def conv_plan(seq_len, n_layers=N_LAYERS):
    """Static geometry of the Conv1d(k=3, s=2, p=2) stack."""
    l_outs, l = [], seq_len
    for _ in range(n_layers):
        l = (l + 2 * 2 - 3) // 2 + 1
        l_outs.append(l)
    out_rows = [_round_up(v, 8) for v in l_outs]            # padded output rows
    src_rows = [_round_up(seq_len, 8)] + out_rows[:-1]      # padded input rows
    src_lens = [seq_len] + l_outs[:-1]                      # valid input length
    return l_outs, out_rows, src_rows, src_lens


# ----------------------------- Pallas kernel -------------------------------- #
def _leaky(x):
    return jnp.where(x >= 0, x, NEG_SLOPE * x)


def _make_kernel(bchunk, c4, l4, n1):
    def kernel(x_ref, s0, s1, s2, s3, cw_ref, cb_ref,
               w1_ref, b1_ref, w2_ref, b2_ref, w3_ref, b3_ref, o_ref):
        sels = (s0, s1, s2, s3)
        act = x_ref[...]                                    # (bchunk*sr0, 128) f32
        # ---- conv + folded-BN + LeakyReLU stack (all MXU work in bf16) ----
        for i in range(N_LAYERS):
            # all 3 taps in one wide matmul (N = 384)
            y = jnp.dot(act.astype(jnp.bfloat16), cw_ref[i],
                        preferred_element_type=jnp.float32)
            y = y.astype(jnp.bfloat16)                      # (bchunk*sr_i, 384)
            sel = sels[i]
            g = jnp.dot(sel[0], y[:, :LANES],
                        preferred_element_type=jnp.float32)
            g = g + jnp.dot(sel[1], y[:, LANES:2 * LANES],
                            preferred_element_type=jnp.float32)
            g = g + jnp.dot(sel[2], y[:, 2 * LANES:],
                            preferred_element_type=jnp.float32)
            # bias + LeakyReLU; padding rows/lanes are harmless because every
            # downstream sel / FC1 slice reads only valid rows & lanes.
            act = _leaky(g + cb_ref[i])                     # (bchunk*rows_i, 128)
        # ---- classifier; torch's (C, L) flatten is folded into w1's regroup.
        # Last conv layer emitted rows position-major (l*bchunk + b), so each
        # FC1 step is a contiguous row slice with M = bchunk.
        # TODO(synk): collapse these l4 matmuls into one K = l4*c4 matmul.
        h = jnp.zeros((bchunk, n1), jnp.float32)
        for l in range(l4):
            lhs = act[l * bchunk:(l + 1) * bchunk, :c4].astype(jnp.bfloat16)
            h = h + jnp.dot(lhs, w1_ref[l], preferred_element_type=jnp.float32)
        h = _leaky(h + b1_ref[...])
        h = jnp.dot(h.astype(jnp.bfloat16), w2_ref[...],
                    preferred_element_type=jnp.float32)
        h = _leaky(h + b2_ref[...])
        h = jnp.dot(h.astype(jnp.bfloat16), w3_ref[...],
                    preferred_element_type=jnp.float32)
        o_ref[...] = jnp.tanh(h + b3_ref[...])              # single lane-dense store
    return kernel


# ----------------------------- packing / wrapper ---------------------------- #
def _sel_block(bchunk, orow, srow, l_out, l_src, interleave_out):
    """0/1 gather matrices for one conv layer, block-diagonal over the batch chunk.

    Shape (3, bchunk*orow, bchunk*srow).  Tap t of output position i reads source
    row k = 2*i + t - 2 of the same sample.  Output rows are sample-major
    (b*orow + i) except for the last layer (position-major: i*bchunk + b) so FC1
    can slice contiguous row blocks.  Validity (i < l_out, 0 <= k < l_src) is
    folded in, so the kernel needs no activation masks.
    """
    r = np.arange(bchunk * orow)
    c = np.arange(bchunk * srow)
    if interleave_out:
        br, ir = r % bchunk, r // bchunk
    else:
        br, ir = r // orow, r % orow
    bc, kc = c // srow, c % srow
    taps = []
    for t in range(3):
        m = ((br[:, None] == bc[None, :])
             & (kc[None, :] == 2 * ir[:, None] + t - 2)
             & (ir[:, None] < l_out)
             & (kc[None, :] < l_src))
        taps.append(m)
    return jnp.asarray(np.stack(taps).astype(np.float32), dtype=jnp.bfloat16)


def pack_params(convs, fcs, plan, nfilters, bchunk):
    """Fold BN, pack conv taps along N, build sel matrices, regroup FC1."""
    l_outs, out_rows, src_rows, src_lens = plan
    cw = jnp.zeros((N_LAYERS, LANES, 3 * LANES), jnp.float32)
    cb = jnp.zeros((N_LAYERS, 1, LANES), jnp.float32)
    for i, (w, b, g, be, m, v) in enumerate(convs):
        scale = g / jnp.sqrt(v + BN_EPS)
        wf = w * scale[:, None, None]                        # (Cout, Cin, 3)
        bf = (b - m) * scale + be                            # (Cout,)
        wt = jnp.transpose(wf, (2, 1, 0))                    # (3, Cin, Cout)
        cin, cout = wt.shape[1], wt.shape[2]
        for t in range(3):
            cw = cw.at[i, :cin, t * LANES:t * LANES + cout].set(wt[t])
        cb = cb.at[i, 0, :cout].set(bf)
    cw = cw.astype(jnp.bfloat16)

    sels = [_sel_block(bchunk, out_rows[i], src_rows[i], l_outs[i], src_lens[i],
                       interleave_out=(i == N_LAYERS - 1))
            for i in range(N_LAYERS)]

    (w1, b1), (w2, b2), (w3, b3) = fcs
    c4, l4 = 8 * nfilters, l_outs[-1]
    n1 = w1.shape[1]
    # torch flatten index f = c*L4 + l  ->  regroup rows to (L4, C4, n1)
    w1_r = w1.reshape(c4, l4, n1).transpose(1, 0, 2).astype(jnp.bfloat16)
    out_ch = w3.shape[1]
    w3_p = jnp.zeros((w3.shape[0], LANES), jnp.float32).at[:, :out_ch].set(w3)
    b3_p = jnp.zeros((1, LANES), jnp.float32).at[0, :out_ch].set(b3)
    return dict(sels=sels, conv_w=cw, conv_b=cb,
                w1=w1_r, b1=b1.reshape(1, -1).astype(jnp.float32),
                w2=w2.astype(jnp.bfloat16),
                b2=b2.reshape(1, -1).astype(jnp.float32),
                w3=w3_p.astype(jnp.bfloat16), b3=b3_p)


def forward_pallas(x, packed, plan, nfilters, out_channels):
    l_outs, out_rows, src_rows, _ = plan
    B, c_in, L = x.shape
    bchunk = _batch_chunk(B)
    b_pad = _round_up(B, bchunk)
    grid = (b_pad // bchunk,)
    c4, l4 = 8 * nfilters, l_outs[-1]
    n1 = packed["w1"].shape[-1]
    n2 = packed["w2"].shape[-1]
    sr0 = src_rows[0]

    # (B, C, L) -> lane-dense (length, channel) rows, flattened over batch.
    x_nlc = jnp.transpose(x, (0, 2, 1))
    x_pad = jnp.zeros((b_pad, sr0, LANES), jnp.float32)
    x_pad = x_pad.at[:B, :L, :c_in].set(x_nlc)
    x_pad = x_pad.reshape(b_pad * sr0, LANES)

    kernel = _make_kernel(bchunk, c4, l4, n1)
    args = (x_pad, *packed["sels"], packed["conv_w"], packed["conv_b"],
            packed["w1"], packed["b1"], packed["w2"], packed["b2"],
            packed["w3"], packed["b3"])

    def whole(a):
        zeros = (0,) * a.ndim
        return pl.BlockSpec(a.shape, lambda i, _z=zeros: _z)

    in_specs = [pl.BlockSpec((bchunk * sr0, LANES), lambda i: (i, 0))]
    in_specs += [whole(a) for a in args[1:]]
    out_specs = pl.BlockSpec((bchunk, LANES), lambda i: (i, 0))

    # Advisory cost estimate so XLA schedules surrounding ops correctly.
    flops = 0
    for i in range(N_LAYERS):
        flops += 2 * (bchunk * src_rows[i]) * LANES * (3 * LANES)
        flops += 3 * 2 * (bchunk * out_rows[i]) * (bchunk * src_rows[i]) * LANES
    flops += 2 * bchunk * (l4 * c4 * n1 + n1 * n2 + n2 * LANES)
    flops *= grid[0]
    bytes_accessed = sum(int(a.size) * a.dtype.itemsize for a in args)
    bytes_accessed += b_pad * LANES * 4
    cost = pl.CostEstimate(flops=int(flops),
                           transcendentals=int(b_pad * LANES),
                           bytes_accessed=int(bytes_accessed))

    # TODO(synk): when scaling nfilters, set vmem_limit_bytes / single-buffer the
    # big weight specs (w1/w2) — current footprint fits every generation's default.
    out = pl.pallas_call(
        kernel,
        out_shape=jax.ShapeDtypeStruct((b_pad, LANES), jnp.float32),
        grid=grid,
        in_specs=in_specs,
        out_specs=out_specs,
        compiler_params=pltpu.CompilerParams(
            dimension_semantics=("parallel",)),
        cost_estimate=cost,
    )(*args)
    return out[:B, :out_channels]


# ----------------------------- plain-JAX reference -------------------------- #
def reference_forward(x, convs, fcs):
    y = x
    for (w, b, g, be, m, v) in convs:
        y = lax.conv_general_dilated(y, w, window_strides=(2,), padding=[(2, 2)],
                                     dimension_numbers=("NCH", "OIH", "NCH"))
        y = y + b[None, :, None]
        scale = g / jnp.sqrt(v + BN_EPS)
        y = (y - m[None, :, None]) * scale[None, :, None] + be[None, :, None]
        y = jnp.where(y >= 0, y, NEG_SLOPE * y)
    feat = y.reshape(y.shape[0], -1)                         # torch .view order (C, L)
    (w1, b1), (w2, b2), (w3, b3) = fcs
    h = feat @ w1 + b1
    h = jnp.where(h >= 0, h, NEG_SLOPE * h)
    h = h @ w2 + b2
    h = jnp.where(h >= 0, h, NEG_SLOPE * h)
    h = h @ w3 + b3
    return jnp.tanh(h)


# ----------------------------- parameters ----------------------------------- #
def init_params(key, in_channels, out_channels, nfilters):
    chans = [in_channels, nfilters, 2 * nfilters, 4 * nfilters, 8 * nfilters]
    keys = iter(jax.random.split(key, 32))
    convs = []
    for layer in range(4):
        cin, cout = chans[layer], chans[layer + 1]
        w = 0.1 * jax.random.normal(next(keys), (cout, cin, 3), jnp.float32)
        b = 0.05 * jax.random.normal(next(keys), (cout,), jnp.float32)
        gamma = 1.0 + 0.1 * jax.random.normal(next(keys), (cout,), jnp.float32)
        beta = 0.05 * jax.random.normal(next(keys), (cout,), jnp.float32)
        mean = 0.05 * jax.random.normal(next(keys), (cout,), jnp.float32)
        var = jnp.abs(jax.random.normal(next(keys), (cout,), jnp.float32)) * 0.5 + 0.5
        convs.append((w, b, gamma, beta, mean, var))

    feat = 10 * nfilters * 8
    dims = [(feat, 2048), (2048, 512), (512, out_channels)]
    fcs = []
    for din, dout in dims:
        w = (1.0 / jnp.sqrt(din)) * jax.random.normal(next(keys), (din, dout),
                                                      jnp.float32)
        b = 0.05 * jax.random.normal(next(keys), (dout,), jnp.float32)
        fcs.append((w, b))
    return convs, fcs


# ----------------------------- main ------------------------------------------ #
if __name__ == "__main__":
    # Network(in_channels=4, out_channels=2, nfilters=4); L=116 so that four
    # stride-2 convs (k=3, p=2) end at length 10, matching the 10*nfilters*8 view.
    in_channels, out_channels, nfilters = 4, 2, 4
    batch, seq_len = 2, 116

    plan = conv_plan(seq_len)
    assert plan[0][-1] == 10, "seq_len must reduce to length 10 for this module"

    key = jax.random.PRNGKey(0)
    k_x, k_p = jax.random.split(key)
    x = jax.random.normal(k_x, (batch, in_channels, seq_len), jnp.float32)
    convs, fcs = init_params(k_p, in_channels, out_channels, nfilters)

    packed = pack_params(convs, fcs, plan, nfilters, _batch_chunk(batch))
    fwd = jax.jit(partial(forward_pallas, plan=plan, nfilters=nfilters,
                          out_channels=out_channels))
    out = jax.block_until_ready(fwd(x, packed))

    ref = jax.block_until_ready(reference_forward(x, convs, fcs))
    assert out.shape == (batch, out_channels), out.shape
    max_err = float(jnp.max(jnp.abs(out - ref)))
    # bf16 conv/FC weights & activations vs the all-f32 reference (~1e-3 expected).
    assert max_err < 2e-2, max_err

    print("KERNEL_OK")
</pallas_src>

<mosaic_0001>
module attributes {stable_mosaic.version = 11 : i64} {
  func.func @kernel(%arg0: i32, %arg1: memref<240x128xf32, #tpu.memory_space<vmem>>, %arg2: memref<3x128x240xbf16, #tpu.memory_space<vmem>>, %arg3: memref<3x64x128xbf16, #tpu.memory_space<vmem>>, %arg4: memref<3x48x64xbf16, #tpu.memory_space<vmem>>, %arg5: memref<3x32x48xbf16, #tpu.memory_space<vmem>>, %arg6: memref<4x128x384xbf16, #tpu.memory_space<vmem>>, %arg7: memref<4x1x128xf32, #tpu.memory_space<vmem>>, %arg8: memref<10x32x2048xbf16, #tpu.memory_space<vmem>>, %arg9: memref<1x2048xf32, #tpu.memory_space<vmem>>, %arg10: memref<2048x512xbf16, #tpu.memory_space<vmem>>, %arg11: memref<1x512xf32, #tpu.memory_space<vmem>>, %arg12: memref<512x128xbf16, #tpu.memory_space<vmem>>, %arg13: memref<1x128xf32, #tpu.memory_space<vmem>>, %arg14: memref<2x128xf32, #tpu.memory_space<vmem>>) attributes {dimension_semantics = [#tpu.dimension_semantics<parallel>], iteration_bounds = array<i64: 1>, scalar_prefetch = 0 : i64, scratch_operands = 0 : i64, tpu.core_type = #tpu.core_type<tc>, window_params = [{transform_indices = @transform_0, window_bounds = array<i64: 240, 128>}, {pipeline_mode = #tpu.pipeline_mode<synchronous>, transform_indices = @transform_1, window_bounds = array<i64: 3, 128, 240>}, {pipeline_mode = #tpu.pipeline_mode<synchronous>, transform_indices = @transform_2, window_bounds = array<i64: 3, 64, 128>}, {pipeline_mode = #tpu.pipeline_mode<synchronous>, transform_indices = @transform_3, window_bounds = array<i64: 3, 48, 64>}, {pipeline_mode = #tpu.pipeline_mode<synchronous>, transform_indices = @transform_4, window_bounds = array<i64: 3, 32, 48>}, {pipeline_mode = #tpu.pipeline_mode<synchronous>, transform_indices = @transform_5, window_bounds = array<i64: 4, 128, 384>}, {pipeline_mode = #tpu.pipeline_mode<synchronous>, transform_indices = @transform_6, window_bounds = array<i64: 4, 1, 128>}, {pipeline_mode = #tpu.pipeline_mode<synchronous>, transform_indices = @transform_7, window_bounds = array<i64: 10, 32, 2048>}, {pipeline_mode = #tpu.pipeline_mode<synchronous>, transform_indices = @transform_8, window_bounds = array<i64: 1, 2048>}, {pipeline_mode = #tpu.pipeline_mode<synchronous>, transform_indices = @transform_9, window_bounds = array<i64: 2048, 512>}, {pipeline_mode = #tpu.pipeline_mode<synchronous>, transform_indices = @transform_10, window_bounds = array<i64: 1, 512>}, {pipeline_mode = #tpu.pipeline_mode<synchronous>, transform_indices = @transform_11, window_bounds = array<i64: 512, 128>}, {pipeline_mode = #tpu.pipeline_mode<synchronous>, transform_indices = @transform_12, window_bounds = array<i64: 1, 128>}, {transform_indices = @transform_13, window_bounds = array<i64: 2, 128>}]} {
    %c0 = arith.constant 0 : index
    %c0_0 = arith.constant 0 : index
    %0 = vector.load %arg1[%c0, %c0_0] : memref<240x128xf32, #tpu.memory_space<vmem>>, vector<240x128xf32>
    %1 = arith.truncf %0 : vector<240x128xf32> to vector<240x128xbf16>
    %c0_1 = arith.constant 0 : index
    %c0_2 = arith.constant 0 : index
    %c0_3 = arith.constant 0 : index
    %2 = vector.load %arg6[%c0_1, %c0_2, %c0_3] : memref<4x128x384xbf16, #tpu.memory_space<vmem>>, vector<1x128x384xbf16>
    %3 = vector.shape_cast %2 : vector<1x128x384xbf16> to vector<128x384xbf16>
    %cst = arith.constant dense<0.000000e+00> : vector<240x384xf32>
    %4 = tpu.matmul %1, %3, %cst {dimension_numbers = #tpu.dot_dimension_numbers<[1], [0], [0], [1], [0, 0, 1, 1], [], []>} : vector<240x128xbf16>, vector<128x384xbf16>, vector<240x384xf32> -> vector<240x384xf32>
    %5 = arith.truncf %4 : vector<240x384xf32> to vector<240x384xbf16>
    %c0_4 = arith.constant 0 : index
    %c0_5 = arith.constant 0 : index
    %c0_6 = arith.constant 0 : index
    %6 = vector.load %arg2[%c0_4, %c0_5, %c0_6] : memref<3x128x240xbf16, #tpu.memory_space<vmem>>, vector<1x128x240xbf16>
    %7 = vector.shape_cast %6 : vector<1x128x240xbf16> to vector<128x240xbf16>
    %8 = vector.extract_strided_slice %5 {offsets = [0, 0], sizes = [240, 128], strides = [1, 1]} : vector<240x384xbf16> to vector<240x128xbf16>
    %cst_7 = arith.constant dense<0.000000e+00> : vector<128x128xf32>
    %9 = tpu.matmul %7, %8, %cst_7 {dimension_numbers = #tpu.dot_dimension_numbers<[1], [0], [0], [1], [0, 0, 1, 1], [], []>} : vector<128x240xbf16>, vector<240x128xbf16>, vector<128x128xf32> -> vector<128x128xf32>
    %c1 = arith.constant 1 : index
    %c0_8 = arith.constant 0 : index
    %c0_9 = arith.constant 0 : index
    %10 = vector.load %arg2[%c1, %c0_8, %c0_9] : memref<3x128x240xbf16, #tpu.memory_space<vmem>>, vector<1x128x240xbf16>
    %11 = vector.shape_cast %10 : vector<1x128x240xbf16> to vector<128x240xbf16>
    %12 = vector.extract_strided_slice %5 {offsets = [0, 128], sizes = [240, 128], strides = [1, 1]} : vector<240x384xbf16> to vector<240x128xbf16>
    %cst_10 = arith.constant dense<0.000000e+00> : vector<128x128xf32>
    %13 = tpu.matmul %11, %12, %cst_10 {dimension_numbers = #tpu.dot_dimension_numbers<[1], [0], [0], [1], [0, 0, 1, 1], [], []>} : vector<128x240xbf16>, vector<240x128xbf16>, vector<128x128xf32> -> vector<128x128xf32>
    %14 = arith.addf %9, %13 : vector<128x128xf32>
    %c2 = arith.constant 2 : index
    %c0_11 = arith.constant 0 : index
    %c0_12 = arith.constant 0 : index
    %15 = vector.load %arg2[%c2, %c0_11, %c0_12] : memref<3x128x240xbf16, #tpu.memory_space<vmem>>, vector<1x128x240xbf16>
    %16 = vector.shape_cast %15 : vector<1x128x240xbf16> to vector<128x240xbf16>
    %17 = vector.extract_strided_slice %5 {offsets = [0, 256], sizes = [240, 128], strides = [1, 1]} : vector<240x384xbf16> to vector<240x128xbf16>
    %cst_13 = arith.constant dense<0.000000e+00> : vector<128x128xf32>
    %18 = tpu.matmul %16, %17, %cst_13 {dimension_numbers = #tpu.dot_dimension_numbers<[1], [0], [0], [1], [0, 0, 1, 1], [], []>} : vector<128x240xbf16>, vector<240x128xbf16>, vector<128x128xf32> -> vector<128x128xf32>
    %19 = arith.addf %14, %18 : vector<128x128xf32>
    %c0_14 = arith.constant 0 : index
    %c0_15 = arith.constant 0 : index
    %c0_16 = arith.constant 0 : index
    %20 = vector.load %arg7[%c0_14, %c0_15, %c0_16] : memref<4x1x128xf32, #tpu.memory_space<vmem>>, vector<1x1x128xf32>
    %21 = vector.shape_cast %20 : vector<1x1x128xf32> to vector<1x128xf32>
    %22 = vector.broadcast %21 : vector<1x128xf32> to vector<128x128xf32>
    %23 = arith.addf %19, %22 : vector<128x128xf32>
    %cst_17 = arith.constant 0.000000e+00 : f32
    %24 = vector.broadcast %cst_17 : f32 to vector<128x128xf32>
    %25 = arith.cmpf oge, %23, %24 : vector<128x128xf32>
    %cst_18 = arith.constant 2.000000e-01 : f32
    %26 = vector.broadcast %cst_18 : f32 to vector<128x128xf32>
    %27 = arith.mulf %26, %23 : vector<128x128xf32>
    %28 = arith.select %25, %23, %27 : vector<128x128xi1>, vector<128x128xf32>
    %29 = arith.truncf %28 : vector<128x128xf32> to vector<128x128xbf16>
    %c1_19 = arith.constant 1 : index
    %c0_20 = arith.constant 0 : index
    %c0_21 = arith.constant 0 : index
    %30 = vector.load %arg6[%c1_19, %c0_20, %c0_21] : memref<4x128x384xbf16, #tpu.memory_space<vmem>>, vector<1x128x384xbf16>
    %31 = vector.shape_cast %30 : vector<1x128x384xbf16> to vector<128x384xbf16>
    %cst_22 = arith.constant dense<0.000000e+00> : vector<128x384xf32>
    %32 = tpu.matmul %29, %31, %cst_22 {dimension_numbers = #tpu.dot_dimension_numbers<[1], [0], [0], [1], [0, 0, 1, 1], [], []>} : vector<128x128xbf16>, vector<128x384xbf16>, vector<128x384xf32> -> vector<128x384xf32>
    %33 = arith.truncf %32 : vector<128x384xf32> to vector<128x384xbf16>
    %c0_23 = arith.constant 0 : index
    %c0_24 = arith.constant 0 : index
    %c0_25 = arith.constant 0 : index
    %34 = vector.load %arg3[%c0_23, %c0_24, %c0_25] : memref<3x64x128xbf16, #tpu.memory_space<vmem>>, vector<1x64x128xbf16>
    %35 = vector.shape_cast %34 : vector<1x64x128xbf16> to vector<64x128xbf16>
    %36 = vector.extract_strided_slice %33 {offsets = [0, 0], sizes = [128, 128], strides = [1, 1]} : vector<128x384xbf16> to vector<128x128xbf16>
    %cst_26 = arith.constant dense<0.000000e+00> : vector<64x128xf32>
    %37 = tpu.matmul %35, %36, %cst_26 {dimension_numbers = #tpu.dot_dimension_numbers<[1], [0], [0], [1], [0, 0, 1, 1], [], []>} : vector<64x128xbf16>, vector<128x128xbf16>, vector<64x128xf32> -> vector<64x128xf32>
    %c1_27 = arith.constant 1 : index
    %c0_28 = arith.constant 0 : index
    %c0_29 = arith.constant 0 : index
    %38 = vector.load %arg3[%c1_27, %c0_28, %c0_29] : memref<3x64x128xbf16, #tpu.memory_space<vmem>>, vector<1x64x128xbf16>
    %39 = vector.shape_cast %38 : vector<1x64x128xbf16> to vector<64x128xbf16>
    %40 = vector.extract_strided_slice %33 {offsets = [0, 128], sizes = [128, 128], strides = [1, 1]} : vector<128x384xbf16> to vector<128x128xbf16>
    %cst_30 = arith.constant dense<0.000000e+00> : vector<64x128xf32>
    %41 = tpu.matmul %39, %40, %cst_30 {dimension_numbers = #tpu.dot_dimension_numbers<[1], [0], [0], [1], [0, 0, 1, 1], [], []>} : vector<64x128xbf16>, vector<128x128xbf16>, vector<64x128xf32> -> vector<64x128xf32>
    %42 = arith.addf %37, %41 : vector<64x128xf32>
    %c2_31 = arith.constant 2 : index
    %c0_32 = arith.constant 0 : index
    %c0_33 = arith.constant 0 : index
    %43 = vector.load %arg3[%c2_31, %c0_32, %c0_33] : memref<3x64x128xbf16, #tpu.memory_space<vmem>>, vector<1x64x128xbf16>
    %44 = vector.shape_cast %43 : vector<1x64x128xbf16> to vector<64x128xbf16>
    %45 = vector.extract_strided_slice %33 {offsets = [0, 256], sizes = [128, 128], strides = [1, 1]} : vector<128x384xbf16> to vector<128x128xbf16>
    %cst_34 = arith.constant dense<0.000000e+00> : vector<64x128xf32>
    %46 = tpu.matmul %44, %45, %cst_34 {dimension_numbers = #tpu.dot_dimension_numbers<[1], [0], [0], [1], [0, 0, 1, 1], [], []>} : vector<64x128xbf16>, vector<128x128xbf16>, vector<64x128xf32> -> vector<64x128xf32>
    %47 = arith.addf %42, %46 : vector<64x128xf32>
    %c1_35 = arith.constant 1 : index
    %c0_36 = arith.constant 0 : index
    %c0_37 = arith.constant 0 : index
    %48 = vector.load %arg7[%c1_35, %c0_36, %c0_37] : memref<4x1x128xf32, #tpu.memory_space<vmem>>, vector<1x1x128xf32>
    %49 = vector.shape_cast %48 : vector<1x1x128xf32> to vector<1x128xf32>
    %50 = vector.broadcast %49 : vector<1x128xf32> to vector<64x128xf32>
    %51 = arith.addf %47, %50 : vector<64x128xf32>
    %cst_38 = arith.constant 0.000000e+00 : f32
    %52 = vector.broadcast %cst_38 : f32 to vector<64x128xf32>
    %53 = arith.cmpf oge, %51, %52 : vector<64x128xf32>
    %cst_39 = arith.constant 2.000000e-01 : f32
    %54 = vector.broadcast %cst_39 : f32 to vector<64x128xf32>
    %55 = arith.mulf %54, %51 : vector<64x128xf32>
    %56 = arith.select %53, %51, %55 : vector<64x128xi1>, vector<64x128xf32>
    %57 = arith.truncf %56 : vector<64x128xf32> to vector<64x128xbf16>
    %c2_40 = arith.constant 2 : index
    %c0_41 = arith.constant 0 : index
    %c0_42 = arith.constant 0 : index
    %58 = vector.load %arg6[%c2_40, %c0_41, %c0_42] : memref<4x128x384xbf16, #tpu.memory_space<vmem>>, vector<1x128x384xbf16>
    %59 = vector.shape_cast %58 : vector<1x128x384xbf16> to vector<128x384xbf16>
    %cst_43 = arith.constant dense<0.000000e+00> : vector<64x384xf32>
    %60 = tpu.matmul %57, %59, %cst_43 {dimension_numbers = #tpu.dot_dimension_numbers<[1], [0], [0], [1], [0, 0, 1, 1], [], []>} : vector<64x128xbf16>, vector<128x384xbf16>, vector<64x384xf32> -> vector<64x384xf32>
    %61 = arith.truncf %60 : vector<64x384xf32> to vector<64x384xbf16>
    %c0_44 = arith.constant 0 : index
    %c0_45 = arith.constant 0 : index
    %c0_46 = arith.constant 0 : index
    %62 = vector.load %arg4[%c0_44, %c0_45, %c0_46] : memref<3x48x64xbf16, #tpu.memory_space<vmem>>, vector<1x48x64xbf16>
    %63 = vector.shape_cast %62 : vector<1x48x64xbf16> to vector<48x64xbf16>
    %64 = vector.extract_strided_slice %61 {offsets = [0, 0], sizes = [64, 128], strides = [1, 1]} : vector<64x384xbf16> to vector<64x128xbf16>
    %cst_47 = arith.constant dense<0.000000e+00> : vector<48x128xf32>
    %65 = tpu.matmul %63, %64, %cst_47 {dimension_numbers = #tpu.dot_dimension_numbers<[1], [0], [0], [1], [0, 0, 1, 1], [], []>} : vector<48x64xbf16>, vector<64x128xbf16>, vector<48x128xf32> -> vector<48x128xf32>
    %c1_48 = arith.constant 1 : index
    %c0_49 = arith.constant 0 : index
    %c0_50 = arith.constant 0 : index
    %66 = vector.load %arg4[%c1_48, %c0_49, %c0_50] : memref<3x48x64xbf16, #tpu.memory_space<vmem>>, vector<1x48x64xbf16>
    %67 = vector.shape_cast %66 : vector<1x48x64xbf16> to vector<48x64xbf16>
    %68 = vector.extract_strided_slice %61 {offsets = [0, 128], sizes = [64, 128], strides = [1, 1]} : vector<64x384xbf16> to vector<64x128xbf16>
    %cst_51 = arith.constant dense<0.000000e+00> : vector<48x128xf32>
    %69 = tpu.matmul %67, %68, %cst_51 {dimension_numbers = #tpu.dot_dimension_numbers<[1], [0], [0], [1], [0, 0, 1, 1], [], []>} : vector<48x64xbf16>, vector<64x128xbf16>, vector<48x128xf32> -> vector<48x128xf32>
    %70 = arith.addf %65, %69 : vector<48x128xf32>
    %c2_52 = arith.constant 2 : index
    %c0_53 = arith.constant 0 : index
    %c0_54 = arith.constant 0 : index
    %71 = vector.load %arg4[%c2_52, %c0_53, %c0_54] : memref<3x48x64xbf16, #tpu.memory_space<vmem>>, vector<1x48x64xbf16>
    %72 = vector.shape_cast %71 : vector<1x48x64xbf16> to vector<48x64xbf16>
    %73 = vector.extract_strided_slice %61 {offsets = [0, 256], sizes = [64, 128], strides = [1, 1]} : vector<64x384xbf16> to vector<64x128xbf16>
    %cst_55 = arith.constant dense<0.000000e+00> : vector<48x128xf32>
    %74 = tpu.matmul %72, %73, %cst_55 {dimension_numbers = #tpu.dot_dimension_numbers<[1], [0], [0], [1], [0, 0, 1, 1], [], []>} : vector<48x64xbf16>, vector<64x128xbf16>, vector<48x128xf32> -> vector<48x128xf32>
    %75 = arith.addf %70, %74 : vector<48x128xf32>
    %c2_56 = arith.constant 2 : index
    %c0_57 = arith.constant 0 : index
    %c0_58 = arith.constant 0 : index
    %76 = vector.load %arg7[%c2_56, %c0_57, %c0_58] : memref<4x1x128xf32, #tpu.memory_space<vmem>>, vector<1x1x128xf32>
    %77 = vector.shape_cast %76 : vector<1x1x128xf32> to vector<1x128xf32>
    %78 = vector.broadcast %77 : vector<1x128xf32> to vector<48x128xf32>
    %79 = arith.addf %75, %78 : vector<48x128xf32>
    %cst_59 = arith.constant 0.000000e+00 : f32
    %80 = vector.broadcast %cst_59 : f32 to vector<48x128xf32>
    %81 = arith.cmpf oge, %79, %80 : vector<48x128xf32>
    %cst_60 = arith.constant 2.000000e-01 : f32
    %82 = vector.broadcast %cst_60 : f32 to vector<48x128xf32>
    %83 = arith.mulf %82, %79 : vector<48x128xf32>
    %84 = arith.select %81, %79, %83 : vector<48x128xi1>, vector<48x128xf32>
    %85 = arith.truncf %84 : vector<48x128xf32> to vector<48x128xbf16>
    %c3 = arith.constant 3 : index
    %c0_61 = arith.constant 0 : index
    %c0_62 = arith.constant 0 : index
    %86 = vector.load %arg6[%c3, %c0_61, %c0_62] : memref<4x128x384xbf16, #tpu.memory_space<vmem>>, vector<1x128x384xbf16>
    %87 = vector.shape_cast %86 : vector<1x128x384xbf16> to vector<128x384xbf16>
    %cst_63 = arith.constant dense<0.000000e+00> : vector<48x384xf32>
    %88 = tpu.matmul %85, %87, %cst_63 {dimension_numbers = #tpu.dot_dimension_numbers<[1], [0], [0], [1], [0, 0, 1, 1], [], []>} : vector<48x128xbf16>, vector<128x384xbf16>, vector<48x384xf32> -> vector<48x384xf32>
    %89 = arith.truncf %88 : vector<48x384xf32> to vector<48x384xbf16>
    %c0_64 = arith.constant 0 : index
    %c0_65 = arith.constant 0 : index
    %c0_66 = arith.constant 0 : index
    %90 = vector.load %arg5[%c0_64, %c0_65, %c0_66] : memref<3x32x48xbf16, #tpu.memory_space<vmem>>, vector<1x32x48xbf16>
    %91 = vector.shape_cast %90 : vector<1x32x48xbf16> to vector<32x48xbf16>
    %92 = vector.extract_strided_slice %89 {offsets = [0, 0], sizes = [48, 128], strides = [1, 1]} : vector<48x384xbf16> to vector<48x128xbf16>
    %cst_67 = arith.constant dense<0.000000e+00> : vector<32x128xf32>
    %93 = tpu.matmul %91, %92, %cst_67 {dimension_numbers = #tpu.dot_dimension_numbers<[1], [0], [0], [1], [0, 0, 1, 1], [], []>} : vector<32x48xbf16>, vector<48x128xbf16>, vector<32x128xf32> -> vector<32x128xf32>
    %c1_68 = arith.constant 1 : index
    %c0_69 = arith.constant 0 : index
    %c0_70 = arith.constant 0 : index
    %94 = vector.load %arg5[%c1_68, %c0_69, %c0_70] : memref<3x32x48xbf16, #tpu.memory_space<vmem>>, vector<1x32x48xbf16>
    %95 = vector.shape_cast %94 : vector<1x32x48xbf16> to vector<32x48xbf16>
    %96 = vector.extract_strided_slice %89 {offsets = [0, 128], sizes = [48, 128], strides = [1, 1]} : vector<48x384xbf16> to vector<48x128xbf16>
    %cst_71 = arith.constant dense<0.000000e+00> : vector<32x128xf32>
    %97 = tpu.matmul %95, %96, %cst_71 {dimension_numbers = #tpu.dot_dimension_numbers<[1], [0], [0], [1], [0, 0, 1, 1], [], []>} : vector<32x48xbf16>, vector<48x128xbf16>, vector<32x128xf32> -> vector<32x128xf32>
    %98 = arith.addf %93, %97 : vector<32x128xf32>
    %c2_72 = arith.constant 2 : index
    %c0_73 = arith.constant 0 : index
    %c0_74 = arith.constant 0 : index
    %99 = vector.load %arg5[%c2_72, %c0_73, %c0_74] : memref<3x32x48xbf16, #tpu.memory_space<vmem>>, vector<1x32x48xbf16>
    %100 = vector.shape_cast %99 : vector<1x32x48xbf16> to vector<32x48xbf16>
    %101 = vector.extract_strided_slice %89 {offsets = [0, 256], sizes = [48, 128], strides = [1, 1]} : vector<48x384xbf16> to vector<48x128xbf16>
    %cst_75 = arith.constant dense<0.000000e+00> : vector<32x128xf32>
    %102 = tpu.matmul %100, %101, %cst_75 {dimension_numbers = #tpu.dot_dimension_numbers<[1], [0], [0], [1], [0, 0, 1, 1], [], []>} : vector<32x48xbf16>, vector<48x128xbf16>, vector<32x128xf32> -> vector<32x128xf32>
    %103 = arith.addf %98, %102 : vector<32x128xf32>
    %c3_76 = arith.constant 3 : index
    %c0_77 = arith.constant 0 : index
    %c0_78 = arith.constant 0 : index
    %104 = vector.load %arg7[%c3_76, %c0_77, %c0_78] : memref<4x1x128xf32, #tpu.memory_space<vmem>>, vector<1x1x128xf32>
    %105 = vector.shape_cast %104 : vector<1x1x128xf32> to vector<1x128xf32>
    %106 = vector.broadcast %105 : vector<1x128xf32> to vector<32x128xf32>
    %107 = arith.addf %103, %106 : vector<32x128xf32>
    %cst_79 = arith.constant 0.000000e+00 : f32
    %108 = vector.broadcast %cst_79 : f32 to vector<32x128xf32>
    %109 = arith.cmpf oge, %107, %108 : vector<32x128xf32>
    %cst_80 = arith.constant 2.000000e-01 : f32
    %110 = vector.broadcast %cst_80 : f32 to vector<32x128xf32>
    %111 = arith.mulf %110, %107 : vector<32x128xf32>
    %112 = arith.select %109, %107, %111 : vector<32x128xi1>, vector<32x128xf32>
    %cst_81 = arith.constant 0.000000e+00 : f32
    %113 = vector.broadcast %cst_81 : f32 to vector<2x2048xf32>
    %114 = vector.extract_strided_slice %112 {offsets = [0, 0], sizes = [2, 32], strides = [1, 1]} : vector<32x128xf32> to vector<2x32xf32>
    %115 = arith.truncf %114 : vector<2x32xf32> to vector<2x32xbf16>
    %c0_82 = arith.constant 0 : index
    %c0_83 = arith.constant 0 : index
    %c0_84 = arith.constant 0 : index
    %116 = vector.load %arg8[%c0_82, %c0_83, %c0_84] : memref<10x32x2048xbf16, #tpu.memory_space<vmem>>, vector<1x32x2048xbf16>
    %117 = vector.shape_cast %116 : vector<1x32x2048xbf16> to vector<32x2048xbf16>
    %cst_85 = arith.constant dense<0.000000e+00> : vector<2x2048xf32>
    %118 = tpu.matmul %115, %117, %cst_85 {dimension_numbers = #tpu.dot_dimension_numbers<[1], [0], [0], [1], [0, 0, 1, 1], [], []>} : vector<2x32xbf16>, vector<32x2048xbf16>, vector<2x2048xf32> -> vector<2x2048xf32>
    %119 = arith.addf %113, %118 : vector<2x2048xf32>
    %120 = vector.extract_strided_slice %112 {offsets = [2, 0], sizes = [2, 32], strides = [1, 1]} : vector<32x128xf32> to vector<2x32xf32>
    %121 = arith.truncf %120 : vector<2x32xf32> to vector<2x32xbf16>
    %c1_86 = arith.constant 1 : index
    %c0_87 = arith.constant 0 : index
    %c0_88 = arith.constant 0 : index
    %122 = vector.load %arg8[%c1_86, %c0_87, %c0_88] : memref<10x32x2048xbf16, #tpu.memory_space<vmem>>, vector<1x32x2048xbf16>
    %123 = vector.shape_cast %122 : vector<1x32x2048xbf16> to vector<32x2048xbf16>
    %cst_89 = arith.constant dense<0.000000e+00> : vector<2x2048xf32>
    %124 = tpu.matmul %121, %123, %cst_89 {dimension_numbers = #tpu.dot_dimension_numbers<[1], [0], [0], [1], [0, 0, 1, 1], [], []>} : vector<2x32xbf16>, vector<32x2048xbf16>, vector<2x2048xf32> -> vector<2x2048xf32>
    %125 = arith.addf %119, %124 : vector<2x2048xf32>
    %126 = vector.extract_strided_slice %112 {offsets = [4, 0], sizes = [2, 32], strides = [1, 1]} : vector<32x128xf32> to vector<2x32xf32>
    %127 = arith.truncf %126 : vector<2x32xf32> to vector<2x32xbf16>
    %c2_90 = arith.constant 2 : index
    %c0_91 = arith.constant 0 : index
    %c0_92 = arith.constant 0 : index
    %128 = vector.load %arg8[%c2_90, %c0_91, %c0_92] : memref<10x32x2048xbf16, #tpu.memory_space<vmem>>, vector<1x32x2048xbf16>
    %129 = vector.shape_cast %128 : vector<1x32x2048xbf16> to vector<32x2048xbf16>
    %cst_93 = arith.constant dense<0.000000e+00> : vector<2x2048xf32>
    %130 = tpu.matmul %127, %129, %cst_93 {dimension_numbers = #tpu.dot_dimension_numbers<[1], [0], [0], [1], [0, 0, 1, 1], [], []>} : vector<2x32xbf16>, vector<32x2048xbf16>, vector<2x2048xf32> -> vector<2x2048xf32>
    %131 = arith.addf %125, %130 : vector<2x2048xf32>
    %132 = vector.extract_strided_slice %112 {offsets = [6, 0], sizes = [2, 32], strides = [1, 1]} : vector<32x128xf32> to vector<2x32xf32>
    %133 = arith.truncf %132 : vector<2x32xf32> to vector<2x32xbf16>
    %c3_94 = arith.constant 3 : index
    %c0_95 = arith.constant 0 : index
    %c0_96 = arith.constant 0 : index
    %134 = vector.load %arg8[%c3_94, %c0_95, %c0_96] : memref<10x32x2048xbf16, #tpu.memory_space<vmem>>, vector<1x32x2048xbf16>
    %135 = vector.shape_cast %134 : vector<1x32x2048xbf16> to vector<32x2048xbf16>
    %cst_97 = arith.constant dense<0.000000e+00> : vector<2x2048xf32>
    %136 = tpu.matmul %133, %135, %cst_97 {dimension_numbers = #tpu.dot_dimension_numbers<[1], [0], [0], [1], [0, 0, 1, 1], [], []>} : vector<2x32xbf16>, vector<32x2048xbf16>, vector<2x2048xf32> -> vector<2x2048xf32>
    %137 = arith.addf %131, %136 : vector<2x2048xf32>
    %138 = vector.extract_strided_slice %112 {offsets = [8, 0], sizes = [2, 32], strides = [1, 1]} : vector<32x128xf32> to vector<2x32xf32>
    %139 = arith.truncf %138 : vector<2x32xf32> to vector<2x32xbf16>
    %c4 = arith.constant 4 : index
    %c0_98 = arith.constant 0 : index
    %c0_99 = arith.constant 0 : index
    %140 = vector.load %arg8[%c4, %c0_98, %c0_99] : memref<10x32x2048xbf16, #tpu.memory_space<vmem>>, vector<1x32x2048xbf16>
    %141 = vector.shape_cast %140 : vector<1x32x2048xbf16> to vector<32x2048xbf16>
    %cst_100 = arith.constant dense<0.000000e+00> : vector<2x2048xf32>
    %142 = tpu.matmul %139, %141, %cst_100 {dimension_numbers = #tpu.dot_dimension_numbers<[1], [0], [0], [1], [0, 0, 1, 1], [], []>} : vector<2x32xbf16>, vector<32x2048xbf16>, vector<2x2048xf32> -> vector<2x2048xf32>
    %143 = arith.addf %137, %142 : vector<2x2048xf32>
    %144 = vector.extract_strided_slice %112 {offsets = [10, 0], sizes = [2, 32], strides = [1, 1]} : vector<32x128xf32> to vector<2x32xf32>
    %145 = arith.truncf %144 : vector<2x32xf32> to vector<2x32xbf16>
    %c5 = arith.constant 5 : index
    %c0_101 = arith.constant 0 : index
    %c0_102 = arith.constant 0 : index
    %146 = vector.load %arg8[%c5, %c0_101, %c0_102] : memref<10x32x2048xbf16, #tpu.memory_space<vmem>>, vector<1x32x2048xbf16>
    %147 = vector.shape_cast %146 : vector<1x32x2048xbf16> to vector<32x2048xbf16>
    %cst_103 = arith.constant dense<0.000000e+00> : vector<2x2048xf32>
    %148 = tpu.matmul %145, %147, %cst_103 {dimension_numbers = #tpu.dot_dimension_numbers<[1], [0], [0], [1], [0, 0, 1, 1], [], []>} : vector<2x32xbf16>, vector<32x2048xbf16>, vector<2x2048xf32> -> vector<2x2048xf32>
    %149 = arith.addf %143, %148 : vector<2x2048xf32>
    %150 = vector.extract_strided_slice %112 {offsets = [12, 0], sizes = [2, 32], strides = [1, 1]} : vector<32x128xf32> to vector<2x32xf32>
    %151 = arith.truncf %150 : vector<2x32xf32> to vector<2x32xbf16>
    %c6 = arith.constant 6 : index
    %c0_104 = arith.constant 0 : index
    %c0_105 = arith.constant 0 : index
    %152 = vector.load %arg8[%c6, %c0_104, %c0_105] : memref<10x32x2048xbf16, #tpu.memory_space<vmem>>, vector<1x32x2048xbf16>
    %153 = vector.shape_cast %152 : vector<1x32x2048xbf16> to vector<32x2048xbf16>
    %cst_106 = arith.constant dense<0.000000e+00> : vector<2x2048xf32>
    %154 = tpu.matmul %151, %153, %cst_106 {dimension_numbers = #tpu.dot_dimension_numbers<[1], [0], [0], [1], [0, 0, 1, 1], [], []>} : vector<2x32xbf16>, vector<32x2048xbf16>, vector<2x2048xf32> -> vector<2x2048xf32>
    %155 = arith.addf %149, %154 : vector<2x2048xf32>
    %156 = vector.extract_strided_slice %112 {offsets = [14, 0], sizes = [2, 32], strides = [1, 1]} : vector<32x128xf32> to vector<2x32xf32>
    %157 = arith.truncf %156 : vector<2x32xf32> to vector<2x32xbf16>
    %c7 = arith.constant 7 : index
    %c0_107 = arith.constant 0 : index
    %c0_108 = arith.constant 0 : index
    %158 = vector.load %arg8[%c7, %c0_107, %c0_108] : memref<10x32x2048xbf16, #tpu.memory_space<vmem>>, vector<1x32x2048xbf16>
    %159 = vector.shape_cast %158 : vector<1x32x2048xbf16> to vector<32x2048xbf16>
    %cst_109 = arith.constant dense<0.000000e+00> : vector<2x2048xf32>
    %160 = tpu.matmul %157, %159, %cst_109 {dimension_numbers = #tpu.dot_dimension_numbers<[1], [0], [0], [1], [0, 0, 1, 1], [], []>} : vector<2x32xbf16>, vector<32x2048xbf16>, vector<2x2048xf32> -> vector<2x2048xf32>
    %161 = arith.addf %155, %160 : vector<2x2048xf32>
    %162 = vector.extract_strided_slice %112 {offsets = [16, 0], sizes = [2, 32], strides = [1, 1]} : vector<32x128xf32> to vector<2x32xf32>
    %163 = arith.truncf %162 : vector<2x32xf32> to vector<2x32xbf16>
    %c8 = arith.constant 8 : index
    %c0_110 = arith.constant 0 : index
    %c0_111 = arith.constant 0 : index
    %164 = vector.load %arg8[%c8, %c0_110, %c0_111] : memref<10x32x2048xbf16, #tpu.memory_space<vmem>>, vector<1x32x2048xbf16>
    %165 = vector.shape_cast %164 : vector<1x32x2048xbf16> to vector<32x2048xbf16>
    %cst_112 = arith.constant dense<0.000000e+00> : vector<2x2048xf32>
    %166 = tpu.matmul %163, %165, %cst_112 {dimension_numbers = #tpu.dot_dimension_numbers<[1], [0], [0], [1], [0, 0, 1, 1], [], []>} : vector<2x32xbf16>, vector<32x2048xbf16>, vector<2x2048xf32> -> vector<2x2048xf32>
    %167 = arith.addf %161, %166 : vector<2x2048xf32>
    %168 = vector.extract_strided_slice %112 {offsets = [18, 0], sizes = [2, 32], strides = [1, 1]} : vector<32x128xf32> to vector<2x32xf32>
    %169 = arith.truncf %168 : vector<2x32xf32> to vector<2x32xbf16>
    %c9 = arith.constant 9 : index
    %c0_113 = arith.constant 0 : index
    %c0_114 = arith.constant 0 : index
    %170 = vector.load %arg8[%c9, %c0_113, %c0_114] : memref<10x32x2048xbf16, #tpu.memory_space<vmem>>, vector<1x32x2048xbf16>
    %171 = vector.shape_cast %170 : vector<1x32x2048xbf16> to vector<32x2048xbf16>
    %cst_115 = arith.constant dense<0.000000e+00> : vector<2x2048xf32>
    %172 = tpu.matmul %169, %171, %cst_115 {dimension_numbers = #tpu.dot_dimension_numbers<[1], [0], [0], [1], [0, 0, 1, 1], [], []>} : vector<2x32xbf16>, vector<32x2048xbf16>, vector<2x2048xf32> -> vector<2x2048xf32>
    %173 = arith.addf %167, %172 : vector<2x2048xf32>
    %c0_116 = arith.constant 0 : index
    %c0_117 = arith.constant 0 : index
    %174 = vector.load %arg9[%c0_116, %c0_117] : memref<1x2048xf32, #tpu.memory_space<vmem>>, vector<1x2048xf32>
    %175 = vector.broadcast %174 : vector<1x2048xf32> to vector<2x2048xf32>
    %176 = arith.addf %173, %175 : vector<2x2048xf32>
    %cst_118 = arith.constant 0.000000e+00 : f32
    %177 = vector.broadcast %cst_118 : f32 to vector<2x2048xf32>
    %178 = arith.cmpf oge, %176, %177 : vector<2x2048xf32>
    %cst_119 = arith.constant 2.000000e-01 : f32
    %179 = vector.broadcast %cst_119 : f32 to vector<2x2048xf32>
    %180 = arith.mulf %179, %176 : vector<2x2048xf32>
    %181 = arith.select %178, %176, %180 : vector<2x2048xi1>, vector<2x2048xf32>
    %182 = arith.truncf %181 : vector<2x2048xf32> to vector<2x2048xbf16>
    %c0_120 = arith.constant 0 : index
    %c0_121 = arith.constant 0 : index
    %183 = vector.load %arg10[%c0_120, %c0_121] : memref<2048x512xbf16, #tpu.memory_space<vmem>>, vector<2048x512xbf16>
    %cst_122 = arith.constant dense<0.000000e+00> : vector<2x512xf32>
    %184 = tpu.matmul %182, %183, %cst_122 {dimension_numbers = #tpu.dot_dimension_numbers<[1], [0], [0], [1], [0, 0, 1, 1], [], []>} : vector<2x2048xbf16>, vector<2048x512xbf16>, vector<2x512xf32> -> vector<2x512xf32>
    %c0_123 = arith.constant 0 : index
    %c0_124 = arith.constant 0 : index
    %185 = vector.load %arg11[%c0_123, %c0_124] : memref<1x512xf32, #tpu.memory_space<vmem>>, vector<1x512xf32>
    %186 = vector.broadcast %185 : vector<1x512xf32> to vector<2x512xf32>
    %187 = arith.addf %184, %186 : vector<2x512xf32>
    %cst_125 = arith.constant 0.000000e+00 : f32
    %188 = vector.broadcast %cst_125 : f32 to vector<2x512xf32>
    %189 = arith.cmpf oge, %187, %188 : vector<2x512xf32>
    %cst_126 = arith.constant 2.000000e-01 : f32
    %190 = vector.broadcast %cst_126 : f32 to vector<2x512xf32>
    %191 = arith.mulf %190, %187 : vector<2x512xf32>
    %192 = arith.select %189, %187, %191 : vector<2x512xi1>, vector<2x512xf32>
    %193 = arith.truncf %192 : vector<2x512xf32> to vector<2x512xbf16>
    %c0_127 = arith.constant 0 : index
    %c0_128 = arith.constant 0 : index
    %194 = vector.load %arg12[%c0_127, %c0_128] : memref<512x128xbf16, #tpu.memory_space<vmem>>, vector<512x128xbf16>
    %cst_129 = arith.constant dense<0.000000e+00> : vector<2x128xf32>
    %195 = tpu.matmul %193, %194, %cst_129 {dimension_numbers = #tpu.dot_dimension_numbers<[1], [0], [0], [1], [0, 0, 1, 1], [], []>} : vector<2x512xbf16>, vector<512x128xbf16>, vector<2x128xf32> -> vector<2x128xf32>
    %c0_130 = arith.constant 0 : index
    %c0_131 = arith.constant 0 : index
    %196 = vector.load %arg13[%c0_130, %c0_131] : memref<1x128xf32, #tpu.memory_space<vmem>>, vector<1x128xf32>
    %197 = vector.broadcast %196 : vector<1x128xf32> to vector<2x128xf32>
    %198 = arith.addf %195, %197 : vector<2x128xf32>
    %199 = math.tanh %198 : vector<2x128xf32>
    %c0_132 = arith.constant 0 : index
    %c0_133 = arith.constant 0 : index
    %200 = vector.load %arg14[%c0_132, %c0_133] : memref<2x128xf32, #tpu.memory_space<vmem>>, vector<2x128xf32>
    tpu.vector_store %arg14[%c0_132, %c0_133], %199 {strides = array<i32>} : memref<2x128xf32, #tpu.memory_space<vmem>>, vector<2x128xf32>,
    return
  }
  func.func @transform_0(%arg0: i32) -> (i32, i32) {
    %c0_i32 = arith.constant 0 : i32
    %c0_i32_0 = arith.constant 0 : i32
    return %arg0, %c0_i32 : i32, i32
  }
  func.func @transform_1(%arg0: i32) -> (i32, i32, i32) {
    %c0_i32 = arith.constant 0 : i32
    %c0_i32_0 = arith.constant 0 : i32
    %c0_i32_1 = arith.constant 0 : i32
    %c0_i32_2 = arith.constant 0 : i32
    return %c0_i32, %c0_i32_0, %c0_i32_1 : i32, i32, i32
  }
  func.func @transform_2(%arg0: i32) -> (i32, i32, i32) {
    %c0_i32 = arith.constant 0 : i32
    %c0_i32_0 = arith.constant 0 : i32
    %c0_i32_1 = arith.constant 0 : i32
    %c0_i32_2 = arith.constant 0 : i32
    return %c0_i32, %c0_i32_0, %c0_i32_1 : i32, i32, i32
  }
  func.func @transform_3(%arg0: i32) -> (i32, i32, i32) {
    %c0_i32 = arith.constant 0 : i32
    %c0_i32_0 = arith.constant 0 : i32
    %c0_i32_1 = arith.constant 0 : i32
    %c0_i32_2 = arith.constant 0 : i32
    return %c0_i32, %c0_i32_0, %c0_i32_1 : i32, i32, i32
  }
  func.func @transform_4(%arg0: i32) -> (i32, i32, i32) {
    %c0_i32 = arith.constant 0 : i32
    %c0_i32_0 = arith.constant 0 : i32
    %c0_i32_1 = arith.constant 0 : i32
    %c0_i32_2 = arith.constant 0 : i32
    return %c0_i32, %c0_i32_0, %c0_i32_1 : i32, i32, i32
  }
  func.func @transform_5(%arg0: i32) -> (i32, i32, i32) {
    %c0_i32 = arith.constant 0 : i32
    %c0_i32_0 = arith.constant 0 : i32
    %c0_i32_1 = arith.constant 0 : i32
    %c0_i32_2 = arith.constant 0 : i32
    return %c0_i32, %c0_i32_0, %c0_i32_1 : i32, i32, i32
  }
  func.func @transform_6(%arg0: i32) -> (i32, i32, i32) {
    %c0_i32 = arith.constant 0 : i32
    %c0_i32_0 = arith.constant 0 : i32
    %c0_i32_1 = arith.constant 0 : i32
    %c0_i32_2 = arith.constant 0 : i32
    return %c0_i32, %c0_i32_0, %c0_i32_1 : i32, i32, i32
  }
  func.func @transform_7(%arg0: i32) -> (i32, i32, i32) {
    %c0_i32 = arith.constant 0 : i32
    %c0_i32_0 = arith.constant 0 : i32
    %c0_i32_1 = arith.constant 0 : i32
    %c0_i32_2 = arith.constant 0 : i32
    return %c0_i32, %c0_i32_0, %c0_i32_1 : i32, i32, i32
  }
  func.func @transform_8(%arg0: i32) -> (i32, i32) {
    %c0_i32 = arith.constant 0 : i32
    %c0_i32_0 = arith.constant 0 : i32
    %c0_i32_1 = arith.constant 0 : i32
    return %c0_i32, %c0_i32_0 : i32, i32
  }
  func.func @transform_9(%arg0: i32) -> (i32, i32) {
    %c0_i32 = arith.constant 0 : i32
    %c0_i32_0 = arith.constant 0 : i32
    %c0_i32_1 = arith.constant 0 : i32
    return %c0_i32, %c0_i32_0 : i32, i32
  }
  func.func @transform_10(%arg0: i32) -> (i32, i32) {
    %c0_i32 = arith.constant 0 : i32
    %c0_i32_0 = arith.constant 0 : i32
    %c0_i32_1 = arith.constant 0 : i32
    return %c0_i32, %c0_i32_0 : i32, i32
  }
  func.func @transform_11(%arg0: i32) -> (i32, i32) {
    %c0_i32 = arith.constant 0 : i32
    %c0_i32_0 = arith.constant 0 : i32
    %c0_i32_1 = arith.constant 0 : i32
    return %c0_i32, %c0_i32_0 : i32, i32
  }
  func.func @transform_12(%arg0: i32) -> (i32, i32) {
    %c0_i32 = arith.constant 0 : i32
    %c0_i32_0 = arith.constant 0 : i32
    %c0_i32_1 = arith.constant 0 : i32
    return %c0_i32, %c0_i32_0 : i32, i32
  }
  func.func @transform_13(%arg0: i32) -> (i32, i32) {
    %c0_i32 = arith.constant 0 : i32
    %c0_i32_0 = arith.constant 0 : i32
    return %arg0, %c0_i32 : i32, i32
  }
}

</mosaic_0001>

<llo_original>
// kernel: forward_pallas.1
$region0: #{forward_pallas.1}
  #allocation0 [shape = 'u32[]', space=smem, size = 0x4, offset = 0x4, fixed_abs, tag = 'smem constant byte address 0x4 - core index']
  #allocation1 [shape = 'u32[144,128]{1,0:T(1,128)}', space=vmem, size = 0x12000, scoped, tag = 'internal scratch']
  %s0 = inlined_call_operand.vmem [shape: f32[240,128], index: 0, kind: input, shape index: {}]
  %s1 = inlined_call_operand.vmem [shape: bf16[3,128,240], index: 1, kind: input, shape index: {}]
  %s2 = inlined_call_operand.hbm [shape: bf16[3,64,128], index: 2, kind: input, shape index: {}]
  %s3 = inlined_call_operand.hbm [shape: bf16[3,48,64], index: 3, kind: input, shape index: {}]
  %s4 = inlined_call_operand.hbm [shape: bf16[3,32,48], index: 4, kind: input, shape index: {}]
  %s5 = inlined_call_operand.hbm [shape: bf16[4,128,384], index: 5, kind: input, shape index: {}]
  %s6 = inlined_call_operand.hbm [shape: f32[4,1,128], index: 6, kind: input, shape index: {}]
  %s7 = inlined_call_operand.hbm [shape: bf16[10,32,2048], index: 7, kind: input, shape index: {}]
  %s8 = inlined_call_operand.hbm [shape: f32[1,2048], index: 8, kind: input, shape index: {}]
  %s9 = inlined_call_operand.hbm [shape: bf16[2048,512], index: 9, kind: input, shape index: {}]
  %s10 = inlined_call_operand.hbm [shape: f32[1,512], index: 10, kind: input, shape index: {}]
  %s11 = inlined_call_operand.hbm [shape: bf16[512,128], index: 11, kind: input, shape index: {}]
  %s12 = inlined_call_operand.hbm [shape: f32[1,128], index: 12, kind: input, shape index: {}]
  %s13 = inlined_call_operand.hbm [shape: f32[2,128], index: 13, kind: output, shape index: {}]
  %s14 = sld [smem:[#allocation0]]
  $region106: #{forward_pallas.1} parent=0
    _
  %s16 = ssub.s32 1, %s14
  %s17 = scalar_select 0, %s16, %s14
  $region1: #{forward_pallas.1} parent=0
    #allocation2 [shape = 'u8[49152]{0}', space=vmem, size = 0xc000, scoped, tag = 'input window, operand 2, single buffered']
    #allocation3 [shape = 's32[1]{0}', space=sflag, size = 0x4, scoped, tag = 'scoped memory for forward_pallas.1']
    #allocation4 [shape = 's32[1]{0}', space=sflag, size = 0x4, scoped, tag = 'scoped memory for forward_pallas.1']
    #allocation5 [shape = 'u8[36864]{0}', space=vmem, size = 0x9000, scoped, tag = 'input window, operand 3, single buffered']
    #allocation6 [shape = 's32[1]{0}', space=sflag, size = 0x4, scoped, tag = 'scoped memory for forward_pallas.1']
    #allocation7 [shape = 'u8[24576]{0}', space=vmem, size = 0x6000, scoped, tag = 'input window, operand 4, single buffered']
    #allocation8 [shape = 'u8[393216]{0}', space=vmem, size = 0x60000, scoped, tag = 'input window, operand 5, single buffered']
    #allocation9 [shape = 's32[1]{0}', space=sflag, size = 0x4, scoped, tag = 'scoped memory for forward_pallas.1']
    #allocation10 [shape = 'u8[2048]{0}', space=vmem, size = 0x800, scoped, tag = 'input window, operand 6, single buffered']
    #allocation11 [shape = 'u8[1310720]{0}', space=vmem, size = 0x140000, scoped, tag = 'input window, operand 7, single buffered']
    #allocation12 [shape = 's32[1]{0}', space=sflag, size = 0x4, scoped, tag = 'scoped memory for forward_pallas.1']
    #allocation13 [shape = 'u8[8192]{0}', space=vmem, size = 0x2000, scoped, tag = 'input window, operand 8, single buffered']
    #allocation14 [shape = 'u8[2097152]{0}', space=vmem, size = 0x200000, scoped, tag = 'input window, operand 9, single buffered']
    #allocation15 [shape = 's32[1]{0}', space=sflag, size = 0x4, scoped, tag = 'scoped memory for forward_pallas.1']
    #allocation16 [shape = 'u8[2048]{0}', space=vmem, size = 0x800, scoped, tag = 'input window, operand 10, single buffered']
    #allocation17 [shape = 'u8[131072]{0}', space=vmem, size = 0x20000, scoped, tag = 'input window, operand 11, single buffered']
    #allocation18 [shape = 's32[1]{0}', space=sflag, size = 0x4, scoped, tag = 'scoped memory for forward_pallas.1']
    #allocation19 [shape = 'u8[512]{0}', space=vmem, size = 0x400, scoped, tag = 'input window, operand 12, single buffered']
    #allocation20 [shape = 'u8[1024]{0}', space=vmem, size = 0x400, scoped, tag = 'output window, operand 0, single buffered']
    %18 = vsyncpa [#allocation3], 0
    %19 = vsyncpa [#allocation6], 0
    %20 = vsyncpa [#allocation9], 0
    %21 = vsyncpa [#allocation12], 0
    %22 = vsyncpa [#allocation15], 0
    %23 = vsyncpa [#allocation18], 0
    %24 = vsyncpa [#allocation4], 0
    // Predicated region
    $region2: #{forward_pallas.1} parent=1 // pred_check
      _
    $region3: #{forward_pallas.1} parent=1 // pred_check_branch
      %26 = sbr.rel (0) target = $region5
    $region4: #{forward_pallas.1} parent=1 // pred_region
      _
    $region5: #{forward_pallas.1} parent=1 // pred_fallthru
      _
    // Predicated region
    $region6: #{forward_pallas.1} parent=1 // pred_check
      _
    $region7: #{forward_pallas.1} parent=1 // pred_check_branch
      %28 = sbr.rel (0) target = $region9
    $region8: #{forward_pallas.1} parent=1 // pred_region
      _
    $region9: #{forward_pallas.1} parent=1 // pred_fallthru
      _
    // Predicated region
    $region10: #{forward_pallas.1} parent=1 // pred_check
      _
    $region11: #{forward_pallas.1} parent=1 // pred_check_branch
      %30 = sbr.rel (0) target = $region13
    $region12: #{forward_pallas.1} parent=1 // pred_region
      %s32 = ssub.s32 1536, 1536
      %33 = vsyncadd [#allocation3], %s32
      %s34 = sshll.u32 [#allocation2], 4
      %s35 = int_to_ptr.vmem [resolvable:$true] %s34
      %40 = dma.hbm_to_vmem [thread:$0]  %s2, 1536, %s35, [#allocation3], 64, 64, 4
    $region13: #{forward_pallas.1} parent=1 // pred_fallthru
      _
    // Predicated region
    $region14: #{forward_pallas.1} parent=1 // pred_check
      _
    $region15: #{forward_pallas.1} parent=1 // pred_check_branch
      %42 = sbr.rel (0) target = $region17
    $region16: #{forward_pallas.1} parent=1 // pred_region
      %s44 = ssub.s32 1152, 1152
      %45 = vsyncadd [#allocation6], %s44
      %s46 = sshll.u32 [#allocation5], 4
      %s47 = int_to_ptr.vmem [resolvable:$true] %s46
      %52 = dma.hbm_to_vmem [thread:$0]  %s3, 1152, %s47, [#allocation6], 64, 64, 4
    $region17: #{forward_pallas.1} parent=1 // pred_fallthru
      _
    // Predicated region
    $region18: #{forward_pallas.1} parent=1 // pred_check
      _
    $region19: #{forward_pallas.1} parent=1 // pred_check_branch
      %54 = sbr.rel (0) target = $region21
    $region20: #{forward_pallas.1} parent=1 // pred_region
      %s56 = ssub.s32 768, 768
      %57 = vsyncadd [#allocation6], %s56
      %s58 = sshll.u32 [#allocation7], 4
      %s59 = int_to_ptr.vmem [resolvable:$true] %s58
      %64 = dma.hbm_to_vmem [thread:$0]  %s4, 768, %s59, [#allocation6], 64, 64, 4
    $region21: #{forward_pallas.1} parent=1 // pred_fallthru
      _
    // Predicated region
    $region22: #{forward_pallas.1} parent=1 // pred_check
      _
    $region23: #{forward_pallas.1} parent=1 // pred_check_branch
      %66 = sbr.rel (0) target = $region25
    $region24: #{forward_pallas.1} parent=1 // pred_region
      %s68 = ssub.s32 12288, 12288
      %69 = vsyncadd [#allocation9], %s68
      %s70 = sshll.u32 [#allocation8], 4
      %s71 = int_to_ptr.vmem [resolvable:$true] %s70
      %76 = dma.hbm_to_vmem [thread:$0]  %s5, 12288, %s71, [#allocation9], 192, 192, 12
    $region25: #{forward_pallas.1} parent=1 // pred_fallthru
      _
    // Predicated region
    $region26: #{forward_pallas.1} parent=1 // pred_check
      _
    $region27: #{forward_pallas.1} parent=1 // pred_check_branch
      %78 = sbr.rel (0) target = $region29
    $region28: #{forward_pallas.1} parent=1 // pred_region
      %s80 = ssub.s32 64, 64
      %81 = vsyncadd [#allocation9], %s80
      %s82 = sshll.u32 [#allocation10], 4
      %s83 = int_to_ptr.vmem [resolvable:$true] %s82
      %88 = dma.hbm_to_vmem [thread:$0]  %s6, 64, %s83, [#allocation9], 16, 16, 1
    $region29: #{forward_pallas.1} parent=1 // pred_fallthru
      _
    // Predicated region
    $region30: #{forward_pallas.1} parent=1 // pred_check
      _
    $region31: #{forward_pallas.1} parent=1 // pred_check_branch
      %90 = sbr.rel (0) target = $region33
    $region32: #{forward_pallas.1} parent=1 // pred_region
      %s92 = ssub.s32 40960, 40960
      %93 = vsyncadd [#allocation12], %s92
      %s94 = sshll.u32 [#allocation11], 4
      %s95 = int_to_ptr.vmem [resolvable:$true] %s94
      %100 = dma.hbm_to_vmem [thread:$0]  %s7, 40960, %s95, [#allocation12], 1024, 1024, 64
    $region33: #{forward_pallas.1} parent=1 // pred_fallthru
      _
    // Predicated region
    $region34: #{forward_pallas.1} parent=1 // pred_check
      _
    $region35: #{forward_pallas.1} parent=1 // pred_check_branch
      %102 = sbr.rel (0) target = $region37
    $region36: #{forward_pallas.1} parent=1 // pred_region
      %s104 = ssub.s32 256, 256
      %105 = vsyncadd [#allocation12], %s104
      %s107 = sshll.u32 [#allocation13], 4
      %s108 = int_to_ptr.vmem [resolvable:$true] %s107
      %110 = dma.hbm_to_vmem [thread:$0]  %s8, 256, %s108, [#allocation12]
    $region37: #{forward_pallas.1} parent=1 // pred_fallthru
      _
    // Predicated region
    $region38: #{forward_pallas.1} parent=1 // pred_check
      _
    $region39: #{forward_pallas.1} parent=1 // pred_check_branch
      %112 = sbr.rel (0) target = $region41
    $region40: #{forward_pallas.1} parent=1 // pred_region
      %s114 = ssub.s32 65536, 65536
      %115 = vsyncadd [#allocation15], %s114
      %s116 = sshll.u32 [#allocation14], 4
      %s117 = int_to_ptr.vmem [resolvable:$true] %s116
      %122 = dma.hbm_to_vmem [thread:$0]  %s9, 65536, %s117, [#allocation15], 256, 256, 16
    $region41: #{forward_pallas.1} parent=1 // pred_fallthru
      _
    // Predicated region
    $region42: #{forward_pallas.1} parent=1 // pred_check
      _
    $region43: #{forward_pallas.1} parent=1 // pred_check_branch
      %124 = sbr.rel (0) target = $region45
    $region44: #{forward_pallas.1} parent=1 // pred_region
      %s126 = ssub.s32 64, 64
      %127 = vsyncadd [#allocation15], %s126
      %s129 = sshll.u32 [#allocation16], 4
      %s130 = int_to_ptr.vmem [resolvable:$true] %s129
      %132 = dma.hbm_to_vmem [thread:$0]  %s10, 64, %s130, [#allocation15]
    $region45: #{forward_pallas.1} parent=1 // pred_fallthru
      _
    // Predicated region
    $region46: #{forward_pallas.1} parent=1 // pred_check
      _
    $region47: #{forward_pallas.1} parent=1 // pred_check_branch
      %134 = sbr.rel (0) target = $region49
    $region48: #{forward_pallas.1} parent=1 // pred_region
      %s136 = ssub.s32 4096, 4096
      %137 = vsyncadd [#allocation18], %s136
      %s138 = sshll.u32 [#allocation17], 4
      %s139 = int_to_ptr.vmem [resolvable:$true] %s138
      %144 = dma.hbm_to_vmem [thread:$0]  %s11, 4096, %s139, [#allocation18], 64, 64, 4
    $region49: #{forward_pallas.1} parent=1 // pred_fallthru
      _
    // Predicated region
    $region50: #{forward_pallas.1} parent=1 // pred_check
      _
    $region51: #{forward_pallas.1} parent=1 // pred_check_branch
      %146 = sbr.rel (0) target = $region53
    $region52: #{forward_pallas.1} parent=1 // pred_region
      %s148 = ssub.s32 16, 16
      %149 = vsyncadd [#allocation18], %s148
      %s151 = sshll.u32 [#allocation19], 4
      %s152 = int_to_ptr.vmem [resolvable:$true] %s151
      %154 = dma.hbm_to_vmem [thread:$0]  %s12, 16, %s152, [#allocation18]
    $region53: #{forward_pallas.1} parent=1 // pred_fallthru
      _
    // Predicated region
    $region54: #{forward_pallas.1} parent=1 // pred_check
      _
    $region55: #{forward_pallas.1} parent=1 // pred_check_branch
      %156 = sbr.rel (0) target = $region57
    $region56: #{forward_pallas.1} parent=1 // pred_region
      %157 = dma.done [#allocation3], 1536
    $region57: #{forward_pallas.1} parent=1 // pred_fallthru
      _
    // Predicated region
    $region58: #{forward_pallas.1} parent=1 // pred_check
      _
    $region59: #{forward_pallas.1} parent=1 // pred_check_branch
      %159 = sbr.rel (0) target = $region61
    $region60: #{forward_pallas.1} parent=1 // pred_region
      %160 = dma.done [#allocation6], 1152
    $region61: #{forward_pallas.1} parent=1 // pred_fallthru
      _
    // Predicated region
    $region62: #{forward_pallas.1} parent=1 // pred_check
      _
    $region63: #{forward_pallas.1} parent=1 // pred_check_branch
      %162 = sbr.rel (0) target = $region65
    $region64: #{forward_pallas.1} parent=1 // pred_region
      %163 = dma.done [#allocation6], 768
    $region65: #{forward_pallas.1} parent=1 // pred_fallthru
      _
    // Predicated region
    $region66: #{forward_pallas.1} parent=1 // pred_check
      _
    $region67: #{forward_pallas.1} parent=1 // pred_check_branch
      %165 = sbr.rel (0) target = $region69
    $region68: #{forward_pallas.1} parent=1 // pred_region
      %166 = dma.done [#allocation9], 12288
    $region69: #{forward_pallas.1} parent=1 // pred_fallthru
      _
    // Predicated region
    $region70: #{forward_pallas.1} parent=1 // pred_check
      _
    $region71: #{forward_pallas.1} parent=1 // pred_check_branch
      %168 = sbr.rel (0) target = $region73
    $region72: #{forward_pallas.1} parent=1 // pred_region
      %169 = dma.done [#allocation9], 64
    $region73: #{forward_pallas.1} parent=1 // pred_fallthru
      _
    // Predicated region
    $region74: #{forward_pallas.1} parent=1 // pred_check
      _
    $region75: #{forward_pallas.1} parent=1 // pred_check_branch
      %171 = sbr.rel (0) target = $region77
    $region76: #{forward_pallas.1} parent=1 // pred_region
      %172 = dma.done [#allocation12], 40960
    $region77: #{forward_pallas.1} parent=1 // pred_fallthru
      _
    // Predicated region
    $region78: #{forward_pallas.1} parent=1 // pred_check
      _
    $region79: #{forward_pallas.1} parent=1 // pred_check_branch
      %174 = sbr.rel (0) target = $region81
    $region80: #{forward_pallas.1} parent=1 // pred_region
      %175 = dma.done [#allocation12], 256
    $region81: #{forward_pallas.1} parent=1 // pred_fallthru
      _
    // Predicated region
    $region82: #{forward_pallas.1} parent=1 // pred_check
      _
    $region83: #{forward_pallas.1} parent=1 // pred_check_branch
      %177 = sbr.rel (0) target = $region85
    $region84: #{forward_pallas.1} parent=1 // pred_region
      %178 = dma.done [#allocation15], 65536
    $region85: #{forward_pallas.1} parent=1 // pred_fallthru
      _
    // Predicated region
    $region86: #{forward_pallas.1} parent=1 // pred_check
      _
    $region87: #{forward_pallas.1} parent=1 // pred_check_branch
      %180 = sbr.rel (0) target = $region89
    $region88: #{forward_pallas.1} parent=1 // pred_region
      %181 = dma.done [#allocation15], 64
    $region89: #{forward_pallas.1} parent=1 // pred_fallthru
      _
    // Predicated region
    $region90: #{forward_pallas.1} parent=1 // pred_check
      _
    $region91: #{forward_pallas.1} parent=1 // pred_check_branch
      %183 = sbr.rel (0) target = $region93
    $region92: #{forward_pallas.1} parent=1 // pred_region
      %184 = dma.done [#allocation18], 4096
    $region93: #{forward_pallas.1} parent=1 // pred_fallthru
      _
    // Predicated region
    $region94: #{forward_pallas.1} parent=1 // pred_check
      _
    $region95: #{forward_pallas.1} parent=1 // pred_check_branch
      %186 = sbr.rel (0) target = $region97
    $region96: #{forward_pallas.1} parent=1 // pred_region
      %187 = dma.done [#allocation18], 16
    $region97: #{forward_pallas.1} parent=1 // pred_fallthru
      _
    %v189 = vld [vmem:[%s0] sm:$0xff]
    %v190 = vld [vmem:[%s0 + $0x8] sm:$0xff]
    %v191 = vld [vmem:[%s0 + $0x10] sm:$0xff]
    %v192 = vld [vmem:[%s0 + $0x18] sm:$0xff]
    %v193 = vld [vmem:[%s0 + $0x20] sm:$0xff]
    %v194 = vld [vmem:[%s0 + $0x28] sm:$0xff]
    %v195 = vld [vmem:[%s0 + $0x30] sm:$0xff]
    %v196 = vld [vmem:[%s0 + $0x38] sm:$0xff]
    %v197 = vld [vmem:[%s0 + $0x40] sm:$0xff]
    %v198 = vld [vmem:[%s0 + $0x48] sm:$0xff]
    %v199 = vld [vmem:[%s0 + $0x50] sm:$0xff]
    %v200 = vld [vmem:[%s0 + $0x58] sm:$0xff]
    %v201 = vld [vmem:[%s0 + $0x60] sm:$0xff]
    %v202 = vld [vmem:[%s0 + $0x68] sm:$0xff]
    %v203 = vld [vmem:[%s0 + $0x70] sm:$0xff]
    %v204 = vld [vmem:[%s0 + $0x78] sm:$0xff]
    %v205 = vld [vmem:[%s0 + $0x80] sm:$0xff]
    %v206 = vld [vmem:[%s0 + $0x88] sm:$0xff]
    %v207 = vld [vmem:[%s0 + $0x90] sm:$0xff]
    %v208 = vld [vmem:[%s0 + $0x98] sm:$0xff]
    %v209 = vld [vmem:[%s0 + $0xa0] sm:$0xff]
    %v210 = vld [vmem:[%s0 + $0xa8] sm:$0xff]
    %v211 = vld [vmem:[%s0 + $0xb0] sm:$0xff]
    %v212 = vld [vmem:[%s0 + $0xb8] sm:$0xff]
    %v213 = vld [vmem:[%s0 + $0xc0] sm:$0xff]
    %v214 = vld [vmem:[%s0 + $0xc8] sm:$0xff]
    %v215 = vld [vmem:[%s0 + $0xd0] sm:$0xff]
    %v216 = vld [vmem:[%s0 + $0xd8] sm:$0xff]
    %v217 = vld [vmem:[%s0 + $0xe0] sm:$0xff]
    %v218 = vld [vmem:[%s0 + $0xe8] sm:$0xff]
    %v219 = vpack.c.bf16 %v190, %v189
    %v220 = vpack.c.bf16 %v192, %v191
    %v221 = vpack.c.bf16 %v194, %v193
    %v222 = vpack.c.bf16 %v196, %v195
    %v223 = vpack.c.bf16 %v198, %v197
    %v224 = vpack.c.bf16 %v200, %v199
    %v225 = vpack.c.bf16 %v202, %v201
    %v226 = vpack.c.bf16 %v204, %v203
    %v227 = vpack.c.bf16 %v206, %v205
    %v228 = vpack.c.bf16 %v208, %v207
    %v229 = vpack.c.bf16 %v210, %v209
    %v230 = vpack.c.bf16 %v212, %v211
    %v231 = vpack.c.bf16 %v214, %v213
    %v232 = vpack.c.bf16 %v216, %v215
    %v233 = vpack.c.bf16 %v218, %v217
    %v234 = vld [vmem:[#allocation8] sm:$0xff]
    %v235 = vld [vmem:[#allocation8 + $0x8] sm:$0xf]
    %v236 = vld [vmem:[#allocation8 + $0xc] sm:$0xff]
    %v237 = vld [vmem:[#allocation8 + $0x14] sm:$0xf]
    %v238 = vld [vmem:[#allocation8 + $0x18] sm:$0xff]
    %v239 = vld [vmem:[#allocation8 + $0x20] sm:$0xf]
    %v240 = vld [vmem:[#allocation8 + $0x24] sm:$0xff]
    %v241 = vld [vmem:[#allocation8 + $0x2c] sm:$0xf]
    %v242 = vld [vmem:[#allocation8 + $0x30] sm:$0xff]
    %v243 = vld [vmem:[#allocation8 + $0x38] sm:$0xf]
    %v244 = vld [vmem:[#allocation8 + $0x3c] sm:$0xff]
    %v245 = vld [vmem:[#allocation8 + $0x44] sm:$0xf]
    %v246 = vld [vmem:[#allocation8 + $0x48] sm:$0xff]
    %v247 = vld [vmem:[#allocation8 + $0x50] sm:$0xf]
    %v248 = vld [vmem:[#allocation8 + $0x54] sm:$0xff]
    %v249 = vld [vmem:[#allocation8 + $0x5c] sm:$0xf]
    %v250 = vld [vmem:[#allocation8 + $0x60] sm:$0xff]
    %v251 = vld [vmem:[#allocation8 + $0x68] sm:$0xf]
    %v252 = vld [vmem:[#allocation8 + $0x6c] sm:$0xff]
    %v253 = vld [vmem:[#allocation8 + $0x74] sm:$0xf]
    %v254 = vld [vmem:[#allocation8 + $0x78] sm:$0xff]
    %v255 = vld [vmem:[#allocation8 + $0x80] sm:$0xf]
    %v256 = vld [vmem:[#allocation8 + $0x84] sm:$0xff]
    %v257 = vld [vmem:[#allocation8 + $0x8c] sm:$0xf]
    %v258 = vld [vmem:[#allocation8 + $0x90] sm:$0xff]
    %v259 = vld [vmem:[#allocation8 + $0x98] sm:$0xf]
    %v260 = vld [vmem:[#allocation8 + $0x9c] sm:$0xff]
    %v261 = vld [vmem:[#allocation8 + $0xa4] sm:$0xf]
    %v262 = vld [vmem:[#allocation8 + $0xa8] sm:$0xff]
    %v263 = vld [vmem:[#allocation8 + $0xb0] sm:$0xf]
    %v264 = vld [vmem:[#allocation8 + $0xb4] sm:$0xff]
    %v265 = vld [vmem:[#allocation8 + $0xbc] sm:$0xf]
    %v298 = vunpack.c.l.b16 %v234
    %v299 = vunpack.c.h.b16 %v234
    %v300 = vunpack.c.l.b16 %v235
    %v301 = vunpack.c.l.b16 %v236
    %v302 = vunpack.c.h.b16 %v236
    %v303 = vunpack.c.l.b16 %v237
    %v304 = vunpack.c.l.b16 %v238
    %v305 = vunpack.c.h.b16 %v238
    %v306 = vunpack.c.l.b16 %v239
    %v307 = vunpack.c.l.b16 %v240
    %v308 = vunpack.c.h.b16 %v240
    %v309 = vunpack.c.l.b16 %v241
    %v310 = vunpack.c.l.b16 %v242
    %v311 = vunpack.c.h.b16 %v242
    %v312 = vunpack.c.l.b16 %v243
    %v313 = vunpack.c.l.b16 %v244
    %v314 = vunpack.c.h.b16 %v244
    %v315 = vunpack.c.l.b16 %v245
    %v316 = vunpack.c.l.b16 %v246
    %v317 = vunpack.c.h.b16 %v246
    %v318 = vunpack.c.l.b16 %v247
    %v319 = vunpack.c.l.b16 %v248
    %v320 = vunpack.c.h.b16 %v248
    %v321 = vunpack.c.l.b16 %v249
    %v322 = vunpack.c.l.b16 %v250
    %v323 = vunpack.c.h.b16 %v250
    %v324 = vunpack.c.l.b16 %v251
    %v325 = vunpack.c.l.b16 %v252
    %v326 = vunpack.c.h.b16 %v252
    %v327 = vunpack.c.l.b16 %v253
    %v328 = vunpack.c.l.b16 %v254
    %v329 = vunpack.c.h.b16 %v254
    %v330 = vunpack.c.l.b16 %v255
    %v331 = vunpack.c.l.b16 %v256
    %v332 = vunpack.c.h.b16 %v256
    %v333 = vunpack.c.l.b16 %v257
    %v334 = vunpack.c.l.b16 %v258
    %v335 = vunpack.c.h.b16 %v258
    %v336 = vunpack.c.l.b16 %v259
    %v337 = vunpack.c.l.b16 %v260
    %v338 = vunpack.c.h.b16 %v260
    %v339 = vunpack.c.l.b16 %v261
    %v340 = vunpack.c.l.b16 %v262
    %v341 = vunpack.c.h.b16 %v262
    %v342 = vunpack.c.l.b16 %v263
    %v343 = vunpack.c.l.b16 %v264
    %v344 = vunpack.c.h.b16 %v264
    %v345 = vunpack.c.l.b16 %v265
    %v346 = vpack.c.b16 %v301, %v298
    %v347 = vpack.c.b16 %v302, %v299
    %v348 = vpack.c.b16 %v303, %v300
    %v349 = vpack.c.b16 %v307, %v304
    %v350 = vpack.c.b16 %v308, %v305
    %v351 = vpack.c.b16 %v309, %v306
    %v352 = vpack.c.b16 %v313, %v310
    %v353 = vpack.c.b16 %v314, %v311
    %v354 = vpack.c.b16 %v315, %v312
    %v355 = vpack.c.b16 %v319, %v316
    %v356 = vpack.c.b16 %v320, %v317
    %v357 = vpack.c.b16 %v321, %v318
    %v358 = vpack.c.b16 %v325, %v322
    %v359 = vpack.c.b16 %v326, %v323
    %v360 = vpack.c.b16 %v327, %v324
    %v361 = vpack.c.b16 %v331, %v328
    %v362 = vpack.c.b16 %v332, %v329
    %v363 = vpack.c.b16 %v333, %v330
    %v364 = vpack.c.b16 %v337, %v334
    %v365 = vpack.c.b16 %v338, %v335
    %v366 = vpack.c.b16 %v339, %v336
    %v367 = vpack.c.b16 %v343, %v340
    %v368 = vpack.c.b16 %v344, %v341
    %v369 = vpack.c.b16 %v345, %v342
    %394 = vmatprep.subr.bf16.mxu0 %v347
    %395 = vmatpush1.bf16.msra.mxu0 %v346
    %396 = vmatprep.subr.bf16.mxu0 %v350
    %397 = vmatpush1.bf16.msra.mxu0 %v349
    %398 = vmatprep.subr.bf16.mxu0 %v353
    %399 = vmatpush1.bf16.msra.mxu0 %v352
    %400 = vmatprep.subr.bf16.mxu0 %v356
    %401 = vmatpush1.bf16.msra.mxu0 %v355
    %402 = vmatprep.subr.bf16.mxu0 %v359
    %403 = vmatpush1.bf16.msra.mxu0 %v358
    %404 = vmatprep.subr.bf16.mxu0 %v362
    %405 = vmatpush1.bf16.msra.mxu0 %v361
    %406 = vmatprep.subr.bf16.mxu0 %v365
    %407 = vmatpush1.bf16.msra.mxu0 %v364
    %408 = vmatprep.subr.bf16.mxu0 %v368
    %409 = vmatpush1.bf16.msra.mxu0 %v367
    %410 = vmatprep.subr.bf16.mxu0 0
    %411 = vmatpush1.bf16.msra.mxu0 0
    %412 = vmatprep.subr.bf16.mxu0 0
    %413 = vmatpush1.bf16.msra.mxu0 0
    %414 = vmatprep.subr.bf16.mxu0 0
    %415 = vmatpush1.bf16.msra.mxu0 0
    %416 = vmatprep.subr.bf16.mxu0 0
    %417 = vmatpush1.bf16.msra.mxu0 0
    %418 = vmatprep.subr.bf16.mxu0 0
    %419 = vmatpush1.bf16.msra.mxu0 0
    %420 = vmatprep.subr.bf16.mxu0 0
    %421 = vmatpush1.bf16.msra.mxu0 0
    %422 = vmatprep.subr.bf16.mxu0 0
    %423 = vmatpush1.bf16.msra.mxu0 0
    %424 = vmatprep.subr.bf16.mxu0 0
    %425 = vmatpush1.bf16.msra.mxu0 0
    %426 = vmatprep.mubr.bf16.mxu0 0
    %427 = vmatmul.mubr.bf16.gmra.mrb[0].mxu0 %v219
    %v428 = vpop.f32.mrb[0].mxu0
    %v429 = vadd.f32 0.0, %v428
    %v430 = vpop.f32.mrb[0].mxu0
    %v431 = vadd.f32 0.0, %v430
    %v432 = vpop.f32.mrb[0].mxu0
    %v433 = vadd.f32 0.0, %v432
    %v434 = vpop.f32.mrb[0].mxu0
    %v435 = vadd.f32 0.0, %v434
    %436 = vmatprep.mubr.bf16.mxu0 0
    %437 = vmatmul.mubr.bf16.gmra.mrb[0].mxu0 %v220
    %v438 = vpop.f32.mrb[0].mxu0
    %v439 = vadd.f32 0.0, %v438
    %v440 = vpop.f32.mrb[0].mxu0
    %v441 = vadd.f32 0.0, %v440
    %v442 = vpop.f32.mrb[0].mxu0
    %v443 = vadd.f32 0.0, %v442
    %v444 = vpop.f32.mrb[0].mxu0
    %v445 = vadd.f32 0.0, %v444
    %446 = vmatprep.mubr.bf16.mxu0 0
    %447 = vmatmul.mubr.bf16.gmra.mrb[0].mxu0 %v221
    %v448 = vpop.f32.mrb[0].mxu0
    %v449 = vadd.f32 0.0, %v448
    %v450 = vpop.f32.mrb[0].mxu0
    %v451 = vadd.f32 0.0, %v450
    %v452 = vpop.f32.mrb[0].mxu0
    %v453 = vadd.f32 0.0, %v452
    %v454 = vpop.f32.mrb[0].mxu0
    %v455 = vadd.f32 0.0, %v454
    %456 = vmatprep.mubr.bf16.mxu0 0
    %457 = vmatmul.mubr.bf16.gmra.mrb[0].mxu0 %v222
    %v458 = vpop.f32.mrb[0].mxu0
    %v459 = vadd.f32 0.0, %v458
    %v460 = vpop.f32.mrb[0].mxu0
    %v461 = vadd.f32 0.0, %v460
    %v462 = vpop.f32.mrb[0].mxu0
    %v463 = vadd.f32 0.0, %v462
    %v464 = vpop.f32.mrb[0].mxu0
    %v465 = vadd.f32 0.0, %v464
    %466 = vmatprep.mubr.bf16.mxu0 0
    %467 = vmatmul.mubr.bf16.gmra.mrb[0].mxu0 %v223
    %v468 = vpop.f32.mrb[0].mxu0
    %v469 = vadd.f32 0.0, %v468
    %v470 = vpop.f32.mrb[0].mxu0
    %v471 = vadd.f32 0.0, %v470
    %v472 = vpop.f32.mrb[0].mxu0
    %v473 = vadd.f32 0.0, %v472
    %v474 = vpop.f32.mrb[0].mxu0
    %v475 = vadd.f32 0.0, %v474
    %476 = vmatprep.mubr.bf16.mxu0 0
    %477 = vmatmul.mubr.bf16.gmra.mrb[0].mxu0 %v224
    %v478 = vpop.f32.mrb[0].mxu0
    %v479 = vadd.f32 0.0, %v478
    %v480 = vpop.f32.mrb[0].mxu0
    %v481 = vadd.f32 0.0, %v480
    %v482 = vpop.f32.mrb[0].mxu0
    %v483 = vadd.f32 0.0, %v482
    %v484 = vpop.f32.mrb[0].mxu0
    %v485 = vadd.f32 0.0, %v484
    %486 = vmatprep.mubr.bf16.mxu0 0
    %487 = vmatmul.mubr.bf16.gmra.mrb[0].mxu0 %v225
    %v488 = vpop.f32.mrb[0].mxu0
    %v489 = vadd.f32 0.0, %v488
    %v490 = vpop.f32.mrb[0].mxu0
    %v491 = vadd.f32 0.0, %v490
    %v492 = vpop.f32.mrb[0].mxu0
    %v493 = vadd.f32 0.0, %v492
    %v494 = vpop.f32.mrb[0].mxu0
    %v495 = vadd.f32 0.0, %v494
    %496 = vmatprep.mubr.bf16.mxu0 0
    %497 = vmatmul.mubr.bf16.gmra.mrb[0].mxu0 %v226
    %v498 = vpop.f32.mrb[0].mxu0
    %v499 = vadd.f32 0.0, %v498
    %v500 = vpop.f32.mrb[0].mxu0
    %v501 = vadd.f32 0.0, %v500
    %v502 = vpop.f32.mrb[0].mxu0
    %v503 = vadd.f32 0.0, %v502
    %v504 = vpop.f32.mrb[0].mxu0
    %v505 = vadd.f32 0.0, %v504
    %506 = vmatprep.mubr.bf16.mxu0 0
    %507 = vmatmul.mubr.bf16.gmra.mrb[0].mxu0 %v227
    %v508 = vpop.f32.mrb[0].mxu0
    %v509 = vadd.f32 0.0, %v508
    %v510 = vpop.f32.mrb[0].mxu0
    %v511 = vadd.f32 0.0, %v510
    %v512 = vpop.f32.mrb[0].mxu0
    %v513 = vadd.f32 0.0, %v512
    %v514 = vpop.f32.mrb[0].mxu0
    %v515 = vadd.f32 0.0, %v514
    %516 = vmatprep.mubr.bf16.mxu0 0
    %517 = vmatmul.mubr.bf16.gmra.mrb[0].mxu0 %v228
    %v518 = vpop.f32.mrb[0].mxu0
    %v519 = vadd.f32 0.0, %v518
    %v520 = vpop.f32.mrb[0].mxu0
    %v521 = vadd.f32 0.0, %v520
    %v522 = vpop.f32.mrb[0].mxu0
    %v523 = vadd.f32 0.0, %v522
    %v524 = vpop.f32.mrb[0].mxu0
    %v525 = vadd.f32 0.0, %v524
    %526 = vmatprep.mubr.bf16.mxu0 0
    %527 = vmatmul.mubr.bf16.gmra.mrb[0].mxu0 %v229
    %v528 = vpop.f32.mrb[0].mxu0
    %v529 = vadd.f32 0.0, %v528
    %v530 = vpop.f32.mrb[0].mxu0
    %v531 = vadd.f32 0.0, %v530
    %v532 = vpop.f32.mrb[0].mxu0
    %v533 = vadd.f32 0.0, %v532
    %v534 = vpop.f32.mrb[0].mxu0
    %v535 = vadd.f32 0.0, %v534
    %536 = vmatprep.mubr.bf16.mxu0 0
    %537 = vmatmul.mubr.bf16.gmra.mrb[0].mxu0 %v230
    %v538 = vpop.f32.mrb[0].mxu0
    %v539 = vadd.f32 0.0, %v538
    %v540 = vpop.f32.mrb[0].mxu0
    %v541 = vadd.f32 0.0, %v540
    %v542 = vpop.f32.mrb[0].mxu0
    %v543 = vadd.f32 0.0, %v542
    %v544 = vpop.f32.mrb[0].mxu0
    %v545 = vadd.f32 0.0, %v544
    %546 = vmatprep.mubr.bf16.mxu0 0
    %547 = vmatmul.mubr.bf16.gmra.mrb[0].mxu0 %v231
    %v548 = vpop.f32.mrb[0].mxu0
    %v549 = vadd.f32 0.0, %v548
    %v550 = vpop.f32.mrb[0].mxu0
    %v551 = vadd.f32 0.0, %v550
    %v552 = vpop.f32.mrb[0].mxu0
    %v553 = vadd.f32 0.0, %v552
    %v554 = vpop.f32.mrb[0].mxu0
    %v555 = vadd.f32 0.0, %v554
    %556 = vmatprep.mubr.bf16.mxu0 0
    %557 = vmatmul.mubr.bf16.gmra.mrb[0].mxu0 %v232
    %v558 = vpop.f32.mrb[0].mxu0
    %v559 = vadd.f32 0.0, %v558
    %v560 = vpop.f32.mrb[0].mxu0
    %v561 = vadd.f32 0.0, %v560
    %v562 = vpop.f32.mrb[0].mxu0
    %v563 = vadd.f32 0.0, %v562
    %v564 = vpop.f32.mrb[0].mxu0
    %v565 = vadd.f32 0.0, %v564
    %566 = vmatprep.mubr.bf16.mxu0 0
    %567 = vmatmul.mubr.bf16.gmra.mrb[0].mxu0 %v233
    %v568 = vpop.f32.mrb[0].mxu0
    %v569 = vadd.f32 0.0, %v568
    %v570 = vpop.f32.mrb[0].mxu0
    %v571 = vadd.f32 0.0, %v570
    %v572 = vpop.f32.mrb[0].mxu0
    %v573 = vadd.f32 0.0, %v572
    %v574 = vpop.f32.mrb[0].mxu0
    %v575 = vadd.f32 0.0, %v574
    %576 = vdwg.mxu0
    %577 = vmatprep.subr.bf16.mxu0 0
    %578 = vmatpush1.bf16.msra.mxu0 %v348
    %579 = vmatprep.subr.bf16.mxu0 0
    %580 = vmatpush1.bf16.msra.mxu0 %v351
    %581 = vmatprep.subr.bf16.mxu0 0
    %582 = vmatpush1.bf16.msra.mxu0 %v354
    %583 = vmatprep.subr.bf16.mxu0 0
    %584 = vmatpush1.bf16.msra.mxu0 %v357
    %585 = vmatprep.subr.bf16.mxu0 0
    %586 = vmatpush1.bf16.msra.mxu0 %v360
    %587 = vmatprep.subr.bf16.mxu0 0
    %588 = vmatpush1.bf16.msra.mxu0 %v363
    %589 = vmatprep.subr.bf16.mxu0 0
    %590 = vmatpush1.bf16.msra.mxu0 %v366
    %591 = vmatprep.subr.bf16.mxu0 0
    %592 = vmatpush1.bf16.msra.mxu0 %v369
    %593 = vmatprep.subr.bf16.mxu0 0
    %594 = vmatpush1.bf16.msra.mxu0 0
    %595 = vmatprep.subr.bf16.mxu0 0
    %596 = vmatpush1.bf16.msra.mxu0 0
    %597 = vmatprep.subr.bf16.mxu0 0
    %598 = vmatpush1.bf16.msra.mxu0 0
    %599 = vmatprep.subr.bf16.mxu0 0
    %600 = vmatpush1.bf16.msra.mxu0 0
    %601 = vmatprep.subr.bf16.mxu0 0
    %602 = vmatpush1.bf16.msra.mxu0 0
    %603 = vmatprep.subr.bf16.mxu0 0
    %604 = vmatpush1.bf16.msra.mxu0 0
    %605 = vmatprep.subr.bf16.mxu0 0
    %606 = vmatpush1.bf16.msra.mxu0 0
    %607 = vmatprep.subr.bf16.mxu0 0
    %608 = vmatpush1.bf16.msra.mxu0 0
    %609 = vmatprep.mubr.bf16.mxu0 0
    %610 = vmatmul.mubr.bf16.gmra.mrb[0].mxu0 %v219
    %v611 = vpop.f32.mrb[0].mxu0
    %v612 = vadd.f32 0.0, %v611
    %v613 = vpop.f32.mrb[0].mxu0
    %v614 = vpop.f32.mrb[0].mxu0
    %v615 = vadd.f32 0.0, %v614
    %v616 = vpop.f32.mrb[0].mxu0
    %617 = vmatprep.mubr.bf16.mxu0 0
    %618 = vmatmul.mubr.bf16.gmra.mrb[0].mxu0 %v220
    %v619 = vpop.f32.mrb[0].mxu0
    %v620 = vadd.f32 0.0, %v619
    %v621 = vpop.f32.mrb[0].mxu0
    %v622 = vpop.f32.mrb[0].mxu0
    %v623 = vadd.f32 0.0, %v622
    %v624 = vpop.f32.mrb[0].mxu0
    %625 = vmatprep.mubr.bf16.mxu0 0
    %626 = vmatmul.mubr.bf16.gmra.mrb[0].mxu0 %v221
    %v627 = vpop.f32.mrb[0].mxu0
    %v628 = vadd.f32 0.0, %v627
    %v629 = vpop.f32.mrb[0].mxu0
    %v630 = vpop.f32.mrb[0].mxu0
    %v631 = vadd.f32 0.0, %v630
    %v632 = vpop.f32.mrb[0].mxu0
    %633 = vmatprep.mubr.bf16.mxu0 0
    %634 = vmatmul.mubr.bf16.gmra.mrb[0].mxu0 %v222
    %v635 = vpop.f32.mrb[0].mxu0
    %v636 = vadd.f32 0.0, %v635
    %v637 = vpop.f32.mrb[0].mxu0
    %v638 = vpop.f32.mrb[0].mxu0
    %v639 = vadd.f32 0.0, %v638
    %v640 = vpop.f32.mrb[0].mxu0
    %641 = vmatprep.mubr.bf16.mxu0 0
    %642 = vmatmul.mubr.bf16.gmra.mrb[0].mxu0 %v223
    %v643 = vpop.f32.mrb[0].mxu0
    %v644 = vadd.f32 0.0, %v643
    %v645 = vpop.f32.mrb[0].mxu0
    %v646 = vpop.f32.mrb[0].mxu0
    %v647 = vadd.f32 0.0, %v646
    %v648 = vpop.f32.mrb[0].mxu0
    %649 = vmatprep.mubr.bf16.mxu0 0
    %650 = vmatmul.mubr.bf16.gmra.mrb[0].mxu0 %v224
    %v651 = vpop.f32.mrb[0].mxu0
    %v652 = vadd.f32 0.0, %v651
    %v653 = vpop.f32.mrb[0].mxu0
    %v654 = vpop.f32.mrb[0].mxu0
    %v655 = vadd.f32 0.0, %v654
    %v656 = vpop.f32.mrb[0].mxu0
    %657 = vmatprep.mubr.bf16.mxu0 0
    %658 = vmatmul.mubr.bf16.gmra.mrb[0].mxu0 %v225
    %v659 = vpop.f32.mrb[0].mxu0
    %v660 = vadd.f32 0.0, %v659
    %v661 = vpop.f32.mrb[0].mxu0
    %v662 = vpop.f32.mrb[0].mxu0
    %v663 = vadd.f32 0.0, %v662
    %v664 = vpop.f32.mrb[0].mxu0
    %665 = vmatprep.mubr.bf16.mxu0 0
    %666 = vmatmul.mubr.bf16.gmra.mrb[0].mxu0 %v226
    %v667 = vpop.f32.mrb[0].mxu0
    %v668 = vadd.f32 0.0, %v667
    %v669 = vpop.f32.mrb[0].mxu0
    %v670 = vpop.f32.mrb[0].mxu0
    %v671 = vadd.f32 0.0, %v670
    %v672 = vpop.f32.mrb[0].mxu0
    %673 = vmatprep.mubr.bf16.mxu0 0
    %674 = vmatmul.mubr.bf16.gmra.mrb[0].mxu0 %v227
    %v675 = vpop.f32.mrb[0].mxu0
    %v676 = vadd.f32 0.0, %v675
    %v677 = vpop.f32.mrb[0].mxu0
    %v678 = vpop.f32.mrb[0].mxu0
    %v679 = vadd.f32 0.0, %v678
    %v680 = vpop.f32.mrb[0].mxu0
    %681 = vmatprep.mubr.bf16.mxu0 0
    %682 = vmatmul.mubr.bf16.gmra.mrb[0].mxu0 %v228
    %v683 = vpop.f32.mrb[0].mxu0
    %v684 = vadd.f32 0.0, %v683
    %v685 = vpop.f32.mrb[0].mxu0
    %v686 = vpop.f32.mrb[0].mxu0
    %v687 = vadd.f32 0.0, %v686
    %v688 = vpop.f32.mrb[0].mxu0
    %689 = vmatprep.mubr.bf16.mxu0 0
    %690 = vmatmul.mubr.bf16.gmra.mrb[0].mxu0 %v229
    %v691 = vpop.f32.mrb[0].mxu0
    %v692 = vadd.f32 0.0, %v691
    %v693 = vpop.f32.mrb[0].mxu0
    %v694 = vpop.f32.mrb[0].mxu0
    %v695 = vadd.f32 0.0, %v694
    %v696 = vpop.f32.mrb[0].mxu0
    %697 = vmatprep.mubr.bf16.mxu0 0
    %698 = vmatmul.mubr.bf16.gmra.mrb[0].mxu0 %v230
    %v699 = vpop.f32.mrb[0].mxu0
    %v700 = vadd.f32 0.0, %v699
    %v701 = vpop.f32.mrb[0].mxu0
    %v702 = vpop.f32.mrb[0].mxu0
    %v703 = vadd.f32 0.0, %v702
    %v704 = vpop.f32.mrb[0].mxu0
    %705 = vmatprep.mubr.bf16.mxu0 0
    %706 = vmatmul.mubr.bf16.gmra.mrb[0].mxu0 %v231
    %v707 = vpop.f32.mrb[0].mxu0
    %v708 = vadd.f32 0.0, %v707
    %v709 = vpop.f32.mrb[0].mxu0
    %v710 = vpop.f32.mrb[0].mxu0
    %v711 = vadd.f32 0.0, %v710
    %v712 = vpop.f32.mrb[0].mxu0
    %713 = vmatprep.mubr.bf16.mxu0 0
    %714 = vmatmul.mubr.bf16.gmra.mrb[0].mxu0 %v232
    %v715 = vpop.f32.mrb[0].mxu0
    %v716 = vadd.f32 0.0, %v715
    %v717 = vpop.f32.mrb[0].mxu0
    %v718 = vpop.f32.mrb[0].mxu0
    %v719 = vadd.f32 0.0, %v718
    %v720 = vpop.f32.mrb[0].mxu0
    %721 = vmatprep.mubr.bf16.mxu0 0
    %722 = vmatmul.mubr.bf16.gmra.mrb[0].mxu0 %v233
    %v723 = vpop.f32.mrb[0].mxu0
    %v724 = vadd.f32 0.0, %v723
    %v725 = vpop.f32.mrb[0].mxu0
    %v726 = vpop.f32.mrb[0].mxu0
    %v727 = vadd.f32 0.0, %v726
    %v728 = vpop.f32.mrb[0].mxu0
    %729 = vdwg.mxu0
    %v730 = vpack.c.bf16 %v433, %v429
    %v731 = vpack.c.bf16 %v435, %v431
    %v732 = vpack.c.bf16 %v615, %v612
    %v733 = vpack.c.bf16 %v443, %v439
    %v734 = vpack.c.bf16 %v445, %v441
    %v735 = vpack.c.bf16 %v623, %v620
    %v736 = vpack.c.bf16 %v453, %v449
    %v737 = vpack.c.bf16 %v455, %v451
    %v738 = vpack.c.bf16 %v631, %v628
    %v739 = vpack.c.bf16 %v463, %v459
    %v740 = vpack.c.bf16 %v465, %v461
    %v741 = vpack.c.bf16 %v639, %v636
    %v742 = vpack.c.bf16 %v473, %v469
    %v743 = vpack.c.bf16 %v475, %v471
    %v744 = vpack.c.bf16 %v647, %v644
    %v745 = vpack.c.bf16 %v483, %v479
    %v746 = vpack.c.bf16 %v485, %v481
    %v747 = vpack.c.bf16 %v655, %v652
    %v748 = vpack.c.bf16 %v493, %v489
    %v749 = vpack.c.bf16 %v495, %v491
    %v750 = vpack.c.bf16 %v663, %v660
    %v751 = vpack.c.bf16 %v503, %v499
    %v752 = vpack.c.bf16 %v505, %v501
    %v753 = vpack.c.bf16 %v671, %v668
    %v754 = vpack.c.bf16 %v513, %v509
    %v755 = vpack.c.bf16 %v515, %v511
    %v756 = vpack.c.bf16 %v679, %v676
    %v757 = vpack.c.bf16 %v523, %v519
    %v758 = vpack.c.bf16 %v525, %v521
    %v759 = vpack.c.bf16 %v687, %v684
    %v760 = vpack.c.bf16 %v533, %v529
    %v761 = vpack.c.bf16 %v535, %v531
    %v762 = vpack.c.bf16 %v695, %v692
    %v763 = vpack.c.bf16 %v543, %v539
    %v764 = vpack.c.bf16 %v545, %v541
    %v765 = vpack.c.bf16 %v703, %v700
    %v766 = vpack.c.bf16 %v553, %v549
    %v767 = vpack.c.bf16 %v555, %v551
    %v768 = vpack.c.bf16 %v711, %v708
    %v769 = vpack.c.bf16 %v563, %v559
    %v770 = vpack.c.bf16 %v565, %v561
    %v771 = vpack.c.bf16 %v719, %v716
    %v772 = vpack.c.bf16 %v573, %v569
    %v773 = vpack.c.bf16 %v575, %v571
    %v774 = vpack.c.bf16 %v727, %v724
    %v775 = vld [vmem:[%s1] sm:$0xff]
    %v776 = vld [vmem:[%s1 + $0x8] sm:$0xff]
    %v777 = vld [vmem:[%s1 + $0x10] sm:$0xff]
    %v778 = vld [vmem:[%s1 + $0x18] sm:$0xff]
    %v779 = vld [vmem:[%s1 + $0x20] sm:$0xff]
    %v780 = vld [vmem:[%s1 + $0x28] sm:$0xff]
    %v781 = vld [vmem:[%s1 + $0x30] sm:$0xff]
    %v782 = vld [vmem:[%s1 + $0x38] sm:$0xff]
    %v783 = vld [vmem:[%s1 + $0x40] sm:$0xff]
    %v784 = vld [vmem:[%s1 + $0x48] sm:$0xff]
    %v785 = vld [vmem:[%s1 + $0x50] sm:$0xff]
    %v786 = vld [vmem:[%s1 + $0x58] sm:$0xff]
    %v787 = vld [vmem:[%s1 + $0x60] sm:$0xff]
    %v788 = vld [vmem:[%s1 + $0x68] sm:$0xff]
    %v789 = vld [vmem:[%s1 + $0x70] sm:$0xff]
    %v790 = vld [vmem:[%s1 + $0x78] sm:$0xff]
    %s791 = scalar_lea.vmem %s1, 128
    %v792 = vld [vmem:[%s791] sm:$0xff]
    %v793 = vld [vmem:[%s791 + $0x8] sm:$0xff]
    %v794 = vld [vmem:[%s791 + $0x10] sm:$0xff]
    %v795 = vld [vmem:[%s791 + $0x18] sm:$0xff]
    %v796 = vld [vmem:[%s791 + $0x20] sm:$0xff]
    %v797 = vld [vmem:[%s791 + $0x28] sm:$0xff]
    %v798 = vld [vmem:[%s791 + $0x30] sm:$0xff]
    %v799 = vld [vmem:[%s791 + $0x38] sm:$0xff]
    %v800 = vld [vmem:[%s791 + $0x40] sm:$0xff]
    %v801 = vld [vmem:[%s791 + $0x48] sm:$0xff]
    %v802 = vld [vmem:[%s791 + $0x50] sm:$0xff]
    %v803 = vld [vmem:[%s791 + $0x58] sm:$0xff]
    %v804 = vld [vmem:[%s791 + $0x60] sm:$0xff]
    %v805 = vld [vmem:[%s791 + $0x68] sm:$0xff]
    %v806 = vld [vmem:[%s791 + $0x70] sm:$0xff]
    %v807 = vld [vmem:[%s791 + $0x78] sm:$0xff]
    %v824 = vunpack.c.l.b16 %v792
    %v825 = vunpack.c.h.b16 %v792
    %v826 = vunpack.c.l.b16 %v793
    %v827 = vunpack.c.h.b16 %v793
    %v828 = vunpack.c.l.b16 %v794
    %v829 = vunpack.c.h.b16 %v794
    %v830 = vunpack.c.l.b16 %v795
    %v831 = vunpack.c.h.b16 %v795
    %v832 = vunpack.c.l.b16 %v796
    %v833 = vunpack.c.h.b16 %v796
    %v834 = vunpack.c.l.b16 %v797
    %v835 = vunpack.c.h.b16 %v797
    %v836 = vunpack.c.l.b16 %v798
    %v837 = vunpack.c.h.b16 %v798
    %v838 = vunpack.c.l.b16 %v799
    %v839 = vunpack.c.h.b16 %v799
    %v840 = vunpack.c.l.b16 %v800
    %v841 = vunpack.c.h.b16 %v800
    %v842 = vunpack.c.l.b16 %v801
    %v843 = vunpack.c.h.b16 %v801
    %v844 = vunpack.c.l.b16 %v802
    %v845 = vunpack.c.h.b16 %v802
    %v846 = vunpack.c.l.b16 %v803
    %v847 = vunpack.c.h.b16 %v803
    %v848 = vunpack.c.l.b16 %v804
    %v849 = vunpack.c.h.b16 %v804
    %v850 = vunpack.c.l.b16 %v805
    %v851 = vunpack.c.h.b16 %v805
    %v852 = vunpack.c.l.b16 %v806
    %v853 = vunpack.c.h.b16 %v806
    %v854 = vunpack.c.l.b16 %v807
    %v855 = vunpack.c.h.b16 %v807
    %v856 = vpack.c.b16 %v826, %v824
    %v857 = vpack.c.b16 %v827, %v825
    %v858 = vpack.c.b16 %v830, %v828
    %v859 = vpack.c.b16 %v831, %v829
    %v860 = vpack.c.b16 %v834, %v832
    %v861 = vpack.c.b16 %v835, %v833
    %v862 = vpack.c.b16 %v838, %v836
    %v863 = vpack.c.b16 %v839, %v837
    %v864 = vpack.c.b16 %v842, %v840
    %v865 = vpack.c.b16 %v843, %v841
    %v866 = vpack.c.b16 %v846, %v844
    %v867 = vpack.c.b16 %v847, %v845
    %v868 = vpack.c.b16 %v850, %v848
    %v869 = vpack.c.b16 %v851, %v849
    %v870 = vpack.c.b16 %v854, %v852
    %v871 = vpack.c.b16 %v855, %v853
    %vm880 = vcmask 916480
    %v882 = vsel %vm880, %v857, 0
    %v885 = vsel %vm880, %v859, 0
    %v888 = vsel %vm880, %v861, 0
    %v891 = vsel %vm880, %v863, 0
    %v894 = vsel %vm880, %v865, 0
    %v897 = vsel %vm880, %v867, 0
    %v900 = vsel %vm880, %v869, 0
    %v903 = vsel %vm880, %v871, 0
    %905 = vmatprep.subr.bf16.mxu0 0
    %906 = vmatpush1.bf16.msra.mxu0 %v731
    %907 = vmatprep.subr.bf16.mxu0 0
    %908 = vmatpush1.bf16.msra.mxu0 %v734
    %909 = vmatprep.subr.bf16.mxu0 0
    %910 = vmatpush1.bf16.msra.mxu0 %v737
    %911 = vmatprep.subr.bf16.mxu0 0
    %912 = vmatpush1.bf16.msra.mxu0 %v740
    %913 = vmatprep.subr.bf16.mxu0 0
    %914 = vmatpush1.bf16.msra.mxu0 %v743
    %915 = vmatprep.subr.bf16.mxu0 0
    %916 = vmatpush1.bf16.msra.mxu0 %v746
    %917 = vmatprep.subr.bf16.mxu0 0
    %918 = vmatpush1.bf16.msra.mxu0 %v749
    %919 = vmatprep.subr.bf16.mxu0 0
    %920 = vmatpush1.bf16.msra.mxu0 %v752
    %921 = vmatprep.subr.bf16.mxu0 0
    %922 = vmatpush1.bf16.msra.mxu0 %v755
    %923 = vmatprep.subr.bf16.mxu0 0
    %924 = vmatpush1.bf16.msra.mxu0 %v758
    %925 = vmatprep.subr.bf16.mxu0 0
    %926 = vmatpush1.bf16.msra.mxu0 %v761
    %927 = vmatprep.subr.bf16.mxu0 0
    %928 = vmatpush1.bf16.msra.mxu0 %v764
    %929 = vmatprep.subr.bf16.mxu0 0
    %930 = vmatpush1.bf16.msra.mxu0 %v767
    %931 = vmatprep.subr.bf16.mxu0 0
    %932 = vmatpush1.bf16.msra.mxu0 %v770
    %933 = vmatprep.subr.bf16.mxu0 0
    %934 = vmatpush1.bf16.msra.mxu0 %v773
    %935 = vmatprep.subr.bf16.mxu0 0
    %936 = vmatpush1.bf16.msra.mxu0 0
    %937 = vmatprep.mubr.bf16.mxu0 %v882
    %938 = vmatmul.mubr.bf16.gmra.mrb[0].mxu0 %v856
    %v939 = vpop.f32.mrb[0].mxu0
    %v940 = vadd.f32 0.0, %v939
    %v941 = vpop.f32.mrb[0].mxu0
    %v942 = vpop.f32.mrb[0].mxu0
    %v943 = vadd.f32 0.0, %v942
    %v944 = vpop.f32.mrb[0].mxu0
    %945 = vmatprep.mubr.bf16.mxu0 %v885
    %946 = vmatmul.mubr.bf16.gmra.mrb[0].mxu0 %v858
    %v947 = vpop.f32.mrb[0].mxu0
    %v948 = vadd.f32 0.0, %v947
    %v949 = vpop.f32.mrb[0].mxu0
    %v950 = vpop.f32.mrb[0].mxu0
    %v951 = vadd.f32 0.0, %v950
    %v952 = vpop.f32.mrb[0].mxu0
    %953 = vmatprep.mubr.bf16.mxu0 %v888
    %954 = vmatmul.mubr.bf16.gmra.mrb[0].mxu0 %v860
    %v955 = vpop.f32.mrb[0].mxu0
    %v956 = vadd.f32 0.0, %v955
    %v957 = vpop.f32.mrb[0].mxu0
    %v958 = vpop.f32.mrb[0].mxu0
    %v959 = vadd.f32 0.0, %v958
    %v960 = vpop.f32.mrb[0].mxu0
    %961 = vmatprep.mubr.bf16.mxu0 %v891
    %962 = vmatmul.mubr.bf16.gmra.mrb[0].mxu0 %v862
    %v963 = vpop.f32.mrb[0].mxu0
    %v964 = vadd.f32 0.0, %v963
    %v965 = vpop.f32.mrb[0].mxu0
    %v966 = vpop.f32.mrb[0].mxu0
    %v967 = vadd.f32 0.0, %v966
    %v968 = vpop.f32.mrb[0].mxu0
    %969 = vmatprep.mubr.bf16.mxu0 %v894
    %970 = vmatmul.mubr.bf16.gmra.mrb[0].mxu0 %v864
    %v971 = vpop.f32.mrb[0].mxu0
    %v972 = vadd.f32 0.0, %v971
    %v973 = vpop.f32.mrb[0].mxu0
    %v974 = vpop.f32.mrb[0].mxu0
    %v975 = vadd.f32 0.0, %v974
    %v976 = vpop.f32.mrb[0].mxu0
    %977 = vmatprep.mubr.bf16.mxu0 %v897
    %978 = vmatmul.mubr.bf16.gmra.mrb[0].mxu0 %v866
    %v979 = vpop.f32.mrb[0].mxu0
    %v980 = vadd.f32 0.0, %v979
    %v981 = vpop.f32.mrb[0].mxu0
    %v982 = vpop.f32.mrb[0].mxu0
    %v983 = vadd.f32 0.0, %v982
    %v984 = vpop.f32.mrb[0].mxu0
    %985 = vmatprep.mubr.bf16.mxu0 %v900
    %986 = vmatmul.mubr.bf16.gmra.mrb[0].mxu0 %v868
    %v987 = vpop.f32.mrb[0].mxu0
    %v988 = vadd.f32 0.0, %v987
    %v989 = vpop.f32.mrb[0].mxu0
    %v990 = vpop.f32.mrb[0].mxu0
    %v991 = vadd.f32 0.0, %v990
    %v992 = vpop.f32.mrb[0].mxu0
    %993 = vmatprep.mubr.bf16.mxu0 %v903
    %994 = vmatmul.mubr.bf16.gmra.mrb[0].mxu0 %v870
    %v995 = vpop.f32.mrb[0].mxu0
    %v996 = vadd.f32 0.0, %v995
    %v997 = vpop.f32.mrb[0].mxu0
    %v998 = vpop.f32.mrb[0].mxu0
    %v999 = vadd.f32 0.0, %v998
    %v1000 = vpop.f32.mrb[0].mxu0
    %1001 = vdwg.mxu0
    %v1018 = vunpack.c.l.b16 %v775
    %v1019 = vunpack.c.h.b16 %v775
    %v1020 = vunpack.c.l.b16 %v776
    %v1021 = vunpack.c.h.b16 %v776
    %v1022 = vunpack.c.l.b16 %v777
    %v1023 = vunpack.c.h.b16 %v777
    %v1024 = vunpack.c.l.b16 %v778
    %v1025 = vunpack.c.h.b16 %v778
    %v1026 = vunpack.c.l.b16 %v779
    %v1027 = vunpack.c.h.b16 %v779
    %v1028 = vunpack.c.l.b16 %v780
    %v1029 = vunpack.c.h.b16 %v780
    %v1030 = vunpack.c.l.b16 %v781
    %v1031 = vunpack.c.h.b16 %v781
    %v1032 = vunpack.c.l.b16 %v782
    %v1033 = vunpack.c.h.b16 %v782
    %v1034 = vunpack.c.l.b16 %v783
    %v1035 = vunpack.c.h.b16 %v783
    %v1036 = vunpack.c.l.b16 %v784
    %v1037 = vunpack.c.h.b16 %v784
    %v1038 = vunpack.c.l.b16 %v785
    %v1039 = vunpack.c.h.b16 %v785
    %v1040 = vunpack.c.l.b16 %v786
    %v1041 = vunpack.c.h.b16 %v786
    %v1042 = vunpack.c.l.b16 %v787
    %v1043 = vunpack.c.h.b16 %v787
    %v1044 = vunpack.c.l.b16 %v788
    %v1045 = vunpack.c.h.b16 %v788
    %v1046 = vunpack.c.l.b16 %v789
    %v1047 = vunpack.c.h.b16 %v789
    %v1048 = vunpack.c.l.b16 %v790
    %v1049 = vunpack.c.h.b16 %v790
    %v1050 = vpack.c.b16 %v1020, %v1018
    %v1051 = vpack.c.b16 %v1021, %v1019
    %v1052 = vpack.c.b16 %v1024, %v1022
    %v1053 = vpack.c.b16 %v1025, %v1023
    %v1054 = vpack.c.b16 %v1028, %v1026
    %v1055 = vpack.c.b16 %v1029, %v1027
    %v1056 = vpack.c.b16 %v1032, %v1030
    %v1057 = vpack.c.b16 %v1033, %v1031
    %v1058 = vpack.c.b16 %v1036, %v1034
    %v1059 = vpack.c.b16 %v1037, %v1035
    %v1060 = vpack.c.b16 %v1040, %v1038
    %v1061 = vpack.c.b16 %v1041, %v1039
    %v1062 = vpack.c.b16 %v1044, %v1042
    %v1063 = vpack.c.b16 %v1045, %v1043
    %v1064 = vpack.c.b16 %v1048, %v1046
    %v1065 = vpack.c.b16 %v1049, %v1047
    %v1075 = vsel %vm880, %v1051, 0
    %v1078 = vsel %vm880, %v1053, 0
    %v1081 = vsel %vm880, %v1055, 0
    %v1084 = vsel %vm880, %v1057, 0
    %v1087 = vsel %vm880, %v1059, 0
    %v1090 = vsel %vm880, %v1061, 0
    %v1093 = vsel %vm880, %v1063, 0
    %v1096 = vsel %vm880, %v1065, 0
    %1098 = vmatprep.subr.bf16.mxu0 0
    %1099 = vmatpush1.bf16.msra.mxu0 %v730
    %1100 = vmatprep.subr.bf16.mxu0 0
    %1101 = vmatpush1.bf16.msra.mxu0 %v733
    %1102 = vmatprep.subr.bf16.mxu0 0
    %1103 = vmatpush1.bf16.msra.mxu0 %v736
    %1104 = vmatprep.subr.bf16.mxu0 0
    %1105 = vmatpush1.bf16.msra.mxu0 %v739
    %1106 = vmatprep.subr.bf16.mxu0 0
    %1107 = vmatpush1.bf16.msra.mxu0 %v742
    %1108 = vmatprep.subr.bf16.mxu0 0
    %1109 = vmatpush1.bf16.msra.mxu0 %v745
    %1110 = vmatprep.subr.bf16.mxu0 0
    %1111 = vmatpush1.bf16.msra.mxu0 %v748
    %1112 = vmatprep.subr.bf16.mxu0 0
    %1113 = vmatpush1.bf16.msra.mxu0 %v751
    %1114 = vmatprep.subr.bf16.mxu0 0
    %1115 = vmatpush1.bf16.msra.mxu0 %v754
    %1116 = vmatprep.subr.bf16.mxu0 0
    %1117 = vmatpush1.bf16.msra.mxu0 %v757
    %1118 = vmatprep.subr.bf16.mxu0 0
    %1119 = vmatpush1.bf16.msra.mxu0 %v760
    %1120 = vmatprep.subr.bf16.mxu0 0
    %1121 = vmatpush1.bf16.msra.mxu0 %v763
    %1122 = vmatprep.subr.bf16.mxu0 0
    %1123 = vmatpush1.bf16.msra.mxu0 %v766
    %1124 = vmatprep.subr.bf16.mxu0 0
    %1125 = vmatpush1.bf16.msra.mxu0 %v769
    %1126 = vmatprep.subr.bf16.mxu0 0
    %1127 = vmatpush1.bf16.msra.mxu0 %v772
    %1128 = vmatprep.subr.bf16.mxu0 0
    %1129 = vmatpush1.bf16.msra.mxu0 0
    %1130 = vmatprep.mubr.bf16.mxu0 %v1075
    %1131 = vmatmul.mubr.bf16.gmra.mrb[0].mxu0 %v1050
    %v1132 = vpop.f32.mrb[0].mxu0
    %v1133 = vadd.f32 %v940, %v1132
    %v1134 = vpop.f32.mrb[0].mxu0
    %v1135 = vpop.f32.mrb[0].mxu0
    %v1136 = vadd.f32 %v943, %v1135
    %v1137 = vpop.f32.mrb[0].mxu0
    %1138 = vmatprep.mubr.bf16.mxu0 %v1078
    %1139 = vmatmul.mubr.bf16.gmra.mrb[0].mxu0 %v1052
    %v1140 = vpop.f32.mrb[0].mxu0
    %v1141 = vadd.f32 %v948, %v1140
    %v1142 = vpop.f32.mrb[0].mxu0
    %v1143 = vpop.f32.mrb[0].mxu0
    %v1144 = vadd.f32 %v951, %v1143
    %v1145 = vpop.f32.mrb[0].mxu0
    %1146 = vmatprep.mubr.bf16.mxu0 %v1081
    %1147 = vmatmul.mubr.bf16.gmra.mrb[0].mxu0 %v1054
    %v1148 = vpop.f32.mrb[0].mxu0
    %v1149 = vadd.f32 %v956, %v1148
    %v1150 = vpop.f32.mrb[0].mxu0
    %v1151 = vpop.f32.mrb[0].mxu0
    %v1152 = vadd.f32 %v959, %v1151
    %v1153 = vpop.f32.mrb[0].mxu0
    %1154 = vmatprep.mubr.bf16.mxu0 %v1084
    %1155 = vmatmul.mubr.bf16.gmra.mrb[0].mxu0 %v1056
    %v1156 = vpop.f32.mrb[0].mxu0
    %v1157 = vadd.f32 %v964, %v1156
    %v1158 = vpop.f32.mrb[0].mxu0
    %v1159 = vpop.f32.mrb[0].mxu0
    %v1160 = vadd.f32 %v967, %v1159
    %v1161 = vpop.f32.mrb[0].mxu0
    %1162 = vmatprep.mubr.bf16.mxu0 %v1087
    %1163 = vmatmul.mubr.bf16.gmra.mrb[0].mxu0 %v1058
    %v1164 = vpop.f32.mrb[0].mxu0
    %v1165 = vadd.f32 %v972, %v1164
    %v1166 = vpop.f32.mrb[0].mxu0
    %v1167 = vpop.f32.mrb[0].mxu0
    %v1168 = vadd.f32 %v975, %v1167
    %v1169 = vpop.f32.mrb[0].mxu0
    %1170 = vmatprep.mubr.bf16.mxu0 %v1090
    %1171 = vmatmul.mubr.bf16.gmra.mrb[0].mxu0 %v1060
    %v1172 = vpop.f32.mrb[0].mxu0
    %v1173 = vadd.f32 %v980, %v1172
    %v1174 = vpop.f32.mrb[0].mxu0
    %v1175 = vpop.f32.mrb[0].mxu0
    %v1176 = vadd.f32 %v983, %v1175
    %v1177 = vpop.f32.mrb[0].mxu0
    %1178 = vmatprep.mubr.bf16.mxu0 %v1093
    %1179 = vmatmul.mubr.bf16.gmra.mrb[0].mxu0 %v1062
    %v1180 = vpop.f32.mrb[0].mxu0
    %v1181 = vadd.f32 %v988, %v1180
    %v1182 = vpop.f32.mrb[0].mxu0
    %v1183 = vpop.f32.mrb[0].mxu0
    %v1184 = vadd.f32 %v991, %v1183
    %v1185 = vpop.f32.mrb[0].mxu0
    %1186 = vmatprep.mubr.bf16.mxu0 %v1096
    %1187 = vmatmul.mubr.bf16.gmra.mrb[0].mxu0 %v1064
    %v1188 = vpop.f32.mrb[0].mxu0
    %v1189 = vadd.f32 %v996, %v1188
    %v1190 = vpop.f32.mrb[0].mxu0
    %v1191 = vpop.f32.mrb[0].mxu0
    %v1192 = vadd.f32 %v999, %v1191
    %v1193 = vpop.f32.mrb[0].mxu0
    %1194 = vdwg.mxu0
    %s1195 = scalar_lea.vmem %s1, 256
    %v1196 = vld [vmem:[%s1195] sm:$0xff]
    %v1197 = vld [vmem:[%s1195 + $0x8] sm:$0xff]
    %v1198 = vld [vmem:[%s1195 + $0x10] sm:$0xff]
    %v1199 = vld [vmem:[%s1195 + $0x18] sm:$0xff]
    %v1200 = vld [vmem:[%s1195 + $0x20] sm:$0xff]
    %v1201 = vld [vmem:[%s1195 + $0x28] sm:$0xff]
    %v1202 = vld [vmem:[%s1195 + $0x30] sm:$0xff]
    %v1203 = vld [vmem:[%s1195 + $0x38] sm:$0xff]
    %v1204 = vld [vmem:[%s1195 + $0x40] sm:$0xff]
    %v1205 = vld [vmem:[%s1195 + $0x48] sm:$0xff]
    %v1206 = vld [vmem:[%s1195 + $0x50] sm:$0xff]
    %v1207 = vld [vmem:[%s1195 + $0x58] sm:$0xff]
    %v1208 = vld [vmem:[%s1195 + $0x60] sm:$0xff]
    %v1209 = vld [vmem:[%s1195 + $0x68] sm:$0xff]
    %v1210 = vld [vmem:[%s1195 + $0x70] sm:$0xff]
    %v1211 = vld [vmem:[%s1195 + $0x78] sm:$0xff]
    %v1228 = vunpack.c.l.b16 %v1196
    %v1229 = vunpack.c.h.b16 %v1196
    %v1230 = vunpack.c.l.b16 %v1197
    %v1231 = vunpack.c.h.b16 %v1197
    %v1232 = vunpack.c.l.b16 %v1198
    %v1233 = vunpack.c.h.b16 %v1198
    %v1234 = vunpack.c.l.b16 %v1199
    %v1235 = vunpack.c.h.b16 %v1199
    %v1236 = vunpack.c.l.b16 %v1200
    %v1237 = vunpack.c.h.b16 %v1200
    %v1238 = vunpack.c.l.b16 %v1201
    %v1239 = vunpack.c.h.b16 %v1201
    %v1240 = vunpack.c.l.b16 %v1202
    %v1241 = vunpack.c.h.b16 %v1202
    %v1242 = vunpack.c.l.b16 %v1203
    %v1243 = vunpack.c.h.b16 %v1203
    %v1244 = vunpack.c.l.b16 %v1204
    %v1245 = vunpack.c.h.b16 %v1204
    %v1246 = vunpack.c.l.b16 %v1205
    %v1247 = vunpack.c.h.b16 %v1205
    %v1248 = vunpack.c.l.b16 %v1206
    %v1249 = vunpack.c.h.b16 %v1206
    %v1250 = vunpack.c.l.b16 %v1207
    %v1251 = vunpack.c.h.b16 %v1207
    %v1252 = vunpack.c.l.b16 %v1208
    %v1253 = vunpack.c.h.b16 %v1208
    %v1254 = vunpack.c.l.b16 %v1209
    %v1255 = vunpack.c.h.b16 %v1209
    %v1256 = vunpack.c.l.b16 %v1210
    %v1257 = vunpack.c.h.b16 %v1210
    %v1258 = vunpack.c.l.b16 %v1211
    %v1259 = vunpack.c.h.b16 %v1211
    %v1260 = vpack.c.b16 %v1230, %v1228
    %v1261 = vpack.c.b16 %v1231, %v1229
    %v1262 = vpack.c.b16 %v1234, %v1232
    %v1263 = vpack.c.b16 %v1235, %v1233
    %v1264 = vpack.c.b16 %v1238, %v1236
    %v1265 = vpack.c.b16 %v1239, %v1237
    %v1266 = vpack.c.b16 %v1242, %v1240
    %v1267 = vpack.c.b16 %v1243, %v1241
    %v1268 = vpack.c.b16 %v1246, %v1244
    %v1269 = vpack.c.b16 %v1247, %v1245
    %v1270 = vpack.c.b16 %v1250, %v1248
    %v1271 = vpack.c.b16 %v1251, %v1249
    %v1272 = vpack.c.b16 %v1254, %v1252
    %v1273 = vpack.c.b16 %v1255, %v1253
    %v1274 = vpack.c.b16 %v1258, %v1256
    %v1275 = vpack.c.b16 %v1259, %v1257
    %v1285 = vsel %vm880, %v1261, 0
    %v1288 = vsel %vm880, %v1263, 0
    %v1291 = vsel %vm880, %v1265, 0
    %v1294 = vsel %vm880, %v1267, 0
    %v1297 = vsel %vm880, %v1269, 0
    %v1300 = vsel %vm880, %v1271, 0
    %v1303 = vsel %vm880, %v1273, 0
    %v1306 = vsel %vm880, %v1275, 0
    %1308 = vmatprep.subr.bf16.mxu0 0
    %1309 = vmatpush1.bf16.msra.mxu0 %v732
    %1310 = vmatprep.subr.bf16.mxu0 0
    %1311 = vmatpush1.bf16.msra.mxu0 %v735
    %1312 = vmatprep.subr.bf16.mxu0 0
    %1313 = vmatpush1.bf16.msra.mxu0 %v738
    %1314 = vmatprep.subr.bf16.mxu0 0
    %1315 = vmatpush1.bf16.msra.mxu0 %v741
    %1316 = vmatprep.subr.bf16.mxu0 0
    %1317 = vmatpush1.bf16.msra.mxu0 %v744
    %1318 = vmatprep.subr.bf16.mxu0 0
    %1319 = vmatpush1.bf16.msra.mxu0 %v747
    %1320 = vmatprep.subr.bf16.mxu0 0
    %1321 = vmatpush1.bf16.msra.mxu0 %v750
    %1322 = vmatprep.subr.bf16.mxu0 0
    %1323 = vmatpush1.bf16.msra.mxu0 %v753
    %1324 = vmatprep.subr.bf16.mxu0 0
    %1325 = vmatpush1.bf16.msra.mxu0 %v756
    %1326 = vmatprep.subr.bf16.mxu0 0
    %1327 = vmatpush1.bf16.msra.mxu0 %v759
    %1328 = vmatprep.subr.bf16.mxu0 0
    %1329 = vmatpush1.bf16.msra.mxu0 %v762
    %1330 = vmatprep.subr.bf16.mxu0 0
    %1331 = vmatpush1.bf16.msra.mxu0 %v765
    %1332 = vmatprep.subr.bf16.mxu0 0
    %1333 = vmatpush1.bf16.msra.mxu0 %v768
    %1334 = vmatprep.subr.bf16.mxu0 0
    %1335 = vmatpush1.bf16.msra.mxu0 %v771
    %1336 = vmatprep.subr.bf16.mxu0 0
    %1337 = vmatpush1.bf16.msra.mxu0 %v774
    %1338 = vmatprep.subr.bf16.mxu0 0
    %1339 = vmatpush1.bf16.msra.mxu0 0
    %1340 = vmatprep.mubr.bf16.mxu0 %v1285
    %1341 = vmatmul.mubr.bf16.gmra.mrb[0].mxu0 %v1260
    %v1342 = vpop.f32.mrb[0].mxu0
    %v1343 = vadd.f32 0.0, %v1342
    %v1344 = vpop.f32.mrb[0].mxu0
    %v1345 = vpop.f32.mrb[0].mxu0
    %v1346 = vadd.f32 0.0, %v1345
    %v1347 = vpop.f32.mrb[0].mxu0
    %1348 = vmatprep.mubr.bf16.mxu0 %v1288
    %1349 = vmatmul.mubr.bf16.gmra.mrb[0].mxu0 %v1262
    %v1350 = vpop.f32.mrb[0].mxu0
    %v1351 = vadd.f32 0.0, %v1350
    %v1352 = vpop.f32.mrb[0].mxu0
    %v1353 = vpop.f32.mrb[0].mxu0
    %v1354 = vadd.f32 0.0, %v1353
    %v1355 = vpop.f32.mrb[0].mxu0
    %1356 = vmatprep.mubr.bf16.mxu0 %v1291
    %1357 = vmatmul.mubr.bf16.gmra.mrb[0].mxu0 %v1264
    %v1358 = vpop.f32.mrb[0].mxu0
    %v1359 = vadd.f32 0.0, %v1358
    %v1360 = vpop.f32.mrb[0].mxu0
    %v1361 = vpop.f32.mrb[0].mxu0
    %v1362 = vadd.f32 0.0, %v1361
    %v1363 = vpop.f32.mrb[0].mxu0
    %1364 = vmatprep.mubr.bf16.mxu0 %v1294
    %1365 = vmatmul.mubr.bf16.gmra.mrb[0].mxu0 %v1266
    %v1366 = vpop.f32.mrb[0].mxu0
    %v1367 = vadd.f32 0.0, %v1366
    %v1368 = vpop.f32.mrb[0].mxu0
    %v1369 = vpop.f32.mrb[0].mxu0
    %v1370 = vadd.f32 0.0, %v1369
    %v1371 = vpop.f32.mrb[0].mxu0
    %1372 = vmatprep.mubr.bf16.mxu0 %v1297
    %1373 = vmatmul.mubr.bf16.gmra.mrb[0].mxu0 %v1268
    %v1374 = vpop.f32.mrb[0].mxu0
    %v1375 = vadd.f32 0.0, %v1374
    %v1376 = vpop.f32.mrb[0].mxu0
    %v1377 = vpop.f32.mrb[0].mxu0
    %v1378 = vadd.f32 0.0, %v1377
    %v1379 = vpop.f32.mrb[0].mxu0
    %1380 = vmatprep.mubr.bf16.mxu0 %v1300
    %1381 = vmatmul.mubr.bf16.gmra.mrb[0].mxu0 %v1270
    %v1382 = vpop.f32.mrb[0].mxu0
    %v1383 = vadd.f32 0.0, %v1382
    %v1384 = vpop.f32.mrb[0].mxu0
    %v1385 = vpop.f32.mrb[0].mxu0
    %v1386 = vadd.f32 0.0, %v1385
    %v1387 = vpop.f32.mrb[0].mxu0
    %1388 = vmatprep.mubr.bf16.mxu0 %v1303
    %1389 = vmatmul.mubr.bf16.gmra.mrb[0].mxu0 %v1272
    %v1390 = vpop.f32.mrb[0].mxu0
    %v1391 = vadd.f32 0.0, %v1390
    %v1392 = vpop.f32.mrb[0].mxu0
    %v1393 = vpop.f32.mrb[0].mxu0
    %v1394 = vadd.f32 0.0, %v1393
    %v1395 = vpop.f32.mrb[0].mxu0
    %1396 = vmatprep.mubr.bf16.mxu0 %v1306
    %1397 = vmatmul.mubr.bf16.gmra.mrb[0].mxu0 %v1274
    %v1398 = vpop.f32.mrb[0].mxu0
    %v1399 = vadd.f32 0.0, %v1398
    %v1400 = vpop.f32.mrb[0].mxu0
    %v1401 = vpop.f32.mrb[0].mxu0
    %v1402 = vadd.f32 0.0, %v1401
    %v1403 = vpop.f32.mrb[0].mxu0
    %1404 = vdwg.mxu0
    %v1405 = vadd.f32 %v1133, %v1343
    %v1406 = vadd.f32 %v1136, %v1346
    %v1407 = vadd.f32 %v1141, %v1351
    %v1408 = vadd.f32 %v1144, %v1354
    %v1409 = vadd.f32 %v1149, %v1359
    %v1410 = vadd.f32 %v1152, %v1362
    %v1411 = vadd.f32 %v1157, %v1367
    %v1412 = vadd.f32 %v1160, %v1370
    %v1413 = vadd.f32 %v1165, %v1375
    %v1414 = vadd.f32 %v1168, %v1378
    %v1415 = vadd.f32 %v1173, %v1383
    %v1416 = vadd.f32 %v1176, %v1386
    %v1417 = vadd.f32 %v1181, %v1391
    %v1418 = vadd.f32 %v1184, %v1394
    %v1419 = vadd.f32 %v1189, %v1399
    %v1420 = vadd.f32 %v1192, %v1402
    %v1421 = vld [vmem:[#allocation10] sm:$0x1]
    %v1423 = vlaneseq
    %v1424 = vshrl.u32 %v1423, 7
    %v1425 = vsub.s32 0, %v1424
    %v1426 = vrot.slane %v1421, %v1425
    %v1428 = vadd.f32 %v1405, %v1426
    %v1429 = vadd.f32 %v1406, %v1426
    %v1430 = vadd.f32 %v1407, %v1426
    %v1431 = vadd.f32 %v1408, %v1426
    %v1432 = vadd.f32 %v1409, %v1426
    %v1433 = vadd.f32 %v1410, %v1426
    %v1434 = vadd.f32 %v1411, %v1426
    %v1435 = vadd.f32 %v1412, %v1426
    %v1436 = vadd.f32 %v1413, %v1426
    %v1437 = vadd.f32 %v1414, %v1426
    %v1438 = vadd.f32 %v1415, %v1426
    %v1439 = vadd.f32 %v1416, %v1426
    %v1440 = vadd.f32 %v1417, %v1426
    %v1441 = vadd.f32 %v1418, %v1426
    %v1442 = vadd.f32 %v1419, %v1426
    %v1443 = vadd.f32 %v1420, %v1426
    %vm1444 = vcmp.ge.f32.partialorder %v1428, 0.0
    %vm1445 = vcmp.ge.f32.partialorder %v1429, 0.0
    %vm1446 = vcmp.ge.f32.partialorder %v1430, 0.0
    %vm1447 = vcmp.ge.f32.partialorder %v1431, 0.0
    %vm1448 = vcmp.ge.f32.partialorder %v1432, 0.0
    %vm1449 = vcmp.ge.f32.partialorder %v1433, 0.0
    %vm1450 = vcmp.ge.f32.partialorder %v1434, 0.0
    %vm1451 = vcmp.ge.f32.partialorder %v1435, 0.0
    %vm1452 = vcmp.ge.f32.partialorder %v1436, 0.0
    %vm1453 = vcmp.ge.f32.partialorder %v1437, 0.0
    %vm1454 = vcmp.ge.f32.partialorder %v1438, 0.0
    %vm1455 = vcmp.ge.f32.partialorder %v1439, 0.0
    %vm1456 = vcmp.ge.f32.partialorder %v1440, 0.0
    %vm1457 = vcmp.ge.f32.partialorder %v1441, 0.0
    %vm1458 = vcmp.ge.f32.partialorder %v1442, 0.0
    %vm1459 = vcmp.ge.f32.partialorder %v1443, 0.0
    %v1460 = vmul.f32 %v1428, 0.2
    %v1461 = vmul.f32 %v1429, 0.2
    %v1462 = vmul.f32 %v1430, 0.2
    %v1463 = vmul.f32 %v1431, 0.2
    %v1464 = vmul.f32 %v1432, 0.2
    %v1465 = vmul.f32 %v1433, 0.2
    %v1466 = vmul.f32 %v1434, 0.2
    %v1467 = vmul.f32 %v1435, 0.2
    %v1468 = vmul.f32 %v1436, 0.2
    %v1469 = vmul.f32 %v1437, 0.2
    %v1470 = vmul.f32 %v1438, 0.2
    %v1471 = vmul.f32 %v1439, 0.2
    %v1472 = vmul.f32 %v1440, 0.2
    %v1473 = vmul.f32 %v1441, 0.2
    %v1474 = vmul.f32 %v1442, 0.2
    %v1475 = vmul.f32 %v1443, 0.2
    %v1476 = vsel %vm1444, %v1428, %v1460
    %v1477 = vsel %vm1445, %v1429, %v1461
    %v1478 = vsel %vm1446, %v1430, %v1462
    %v1479 = vsel %vm1447, %v1431, %v1463
    %v1480 = vsel %vm1448, %v1432, %v1464
    %v1481 = vsel %vm1449, %v1433, %v1465
    %v1482 = vsel %vm1450, %v1434, %v1466
    %v1483 = vsel %vm1451, %v1435, %v1467
    %v1484 = vsel %vm1452, %v1436, %v1468
    %v1485 = vsel %vm1453, %v1437, %v1469
    %v1486 = vsel %vm1454, %v1438, %v1470
    %v1487 = vsel %vm1455, %v1439, %v1471
    %v1488 = vsel %vm1456, %v1440, %v1472
    %v1489 = vsel %vm1457, %v1441, %v1473
    %v1490 = vsel %vm1458, %v1442, %v1474
    %v1491 = vsel %vm1459, %v1443, %v1475
    %v1492 = vpack.c.bf16 %v1477, %v1476
    %v1493 = vpack.c.bf16 %v1479, %v1478
    %v1494 = vpack.c.bf16 %v1481, %v1480
    %v1495 = vpack.c.bf16 %v1483, %v1482
    %v1496 = vpack.c.bf16 %v1485, %v1484
    %v1497 = vpack.c.bf16 %v1487, %v1486
    %v1498 = vpack.c.bf16 %v1489, %v1488
    %v1499 = vpack.c.bf16 %v1491, %v1490
    %s1500 = scalar_lea.vmem [#allocation8], 192
    %v1501 = vld [vmem:[%s1500] sm:$0xff]
    %v1502 = vld [vmem:[%s1500 + $0x8] sm:$0xf]
    %v1503 = vld [vmem:[%s1500 + $0xc] sm:$0xff]
    %v1504 = vld [vmem:[%s1500 + $0x14] sm:$0xf]
    %v1505 = vld [vmem:[%s1500 + $0x18] sm:$0xff]
    %v1506 = vld [vmem:[%s1500 + $0x20] sm:$0xf]
    %v1507 = vld [vmem:[%s1500 + $0x24] sm:$0xff]
    %v1508 = vld [vmem:[%s1500 + $0x2c] sm:$0xf]
    %v1509 = vld [vmem:[%s1500 + $0x30] sm:$0xff]
    %v1510 = vld [vmem:[%s1500 + $0x38] sm:$0xf]
    %v1511 = vld [vmem:[%s1500 + $0x3c] sm:$0xff]
    %v1512 = vld [vmem:[%s1500 + $0x44] sm:$0xf]
    %v1513 = vld [vmem:[%s1500 + $0x48] sm:$0xff]
    %v1514 = vld [vmem:[%s1500 + $0x50] sm:$0xf]
    %v1515 = vld [vmem:[%s1500 + $0x54] sm:$0xff]
    %v1516 = vld [vmem:[%s1500 + $0x5c] sm:$0xf]
    %v1517 = vld [vmem:[%s1500 + $0x60] sm:$0xff]
    %v1518 = vld [vmem:[%s1500 + $0x68] sm:$0xf]
    %v1519 = vld [vmem:[%s1500 + $0x6c] sm:$0xff]
    %v1520 = vld [vmem:[%s1500 + $0x74] sm:$0xf]
    %v1521 = vld [vmem:[%s1500 + $0x78] sm:$0xff]
    %v1522 = vld [vmem:[%s1500 + $0x80] sm:$0xf]
    %v1523 = vld [vmem:[%s1500 + $0x84] sm:$0xff]
    %v1524 = vld [vmem:[%s1500 + $0x8c] sm:$0xf]
    %v1525 = vld [vmem:[%s1500 + $0x90] sm:$0xff]
    %v1526 = vld [vmem:[%s1500 + $0x98] sm:$0xf]
    %v1527 = vld [vmem:[%s1500 + $0x9c] sm:$0xff]
    %v1528 = vld [vmem:[%s1500 + $0xa4] sm:$0xf]
    %v1529 = vld [vmem:[%s1500 + $0xa8] sm:$0xff]
    %v1530 = vld [vmem:[%s1500 + $0xb0] sm:$0xf]
    %v1531 = vld [vmem:[%s1500 + $0xb4] sm:$0xff]
    %v1532 = vld [vmem:[%s1500 + $0xbc] sm:$0xf]
    %v1565 = vunpack.c.l.b16 %v1501
    %v1566 = vunpack.c.h.b16 %v1501
    %v1567 = vunpack.c.l.b16 %v1502
    %v1568 = vunpack.c.l.b16 %v1503
    %v1569 = vunpack.c.h.b16 %v1503
    %v1570 = vunpack.c.l.b16 %v1504
    %v1571 = vunpack.c.l.b16 %v1505
    %v1572 = vunpack.c.h.b16 %v1505
    %v1573 = vunpack.c.l.b16 %v1506
    %v1574 = vunpack.c.l.b16 %v1507
    %v1575 = vunpack.c.h.b16 %v1507
    %v1576 = vunpack.c.l.b16 %v1508
    %v1577 = vunpack.c.l.b16 %v1509
    %v1578 = vunpack.c.h.b16 %v1509
    %v1579 = vunpack.c.l.b16 %v1510
    %v1580 = vunpack.c.l.b16 %v1511
    %v1581 = vunpack.c.h.b16 %v1511
    %v1582 = vunpack.c.l.b16 %v1512
    %v1583 = vunpack.c.l.b16 %v1513
    %v1584 = vunpack.c.h.b16 %v1513
    %v1585 = vunpack.c.l.b16 %v1514
    %v1586 = vunpack.c.l.b16 %v1515
    %v1587 = vunpack.c.h.b16 %v1515
    %v1588 = vunpack.c.l.b16 %v1516
    %v1589 = vunpack.c.l.b16 %v1517
    %v1590 = vunpack.c.h.b16 %v1517
    %v1591 = vunpack.c.l.b16 %v1518
    %v1592 = vunpack.c.l.b16 %v1519
    %v1593 = vunpack.c.h.b16 %v1519
    %v1594 = vunpack.c.l.b16 %v1520
    %v1595 = vunpack.c.l.b16 %v1521
    %v1596 = vunpack.c.h.b16 %v1521
    %v1597 = vunpack.c.l.b16 %v1522
    %v1598 = vunpack.c.l.b16 %v1523
    %v1599 = vunpack.c.h.b16 %v1523
    %v1600 = vunpack.c.l.b16 %v1524
    %v1601 = vunpack.c.l.b16 %v1525
    %v1602 = vunpack.c.h.b16 %v1525
    %v1603 = vunpack.c.l.b16 %v1526
    %v1604 = vunpack.c.l.b16 %v1527
    %v1605 = vunpack.c.h.b16 %v1527
    %v1606 = vunpack.c.l.b16 %v1528
    %v1607 = vunpack.c.l.b16 %v1529
    %v1608 = vunpack.c.h.b16 %v1529
    %v1609 = vunpack.c.l.b16 %v1530
    %v1610 = vunpack.c.l.b16 %v1531
    %v1611 = vunpack.c.h.b16 %v1531
    %v1612 = vunpack.c.l.b16 %v1532
    %v1613 = vpack.c.b16 %v1568, %v1565
    %v1614 = vpack.c.b16 %v1569, %v1566
    %v1615 = vpack.c.b16 %v1570, %v1567
    %v1616 = vpack.c.b16 %v1574, %v1571
    %v1617 = vpack.c.b16 %v1575, %v1572
    %v1618 = vpack.c.b16 %v1576, %v1573
    %v1619 = vpack.c.b16 %v1580, %v1577
    %v1620 = vpack.c.b16 %v1581, %v1578
    %v1621 = vpack.c.b16 %v1582, %v1579
    %v1622 = vpack.c.b16 %v1586, %v1583
    %v1623 = vpack.c.b16 %v1587, %v1584
    %v1624 = vpack.c.b16 %v1588, %v1585
    %v1625 = vpack.c.b16 %v1592, %v1589
    %v1626 = vpack.c.b16 %v1593, %v1590
    %v1627 = vpack.c.b16 %v1594, %v1591
    %v1628 = vpack.c.b16 %v1598, %v1595
    %v1629 = vpack.c.b16 %v1599, %v1596
    %v1630 = vpack.c.b16 %v1600, %v1597
    %v1631 = vpack.c.b16 %v1604, %v1601
    %v1632 = vpack.c.b16 %v1605, %v1602
    %v1633 = vpack.c.b16 %v1606, %v1603
    %v1634 = vpack.c.b16 %v1610, %v1607
    %v1635 = vpack.c.b16 %v1611, %v1608
    %v1636 = vpack.c.b16 %v1612, %v1609
    %1661 = vmatprep.subr.bf16.mxu0 %v1614
    %1662 = vmatpush1.bf16.msra.mxu0 %v1613
    %1663 = vmatprep.subr.bf16.mxu0 %v1617
    %1664 = vmatpush1.bf16.msra.mxu0 %v1616
    %1665 = vmatprep.subr.bf16.mxu0 %v1620
    %1666 = vmatpush1.bf16.msra.mxu0 %v1619
    %1667 = vmatprep.subr.bf16.mxu0 %v1623
    %1668 = vmatpush1.bf16.msra.mxu0 %v1622
    %1669 = vmatprep.subr.bf16.mxu0 %v1626
    %1670 = vmatpush1.bf16.msra.mxu0 %v1625
    %1671 = vmatprep.subr.bf16.mxu0 %v1629
    %1672 = vmatpush1.bf16.msra.mxu0 %v1628
    %1673 = vmatprep.subr.bf16.mxu0 %v1632
    %1674 = vmatpush1.bf16.msra.mxu0 %v1631
    %1675 = vmatprep.subr.bf16.mxu0 %v1635
    %1676 = vmatpush1.bf16.msra.mxu0 %v1634
    %1677 = vmatprep.subr.bf16.mxu0 0
    %1678 = vmatpush1.bf16.msra.mxu0 0
    %1679 = vmatprep.subr.bf16.mxu0 0
    %1680 = vmatpush1.bf16.msra.mxu0 0
    %1681 = vmatprep.subr.bf16.mxu0 0
    %1682 = vmatpush1.bf16.msra.mxu0 0
    %1683 = vmatprep.subr.bf16.mxu0 0
    %1684 = vmatpush1.bf16.msra.mxu0 0
    %1685 = vmatprep.subr.bf16.mxu0 0
    %1686 = vmatpush1.bf16.msra.mxu0 0
    %1687 = vmatprep.subr.bf16.mxu0 0
    %1688 = vmatpush1.bf16.msra.mxu0 0
    %1689 = vmatprep.subr.bf16.mxu0 0
    %1690 = vmatpush1.bf16.msra.mxu0 0
    %1691 = vmatprep.subr.bf16.mxu0 0
    %1692 = vmatpush1.bf16.msra.mxu0 0
    %1693 = vmatprep.mubr.bf16.mxu0 0
    %1694 = vmatmul.mubr.bf16.gmra.mrb[0].mxu0 %v1492
    %v1695 = vpop.f32.mrb[0].mxu0
    %v1696 = vadd.f32 0.0, %v1695
    %v1697 = vpop.f32.mrb[0].mxu0
    %v1698 = vadd.f32 0.0, %v1697
    %v1699 = vpop.f32.mrb[0].mxu0
    %v1700 = vadd.f32 0.0, %v1699
    %v1701 = vpop.f32.mrb[0].mxu0
    %v1702 = vadd.f32 0.0, %v1701
    %1703 = vmatprep.mubr.bf16.mxu0 0
    %1704 = vmatmul.mubr.bf16.gmra.mrb[0].mxu0 %v1493
    %v1705 = vpop.f32.mrb[0].mxu0
    %v1706 = vadd.f32 0.0, %v1705
    %v1707 = vpop.f32.mrb[0].mxu0
    %v1708 = vadd.f32 0.0, %v1707
    %v1709 = vpop.f32.mrb[0].mxu0
    %v1710 = vadd.f32 0.0, %v1709
    %v1711 = vpop.f32.mrb[0].mxu0
    %v1712 = vadd.f32 0.0, %v1711
    %1713 = vmatprep.mubr.bf16.mxu0 0
    %1714 = vmatmul.mubr.bf16.gmra.mrb[0].mxu0 %v1494
    %v1715 = vpop.f32.mrb[0].mxu0
    %v1716 = vadd.f32 0.0, %v1715
    %v1717 = vpop.f32.mrb[0].mxu0
    %v1718 = vadd.f32 0.0, %v1717
    %v1719 = vpop.f32.mrb[0].mxu0
    %v1720 = vadd.f32 0.0, %v1719
    %v1721 = vpop.f32.mrb[0].mxu0
    %v1722 = vadd.f32 0.0, %v1721
    %1723 = vmatprep.mubr.bf16.mxu0 0
    %1724 = vmatmul.mubr.bf16.gmra.mrb[0].mxu0 %v1495
    %v1725 = vpop.f32.mrb[0].mxu0
    %v1726 = vadd.f32 0.0, %v1725
    %v1727 = vpop.f32.mrb[0].mxu0
    %v1728 = vadd.f32 0.0, %v1727
    %v1729 = vpop.f32.mrb[0].mxu0
    %v1730 = vadd.f32 0.0, %v1729
    %v1731 = vpop.f32.mrb[0].mxu0
    %v1732 = vadd.f32 0.0, %v1731
    %1733 = vmatprep.mubr.bf16.mxu0 0
    %1734 = vmatmul.mubr.bf16.gmra.mrb[0].mxu0 %v1496
    %v1735 = vpop.f32.mrb[0].mxu0
    %v1736 = vadd.f32 0.0, %v1735
    %v1737 = vpop.f32.mrb[0].mxu0
    %v1738 = vadd.f32 0.0, %v1737
    %v1739 = vpop.f32.mrb[0].mxu0
    %v1740 = vadd.f32 0.0, %v1739
    %v1741 = vpop.f32.mrb[0].mxu0
    %v1742 = vadd.f32 0.0, %v1741
    %1743 = vmatprep.mubr.bf16.mxu0 0
    %1744 = vmatmul.mubr.bf16.gmra.mrb[0].mxu0 %v1497
    %v1745 = vpop.f32.mrb[0].mxu0
    %v1746 = vadd.f32 0.0, %v1745
    %v1747 = vpop.f32.mrb[0].mxu0
    %v1748 = vadd.f32 0.0, %v1747
    %v1749 = vpop.f32.mrb[0].mxu0
    %v1750 = vadd.f32 0.0, %v1749
    %v1751 = vpop.f32.mrb[0].mxu0
    %v1752 = vadd.f32 0.0, %v1751
    %1753 = vmatprep.mubr.bf16.mxu0 0
    %1754 = vmatmul.mubr.bf16.gmra.mrb[0].mxu0 %v1498
    %v1755 = vpop.f32.mrb[0].mxu0
    %v1756 = vadd.f32 0.0, %v1755
    %v1757 = vpop.f32.mrb[0].mxu0
    %v1758 = vadd.f32 0.0, %v1757
    %v1759 = vpop.f32.mrb[0].mxu0
    %v1760 = vadd.f32 0.0, %v1759
    %v1761 = vpop.f32.mrb[0].mxu0
    %v1762 = vadd.f32 0.0, %v1761
    %1763 = vmatprep.mubr.bf16.mxu0 0
    %1764 = vmatmul.mubr.bf16.gmra.mrb[0].mxu0 %v1499
    %v1765 = vpop.f32.mrb[0].mxu0
    %v1766 = vadd.f32 0.0, %v1765
    %v1767 = vpop.f32.mrb[0].mxu0
    %v1768 = vadd.f32 0.0, %v1767
    %v1769 = vpop.f32.mrb[0].mxu0
    %v1770 = vadd.f32 0.0, %v1769
    %v1771 = vpop.f32.mrb[0].mxu0
    %v1772 = vadd.f32 0.0, %v1771
    %1773 = vdwg.mxu0
    %1774 = vmatprep.subr.bf16.mxu0 0
    %1775 = vmatpush1.bf16.msra.mxu0 %v1615
    %1776 = vmatprep.subr.bf16.mxu0 0
    %1777 = vmatpush1.bf16.msra.mxu0 %v1618
    %1778 = vmatprep.subr.bf16.mxu0 0
    %1779 = vmatpush1.bf16.msra.mxu0 %v1621
    %1780 = vmatprep.subr.bf16.mxu0 0
    %1781 = vmatpush1.bf16.msra.mxu0 %v1624
    %1782 = vmatprep.subr.bf16.mxu0 0
    %1783 = vmatpush1.bf16.msra.mxu0 %v1627
    %1784 = vmatprep.subr.bf16.mxu0 0
    %1785 = vmatpush1.bf16.msra.mxu0 %v1630
    %1786 = vmatprep.subr.bf16.mxu0 0
    %1787 = vmatpush1.bf16.msra.mxu0 %v1633
    %1788 = vmatprep.subr.bf16.mxu0 0
    %1789 = vmatpush1.bf16.msra.mxu0 %v1636
    %1790 = vmatprep.subr.bf16.mxu0 0
    %1791 = vmatpush1.bf16.msra.mxu0 0
    %1792 = vmatprep.subr.bf16.mxu0 0
    %1793 = vmatpush1.bf16.msra.mxu0 0
    %1794 = vmatprep.subr.bf16.mxu0 0
    %1795 = vmatpush1.bf16.msra.mxu0 0
    %1796 = vmatprep.subr.bf16.mxu0 0
    %1797 = vmatpush1.bf16.msra.mxu0 0
    %1798 = vmatprep.subr.bf16.mxu0 0
    %1799 = vmatpush1.bf16.msra.mxu0 0
    %1800 = vmatprep.subr.bf16.mxu0 0
    %1801 = vmatpush1.bf16.msra.mxu0 0
    %1802 = vmatprep.subr.bf16.mxu0 0
    %1803 = vmatpush1.bf16.msra.mxu0 0
    %1804 = vmatprep.subr.bf16.mxu0 0
    %1805 = vmatpush1.bf16.msra.mxu0 0
    %1806 = vmatprep.mubr.bf16.mxu0 0
    %1807 = vmatmul.mubr.bf16.gmra.mrb[0].mxu0 %v1492
    %v1808 = vpop.f32.mrb[0].mxu0
    %v1809 = vadd.f32 0.0, %v1808
    %v1810 = vpop.f32.mrb[0].mxu0
    %v1811 = vpop.f32.mrb[0].mxu0
    %v1812 = vadd.f32 0.0, %v1811
    %v1813 = vpop.f32.mrb[0].mxu0
    %1814 = vmatprep.mubr.bf16.mxu0 0
    %1815 = vmatmul.mubr.bf16.gmra.mrb[0].mxu0 %v1493
    %v1816 = vpop.f32.mrb[0].mxu0
    %v1817 = vadd.f32 0.0, %v1816
    %v1818 = vpop.f32.mrb[0].mxu0
    %v1819 = vpop.f32.mrb[0].mxu0
    %v1820 = vadd.f32 0.0, %v1819
    %v1821 = vpop.f32.mrb[0].mxu0
    %1822 = vmatprep.mubr.bf16.mxu0 0
    %1823 = vmatmul.mubr.bf16.gmra.mrb[0].mxu0 %v1494
    %v1824 = vpop.f32.mrb[0].mxu0
    %v1825 = vadd.f32 0.0, %v1824
    %v1826 = vpop.f32.mrb[0].mxu0
    %v1827 = vpop.f32.mrb[0].mxu0
    %v1828 = vadd.f32 0.0, %v1827
    %v1829 = vpop.f32.mrb[0].mxu0
    %1830 = vmatprep.mubr.bf16.mxu0 0
    %1831 = vmatmul.mubr.bf16.gmra.mrb[0].mxu0 %v1495
    %v1832 = vpop.f32.mrb[0].mxu0
    %v1833 = vadd.f32 0.0, %v1832
    %v1834 = vpop.f32.mrb[0].mxu0
    %v1835 = vpop.f32.mrb[0].mxu0
    %v1836 = vadd.f32 0.0, %v1835
    %v1837 = vpop.f32.mrb[0].mxu0
    %1838 = vmatprep.mubr.bf16.mxu0 0
    %1839 = vmatmul.mubr.bf16.gmra.mrb[0].mxu0 %v1496
    %v1840 = vpop.f32.mrb[0].mxu0
    %v1841 = vadd.f32 0.0, %v1840
    %v1842 = vpop.f32.mrb[0].mxu0
    %v1843 = vpop.f32.mrb[0].mxu0
    %v1844 = vadd.f32 0.0, %v1843
    %v1845 = vpop.f32.mrb[0].mxu0
    %1846 = vmatprep.mubr.bf16.mxu0 0
    %1847 = vmatmul.mubr.bf16.gmra.mrb[0].mxu0 %v1497
    %v1848 = vpop.f32.mrb[0].mxu0
    %v1849 = vadd.f32 0.0, %v1848
    %v1850 = vpop.f32.mrb[0].mxu0
    %v1851 = vpop.f32.mrb[0].mxu0
    %v1852 = vadd.f32 0.0, %v1851
    %v1853 = vpop.f32.mrb[0].mxu0
    %1854 = vmatprep.mubr.bf16.mxu0 0
    %1855 = vmatmul.mubr.bf16.gmra.mrb[0].mxu0 %v1498
    %v1856 = vpop.f32.mrb[0].mxu0
    %v1857 = vadd.f32 0.0, %v1856
    %v1858 = vpop.f32.mrb[0].mxu0
    %v1859 = vpop.f32.mrb[0].mxu0
    %v1860 = vadd.f32 0.0, %v1859
    %v1861 = vpop.f32.mrb[0].mxu0
    %1862 = vmatprep.mubr.bf16.mxu0 0
    %1863 = vmatmul.mubr.bf16.gmra.mrb[0].mxu0 %v1499
    %v1864 = vpop.f32.mrb[0].mxu0
    %v1865 = vadd.f32 0.0, %v1864
    %v1866 = vpop.f32.mrb[0].mxu0
    %v1867 = vpop.f32.mrb[0].mxu0
    %v1868 = vadd.f32 0.0, %v1867
    %v1869 = vpop.f32.mrb[0].mxu0
    %1870 = vdwg.mxu0
    %v1871 = vpack.c.bf16 %v1700, %v1696
    %v1872 = vpack.c.bf16 %v1702, %v1698
    %v1873 = vpack.c.bf16 %v1812, %v1809
    %v1874 = vpack.c.bf16 %v1710, %v1706
    %v1875 = vpack.c.bf16 %v1712, %v1708
    %v1876 = vpack.c.bf16 %v1820, %v1817
    %v1877 = vpack.c.bf16 %v1720, %v1716
    %v1878 = vpack.c.bf16 %v1722, %v1718
    %v1879 = vpack.c.bf16 %v1828, %v1825
    %v1880 = vpack.c.bf16 %v1730, %v1726
    %v1881 = vpack.c.bf16 %v1732, %v1728
    %v1882 = vpack.c.bf16 %v1836, %v1833
    %v1883 = vpack.c.bf16 %v1740, %v1736
    %v1884 = vpack.c.bf16 %v1742, %v1738
    %v1885 = vpack.c.bf16 %v1844, %v1841
    %v1886 = vpack.c.bf16 %v1750, %v1746
    %v1887 = vpack.c.bf16 %v1752, %v1748
    %v1888 = vpack.c.bf16 %v1852, %v1849
    %v1889 = vpack.c.bf16 %v1760, %v1756
    %v1890 = vpack.c.bf16 %v1762, %v1758
    %v1891 = vpack.c.bf16 %v1860, %v1857
    %v1892 = vpack.c.bf16 %v1770, %v1766
    %v1893 = vpack.c.bf16 %v1772, %v1768
    %v1894 = vpack.c.bf16 %v1868, %v1865
    %v1895 = vld [vmem:[#allocation2] sm:$0xf]
    %v1896 = vld [vmem:[#allocation2 + $0x4] sm:$0xf]
    %v1897 = vld [vmem:[#allocation2 + $0x8] sm:$0xf]
    %v1898 = vld [vmem:[#allocation2 + $0xc] sm:$0xf]
    %v1899 = vld [vmem:[#allocation2 + $0x10] sm:$0xf]
    %v1900 = vld [vmem:[#allocation2 + $0x14] sm:$0xf]
    %v1901 = vld [vmem:[#allocation2 + $0x18] sm:$0xf]
    %v1902 = vld [vmem:[#allocation2 + $0x1c] sm:$0xf]
    %s1903 = scalar_lea.vmem [#allocation2], 32
    %v1904 = vld [vmem:[%s1903] sm:$0xf]
    %v1905 = vld [vmem:[%s1903 + $0x4] sm:$0xf]
    %v1906 = vld [vmem:[%s1903 + $0x8] sm:$0xf]
    %v1907 = vld [vmem:[%s1903 + $0xc] sm:$0xf]
    %v1908 = vld [vmem:[%s1903 + $0x10] sm:$0xf]
    %v1909 = vld [vmem:[%s1903 + $0x14] sm:$0xf]
    %v1910 = vld [vmem:[%s1903 + $0x18] sm:$0xf]
    %v1911 = vld [vmem:[%s1903 + $0x1c] sm:$0xf]
    %v1920 = vunpack.c.l.b16 %v1904
    %v1921 = vunpack.c.l.b16 %v1905
    %v1922 = vunpack.c.l.b16 %v1906
    %v1923 = vunpack.c.l.b16 %v1907
    %v1924 = vunpack.c.l.b16 %v1908
    %v1925 = vunpack.c.l.b16 %v1909
    %v1926 = vunpack.c.l.b16 %v1910
    %v1927 = vunpack.c.l.b16 %v1911
    %v1928 = vpack.c.b16 %v1921, %v1920
    %v1929 = vpack.c.b16 %v1923, %v1922
    %v1930 = vpack.c.b16 %v1925, %v1924
    %v1931 = vpack.c.b16 %v1927, %v1926
    %1936 = vmatprep.subr.bf16.mxu0 0
    %1937 = vmatpush1.bf16.msra.mxu0 %v1872
    %1938 = vmatprep.subr.bf16.mxu0 0
    %1939 = vmatpush1.bf16.msra.mxu0 %v1875
    %1940 = vmatprep.subr.bf16.mxu0 0
    %1941 = vmatpush1.bf16.msra.mxu0 %v1878
    %1942 = vmatprep.subr.bf16.mxu0 0
    %1943 = vmatpush1.bf16.msra.mxu0 %v1881
    %1944 = vmatprep.subr.bf16.mxu0 0
    %1945 = vmatpush1.bf16.msra.mxu0 %v1884
    %1946 = vmatprep.subr.bf16.mxu0 0
    %1947 = vmatpush1.bf16.msra.mxu0 %v1887
    %1948 = vmatprep.subr.bf16.mxu0 0
    %1949 = vmatpush1.bf16.msra.mxu0 %v1890
    %1950 = vmatprep.subr.bf16.mxu0 0
    %1951 = vmatpush1.bf16.msra.mxu0 %v1893
    %1952 = vmatprep.subr.bf16.mxu0 0
    %1953 = vmatpush1.bf16.msra.mxu0 0
    %1954 = vmatprep.subr.bf16.mxu0 0
    %1955 = vmatpush1.bf16.msra.mxu0 0
    %1956 = vmatprep.subr.bf16.mxu0 0
    %1957 = vmatpush1.bf16.msra.mxu0 0
    %1958 = vmatprep.subr.bf16.mxu0 0
    %1959 = vmatpush1.bf16.msra.mxu0 0
    %1960 = vmatprep.subr.bf16.mxu0 0
    %1961 = vmatpush1.bf16.msra.mxu0 0
    %1962 = vmatprep.subr.bf16.mxu0 0
    %1963 = vmatpush1.bf16.msra.mxu0 0
    %1964 = vmatprep.subr.bf16.mxu0 0
    %1965 = vmatpush1.bf16.msra.mxu0 0
    %1966 = vmatprep.subr.bf16.mxu0 0
    %1967 = vmatpush1.bf16.msra.mxu0 0
    %1968 = vmatprep.mubr.bf16.mxu0 0
    %1969 = vmatmul.mubr.bf16.gmra.mrb[0].mxu0 %v1928
    %v1970 = vpop.f32.mrb[0].mxu0
    %v1971 = vadd.f32 0.0, %v1970
    %v1972 = vpop.f32.mrb[0].mxu0
    %v1973 = vpop.f32.mrb[0].mxu0
    %v1974 = vadd.f32 0.0, %v1973
    %v1975 = vpop.f32.mrb[0].mxu0
    %1976 = vmatprep.mubr.bf16.mxu0 0
    %1977 = vmatmul.mubr.bf16.gmra.mrb[0].mxu0 %v1929
    %v1978 = vpop.f32.mrb[0].mxu0
    %v1979 = vadd.f32 0.0, %v1978
    %v1980 = vpop.f32.mrb[0].mxu0
    %v1981 = vpop.f32.mrb[0].mxu0
    %v1982 = vadd.f32 0.0, %v1981
    %v1983 = vpop.f32.mrb[0].mxu0
    %1984 = vmatprep.mubr.bf16.mxu0 0
    %1985 = vmatmul.mubr.bf16.gmra.mrb[0].mxu0 %v1930
    %v1986 = vpop.f32.mrb[0].mxu0
    %v1987 = vadd.f32 0.0, %v1986
    %v1988 = vpop.f32.mrb[0].mxu0
    %v1989 = vpop.f32.mrb[0].mxu0
    %v1990 = vadd.f32 0.0, %v1989
    %v1991 = vpop.f32.mrb[0].mxu0
    %1992 = vmatprep.mubr.bf16.mxu0 0
    %1993 = vmatmul.mubr.bf16.gmra.mrb[0].mxu0 %v1931
    %v1994 = vpop.f32.mrb[0].mxu0
    %v1995 = vadd.f32 0.0, %v1994
    %v1996 = vpop.f32.mrb[0].mxu0
    %v1997 = vpop.f32.mrb[0].mxu0
    %v1998 = vadd.f32 0.0, %v1997
    %v1999 = vpop.f32.mrb[0].mxu0
    %2000 = vdwg.mxu0
    %v2009 = vunpack.c.l.b16 %v1895
    %v2010 = vunpack.c.l.b16 %v1896
    %v2011 = vunpack.c.l.b16 %v1897
    %v2012 = vunpack.c.l.b16 %v1898
    %v2013 = vunpack.c.l.b16 %v1899
    %v2014 = vunpack.c.l.b16 %v1900
    %v2015 = vunpack.c.l.b16 %v1901
    %v2016 = vunpack.c.l.b16 %v1902
    %v2017 = vpack.c.b16 %v2010, %v2009
    %v2018 = vpack.c.b16 %v2012, %v2011
    %v2019 = vpack.c.b16 %v2014, %v2013
    %v2020 = vpack.c.b16 %v2016, %v2015
    %2025 = vmatprep.subr.bf16.mxu0 0
    %2026 = vmatpush1.bf16.msra.mxu0 %v1871
    %2027 = vmatprep.subr.bf16.mxu0 0
    %2028 = vmatpush1.bf16.msra.mxu0 %v1874
    %2029 = vmatprep.subr.bf16.mxu0 0
    %2030 = vmatpush1.bf16.msra.mxu0 %v1877
    %2031 = vmatprep.subr.bf16.mxu0 0
    %2032 = vmatpush1.bf16.msra.mxu0 %v1880
    %2033 = vmatprep.subr.bf16.mxu0 0
    %2034 = vmatpush1.bf16.msra.mxu0 %v1883
    %2035 = vmatprep.subr.bf16.mxu0 0
    %2036 = vmatpush1.bf16.msra.mxu0 %v1886
    %2037 = vmatprep.subr.bf16.mxu0 0
    %2038 = vmatpush1.bf16.msra.mxu0 %v1889
    %2039 = vmatprep.subr.bf16.mxu0 0
    %2040 = vmatpush1.bf16.msra.mxu0 %v1892
    %2041 = vmatprep.subr.bf16.mxu0 0
    %2042 = vmatpush1.bf16.msra.mxu0 0
    %2043 = vmatprep.subr.bf16.mxu0 0
    %2044 = vmatpush1.bf16.msra.mxu0 0
    %2045 = vmatprep.subr.bf16.mxu0 0
    %2046 = vmatpush1.bf16.msra.mxu0 0
    %2047 = vmatprep.subr.bf16.mxu0 0
    %2048 = vmatpush1.bf16.msra.mxu0 0
    %2049 = vmatprep.subr.bf16.mxu0 0
    %2050 = vmatpush1.bf16.msra.mxu0 0
    %2051 = vmatprep.subr.bf16.mxu0 0
    %2052 = vmatpush1.bf16.msra.mxu0 0
    %2053 = vmatprep.subr.bf16.mxu0 0
    %2054 = vmatpush1.bf16.msra.mxu0 0
    %2055 = vmatprep.subr.bf16.mxu0 0
    %2056 = vmatpush1.bf16.msra.mxu0 0
    %2057 = vmatprep.mubr.bf16.mxu0 0
    %2058 = vmatmul.mubr.bf16.gmra.mrb[0].mxu0 %v2017
    %v2059 = vpop.f32.mrb[0].mxu0
    %v2060 = vadd.f32 %v1971, %v2059
    %v2061 = vpop.f32.mrb[0].mxu0
    %v2062 = vpop.f32.mrb[0].mxu0
    %v2063 = vadd.f32 %v1974, %v2062
    %v2064 = vpop.f32.mrb[0].mxu0
    %2065 = vmatprep.mubr.bf16.mxu0 0
    %2066 = vmatmul.mubr.bf16.gmra.mrb[0].mxu0 %v2018
    %v2067 = vpop.f32.mrb[0].mxu0
    %v2068 = vadd.f32 %v1979, %v2067
    %v2069 = vpop.f32.mrb[0].mxu0
    %v2070 = vpop.f32.mrb[0].mxu0
    %v2071 = vadd.f32 %v1982, %v2070
    %v2072 = vpop.f32.mrb[0].mxu0
    %2073 = vmatprep.mubr.bf16.mxu0 0
    %2074 = vmatmul.mubr.bf16.gmra.mrb[0].mxu0 %v2019
    %v2075 = vpop.f32.mrb[0].mxu0
    %v2076 = vadd.f32 %v1987, %v2075
    %v2077 = vpop.f32.mrb[0].mxu0
    %v2078 = vpop.f32.mrb[0].mxu0
    %v2079 = vadd.f32 %v1990, %v2078
    %v2080 = vpop.f32.mrb[0].mxu0
    %2081 = vmatprep.mubr.bf16.mxu0 0
    %2082 = vmatmul.mubr.bf16.gmra.mrb[0].mxu0 %v2020
    %v2083 = vpop.f32.mrb[0].mxu0
    %v2084 = vadd.f32 %v1995, %v2083
    %v2085 = vpop.f32.mrb[0].mxu0
    %v2086 = vpop.f32.mrb[0].mxu0
    %v2087 = vadd.f32 %v1998, %v2086
    %v2088 = vpop.f32.mrb[0].mxu0
    %2089 = vdwg.mxu0
    %s2090 = scalar_lea.vmem [#allocation2], 64
    %v2091 = vld [vmem:[%s2090] sm:$0xf]
    %v2092 = vld [vmem:[%s2090 + $0x4] sm:$0xf]
    %v2093 = vld [vmem:[%s2090 + $0x8] sm:$0xf]
    %v2094 = vld [vmem:[%s2090 + $0xc] sm:$0xf]
    %v2095 = vld [vmem:[%s2090 + $0x10] sm:$0xf]
    %v2096 = vld [vmem:[%s2090 + $0x14] sm:$0xf]
    %v2097 = vld [vmem:[%s2090 + $0x18] sm:$0xf]
    %v2098 = vld [vmem:[%s2090 + $0x1c] sm:$0xf]
    %v2107 = vunpack.c.l.b16 %v2091
    %v2108 = vunpack.c.l.b16 %v2092
    %v2109 = vunpack.c.l.b16 %v2093
    %v2110 = vunpack.c.l.b16 %v2094
    %v2111 = vunpack.c.l.b16 %v2095
    %v2112 = vunpack.c.l.b16 %v2096
    %v2113 = vunpack.c.l.b16 %v2097
    %v2114 = vunpack.c.l.b16 %v2098
    %v2115 = vpack.c.b16 %v2108, %v2107
    %v2116 = vpack.c.b16 %v2110, %v2109
    %v2117 = vpack.c.b16 %v2112, %v2111
    %v2118 = vpack.c.b16 %v2114, %v2113
    %2123 = vmatprep.subr.bf16.mxu0 0
    %2124 = vmatpush1.bf16.msra.mxu0 %v1873
    %2125 = vmatprep.subr.bf16.mxu0 0
    %2126 = vmatpush1.bf16.msra.mxu0 %v1876
    %2127 = vmatprep.subr.bf16.mxu0 0
    %2128 = vmatpush1.bf16.msra.mxu0 %v1879
    %2129 = vmatprep.subr.bf16.mxu0 0
    %2130 = vmatpush1.bf16.msra.mxu0 %v1882
    %2131 = vmatprep.subr.bf16.mxu0 0
    %2132 = vmatpush1.bf16.msra.mxu0 %v1885
    %2133 = vmatprep.subr.bf16.mxu0 0
    %2134 = vmatpush1.bf16.msra.mxu0 %v1888
    %2135 = vmatprep.subr.bf16.mxu0 0
    %2136 = vmatpush1.bf16.msra.mxu0 %v1891
    %2137 = vmatprep.subr.bf16.mxu0 0
    %2138 = vmatpush1.bf16.msra.mxu0 %v1894
    %2139 = vmatprep.subr.bf16.mxu0 0
    %2140 = vmatpush1.bf16.msra.mxu0 0
    %2141 = vmatprep.subr.bf16.mxu0 0
    %2142 = vmatpush1.bf16.msra.mxu0 0
    %2143 = vmatprep.subr.bf16.mxu0 0
    %2144 = vmatpush1.bf16.msra.mxu0 0
    %2145 = vmatprep.subr.bf16.mxu0 0
    %2146 = vmatpush1.bf16.msra.mxu0 0
    %2147 = vmatprep.subr.bf16.mxu0 0
    %2148 = vmatpush1.bf16.msra.mxu0 0
    %2149 = vmatprep.subr.bf16.mxu0 0
    %2150 = vmatpush1.bf16.msra.mxu0 0
    %2151 = vmatprep.subr.bf16.mxu0 0
    %2152 = vmatpush1.bf16.msra.mxu0 0
    %2153 = vmatprep.subr.bf16.mxu0 0
    %2154 = vmatpush1.bf16.msra.mxu0 0
    %2155 = vmatprep.mubr.bf16.mxu0 0
    %2156 = vmatmul.mubr.bf16.gmra.mrb[0].mxu0 %v2115
    %v2157 = vpop.f32.mrb[0].mxu0
    %v2158 = vadd.f32 0.0, %v2157
    %v2159 = vpop.f32.mrb[0].mxu0
    %v2160 = vpop.f32.mrb[0].mxu0
    %v2161 = vadd.f32 0.0, %v2160
    %v2162 = vpop.f32.mrb[0].mxu0
    %2163 = vmatprep.mubr.bf16.mxu0 0
    %2164 = vmatmul.mubr.bf16.gmra.mrb[0].mxu0 %v2116
    %v2165 = vpop.f32.mrb[0].mxu0
    %v2166 = vadd.f32 0.0, %v2165
    %v2167 = vpop.f32.mrb[0].mxu0
    %v2168 = vpop.f32.mrb[0].mxu0
    %v2169 = vadd.f32 0.0, %v2168
    %v2170 = vpop.f32.mrb[0].mxu0
    %2171 = vmatprep.mubr.bf16.mxu0 0
    %2172 = vmatmul.mubr.bf16.gmra.mrb[0].mxu0 %v2117
    %v2173 = vpop.f32.mrb[0].mxu0
    %v2174 = vadd.f32 0.0, %v2173
    %v2175 = vpop.f32.mrb[0].mxu0
    %v2176 = vpop.f32.mrb[0].mxu0
    %v2177 = vadd.f32 0.0, %v2176
    %v2178 = vpop.f32.mrb[0].mxu0
    %2179 = vmatprep.mubr.bf16.mxu0 0
    %2180 = vmatmul.mubr.bf16.gmra.mrb[0].mxu0 %v2118
    %v2181 = vpop.f32.mrb[0].mxu0
    %v2182 = vadd.f32 0.0, %v2181
    %v2183 = vpop.f32.mrb[0].mxu0
    %v2184 = vpop.f32.mrb[0].mxu0
    %v2185 = vadd.f32 0.0, %v2184
    %v2186 = vpop.f32.mrb[0].mxu0
    %2187 = vdwg.mxu0
    %v2188 = vadd.f32 %v2060, %v2158
    %v2189 = vadd.f32 %v2063, %v2161
    %v2190 = vadd.f32 %v2068, %v2166
    %v2191 = vadd.f32 %v2071, %v2169
    %v2192 = vadd.f32 %v2076, %v2174
    %v2193 = vadd.f32 %v2079, %v2177
    %v2194 = vadd.f32 %v2084, %v2182
    %v2195 = vadd.f32 %v2087, %v2185
    %s2196 = scalar_lea.vmem [#allocation10], 1
    %v2197 = vld [vmem:[%s2196] sm:$0x1]
    %v2199 = vlaneseq
    %v2200 = vshrl.u32 %v2199, 7
    %v2201 = vsub.s32 0, %v2200
    %v2202 = vrot.slane %v2197, %v2201
    %v2204 = vadd.f32 %v2188, %v2202
    %v2205 = vadd.f32 %v2189, %v2202
    %v2206 = vadd.f32 %v2190, %v2202
    %v2207 = vadd.f32 %v2191, %v2202
    %v2208 = vadd.f32 %v2192, %v2202
    %v2209 = vadd.f32 %v2193, %v2202
    %v2210 = vadd.f32 %v2194, %v2202
    %v2211 = vadd.f32 %v2195, %v2202
    %vm2212 = vcmp.ge.f32.partialorder %v2204, 0.0
    %vm2213 = vcmp.ge.f32.partialorder %v2205, 0.0
    %vm2214 = vcmp.ge.f32.partialorder %v2206, 0.0
    %vm2215 = vcmp.ge.f32.partialorder %v2207, 0.0
    %vm2216 = vcmp.ge.f32.partialorder %v2208, 0.0
    %vm2217 = vcmp.ge.f32.partialorder %v2209, 0.0
    %vm2218 = vcmp.ge.f32.partialorder %v2210, 0.0
    %vm2219 = vcmp.ge.f32.partialorder %v2211, 0.0
    %v2220 = vmul.f32 %v2204, 0.2
    %v2221 = vmul.f32 %v2205, 0.2
    %v2222 = vmul.f32 %v2206, 0.2
    %v2223 = vmul.f32 %v2207, 0.2
    %v2224 = vmul.f32 %v2208, 0.2
    %v2225 = vmul.f32 %v2209, 0.2
    %v2226 = vmul.f32 %v2210, 0.2
    %v2227 = vmul.f32 %v2211, 0.2
    %v2228 = vsel %vm2212, %v2204, %v2220
    %v2229 = vsel %vm2213, %v2205, %v2221
    %v2230 = vsel %vm2214, %v2206, %v2222
    %v2231 = vsel %vm2215, %v2207, %v2223
    %v2232 = vsel %vm2216, %v2208, %v2224
    %v2233 = vsel %vm2217, %v2209, %v2225
    %v2234 = vsel %vm2218, %v2210, %v2226
    %v2235 = vsel %vm2219, %v2211, %v2227
    %v2236 = vpack.c.bf16 %v2229, %v2228
    %v2237 = vpack.c.bf16 %v2231, %v2230
    %v2238 = vpack.c.bf16 %v2233, %v2232
    %v2239 = vpack.c.bf16 %v2235, %v2234
    %s2240 = scalar_lea.vmem [#allocation8], 384
    %v2241 = vld [vmem:[%s2240] sm:$0xff]
    %v2242 = vld [vmem:[%s2240 + $0x8] sm:$0xf]
    %v2243 = vld [vmem:[%s2240 + $0xc] sm:$0xff]
    %v2244 = vld [vmem:[%s2240 + $0x14] sm:$0xf]
    %v2245 = vld [vmem:[%s2240 + $0x18] sm:$0xff]
    %v2246 = vld [vmem:[%s2240 + $0x20] sm:$0xf]
    %v2247 = vld [vmem:[%s2240 + $0x24] sm:$0xff]
    %v2248 = vld [vmem:[%s2240 + $0x2c] sm:$0xf]
    %v2249 = vld [vmem:[%s2240 + $0x30] sm:$0xff]
    %v2250 = vld [vmem:[%s2240 + $0x38] sm:$0xf]
    %v2251 = vld [vmem:[%s2240 + $0x3c] sm:$0xff]
    %v2252 = vld [vmem:[%s2240 + $0x44] sm:$0xf]
    %v2253 = vld [vmem:[%s2240 + $0x48] sm:$0xff]
    %v2254 = vld [vmem:[%s2240 + $0x50] sm:$0xf]
    %v2255 = vld [vmem:[%s2240 + $0x54] sm:$0xff]
    %v2256 = vld [vmem:[%s2240 + $0x5c] sm:$0xf]
    %v2257 = vld [vmem:[%s2240 + $0x60] sm:$0xff]
    %v2258 = vld [vmem:[%s2240 + $0x68] sm:$0xf]
    %v2259 = vld [vmem:[%s2240 + $0x6c] sm:$0xff]
    %v2260 = vld [vmem:[%s2240 + $0x74] sm:$0xf]
    %v2261 = vld [vmem:[%s2240 + $0x78] sm:$0xff]
    %v2262 = vld [vmem:[%s2240 + $0x80] sm:$0xf]
    %v2263 = vld [vmem:[%s2240 + $0x84] sm:$0xff]
    %v2264 = vld [vmem:[%s2240 + $0x8c] sm:$0xf]
    %v2265 = vld [vmem:[%s2240 + $0x90] sm:$0xff]
    %v2266 = vld [vmem:[%s2240 + $0x98] sm:$0xf]
    %v2267 = vld [vmem:[%s2240 + $0x9c] sm:$0xff]
    %v2268 = vld [vmem:[%s2240 + $0xa4] sm:$0xf]
    %v2269 = vld [vmem:[%s2240 + $0xa8] sm:$0xff]
    %v2270 = vld [vmem:[%s2240 + $0xb0] sm:$0xf]
    %v2271 = vld [vmem:[%s2240 + $0xb4] sm:$0xff]
    %v2272 = vld [vmem:[%s2240 + $0xbc] sm:$0xf]
    %v2305 = vunpack.c.l.b16 %v2241
    %v2306 = vunpack.c.h.b16 %v2241
    %v2307 = vunpack.c.l.b16 %v2242
    %v2308 = vunpack.c.l.b16 %v2243
    %v2309 = vunpack.c.h.b16 %v2243
    %v2310 = vunpack.c.l.b16 %v2244
    %v2311 = vunpack.c.l.b16 %v2245
    %v2312 = vunpack.c.h.b16 %v2245
    %v2313 = vunpack.c.l.b16 %v2246
    %v2314 = vunpack.c.l.b16 %v2247
    %v2315 = vunpack.c.h.b16 %v2247
    %v2316 = vunpack.c.l.b16 %v2248
    %v2317 = vunpack.c.l.b16 %v2249
    %v2318 = vunpack.c.h.b16 %v2249
    %v2319 = vunpack.c.l.b16 %v2250
    %v2320 = vunpack.c.l.b16 %v2251
    %v2321 = vunpack.c.h.b16 %v2251
    %v2322 = vunpack.c.l.b16 %v2252
    %v2323 = vunpack.c.l.b16 %v2253
    %v2324 = vunpack.c.h.b16 %v2253
    %v2325 = vunpack.c.l.b16 %v2254
    %v2326 = vunpack.c.l.b16 %v2255
    %v2327 = vunpack.c.h.b16 %v2255
    %v2328 = vunpack.c.l.b16 %v2256
    %v2329 = vunpack.c.l.b16 %v2257
    %v2330 = vunpack.c.h.b16 %v2257
    %v2331 = vunpack.c.l.b16 %v2258
    %v2332 = vunpack.c.l.b16 %v2259
    %v2333 = vunpack.c.h.b16 %v2259
    %v2334 = vunpack.c.l.b16 %v2260
    %v2335 = vunpack.c.l.b16 %v2261
    %v2336 = vunpack.c.h.b16 %v2261
    %v2337 = vunpack.c.l.b16 %v2262
    %v2338 = vunpack.c.l.b16 %v2263
    %v2339 = vunpack.c.h.b16 %v2263
    %v2340 = vunpack.c.l.b16 %v2264
    %v2341 = vunpack.c.l.b16 %v2265
    %v2342 = vunpack.c.h.b16 %v2265
    %v2343 = vunpack.c.l.b16 %v2266
    %v2344 = vunpack.c.l.b16 %v2267
    %v2345 = vunpack.c.h.b16 %v2267
    %v2346 = vunpack.c.l.b16 %v2268
    %v2347 = vunpack.c.l.b16 %v2269
    %v2348 = vunpack.c.h.b16 %v2269
    %v2349 = vunpack.c.l.b16 %v2270
    %v2350 = vunpack.c.l.b16 %v2271
    %v2351 = vunpack.c.h.b16 %v2271
    %v2352 = vunpack.c.l.b16 %v2272
    %v2353 = vpack.c.b16 %v2308, %v2305
    %v2354 = vpack.c.b16 %v2309, %v2306
    %v2355 = vpack.c.b16 %v2310, %v2307
    %v2356 = vpack.c.b16 %v2314, %v2311
    %v2357 = vpack.c.b16 %v2315, %v2312
    %v2358 = vpack.c.b16 %v2316, %v2313
    %v2359 = vpack.c.b16 %v2320, %v2317
    %v2360 = vpack.c.b16 %v2321, %v2318
    %v2361 = vpack.c.b16 %v2322, %v2319
    %v2362 = vpack.c.b16 %v2326, %v2323
    %v2363 = vpack.c.b16 %v2327, %v2324
    %v2364 = vpack.c.b16 %v2328, %v2325
    %v2365 = vpack.c.b16 %v2332, %v2329
    %v2366 = vpack.c.b16 %v2333, %v2330
    %v2367 = vpack.c.b16 %v2334, %v2331
    %v2368 = vpack.c.b16 %v2338, %v2335
    %v2369 = vpack.c.b16 %v2339, %v2336
    %v2370 = vpack.c.b16 %v2340, %v2337
    %v2371 = vpack.c.b16 %v2344, %v2341
    %v2372 = vpack.c.b16 %v2345, %v2342
    %v2373 = vpack.c.b16 %v2346, %v2343
    %v2374 = vpack.c.b16 %v2350, %v2347
    %v2375 = vpack.c.b16 %v2351, %v2348
    %v2376 = vpack.c.b16 %v2352, %v2349
    %2401 = vmatprep.subr.bf16.mxu0 %v2354
    %2402 = vmatpush1.bf16.msra.mxu0 %v2353
    %2403 = vmatprep.subr.bf16.mxu0 %v2357
    %2404 = vmatpush1.bf16.msra.mxu0 %v2356
    %2405 = vmatprep.subr.bf16.mxu0 %v2360
    %2406 = vmatpush1.bf16.msra.mxu0 %v2359
    %2407 = vmatprep.subr.bf16.mxu0 %v2363
    %2408 = vmatpush1.bf16.msra.mxu0 %v2362
    %2409 = vmatprep.subr.bf16.mxu0 %v2366
    %2410 = vmatpush1.bf16.msra.mxu0 %v2365
    %2411 = vmatprep.subr.bf16.mxu0 %v2369
    %2412 = vmatpush1.bf16.msra.mxu0 %v2368
    %2413 = vmatprep.subr.bf16.mxu0 %v2372
    %2414 = vmatpush1.bf16.msra.mxu0 %v2371
    %2415 = vmatprep.subr.bf16.mxu0 %v2375
    %2416 = vmatpush1.bf16.msra.mxu0 %v2374
    %2417 = vmatprep.subr.bf16.mxu0 0
    %2418 = vmatpush1.bf16.msra.mxu0 0
    %2419 = vmatprep.subr.bf16.mxu0 0
    %2420 = vmatpush1.bf16.msra.mxu0 0
    %2421 = vmatprep.subr.bf16.mxu0 0
    %2422 = vmatpush1.bf16.msra.mxu0 0
    %2423 = vmatprep.subr.bf16.mxu0 0
    %2424 = vmatpush1.bf16.msra.mxu0 0
    %2425 = vmatprep.subr.bf16.mxu0 0
    %2426 = vmatpush1.bf16.msra.mxu0 0
    %2427 = vmatprep.subr.bf16.mxu0 0
    %2428 = vmatpush1.bf16.msra.mxu0 0
    %2429 = vmatprep.subr.bf16.mxu0 0
    %2430 = vmatpush1.bf16.msra.mxu0 0
    %2431 = vmatprep.subr.bf16.mxu0 0
    %2432 = vmatpush1.bf16.msra.mxu0 0
    %2433 = vmatprep.mubr.bf16.mxu0 0
    %2434 = vmatmul.mubr.bf16.gmra.mrb[0].mxu0 %v2236
    %v2435 = vpop.f32.mrb[0].mxu0
    %v2436 = vadd.f32 0.0, %v2435
    %v2437 = vpop.f32.mrb[0].mxu0
    %v2438 = vadd.f32 0.0, %v2437
    %v2439 = vpop.f32.mrb[0].mxu0
    %v2440 = vadd.f32 0.0, %v2439
    %v2441 = vpop.f32.mrb[0].mxu0
    %v2442 = vadd.f32 0.0, %v2441
    %2443 = vmatprep.mubr.bf16.mxu0 0
    %2444 = vmatmul.mubr.bf16.gmra.mrb[0].mxu0 %v2237
    %v2445 = vpop.f32.mrb[0].mxu0
    %v2446 = vadd.f32 0.0, %v2445
    %v2447 = vpop.f32.mrb[0].mxu0
    %v2448 = vadd.f32 0.0, %v2447
    %v2449 = vpop.f32.mrb[0].mxu0
    %v2450 = vadd.f32 0.0, %v2449
    %v2451 = vpop.f32.mrb[0].mxu0
    %v2452 = vadd.f32 0.0, %v2451
    %2453 = vmatprep.mubr.bf16.mxu0 0
    %2454 = vmatmul.mubr.bf16.gmra.mrb[0].mxu0 %v2238
    %v2455 = vpop.f32.mrb[0].mxu0
    %v2456 = vadd.f32 0.0, %v2455
    %v2457 = vpop.f32.mrb[0].mxu0
    %v2458 = vadd.f32 0.0, %v2457
    %v2459 = vpop.f32.mrb[0].mxu0
    %v2460 = vadd.f32 0.0, %v2459
    %v2461 = vpop.f32.mrb[0].mxu0
    %v2462 = vadd.f32 0.0, %v2461
    %2463 = vmatprep.mubr.bf16.mxu0 0
    %2464 = vmatmul.mubr.bf16.gmra.mrb[0].mxu0 %v2239
    %v2465 = vpop.f32.mrb[0].mxu0
    %v2466 = vadd.f32 0.0, %v2465
    %v2467 = vpop.f32.mrb[0].mxu0
    %v2468 = vadd.f32 0.0, %v2467
    %v2469 = vpop.f32.mrb[0].mxu0
    %v2470 = vadd.f32 0.0, %v2469
    %v2471 = vpop.f32.mrb[0].mxu0
    %v2472 = vadd.f32 0.0, %v2471
    %2473 = vdwg.mxu0
    %2474 = vmatprep.subr.bf16.mxu0 0
    %2475 = vmatpush1.bf16.msra.mxu0 %v2355
    %2476 = vmatprep.subr.bf16.mxu0 0
    %2477 = vmatpush1.bf16.msra.mxu0 %v2358
    %2478 = vmatprep.subr.bf16.mxu0 0
    %2479 = vmatpush1.bf16.msra.mxu0 %v2361
    %2480 = vmatprep.subr.bf16.mxu0 0
    %2481 = vmatpush1.bf16.msra.mxu0 %v2364
    %2482 = vmatprep.subr.bf16.mxu0 0
    %2483 = vmatpush1.bf16.msra.mxu0 %v2367
    %2484 = vmatprep.subr.bf16.mxu0 0
    %2485 = vmatpush1.bf16.msra.mxu0 %v2370
    %2486 = vmatprep.subr.bf16.mxu0 0
    %2487 = vmatpush1.bf16.msra.mxu0 %v2373
    %2488 = vmatprep.subr.bf16.mxu0 0
    %2489 = vmatpush1.bf16.msra.mxu0 %v2376
    %2490 = vmatprep.subr.bf16.mxu0 0
    %2491 = vmatpush1.bf16.msra.mxu0 0
    %2492 = vmatprep.subr.bf16.mxu0 0
    %2493 = vmatpush1.bf16.msra.mxu0 0
    %2494 = vmatprep.subr.bf16.mxu0 0
    %2495 = vmatpush1.bf16.msra.mxu0 0
    %2496 = vmatprep.subr.bf16.mxu0 0
    %2497 = vmatpush1.bf16.msra.mxu0 0
    %2498 = vmatprep.subr.bf16.mxu0 0
    %2499 = vmatpush1.bf16.msra.mxu0 0
    %2500 = vmatprep.subr.bf16.mxu0 0
    %2501 = vmatpush1.bf16.msra.mxu0 0
    %2502 = vmatprep.subr.bf16.mxu0 0
    %2503 = vmatpush1.bf16.msra.mxu0 0
    %2504 = vmatprep.subr.bf16.mxu0 0
    %2505 = vmatpush1.bf16.msra.mxu0 0
    %2506 = vmatprep.mubr.bf16.mxu0 0
    %2507 = vmatmul.mubr.bf16.gmra.mrb[0].mxu0 %v2236
    %v2508 = vpop.f32.mrb[0].mxu0
    %v2509 = vadd.f32 0.0, %v2508
    %v2510 = vpop.f32.mrb[0].mxu0
    %v2511 = vpop.f32.mrb[0].mxu0
    %v2512 = vadd.f32 0.0, %v2511
    %v2513 = vpop.f32.mrb[0].mxu0
    %2514 = vmatprep.mubr.bf16.mxu0 0
    %2515 = vmatmul.mubr.bf16.gmra.mrb[0].mxu0 %v2237
    %v2516 = vpop.f32.mrb[0].mxu0
    %v2517 = vadd.f32 0.0, %v2516
    %v2518 = vpop.f32.mrb[0].mxu0
    %v2519 = vpop.f32.mrb[0].mxu0
    %v2520 = vadd.f32 0.0, %v2519
    %v2521 = vpop.f32.mrb[0].mxu0
    %2522 = vmatprep.mubr.bf16.mxu0 0
    %2523 = vmatmul.mubr.bf16.gmra.mrb[0].mxu0 %v2238
    %v2524 = vpop.f32.mrb[0].mxu0
    %v2525 = vadd.f32 0.0, %v2524
    %v2526 = vpop.f32.mrb[0].mxu0
    %v2527 = vpop.f32.mrb[0].mxu0
    %v2528 = vadd.f32 0.0, %v2527
    %v2529 = vpop.f32.mrb[0].mxu0
    %2530 = vmatprep.mubr.bf16.mxu0 0
    %2531 = vmatmul.mubr.bf16.gmra.mrb[0].mxu0 %v2239
    %v2532 = vpop.f32.mrb[0].mxu0
    %v2533 = vadd.f32 0.0, %v2532
    %v2534 = vpop.f32.mrb[0].mxu0
    %v2535 = vpop.f32.mrb[0].mxu0
    %v2536 = vadd.f32 0.0, %v2535
    %v2537 = vpop.f32.mrb[0].mxu0
    %2538 = vdwg.mxu0
    %v2539 = vpack.c.bf16 %v2440, %v2436
    %v2540 = vpack.c.bf16 %v2442, %v2438
    %v2541 = vpack.c.bf16 %v2512, %v2509
    %v2542 = vpack.c.bf16 %v2450, %v2446
    %v2543 = vpack.c.bf16 %v2452, %v2448
    %v2544 = vpack.c.bf16 %v2520, %v2517
    %v2545 = vpack.c.bf16 %v2460, %v2456
    %v2546 = vpack.c.bf16 %v2462, %v2458
    %v2547 = vpack.c.bf16 %v2528, %v2525
    %v2548 = vpack.c.bf16 %v2470, %v2466
    %v2549 = vpack.c.bf16 %v2472, %v2468
    %v2550 = vpack.c.bf16 %v2536, %v2533
    %v2551 = vld [vmem:[#allocation5] sm:$0xf]
    %v2552 = vld [vmem:[#allocation5 + $0x4] sm:$0xf]
    %v2553 = vld [vmem:[#allocation5 + $0x8] sm:$0xf]
    %v2554 = vld [vmem:[#allocation5 + $0xc] sm:$0xf]
    %v2555 = vld [vmem:[#allocation5 + $0x10] sm:$0xf]
    %v2556 = vld [vmem:[#allocation5 + $0x14] sm:$0xf]
    %s2557 = scalar_lea.vmem [#allocation5], 24
    %v2558 = vld [vmem:[%s2557] sm:$0xf]
    %v2559 = vld [vmem:[%s2557 + $0x4] sm:$0xf]
    %v2560 = vld [vmem:[%s2557 + $0x8] sm:$0xf]
    %v2561 = vld [vmem:[%s2557 + $0xc] sm:$0xf]
    %v2562 = vld [vmem:[%s2557 + $0x10] sm:$0xf]
    %v2563 = vld [vmem:[%s2557 + $0x14] sm:$0xf]
    %v2570 = vunpack.c.l.b16 %v2558
    %v2571 = vunpack.c.l.b16 %v2559
    %v2572 = vunpack.c.l.b16 %v2560
    %v2573 = vunpack.c.l.b16 %v2561
    %v2574 = vunpack.c.l.b16 %v2562
    %v2575 = vunpack.c.l.b16 %v2563
    %v2576 = vpack.c.b16 %v2571, %v2570
    %v2577 = vpack.c.b16 %v2573, %v2572
    %v2578 = vpack.c.b16 %v2575, %v2574
    %vm2579 = vcmask 523264
    %v2581 = vsel %vm2579, %v2576, 0
    %v2584 = vsel %vm2579, %v2577, 0
    %v2587 = vsel %vm2579, %v2578, 0
    %2589 = vmatprep.subr.bf16.mxu0 0
    %2590 = vmatpush1.bf16.msra.mxu0 %v2540
    %2591 = vmatprep.subr.bf16.mxu0 0
    %2592 = vmatpush1.bf16.msra.mxu0 %v2543
    %2593 = vmatprep.subr.bf16.mxu0 0
    %2594 = vmatpush1.bf16.msra.mxu0 %v2546
    %2595 = vmatprep.subr.bf16.mxu0 0
    %2596 = vmatpush1.bf16.msra.mxu0 %v2549
    %2597 = vmatprep.subr.bf16.mxu0 0
    %2598 = vmatpush1.bf16.msra.mxu0 0
    %2599 = vmatprep.subr.bf16.mxu0 0
    %2600 = vmatpush1.bf16.msra.mxu0 0
    %2601 = vmatprep.subr.bf16.mxu0 0
    %2602 = vmatpush1.bf16.msra.mxu0 0
    %2603 = vmatprep.subr.bf16.mxu0 0
    %2604 = vmatpush1.bf16.msra.mxu0 0
    %2605 = vmatprep.subr.bf16.mxu0 0
    %2606 = vmatpush1.bf16.msra.mxu0 0
    %2607 = vmatprep.subr.bf16.mxu0 0
    %2608 = vmatpush1.bf16.msra.mxu0 0
    %2609 = vmatprep.subr.bf16.mxu0 0
    %2610 = vmatpush1.bf16.msra.mxu0 0
    %2611 = vmatprep.subr.bf16.mxu0 0
    %2612 = vmatpush1.bf16.msra.mxu0 0
    %2613 = vmatprep.subr.bf16.mxu0 0
    %2614 = vmatpush1.bf16.msra.mxu0 0
    %2615 = vmatprep.subr.bf16.mxu0 0
    %2616 = vmatpush1.bf16.msra.mxu0 0
    %2617 = vmatprep.subr.bf16.mxu0 0
    %2618 = vmatpush1.bf16.msra.mxu0 0
    %2619 = vmatprep.subr.bf16.mxu0 0
    %2620 = vmatpush1.bf16.msra.mxu0 0
    %2621 = vmatprep.mubr.bf16.mxu0 0
    %2622 = vmatmul.mubr.bf16.gmra.mrb[0].mxu0 %v2581
    %v2623 = vpop.f32.mrb[0].mxu0
    %v2624 = vadd.f32 0.0, %v2623
    %v2625 = vpop.f32.mrb[0].mxu0
    %v2626 = vpop.f32.mrb[0].mxu0
    %v2627 = vadd.f32 0.0, %v2626
    %v2628 = vpop.f32.mrb[0].mxu0
    %2629 = vmatprep.mubr.bf16.mxu0 0
    %2630 = vmatmul.mubr.bf16.gmra.mrb[0].mxu0 %v2584
    %v2631 = vpop.f32.mrb[0].mxu0
    %v2632 = vadd.f32 0.0, %v2631
    %v2633 = vpop.f32.mrb[0].mxu0
    %v2634 = vpop.f32.mrb[0].mxu0
    %v2635 = vadd.f32 0.0, %v2634
    %v2636 = vpop.f32.mrb[0].mxu0
    %2637 = vmatprep.mubr.bf16.mxu0 0
    %2638 = vmatmul.mubr.bf16.gmra.mrb[0].mxu0 %v2587
    %v2639 = vpop.f32.mrb[0].mxu0
    %v2640 = vadd.f32 0.0, %v2639
    %v2641 = vpop.f32.mrb[0].mxu0
    %v2642 = vpop.f32.mrb[0].mxu0
    %v2643 = vadd.f32 0.0, %v2642
    %v2644 = vpop.f32.mrb[0].mxu0
    %2645 = vdwg.mxu0
    %v2652 = vunpack.c.l.b16 %v2551
    %v2653 = vunpack.c.l.b16 %v2552
    %v2654 = vunpack.c.l.b16 %v2553
    %v2655 = vunpack.c.l.b16 %v2554
    %v2656 = vunpack.c.l.b16 %v2555
    %v2657 = vunpack.c.l.b16 %v2556
    %v2658 = vpack.c.b16 %v2653, %v2652
    %v2659 = vpack.c.b16 %v2655, %v2654
    %v2660 = vpack.c.b16 %v2657, %v2656
    %v2662 = vsel %vm2579, %v2658, 0
    %v2665 = vsel %vm2579, %v2659, 0
    %v2668 = vsel %vm2579, %v2660, 0
    %2670 = vmatprep.subr.bf16.mxu0 0
    %2671 = vmatpush1.bf16.msra.mxu0 %v2539
    %2672 = vmatprep.subr.bf16.mxu0 0
    %2673 = vmatpush1.bf16.msra.mxu0 %v2542
    %2674 = vmatprep.subr.bf16.mxu0 0
    %2675 = vmatpush1.bf16.msra.mxu0 %v2545
    %2676 = vmatprep.subr.bf16.mxu0 0
    %2677 = vmatpush1.bf16.msra.mxu0 %v2548
    %2678 = vmatprep.subr.bf16.mxu0 0
    %2679 = vmatpush1.bf16.msra.mxu0 0
    %2680 = vmatprep.subr.bf16.mxu0 0
    %2681 = vmatpush1.bf16.msra.mxu0 0
    %2682 = vmatprep.subr.bf16.mxu0 0
    %2683 = vmatpush1.bf16.msra.mxu0 0
    %2684 = vmatprep.subr.bf16.mxu0 0
    %2685 = vmatpush1.bf16.msra.mxu0 0
    %2686 = vmatprep.subr.bf16.mxu0 0
    %2687 = vmatpush1.bf16.msra.mxu0 0
    %2688 = vmatprep.subr.bf16.mxu0 0
    %2689 = vmatpush1.bf16.msra.mxu0 0
    %2690 = vmatprep.subr.bf16.mxu0 0
    %2691 = vmatpush1.bf16.msra.mxu0 0
    %2692 = vmatprep.subr.bf16.mxu0 0
    %2693 = vmatpush1.bf16.msra.mxu0 0
    %2694 = vmatprep.subr.bf16.mxu0 0
    %2695 = vmatpush1.bf16.msra.mxu0 0
    %2696 = vmatprep.subr.bf16.mxu0 0
    %2697 = vmatpush1.bf16.msra.mxu0 0
    %2698 = vmatprep.subr.bf16.mxu0 0
    %2699 = vmatpush1.bf16.msra.mxu0 0
    %2700 = vmatprep.subr.bf16.mxu0 0
    %2701 = vmatpush1.bf16.msra.mxu0 0
    %2702 = vmatprep.mubr.bf16.mxu0 0
    %2703 = vmatmul.mubr.bf16.gmra.mrb[0].mxu0 %v2662
    %v2704 = vpop.f32.mrb[0].mxu0
    %v2705 = vadd.f32 %v2624, %v2704
    %v2706 = vpop.f32.mrb[0].mxu0
    %v2707 = vpop.f32.mrb[0].mxu0
    %v2708 = vadd.f32 %v2627, %v2707
    %v2709 = vpop.f32.mrb[0].mxu0
    %2710 = vmatprep.mubr.bf16.mxu0 0
    %2711 = vmatmul.mubr.bf16.gmra.mrb[0].mxu0 %v2665
    %v2712 = vpop.f32.mrb[0].mxu0
    %v2713 = vadd.f32 %v2632, %v2712
    %v2714 = vpop.f32.mrb[0].mxu0
    %v2715 = vpop.f32.mrb[0].mxu0
    %v2716 = vadd.f32 %v2635, %v2715
    %v2717 = vpop.f32.mrb[0].mxu0
    %2718 = vmatprep.mubr.bf16.mxu0 0
    %2719 = vmatmul.mubr.bf16.gmra.mrb[0].mxu0 %v2668
    %v2720 = vpop.f32.mrb[0].mxu0
    %v2721 = vadd.f32 %v2640, %v2720
    %v2722 = vpop.f32.mrb[0].mxu0
    %v2723 = vpop.f32.mrb[0].mxu0
    %v2724 = vadd.f32 %v2643, %v2723
    %v2725 = vpop.f32.mrb[0].mxu0
    %2726 = vdwg.mxu0
    %s2727 = scalar_lea.vmem [#allocation5], 48
    %v2728 = vld [vmem:[%s2727] sm:$0xf]
    %v2729 = vld [vmem:[%s2727 + $0x4] sm:$0xf]
    %v2730 = vld [vmem:[%s2727 + $0x8] sm:$0xf]
    %v2731 = vld [vmem:[%s2727 + $0xc] sm:$0xf]
    %v2732 = vld [vmem:[%s2727 + $0x10] sm:$0xf]
    %v2733 = vld [vmem:[%s2727 + $0x14] sm:$0xf]
    %v2740 = vunpack.c.l.b16 %v2728
    %v2741 = vunpack.c.l.b16 %v2729
    %v2742 = vunpack.c.l.b16 %v2730
    %v2743 = vunpack.c.l.b16 %v2731
    %v2744 = vunpack.c.l.b16 %v2732
    %v2745 = vunpack.c.l.b16 %v2733
    %v2746 = vpack.c.b16 %v2741, %v2740
    %v2747 = vpack.c.b16 %v2743, %v2742
    %v2748 = vpack.c.b16 %v2745, %v2744
    %v2750 = vsel %vm2579, %v2746, 0
    %v2753 = vsel %vm2579, %v2747, 0
    %v2756 = vsel %vm2579, %v2748, 0
    %2758 = vmatprep.subr.bf16.mxu0 0
    %2759 = vmatpush1.bf16.msra.mxu0 %v2541
    %2760 = vmatprep.subr.bf16.mxu0 0
    %2761 = vmatpush1.bf16.msra.mxu0 %v2544
    %2762 = vmatprep.subr.bf16.mxu0 0
    %2763 = vmatpush1.bf16.msra.mxu0 %v2547
    %2764 = vmatprep.subr.bf16.mxu0 0
    %2765 = vmatpush1.bf16.msra.mxu0 %v2550
    %2766 = vmatprep.subr.bf16.mxu0 0
    %2767 = vmatpush1.bf16.msra.mxu0 0
    %2768 = vmatprep.subr.bf16.mxu0 0
    %2769 = vmatpush1.bf16.msra.mxu0 0
    %2770 = vmatprep.subr.bf16.mxu0 0
    %2771 = vmatpush1.bf16.msra.mxu0 0
    %2772 = vmatprep.subr.bf16.mxu0 0
    %2773 = vmatpush1.bf16.msra.mxu0 0
    %2774 = vmatprep.subr.bf16.mxu0 0
    %2775 = vmatpush1.bf16.msra.mxu0 0
    %2776 = vmatprep.subr.bf16.mxu0 0
    %2777 = vmatpush1.bf16.msra.mxu0 0
    %2778 = vmatprep.subr.bf16.mxu0 0
    %2779 = vmatpush1.bf16.msra.mxu0 0
    %2780 = vmatprep.subr.bf16.mxu0 0
    %2781 = vmatpush1.bf16.msra.mxu0 0
    %2782 = vmatprep.subr.bf16.mxu0 0
    %2783 = vmatpush1.bf16.msra.mxu0 0
    %2784 = vmatprep.subr.bf16.mxu0 0
    %2785 = vmatpush1.bf16.msra.mxu0 0
    %2786 = vmatprep.subr.bf16.mxu0 0
    %2787 = vmatpush1.bf16.msra.mxu0 0
    %2788 = vmatprep.subr.bf16.mxu0 0
    %2789 = vmatpush1.bf16.msra.mxu0 0
    %2790 = vmatprep.mubr.bf16.mxu0 0
    %2791 = vmatmul.mubr.bf16.gmra.mrb[0].mxu0 %v2750
    %v2792 = vpop.f32.mrb[0].mxu0
    %v2793 = vadd.f32 0.0, %v2792
    %v2794 = vpop.f32.mrb[0].mxu0
    %v2795 = vpop.f32.mrb[0].mxu0
    %v2796 = vadd.f32 0.0, %v2795
    %v2797 = vpop.f32.mrb[0].mxu0
    %2798 = vmatprep.mubr.bf16.mxu0 0
    %2799 = vmatmul.mubr.bf16.gmra.mrb[0].mxu0 %v2753
    %v2800 = vpop.f32.mrb[0].mxu0
    %v2801 = vadd.f32 0.0, %v2800
    %v2802 = vpop.f32.mrb[0].mxu0
    %v2803 = vpop.f32.mrb[0].mxu0
    %v2804 = vadd.f32 0.0, %v2803
    %v2805 = vpop.f32.mrb[0].mxu0
    %2806 = vmatprep.mubr.bf16.mxu0 0
    %2807 = vmatmul.mubr.bf16.gmra.mrb[0].mxu0 %v2756
    %v2808 = vpop.f32.mrb[0].mxu0
    %v2809 = vadd.f32 0.0, %v2808
    %v2810 = vpop.f32.mrb[0].mxu0
    %v2811 = vpop.f32.mrb[0].mxu0
    %v2812 = vadd.f32 0.0, %v2811
    %v2813 = vpop.f32.mrb[0].mxu0
    %2814 = vdwg.mxu0
    %v2815 = vadd.f32 %v2705, %v2793
    %v2816 = vadd.f32 %v2708, %v2796
    %v2817 = vadd.f32 %v2713, %v2801
    %v2818 = vadd.f32 %v2716, %v2804
    %v2819 = vadd.f32 %v2721, %v2809
    %v2820 = vadd.f32 %v2724, %v2812
    %s2821 = scalar_lea.vmem [#allocation10], 2
    %v2822 = vld [vmem:[%s2821] sm:$0x1]
    %v2824 = vlaneseq
    %v2825 = vshrl.u32 %v2824, 7
    %v2826 = vsub.s32 0, %v2825
    %v2827 = vrot.slane %v2822, %v2826
    %v2829 = vadd.f32 %v2815, %v2827
    %v2830 = vadd.f32 %v2816, %v2827
    %v2831 = vadd.f32 %v2817, %v2827
    %v2832 = vadd.f32 %v2818, %v2827
    %v2833 = vadd.f32 %v2819, %v2827
    %v2834 = vadd.f32 %v2820, %v2827
    %vm2835 = vcmp.ge.f32.partialorder %v2829, 0.0
    %vm2836 = vcmp.ge.f32.partialorder %v2830, 0.0
    %vm2837 = vcmp.ge.f32.partialorder %v2831, 0.0
    %vm2838 = vcmp.ge.f32.partialorder %v2832, 0.0
    %vm2839 = vcmp.ge.f32.partialorder %v2833, 0.0
    %vm2840 = vcmp.ge.f32.partialorder %v2834, 0.0
    %v2841 = vmul.f32 %v2829, 0.2
    %v2842 = vmul.f32 %v2830, 0.2
    %v2843 = vmul.f32 %v2831, 0.2
    %v2844 = vmul.f32 %v2832, 0.2
    %v2845 = vmul.f32 %v2833, 0.2
    %v2846 = vmul.f32 %v2834, 0.2
    %v2847 = vsel %vm2835, %v2829, %v2841
    %v2848 = vsel %vm2836, %v2830, %v2842
    %v2849 = vsel %vm2837, %v2831, %v2843
    %v2850 = vsel %vm2838, %v2832, %v2844
    %v2851 = vsel %vm2839, %v2833, %v2845
    %v2852 = vsel %vm2840, %v2834, %v2846
    %v2853 = vpack.c.bf16 %v2848, %v2847
    %v2854 = vpack.c.bf16 %v2850, %v2849
    %v2855 = vpack.c.bf16 %v2852, %v2851
    %s2856 = scalar_lea.vmem [#allocation8], 576
    %v2857 = vld [vmem:[%s2856] sm:$0xff]
    %v2858 = vld [vmem:[%s2856 + $0x8] sm:$0xf]
    %v2859 = vld [vmem:[%s2856 + $0xc] sm:$0xff]
    %v2860 = vld [vmem:[%s2856 + $0x14] sm:$0xf]
    %v2861 = vld [vmem:[%s2856 + $0x18] sm:$0xff]
    %v2862 = vld [vmem:[%s2856 + $0x20] sm:$0xf]
    %v2863 = vld [vmem:[%s2856 + $0x24] sm:$0xff]
    %v2864 = vld [vmem:[%s2856 + $0x2c] sm:$0xf]
    %v2865 = vld [vmem:[%s2856 + $0x30] sm:$0xff]
    %v2866 = vld [vmem:[%s2856 + $0x38] sm:$0xf]
    %v2867 = vld [vmem:[%s2856 + $0x3c] sm:$0xff]
    %v2868 = vld [vmem:[%s2856 + $0x44] sm:$0xf]
    %v2869 = vld [vmem:[%s2856 + $0x48] sm:$0xff]
    %v2870 = vld [vmem:[%s2856 + $0x50] sm:$0xf]
    %v2871 = vld [vmem:[%s2856 + $0x54] sm:$0xff]
    %v2872 = vld [vmem:[%s2856 + $0x5c] sm:$0xf]
    %v2873 = vld [vmem:[%s2856 + $0x60] sm:$0xff]
    %v2874 = vld [vmem:[%s2856 + $0x68] sm:$0xf]
    %v2875 = vld [vmem:[%s2856 + $0x6c] sm:$0xff]
    %v2876 = vld [vmem:[%s2856 + $0x74] sm:$0xf]
    %v2877 = vld [vmem:[%s2856 + $0x78] sm:$0xff]
    %v2878 = vld [vmem:[%s2856 + $0x80] sm:$0xf]
    %v2879 = vld [vmem:[%s2856 + $0x84] sm:$0xff]
    %v2880 = vld [vmem:[%s2856 + $0x8c] sm:$0xf]
    %v2881 = vld [vmem:[%s2856 + $0x90] sm:$0xff]
    %v2882 = vld [vmem:[%s2856 + $0x98] sm:$0xf]
    %v2883 = vld [vmem:[%s2856 + $0x9c] sm:$0xff]
    %v2884 = vld [vmem:[%s2856 + $0xa4] sm:$0xf]
    %v2885 = vld [vmem:[%s2856 + $0xa8] sm:$0xff]
    %v2886 = vld [vmem:[%s2856 + $0xb0] sm:$0xf]
    %v2887 = vld [vmem:[%s2856 + $0xb4] sm:$0xff]
    %v2888 = vld [vmem:[%s2856 + $0xbc] sm:$0xf]
    %v2921 = vunpack.c.l.b16 %v2857
    %v2922 = vunpack.c.h.b16 %v2857
    %v2923 = vunpack.c.l.b16 %v2858
    %v2924 = vunpack.c.l.b16 %v2859
    %v2925 = vunpack.c.h.b16 %v2859
    %v2926 = vunpack.c.l.b16 %v2860
    %v2927 = vunpack.c.l.b16 %v2861
    %v2928 = vunpack.c.h.b16 %v2861
    %v2929 = vunpack.c.l.b16 %v2862
    %v2930 = vunpack.c.l.b16 %v2863
    %v2931 = vunpack.c.h.b16 %v2863
    %v2932 = vunpack.c.l.b16 %v2864
    %v2933 = vunpack.c.l.b16 %v2865
    %v2934 = vunpack.c.h.b16 %v2865
    %v2935 = vunpack.c.l.b16 %v2866
    %v2936 = vunpack.c.l.b16 %v2867
    %v2937 = vunpack.c.h.b16 %v2867
    %v2938 = vunpack.c.l.b16 %v2868
    %v2939 = vunpack.c.l.b16 %v2869
    %v2940 = vunpack.c.h.b16 %v2869
    %v2941 = vunpack.c.l.b16 %v2870
    %v2942 = vunpack.c.l.b16 %v2871
    %v2943 = vunpack.c.h.b16 %v2871
    %v2944 = vunpack.c.l.b16 %v2872
    %v2945 = vunpack.c.l.b16 %v2873
    %v2946 = vunpack.c.h.b16 %v2873
    %v2947 = vunpack.c.l.b16 %v2874
    %v2948 = vunpack.c.l.b16 %v2875
    %v2949 = vunpack.c.h.b16 %v2875
    %v2950 = vunpack.c.l.b16 %v2876
    %v2951 = vunpack.c.l.b16 %v2877
    %v2952 = vunpack.c.h.b16 %v2877
    %v2953 = vunpack.c.l.b16 %v2878
    %v2954 = vunpack.c.l.b16 %v2879
    %v2955 = vunpack.c.h.b16 %v2879
    %v2956 = vunpack.c.l.b16 %v2880
    %v2957 = vunpack.c.l.b16 %v2881
    %v2958 = vunpack.c.h.b16 %v2881
    %v2959 = vunpack.c.l.b16 %v2882
    %v2960 = vunpack.c.l.b16 %v2883
    %v2961 = vunpack.c.h.b16 %v2883
    %v2962 = vunpack.c.l.b16 %v2884
    %v2963 = vunpack.c.l.b16 %v2885
    %v2964 = vunpack.c.h.b16 %v2885
    %v2965 = vunpack.c.l.b16 %v2886
    %v2966 = vunpack.c.l.b16 %v2887
    %v2967 = vunpack.c.h.b16 %v2887
    %v2968 = vunpack.c.l.b16 %v2888
    %v2969 = vpack.c.b16 %v2924, %v2921
    %v2970 = vpack.c.b16 %v2925, %v2922
    %v2971 = vpack.c.b16 %v2926, %v2923
    %v2972 = vpack.c.b16 %v2930, %v2927
    %v2973 = vpack.c.b16 %v2931, %v2928
    %v2974 = vpack.c.b16 %v2932, %v2929
    %v2975 = vpack.c.b16 %v2936, %v2933
    %v2976 = vpack.c.b16 %v2937, %v2934
    %v2977 = vpack.c.b16 %v2938, %v2935
    %v2978 = vpack.c.b16 %v2942, %v2939
    %v2979 = vpack.c.b16 %v2943, %v2940
    %v2980 = vpack.c.b16 %v2944, %v2941
    %v2981 = vpack.c.b16 %v2948, %v2945
    %v2982 = vpack.c.b16 %v2949, %v2946
    %v2983 = vpack.c.b16 %v2950, %v2947
    %v2984 = vpack.c.b16 %v2954, %v2951
    %v2985 = vpack.c.b16 %v2955, %v2952
    %v2986 = vpack.c.b16 %v2956, %v2953
    %v2987 = vpack.c.b16 %v2960, %v2957
    %v2988 = vpack.c.b16 %v2961, %v2958
    %v2989 = vpack.c.b16 %v2962, %v2959
    %v2990 = vpack.c.b16 %v2966, %v2963
    %v2991 = vpack.c.b16 %v2967, %v2964
    %v2992 = vpack.c.b16 %v2968, %v2965
    %3017 = vmatprep.subr.bf16.mxu0 %v2970
    %3018 = vmatpush1.bf16.msra.mxu0 %v2969
    %3019 = vmatprep.subr.bf16.mxu0 %v2973
    %3020 = vmatpush1.bf16.msra.mxu0 %v2972
    %3021 = vmatprep.subr.bf16.mxu0 %v2976
    %3022 = vmatpush1.bf16.msra.mxu0 %v2975
    %3023 = vmatprep.subr.bf16.mxu0 %v2979
    %3024 = vmatpush1.bf16.msra.mxu0 %v2978
    %3025 = vmatprep.subr.bf16.mxu0 %v2982
    %3026 = vmatpush1.bf16.msra.mxu0 %v2981
    %3027 = vmatprep.subr.bf16.mxu0 %v2985
    %3028 = vmatpush1.bf16.msra.mxu0 %v2984
    %3029 = vmatprep.subr.bf16.mxu0 %v2988
    %3030 = vmatpush1.bf16.msra.mxu0 %v2987
    %3031 = vmatprep.subr.bf16.mxu0 %v2991
    %3032 = vmatpush1.bf16.msra.mxu0 %v2990
    %3033 = vmatprep.subr.bf16.mxu0 0
    %3034 = vmatpush1.bf16.msra.mxu0 0
    %3035 = vmatprep.subr.bf16.mxu0 0
    %3036 = vmatpush1.bf16.msra.mxu0 0
    %3037 = vmatprep.subr.bf16.mxu0 0
    %3038 = vmatpush1.bf16.msra.mxu0 0
    %3039 = vmatprep.subr.bf16.mxu0 0
    %3040 = vmatpush1.bf16.msra.mxu0 0
    %3041 = vmatprep.subr.bf16.mxu0 0
    %3042 = vmatpush1.bf16.msra.mxu0 0
    %3043 = vmatprep.subr.bf16.mxu0 0
    %3044 = vmatpush1.bf16.msra.mxu0 0
    %3045 = vmatprep.subr.bf16.mxu0 0
    %3046 = vmatpush1.bf16.msra.mxu0 0
    %3047 = vmatprep.subr.bf16.mxu0 0
    %3048 = vmatpush1.bf16.msra.mxu0 0
    %3049 = vmatprep.mubr.bf16.mxu0 0
    %3050 = vmatmul.mubr.bf16.gmra.mrb[0].mxu0 %v2853
    %v3051 = vpop.f32.mrb[0].mxu0
    %v3052 = vadd.f32 0.0, %v3051
    %v3053 = vpop.f32.mrb[0].mxu0
    %v3054 = vadd.f32 0.0, %v3053
    %v3055 = vpop.f32.mrb[0].mxu0
    %v3056 = vadd.f32 0.0, %v3055
    %v3057 = vpop.f32.mrb[0].mxu0
    %v3058 = vadd.f32 0.0, %v3057
    %3059 = vmatprep.mubr.bf16.mxu0 0
    %3060 = vmatmul.mubr.bf16.gmra.mrb[0].mxu0 %v2854
    %v3061 = vpop.f32.mrb[0].mxu0
    %v3062 = vadd.f32 0.0, %v3061
    %v3063 = vpop.f32.mrb[0].mxu0
    %v3064 = vadd.f32 0.0, %v3063
    %v3065 = vpop.f32.mrb[0].mxu0
    %v3066 = vadd.f32 0.0, %v3065
    %v3067 = vpop.f32.mrb[0].mxu0
    %v3068 = vadd.f32 0.0, %v3067
    %3069 = vmatprep.mubr.bf16.mxu0 0
    %3070 = vmatmul.mubr.bf16.gmra.mrb[0].mxu0 %v2855
    %v3071 = vpop.f32.mrb[0].mxu0
    %v3072 = vadd.f32 0.0, %v3071
    %v3073 = vpop.f32.mrb[0].mxu0
    %v3074 = vadd.f32 0.0, %v3073
    %v3075 = vpop.f32.mrb[0].mxu0
    %v3076 = vadd.f32 0.0, %v3075
    %v3077 = vpop.f32.mrb[0].mxu0
    %v3078 = vadd.f32 0.0, %v3077
    %3079 = vdwg.mxu0
    %3080 = vmatprep.subr.bf16.mxu0 0
    %3081 = vmatpush1.bf16.msra.mxu0 %v2971
    %3082 = vmatprep.subr.bf16.mxu0 0
    %3083 = vmatpush1.bf16.msra.mxu0 %v2974
    %3084 = vmatprep.subr.bf16.mxu0 0
    %3085 = vmatpush1.bf16.msra.mxu0 %v2977
    %3086 = vmatprep.subr.bf16.mxu0 0
    %3087 = vmatpush1.bf16.msra.mxu0 %v2980
    %3088 = vmatprep.subr.bf16.mxu0 0
    %3089 = vmatpush1.bf16.msra.mxu0 %v2983
    %3090 = vmatprep.subr.bf16.mxu0 0
    %3091 = vmatpush1.bf16.msra.mxu0 %v2986
    %3092 = vmatprep.subr.bf16.mxu0 0
    %3093 = vmatpush1.bf16.msra.mxu0 %v2989
    %3094 = vmatprep.subr.bf16.mxu0 0
    %3095 = vmatpush1.bf16.msra.mxu0 %v2992
    %3096 = vmatprep.subr.bf16.mxu0 0
    %3097 = vmatpush1.bf16.msra.mxu0 0
    %3098 = vmatprep.subr.bf16.mxu0 0
    %3099 = vmatpush1.bf16.msra.mxu0 0
    %3100 = vmatprep.subr.bf16.mxu0 0
    %3101 = vmatpush1.bf16.msra.mxu0 0
    %3102 = vmatprep.subr.bf16.mxu0 0
    %3103 = vmatpush1.bf16.msra.mxu0 0
    %3104 = vmatprep.subr.bf16.mxu0 0
    %3105 = vmatpush1.bf16.msra.mxu0 0
    %3106 = vmatprep.subr.bf16.mxu0 0
    %3107 = vmatpush1.bf16.msra.mxu0 0
    %3108 = vmatprep.subr.bf16.mxu0 0
    %3109 = vmatpush1.bf16.msra.mxu0 0
    %3110 = vmatprep.subr.bf16.mxu0 0
    %3111 = vmatpush1.bf16.msra.mxu0 0
    %3112 = vmatprep.mubr.bf16.mxu0 0
    %3113 = vmatmul.mubr.bf16.gmra.mrb[0].mxu0 %v2853
    %v3114 = vpop.f32.mrb[0].mxu0
    %v3115 = vadd.f32 0.0, %v3114
    %v3116 = vpop.f32.mrb[0].mxu0
    %v3117 = vpop.f32.mrb[0].mxu0
    %v3118 = vadd.f32 0.0, %v3117
    %v3119 = vpop.f32.mrb[0].mxu0
    %3120 = vmatprep.mubr.bf16.mxu0 0
    %3121 = vmatmul.mubr.bf16.gmra.mrb[0].mxu0 %v2854
    %v3122 = vpop.f32.mrb[0].mxu0
    %v3123 = vadd.f32 0.0, %v3122
    %v3124 = vpop.f32.mrb[0].mxu0
    %v3125 = vpop.f32.mrb[0].mxu0
    %v3126 = vadd.f32 0.0, %v3125
    %v3127 = vpop.f32.mrb[0].mxu0
    %3128 = vmatprep.mubr.bf16.mxu0 0
    %3129 = vmatmul.mubr.bf16.gmra.mrb[0].mxu0 %v2855
    %v3130 = vpop.f32.mrb[0].mxu0
    %v3131 = vadd.f32 0.0, %v3130
    %v3132 = vpop.f32.mrb[0].mxu0
    %v3133 = vpop.f32.mrb[0].mxu0
    %v3134 = vadd.f32 0.0, %v3133
    %v3135 = vpop.f32.mrb[0].mxu0
    %3136 = vdwg.mxu0
    %v3137 = vpack.c.bf16 %v3056, %v3052
    %v3138 = vpack.c.bf16 %v3058, %v3054
    %v3139 = vpack.c.bf16 %v3118, %v3115
    %v3140 = vpack.c.bf16 %v3066, %v3062
    %v3141 = vpack.c.bf16 %v3068, %v3064
    %v3142 = vpack.c.bf16 %v3126, %v3123
    %v3143 = vpack.c.bf16 %v3076, %v3072
    %v3144 = vpack.c.bf16 %v3078, %v3074
    %v3145 = vpack.c.bf16 %v3134, %v3131
    %v3146 = vld [vmem:[#allocation7] sm:$0xf]
    %v3147 = vld [vmem:[#allocation7 + $0x4] sm:$0xf]
    %v3148 = vld [vmem:[#allocation7 + $0x8] sm:$0xf]
    %v3149 = vld [vmem:[#allocation7 + $0xc] sm:$0xf]
    %s3150 = scalar_lea.vmem [#allocation7], 16
    %v3151 = vld [vmem:[%s3150] sm:$0xf]
    %v3152 = vld [vmem:[%s3150 + $0x4] sm:$0xf]
    %v3153 = vld [vmem:[%s3150 + $0x8] sm:$0xf]
    %v3154 = vld [vmem:[%s3150 + $0xc] sm:$0xf]
    %v3159 = vunpack.c.l.b16 %v3151
    %v3160 = vunpack.c.l.b16 %v3152
    %v3161 = vunpack.c.l.b16 %v3153
    %v3162 = vunpack.c.l.b16 %v3154
    %v3163 = vpack.c.b16 %v3160, %v3159
    %v3164 = vpack.c.b16 %v3162, %v3161
    %vm3165 = vcmask 392192
    %v3167 = vsel %vm3165, %v3163, 0
    %v3170 = vsel %vm3165, %v3164, 0
    %3172 = vmatprep.subr.bf16.mxu0 0
    %3173 = vmatpush1.bf16.msra.mxu0 %v3138
    %3174 = vmatprep.subr.bf16.mxu0 0
    %3175 = vmatpush1.bf16.msra.mxu0 %v3141
    %3176 = vmatprep.subr.bf16.mxu0 0
    %3177 = vmatpush1.bf16.msra.mxu0 %v3144
    %3178 = vmatprep.subr.bf16.mxu0 0
    %3179 = vmatpush1.bf16.msra.mxu0 0
    %3180 = vmatprep.subr.bf16.mxu0 0
    %3181 = vmatpush1.bf16.msra.mxu0 0
    %3182 = vmatprep.subr.bf16.mxu0 0
    %3183 = vmatpush1.bf16.msra.mxu0 0
    %3184 = vmatprep.subr.bf16.mxu0 0
    %3185 = vmatpush1.bf16.msra.mxu0 0
    %3186 = vmatprep.subr.bf16.mxu0 0
    %3187 = vmatpush1.bf16.msra.mxu0 0
    %3188 = vmatprep.subr.bf16.mxu0 0
    %3189 = vmatpush1.bf16.msra.mxu0 0
    %3190 = vmatprep.subr.bf16.mxu0 0
    %3191 = vmatpush1.bf16.msra.mxu0 0
    %3192 = vmatprep.subr.bf16.mxu0 0
    %3193 = vmatpush1.bf16.msra.mxu0 0
    %3194 = vmatprep.subr.bf16.mxu0 0
    %3195 = vmatpush1.bf16.msra.mxu0 0
    %3196 = vmatprep.subr.bf16.mxu0 0
    %3197 = vmatpush1.bf16.msra.mxu0 0
    %3198 = vmatprep.subr.bf16.mxu0 0
    %3199 = vmatpush1.bf16.msra.mxu0 0
    %3200 = vmatprep.subr.bf16.mxu0 0
    %3201 = vmatpush1.bf16.msra.mxu0 0
    %3202 = vmatprep.subr.bf16.mxu0 0
    %3203 = vmatpush1.bf16.msra.mxu0 0
    %3204 = vmatprep.mubr.bf16.mxu0 0
    %3205 = vmatmul.mubr.bf16.gmra.mrb[0].mxu0 %v3167
    %v3206 = vpop.f32.mrb[0].mxu0
    %v3207 = vadd.f32 0.0, %v3206
    %v3208 = vpop.f32.mrb[0].mxu0
    %v3209 = vpop.f32.mrb[0].mxu0
    %v3210 = vadd.f32 0.0, %v3209
    %v3211 = vpop.f32.mrb[0].mxu0
    %3212 = vmatprep.mubr.bf16.mxu0 0
    %3213 = vmatmul.mubr.bf16.gmra.mrb[0].mxu0 %v3170
    %v3214 = vpop.f32.mrb[0].mxu0
    %v3215 = vadd.f32 0.0, %v3214
    %v3216 = vpop.f32.mrb[0].mxu0
    %v3217 = vpop.f32.mrb[0].mxu0
    %v3218 = vpop.f32.mrb[0].mxu0
    %3219 = vdwg.mxu0
    %v3224 = vunpack.c.l.b16 %v3146
    %v3225 = vunpack.c.l.b16 %v3147
    %v3226 = vunpack.c.l.b16 %v3148
    %v3227 = vunpack.c.l.b16 %v3149
    %v3228 = vpack.c.b16 %v3225, %v3224
    %v3229 = vpack.c.b16 %v3227, %v3226
    %v3231 = vsel %vm3165, %v3228, 0
    %v3234 = vsel %vm3165, %v3229, 0
    %3236 = vmatprep.subr.bf16.mxu0 0
    %3237 = vmatpush1.bf16.msra.mxu0 %v3137
    %3238 = vmatprep.subr.bf16.mxu0 0
    %3239 = vmatpush1.bf16.msra.mxu0 %v3140
    %3240 = vmatprep.subr.bf16.mxu0 0
    %3241 = vmatpush1.bf16.msra.mxu0 %v3143
    %3242 = vmatprep.subr.bf16.mxu0 0
    %3243 = vmatpush1.bf16.msra.mxu0 0
    %3244 = vmatprep.subr.bf16.mxu0 0
    %3245 = vmatpush1.bf16.msra.mxu0 0
    %3246 = vmatprep.subr.bf16.mxu0 0
    %3247 = vmatpush1.bf16.msra.mxu0 0
    %3248 = vmatprep.subr.bf16.mxu0 0
    %3249 = vmatpush1.bf16.msra.mxu0 0
    %3250 = vmatprep.subr.bf16.mxu0 0
    %3251 = vmatpush1.bf16.msra.mxu0 0
    %3252 = vmatprep.subr.bf16.mxu0 0
    %3253 = vmatpush1.bf16.msra.mxu0 0
    %3254 = vmatprep.subr.bf16.mxu0 0
    %3255 = vmatpush1.bf16.msra.mxu0 0
    %3256 = vmatprep.subr.bf16.mxu0 0
    %3257 = vmatpush1.bf16.msra.mxu0 0
    %3258 = vmatprep.subr.bf16.mxu0 0
    %3259 = vmatpush1.bf16.msra.mxu0 0
    %3260 = vmatprep.subr.bf16.mxu0 0
    %3261 = vmatpush1.bf16.msra.mxu0 0
    %3262 = vmatprep.subr.bf16.mxu0 0
    %3263 = vmatpush1.bf16.msra.mxu0 0
    %3264 = vmatprep.subr.bf16.mxu0 0
    %3265 = vmatpush1.bf16.msra.mxu0 0
    %3266 = vmatprep.subr.bf16.mxu0 0
    %3267 = vmatpush1.bf16.msra.mxu0 0
    %3268 = vmatprep.mubr.bf16.mxu0 0
    %3269 = vmatmul.mubr.bf16.gmra.mrb[0].mxu0 %v3231
    %v3270 = vpop.f32.mrb[0].mxu0
    %v3271 = vadd.f32 %v3207, %v3270
    %v3272 = vpop.f32.mrb[0].mxu0
    %v3273 = vpop.f32.mrb[0].mxu0
    %v3274 = vadd.f32 %v3210, %v3273
    %v3275 = vpop.f32.mrb[0].mxu0
    %3276 = vmatprep.mubr.bf16.mxu0 0
    %3277 = vmatmul.mubr.bf16.gmra.mrb[0].mxu0 %v3234
    %v3278 = vpop.f32.mrb[0].mxu0
    %v3279 = vadd.f32 %v3215, %v3278
    %v3280 = vpop.f32.mrb[0].mxu0
    %v3281 = vpop.f32.mrb[0].mxu0
    %v3282 = vpop.f32.mrb[0].mxu0
    %3283 = vdwg.mxu0
    %s3284 = scalar_lea.vmem [#allocation7], 32
    %v3285 = vld [vmem:[%s3284] sm:$0xf]
    %v3286 = vld [vmem:[%s3284 + $0x4] sm:$0xf]
    %v3287 = vld [vmem:[%s3284 + $0x8] sm:$0xf]
    %v3288 = vld [vmem:[%s3284 + $0xc] sm:$0xf]
    %v3293 = vunpack.c.l.b16 %v3285
    %v3294 = vunpack.c.l.b16 %v3286
    %v3295 = vunpack.c.l.b16 %v3287
    %v3296 = vunpack.c.l.b16 %v3288
    %v3297 = vpack.c.b16 %v3294, %v3293
    %v3298 = vpack.c.b16 %v3296, %v3295
    %v3300 = vsel %vm3165, %v3297, 0
    %v3303 = vsel %vm3165, %v3298, 0
    %3305 = vmatprep.subr.bf16.mxu0 0
    %3306 = vmatpush1.bf16.msra.mxu0 %v3139
    %3307 = vmatprep.subr.bf16.mxu0 0
    %3308 = vmatpush1.bf16.msra.mxu0 %v3142
    %3309 = vmatprep.subr.bf16.mxu0 0
    %3310 = vmatpush1.bf16.msra.mxu0 %v3145
    %3311 = vmatprep.subr.bf16.mxu0 0
    %3312 = vmatpush1.bf16.msra.mxu0 0
    %3313 = vmatprep.subr.bf16.mxu0 0
    %3314 = vmatpush1.bf16.msra.mxu0 0
    %3315 = vmatprep.subr.bf16.mxu0 0
    %3316 = vmatpush1.bf16.msra.mxu0 0
    %3317 = vmatprep.subr.bf16.mxu0 0
    %3318 = vmatpush1.bf16.msra.mxu0 0
    %3319 = vmatprep.subr.bf16.mxu0 0
    %3320 = vmatpush1.bf16.msra.mxu0 0
    %3321 = vmatprep.subr.bf16.mxu0 0
    %3322 = vmatpush1.bf16.msra.mxu0 0
    %3323 = vmatprep.subr.bf16.mxu0 0
    %3324 = vmatpush1.bf16.msra.mxu0 0
    %3325 = vmatprep.subr.bf16.mxu0 0
    %3326 = vmatpush1.bf16.msra.mxu0 0
    %3327 = vmatprep.subr.bf16.mxu0 0
    %3328 = vmatpush1.bf16.msra.mxu0 0
    %3329 = vmatprep.subr.bf16.mxu0 0
    %3330 = vmatpush1.bf16.msra.mxu0 0
    %3331 = vmatprep.subr.bf16.mxu0 0
    %3332 = vmatpush1.bf16.msra.mxu0 0
    %3333 = vmatprep.subr.bf16.mxu0 0
    %3334 = vmatpush1.bf16.msra.mxu0 0
    %3335 = vmatprep.subr.bf16.mxu0 0
    %3336 = vmatpush1.bf16.msra.mxu0 0
    %3337 = vmatprep.mubr.bf16.mxu0 0
    %3338 = vmatmul.mubr.bf16.gmra.mrb[0].mxu0 %v3300
    %v3339 = vpop.f32.mrb[0].mxu0
    %v3340 = vadd.f32 0.0, %v3339
    %v3341 = vpop.f32.mrb[0].mxu0
    %v3342 = vpop.f32.mrb[0].mxu0
    %v3343 = vadd.f32 0.0, %v3342
    %v3344 = vpop.f32.mrb[0].mxu0
    %3345 = vmatprep.mubr.bf16.mxu0 0
    %3346 = vmatmul.mubr.bf16.gmra.mrb[0].mxu0 %v3303
    %v3347 = vpop.f32.mrb[0].mxu0
    %v3348 = vadd.f32 0.0, %v3347
    %v3349 = vpop.f32.mrb[0].mxu0
    %v3350 = vpop.f32.mrb[0].mxu0
    %v3351 = vpop.f32.mrb[0].mxu0
    %3352 = vdwg.mxu0
    %v3353 = vadd.f32 %v3271, %v3340
    %v3354 = vadd.f32 %v3274, %v3343
    %v3355 = vadd.f32 %v3279, %v3348
    %s3356 = scalar_lea.vmem [#allocation10], 3
    %v3357 = vld [vmem:[%s3356] sm:$0x1]
    %v3359 = vlaneseq
    %v3360 = vshrl.u32 %v3359, 7
    %v3361 = vsub.s32 0, %v3360
    %v3362 = vrot.slane %v3357, %v3361
    %v3364 = vadd.f32 %v3353, %v3362
    %v3365 = vadd.f32 %v3354, %v3362
    %v3366 = vadd.f32 %v3355, %v3362
    %vm3367 = vcmp.ge.f32.partialorder %v3364, 0.0
    %vm3368 = vcmp.ge.f32.partialorder %v3365, 0.0
    %vm3369 = vcmp.ge.f32.partialorder %v3366, 0.0
    %v3370 = vmul.f32 %v3364, 0.2
    %v3371 = vmul.f32 %v3365, 0.2
    %v3372 = vmul.f32 %v3366, 0.2
    %v3373 = vsel %vm3367, %v3364, %v3370
    %v3374 = vsel %vm3368, %v3365, %v3371
    %v3375 = vsel %vm3369, %v3366, %v3372
    %v3376 = vpack.c.bf16 %v3373, %v3373
    %v3377 = vld [vmem:[#allocation11] sm:$0xff]
    %v3378 = vld [vmem:[#allocation11 + $0x8] sm:$0xff]
    %v3379 = vld [vmem:[#allocation11 + $0x10] sm:$0xff]
    %v3380 = vld [vmem:[#allocation11 + $0x18] sm:$0xff]
    %v3381 = vld [vmem:[#allocation11 + $0x20] sm:$0xff]
    %v3382 = vld [vmem:[#allocation11 + $0x28] sm:$0xff]
    %v3383 = vld [vmem:[#allocation11 + $0x30] sm:$0xff]
    %v3384 = vld [vmem:[#allocation11 + $0x38] sm:$0xff]
    %v3385 = vld [vmem:[#allocation11 + $0x40] sm:$0xff]
    %v3386 = vld [vmem:[#allocation11 + $0x48] sm:$0xff]
    %v3387 = vld [vmem:[#allocation11 + $0x50] sm:$0xff]
    %v3388 = vld [vmem:[#allocation11 + $0x58] sm:$0xff]
    %v3389 = vld [vmem:[#allocation11 + $0x60] sm:$0xff]
    %v3390 = vld [vmem:[#allocation11 + $0x68] sm:$0xff]
    %v3391 = vld [vmem:[#allocation11 + $0x70] sm:$0xff]
    %v3392 = vld [vmem:[#allocation11 + $0x78] sm:$0xff]
    %v3393 = vld [vmem:[#allocation11 + $0x80] sm:$0xff]
    %v3394 = vld [vmem:[#allocation11 + $0x88] sm:$0xff]
    %v3395 = vld [vmem:[#allocation11 + $0x90] sm:$0xff]
    %v3396 = vld [vmem:[#allocation11 + $0x98] sm:$0xff]
    %v3397 = vld [vmem:[#allocation11 + $0xa0] sm:$0xff]
    %v3398 = vld [vmem:[#allocation11 + $0xa8] sm:$0xff]
    %v3399 = vld [vmem:[#allocation11 + $0xb0] sm:$0xff]
    %v3400 = vld [vmem:[#allocation11 + $0xb8] sm:$0xff]
    %v3401 = vld [vmem:[#allocation11 + $0xc0] sm:$0xff]
    %v3402 = vld [vmem:[#allocation11 + $0xc8] sm:$0xff]
    %v3403 = vld [vmem:[#allocation11 + $0xd0] sm:$0xff]
    %v3404 = vld [vmem:[#allocation11 + $0xd8] sm:$0xff]
    %v3405 = vld [vmem:[#allocation11 + $0xe0] sm:$0xff]
    %v3406 = vld [vmem:[#allocation11 + $0xe8] sm:$0xff]
    %v3407 = vld [vmem:[#allocation11 + $0xf0] sm:$0xff]
    %v3408 = vld [vmem:[#allocation11 + $0xf8] sm:$0xff]
    %s3409 = scalar_lea.vmem [#allocation11], 256
    %v3410 = vld [vmem:[%s3409] sm:$0xff]
    %v3411 = vld [vmem:[%s3409 + $0x8] sm:$0xff]
    %v3412 = vld [vmem:[%s3409 + $0x10] sm:$0xff]
    %v3413 = vld [vmem:[%s3409 + $0x18] sm:$0xff]
    %v3414 = vld [vmem:[%s3409 + $0x20] sm:$0xff]
    %v3415 = vld [vmem:[%s3409 + $0x28] sm:$0xff]
    %v3416 = vld [vmem:[%s3409 + $0x30] sm:$0xff]
    %v3417 = vld [vmem:[%s3409 + $0x38] sm:$0xff]
    %v3418 = vld [vmem:[%s3409 + $0x40] sm:$0xff]
    %v3419 = vld [vmem:[%s3409 + $0x48] sm:$0xff]
    %v3420 = vld [vmem:[%s3409 + $0x50] sm:$0xff]
    %v3421 = vld [vmem:[%s3409 + $0x58] sm:$0xff]
    %v3422 = vld [vmem:[%s3409 + $0x60] sm:$0xff]
    %v3423 = vld [vmem:[%s3409 + $0x68] sm:$0xff]
    %v3424 = vld [vmem:[%s3409 + $0x70] sm:$0xff]
    %v3425 = vld [vmem:[%s3409 + $0x78] sm:$0xff]
    %v3426 = vld [vmem:[%s3409 + $0x80] sm:$0xff]
    %v3427 = vld [vmem:[%s3409 + $0x88] sm:$0xff]
    %v3428 = vld [vmem:[%s3409 + $0x90] sm:$0xff]
    %v3429 = vld [vmem:[%s3409 + $0x98] sm:$0xff]
    %v3430 = vld [vmem:[%s3409 + $0xa0] sm:$0xff]
    %v3431 = vld [vmem:[%s3409 + $0xa8] sm:$0xff]
    %v3432 = vld [vmem:[%s3409 + $0xb0] sm:$0xff]
    %v3433 = vld [vmem:[%s3409 + $0xb8] sm:$0xff]
    %v3434 = vld [vmem:[%s3409 + $0xc0] sm:$0xff]
    %v3435 = vld [vmem:[%s3409 + $0xc8] sm:$0xff]
    %v3436 = vld [vmem:[%s3409 + $0xd0] sm:$0xff]
    %v3437 = vld [vmem:[%s3409 + $0xd8] sm:$0xff]
    %v3438 = vld [vmem:[%s3409 + $0xe0] sm:$0xff]
    %v3439 = vld [vmem:[%s3409 + $0xe8] sm:$0xff]
    %v3440 = vld [vmem:[%s3409 + $0xf0] sm:$0xff]
    %v3441 = vld [vmem:[%s3409 + $0xf8] sm:$0xff]
    %v3443 = vrot.slane %v3376, 1
    %v3476 = vunpack.c.l.b16 %v3410
    %v3477 = vunpack.c.h.b16 %v3410
    %v3478 = vunpack.c.l.b16 %v3411
    %v3479 = vunpack.c.h.b16 %v3411
    %v3480 = vunpack.c.l.b16 %v3412
    %v3481 = vunpack.c.h.b16 %v3412
    %v3482 = vunpack.c.l.b16 %v3413
    %v3483 = vunpack.c.h.b16 %v3413
    %v3484 = vunpack.c.l.b16 %v3414
    %v3485 = vunpack.c.h.b16 %v3414
    %v3486 = vunpack.c.l.b16 %v3415
    %v3487 = vunpack.c.h.b16 %v3415
    %v3488 = vunpack.c.l.b16 %v3416
    %v3489 = vunpack.c.h.b16 %v3416
    %v3490 = vunpack.c.l.b16 %v3417
    %v3491 = vunpack.c.h.b16 %v3417
    %v3492 = vunpack.c.l.b16 %v3418
    %v3493 = vunpack.c.h.b16 %v3418
    %v3494 = vunpack.c.l.b16 %v3419
    %v3495 = vunpack.c.h.b16 %v3419
    %v3496 = vunpack.c.l.b16 %v3420
    %v3497 = vunpack.c.h.b16 %v3420
    %v3498 = vunpack.c.l.b16 %v3421
    %v3499 = vunpack.c.h.b16 %v3421
    %v3500 = vunpack.c.l.b16 %v3422
    %v3501 = vunpack.c.h.b16 %v3422
    %v3502 = vunpack.c.l.b16 %v3423
    %v3503 = vunpack.c.h.b16 %v3423
    %v3504 = vunpack.c.l.b16 %v3424
    %v3505 = vunpack.c.h.b16 %v3424
    %v3506 = vunpack.c.l.b16 %v3425
    %v3507 = vunpack.c.h.b16 %v3425
    %v3508 = vunpack.c.l.b16 %v3426
    %v3509 = vunpack.c.h.b16 %v3426
    %v3510 = vunpack.c.l.b16 %v3427
    %v3511 = vunpack.c.h.b16 %v3427
    %v3512 = vunpack.c.l.b16 %v3428
    %v3513 = vunpack.c.h.b16 %v3428
    %v3514 = vunpack.c.l.b16 %v3429
    %v3515 = vunpack.c.h.b16 %v3429
    %v3516 = vunpack.c.l.b16 %v3430
    %v3517 = vunpack.c.h.b16 %v3430
    %v3518 = vunpack.c.l.b16 %v3431
    %v3519 = vunpack.c.h.b16 %v3431
    %v3520 = vunpack.c.l.b16 %v3432
    %v3521 = vunpack.c.h.b16 %v3432
    %v3522 = vunpack.c.l.b16 %v3433
    %v3523 = vunpack.c.h.b16 %v3433
    %v3524 = vunpack.c.l.b16 %v3434
    %v3525 = vunpack.c.h.b16 %v3434
    %v3526 = vunpack.c.l.b16 %v3435
    %v3527 = vunpack.c.h.b16 %v3435
    %v3528 = vunpack.c.l.b16 %v3436
    %v3529 = vunpack.c.h.b16 %v3436
    %v3530 = vunpack.c.l.b16 %v3437
    %v3531 = vunpack.c.h.b16 %v3437
    %v3532 = vunpack.c.l.b16 %v3438
    %v3533 = vunpack.c.h.b16 %v3438
    %v3534 = vunpack.c.l.b16 %v3439
    %v3535 = vunpack.c.h.b16 %v3439
    %v3536 = vunpack.c.l.b16 %v3440
    %v3537 = vunpack.c.h.b16 %v3440
    %v3538 = vunpack.c.l.b16 %v3441
    %v3539 = vunpack.c.h.b16 %v3441
    %v3540 = vpack.c.b16 %v3492, %v3476
    %v3541 = vpack.c.b16 %v3493, %v3477
    %v3542 = vpack.c.b16 %v3494, %v3478
    %v3543 = vpack.c.b16 %v3495, %v3479
    %v3544 = vpack.c.b16 %v3496, %v3480
    %v3545 = vpack.c.b16 %v3497, %v3481
    %v3546 = vpack.c.b16 %v3498, %v3482
    %v3547 = vpack.c.b16 %v3499, %v3483
    %v3548 = vpack.c.b16 %v3500, %v3484
    %v3549 = vpack.c.b16 %v3501, %v3485
    %v3550 = vpack.c.b16 %v3502, %v3486
    %v3551 = vpack.c.b16 %v3503, %v3487
    %v3552 = vpack.c.b16 %v3504, %v3488
    %v3553 = vpack.c.b16 %v3505, %v3489
    %v3554 = vpack.c.b16 %v3506, %v3490
    %v3555 = vpack.c.b16 %v3507, %v3491
    %v3556 = vpack.c.b16 %v3524, %v3508
    %v3557 = vpack.c.b16 %v3525, %v3509
    %v3558 = vpack.c.b16 %v3526, %v3510
    %v3559 = vpack.c.b16 %v3527, %v3511
    %v3560 = vpack.c.b16 %v3528, %v3512
    %v3561 = vpack.c.b16 %v3529, %v3513
    %v3562 = vpack.c.b16 %v3530, %v3514
    %v3563 = vpack.c.b16 %v3531, %v3515
    %v3564 = vpack.c.b16 %v3532, %v3516
    %v3565 = vpack.c.b16 %v3533, %v3517
    %v3566 = vpack.c.b16 %v3534, %v3518
    %v3567 = vpack.c.b16 %v3535, %v3519
    %v3568 = vpack.c.b16 %v3536, %v3520
    %v3569 = vpack.c.b16 %v3537, %v3521
    %v3570 = vpack.c.b16 %v3538, %v3522
    %v3571 = vpack.c.b16 %v3539, %v3523
    %vm3604 = vcmask 261120
    %v3606 = vsel %vm3604, %v3443, 0
    %3608 = vmatprep.subr.bf16.mxu0 %v3541
    %3609 = vmatpush1.bf16.msra.mxu0 %v3540
    %3610 = vmatprep.subr.bf16.mxu0 %v3557
    %3611 = vmatpush1.bf16.msra.mxu0 %v3556
    %3612 = vmatprep.subr.bf16.mxu0 0
    %3613 = vmatpush1.bf16.msra.mxu0 0
    %3614 = vmatprep.subr.bf16.mxu0 0
    %3615 = vmatpush1.bf16.msra.mxu0 0
    %3616 = vmatprep.subr.bf16.mxu0 0
    %3617 = vmatpush1.bf16.msra.mxu0 0
    %3618 = vmatprep.subr.bf16.mxu0 0
    %3619 = vmatpush1.bf16.msra.mxu0 0
    %3620 = vmatprep.subr.bf16.mxu0 0
    %3621 = vmatpush1.bf16.msra.mxu0 0
    %3622 = vmatprep.subr.bf16.mxu0 0
    %3623 = vmatpush1.bf16.msra.mxu0 0
    %3624 = vmatprep.subr.bf16.mxu0 0
    %3625 = vmatpush1.bf16.msra.mxu0 0
    %3626 = vmatprep.subr.bf16.mxu0 0
    %3627 = vmatpush1.bf16.msra.mxu0 0
    %3628 = vmatprep.subr.bf16.mxu0 0
    %3629 = vmatpush1.bf16.msra.mxu0 0
    %3630 = vmatprep.subr.bf16.mxu0 0
    %3631 = vmatpush1.bf16.msra.mxu0 0
    %3632 = vmatprep.subr.bf16.mxu0 0
    %3633 = vmatpush1.bf16.msra.mxu0 0
    %3634 = vmatprep.subr.bf16.mxu0 0
    %3635 = vmatpush1.bf16.msra.mxu0 0
    %3636 = vmatprep.subr.bf16.mxu0 0
    %3637 = vmatpush1.bf16.msra.mxu0 0
    %3638 = vmatprep.subr.bf16.mxu0 0
    %3639 = vmatpush1.bf16.msra.mxu0 0
    %3640 = vmatprep.mubr.bf16.mxu0 0
    %3641 = vmatmul.mubr.bf16.gmra.mrb[0].mxu0 %v3606
    %v3642 = vpop.f32.mrb[0].mxu0
    %v3643 = vadd.f32 0.0, %v3642
    %v3644 = vpop.f32.mrb[0].mxu0
    %v3645 = vadd.f32 0.0, %v3644
    %v3646 = vpop.f32.mrb[0].mxu0
    %v3647 = vpop.f32.mrb[0].mxu0
    %3648 = vdwg.mxu0
    %3649 = vmatprep.subr.bf16.mxu0 %v3543
    %3650 = vmatpush1.bf16.msra.mxu0 %v3542
    %3651 = vmatprep.subr.bf16.mxu0 %v3559
    %3652 = vmatpush1.bf16.msra.mxu0 %v3558
    %3653 = vmatprep.subr.bf16.mxu0 0
    %3654 = vmatpush1.bf16.msra.mxu0 0
    %3655 = vmatprep.subr.bf16.mxu0 0
    %3656 = vmatpush1.bf16.msra.mxu0 0
    %3657 = vmatprep.subr.bf16.mxu0 0
    %3658 = vmatpush1.bf16.msra.mxu0 0
    %3659 = vmatprep.subr.bf16.mxu0 0
    %3660 = vmatpush1.bf16.msra.mxu0 0
    %3661 = vmatprep.subr.bf16.mxu0 0
    %3662 = vmatpush1.bf16.msra.mxu0 0
    %3663 = vmatprep.subr.bf16.mxu0 0
    %3664 = vmatpush1.bf16.msra.mxu0 0
    %3665 = vmatprep.subr.bf16.mxu0 0
    %3666 = vmatpush1.bf16.msra.mxu0 0
    %3667 = vmatprep.subr.bf16.mxu0 0
    %3668 = vmatpush1.bf16.msra.mxu0 0
    %3669 = vmatprep.subr.bf16.mxu0 0
    %3670 = vmatpush1.bf16.msra.mxu0 0
    %3671 = vmatprep.subr.bf16.mxu0 0
    %3672 = vmatpush1.bf16.msra.mxu0 0
    %3673 = vmatprep.subr.bf16.mxu0 0
    %3674 = vmatpush1.bf16.msra.mxu0 0
    %3675 = vmatprep.subr.bf16.mxu0 0
    %3676 = vmatpush1.bf16.msra.mxu0 0
    %3677 = vmatprep.subr.bf16.mxu0 0
    %3678 = vmatpush1.bf16.msra.mxu0 0
    %3679 = vmatprep.subr.bf16.mxu0 0
    %3680 = vmatpush1.bf16.msra.mxu0 0
    %3681 = vmatprep.mubr.bf16.mxu0 0
    %3682 = vmatmul.mubr.bf16.gmra.mrb[0].mxu0 %v3606
    %v3683 = vpop.f32.mrb[0].mxu0
    %v3684 = vadd.f32 0.0, %v3683
    %v3685 = vpop.f32.mrb[0].mxu0
    %v3686 = vadd.f32 0.0, %v3685
    %v3687 = vpop.f32.mrb[0].mxu0
    %v3688 = vpop.f32.mrb[0].mxu0
    %3689 = vdwg.mxu0
    %3690 = vmatprep.subr.bf16.mxu0 %v3545
    %3691 = vmatpush1.bf16.msra.mxu0 %v3544
    %3692 = vmatprep.subr.bf16.mxu0 %v3561
    %3693 = vmatpush1.bf16.msra.mxu0 %v3560
    %3694 = vmatprep.subr.bf16.mxu0 0
    %3695 = vmatpush1.bf16.msra.mxu0 0
    %3696 = vmatprep.subr.bf16.mxu0 0
    %3697 = vmatpush1.bf16.msra.mxu0 0
    %3698 = vmatprep.subr.bf16.mxu0 0
    %3699 = vmatpush1.bf16.msra.mxu0 0
    %3700 = vmatprep.subr.bf16.mxu0 0
    %3701 = vmatpush1.bf16.msra.mxu0 0
    %3702 = vmatprep.subr.bf16.mxu0 0
    %3703 = vmatpush1.bf16.msra.mxu0 0
    %3704 = vmatprep.subr.bf16.mxu0 0
    %3705 = vmatpush1.bf16.msra.mxu0 0
    %3706 = vmatprep.subr.bf16.mxu0 0
    %3707 = vmatpush1.bf16.msra.mxu0 0
    %3708 = vmatprep.subr.bf16.mxu0 0
    %3709 = vmatpush1.bf16.msra.mxu0 0
    %3710 = vmatprep.subr.bf16.mxu0 0
    %3711 = vmatpush1.bf16.msra.mxu0 0
    %3712 = vmatprep.subr.bf16.mxu0 0
    %3713 = vmatpush1.bf16.msra.mxu0 0
    %3714 = vmatprep.subr.bf16.mxu0 0
    %3715 = vmatpush1.bf16.msra.mxu0 0
    %3716 = vmatprep.subr.bf16.mxu0 0
    %3717 = vmatpush1.bf16.msra.mxu0 0
    %3718 = vmatprep.subr.bf16.mxu0 0
    %3719 = vmatpush1.bf16.msra.mxu0 0
    %3720 = vmatprep.subr.bf16.mxu0 0
    %3721 = vmatpush1.bf16.msra.mxu0 0
    %3722 = vmatprep.mubr.bf16.mxu0 0
    %3723 = vmatmul.mubr.bf16.gmra.mrb[0].mxu0 %v3606
    %v3724 = vpop.f32.mrb[0].mxu0
    %v3725 = vadd.f32 0.0, %v3724
    %v3726 = vpop.f32.mrb[0].mxu0
    %v3727 = vadd.f32 0.0, %v3726
    %v3728 = vpop.f32.mrb[0].mxu0
    %v3729 = vpop.f32.mrb[0].mxu0
    %3730 = vdwg.mxu0
    %3731 = vmatprep.subr.bf16.mxu0 %v3547
    %3732 = vmatpush1.bf16.msra.mxu0 %v3546
    %3733 = vmatprep.subr.bf16.mxu0 %v3563
    %3734 = vmatpush1.bf16.msra.mxu0 %v3562
    %3735 = vmatprep.subr.bf16.mxu0 0
    %3736 = vmatpush1.bf16.msra.mxu0 0
    %3737 = vmatprep.subr.bf16.mxu0 0
    %3738 = vmatpush1.bf16.msra.mxu0 0
    %3739 = vmatprep.subr.bf16.mxu0 0
    %3740 = vmatpush1.bf16.msra.mxu0 0
    %3741 = vmatprep.subr.bf16.mxu0 0
    %3742 = vmatpush1.bf16.msra.mxu0 0
    %3743 = vmatprep.subr.bf16.mxu0 0
    %3744 = vmatpush1.bf16.msra.mxu0 0
    %3745 = vmatprep.subr.bf16.mxu0 0
    %3746 = vmatpush1.bf16.msra.mxu0 0
    %3747 = vmatprep.subr.bf16.mxu0 0
    %3748 = vmatpush1.bf16.msra.mxu0 0
    %3749 = vmatprep.subr.bf16.mxu0 0
    %3750 = vmatpush1.bf16.msra.mxu0 0
    %3751 = vmatprep.subr.bf16.mxu0 0
    %3752 = vmatpush1.bf16.msra.mxu0 0
    %3753 = vmatprep.subr.bf16.mxu0 0
    %3754 = vmatpush1.bf16.msra.mxu0 0
    %3755 = vmatprep.subr.bf16.mxu0 0
    %3756 = vmatpush1.bf16.msra.mxu0 0
    %3757 = vmatprep.subr.bf16.mxu0 0
    %3758 = vmatpush1.bf16.msra.mxu0 0
    %3759 = vmatprep.subr.bf16.mxu0 0
    %3760 = vmatpush1.bf16.msra.mxu0 0
    %3761 = vmatprep.subr.bf16.mxu0 0
    %3762 = vmatpush1.bf16.msra.mxu0 0
    %3763 = vmatprep.mubr.bf16.mxu0 0
    %3764 = vmatmul.mubr.bf16.gmra.mrb[0].mxu0 %v3606
    %v3765 = vpop.f32.mrb[0].mxu0
    %v3766 = vadd.f32 0.0, %v3765
    %v3767 = vpop.f32.mrb[0].mxu0
    %v3768 = vadd.f32 0.0, %v3767
    %v3769 = vpop.f32.mrb[0].mxu0
    %v3770 = vpop.f32.mrb[0].mxu0
    %3771 = vdwg.mxu0
    %3772 = vmatprep.subr.bf16.mxu0 %v3549
    %3773 = vmatpush1.bf16.msra.mxu0 %v3548
    %3774 = vmatprep.subr.bf16.mxu0 %v3565
    %3775 = vmatpush1.bf16.msra.mxu0 %v3564
    %3776 = vmatprep.subr.bf16.mxu0 0
    %3777 = vmatpush1.bf16.msra.mxu0 0
    %3778 = vmatprep.subr.bf16.mxu0 0
    %3779 = vmatpush1.bf16.msra.mxu0 0
    %3780 = vmatprep.subr.bf16.mxu0 0
    %3781 = vmatpush1.bf16.msra.mxu0 0
    %3782 = vmatprep.subr.bf16.mxu0 0
    %3783 = vmatpush1.bf16.msra.mxu0 0
    %3784 = vmatprep.subr.bf16.mxu0 0
    %3785 = vmatpush1.bf16.msra.mxu0 0
    %3786 = vmatprep.subr.bf16.mxu0 0
    %3787 = vmatpush1.bf16.msra.mxu0 0
    %3788 = vmatprep.subr.bf16.mxu0 0
    %3789 = vmatpush1.bf16.msra.mxu0 0
    %3790 = vmatprep.subr.bf16.mxu0 0
    %3791 = vmatpush1.bf16.msra.mxu0 0
    %3792 = vmatprep.subr.bf16.mxu0 0
    %3793 = vmatpush1.bf16.msra.mxu0 0
    %3794 = vmatprep.subr.bf16.mxu0 0
    %3795 = vmatpush1.bf16.msra.mxu0 0
    %3796 = vmatprep.subr.bf16.mxu0 0
    %3797 = vmatpush1.bf16.msra.mxu0 0
    %3798 = vmatprep.subr.bf16.mxu0 0
    %3799 = vmatpush1.bf16.msra.mxu0 0
    %3800 = vmatprep.subr.bf16.mxu0 0
    %3801 = vmatpush1.bf16.msra.mxu0 0
    %3802 = vmatprep.subr.bf16.mxu0 0
    %3803 = vmatpush1.bf16.msra.mxu0 0
    %3804 = vmatprep.mubr.bf16.mxu0 0
    %3805 = vmatmul.mubr.bf16.gmra.mrb[0].mxu0 %v3606
    %v3806 = vpop.f32.mrb[0].mxu0
    %v3807 = vadd.f32 0.0, %v3806
    %v3808 = vpop.f32.mrb[0].mxu0
    %v3809 = vadd.f32 0.0, %v3808
    %v3810 = vpop.f32.mrb[0].mxu0
    %v3811 = vpop.f32.mrb[0].mxu0
    %3812 = vdwg.mxu0
    %3813 = vmatprep.subr.bf16.mxu0 %v3551
    %3814 = vmatpush1.bf16.msra.mxu0 %v3550
    %3815 = vmatprep.subr.bf16.mxu0 %v3567
    %3816 = vmatpush1.bf16.msra.mxu0 %v3566
    %3817 = vmatprep.subr.bf16.mxu0 0
    %3818 = vmatpush1.bf16.msra.mxu0 0
    %3819 = vmatprep.subr.bf16.mxu0 0
    %3820 = vmatpush1.bf16.msra.mxu0 0
    %3821 = vmatprep.subr.bf16.mxu0 0
    %3822 = vmatpush1.bf16.msra.mxu0 0
    %3823 = vmatprep.subr.bf16.mxu0 0
    %3824 = vmatpush1.bf16.msra.mxu0 0
    %3825 = vmatprep.subr.bf16.mxu0 0
    %3826 = vmatpush1.bf16.msra.mxu0 0
    %3827 = vmatprep.subr.bf16.mxu0 0
    %3828 = vmatpush1.bf16.msra.mxu0 0
    %3829 = vmatprep.subr.bf16.mxu0 0
    %3830 = vmatpush1.bf16.msra.mxu0 0
    %3831 = vmatprep.subr.bf16.mxu0 0
    %3832 = vmatpush1.bf16.msra.mxu0 0
    %3833 = vmatprep.subr.bf16.mxu0 0
    %3834 = vmatpush1.bf16.msra.mxu0 0
    %3835 = vmatprep.subr.bf16.mxu0 0
    %3836 = vmatpush1.bf16.msra.mxu0 0
    %3837 = vmatprep.subr.bf16.mxu0 0
    %3838 = vmatpush1.bf16.msra.mxu0 0
    %3839 = vmatprep.subr.bf16.mxu0 0
    %3840 = vmatpush1.bf16.msra.mxu0 0
    %3841 = vmatprep.subr.bf16.mxu0 0
    %3842 = vmatpush1.bf16.msra.mxu0 0
    %3843 = vmatprep.subr.bf16.mxu0 0
    %3844 = vmatpush1.bf16.msra.mxu0 0
    %3845 = vmatprep.mubr.bf16.mxu0 0
    %3846 = vmatmul.mubr.bf16.gmra.mrb[0].mxu0 %v3606
    %v3847 = vpop.f32.mrb[0].mxu0
    %v3848 = vadd.f32 0.0, %v3847
    %v3849 = vpop.f32.mrb[0].mxu0
    %v3850 = vadd.f32 0.0, %v3849
    %v3851 = vpop.f32.mrb[0].mxu0
    %v3852 = vpop.f32.mrb[0].mxu0
    %3853 = vdwg.mxu0
    %3854 = vmatprep.subr.bf16.mxu0 %v3553
    %3855 = vmatpush1.bf16.msra.mxu0 %v3552
    %3856 = vmatprep.subr.bf16.mxu0 %v3569
    %3857 = vmatpush1.bf16.msra.mxu0 %v3568
    %3858 = vmatprep.subr.bf16.mxu0 0
    %3859 = vmatpush1.bf16.msra.mxu0 0
    %3860 = vmatprep.subr.bf16.mxu0 0
    %3861 = vmatpush1.bf16.msra.mxu0 0
    %3862 = vmatprep.subr.bf16.mxu0 0
    %3863 = vmatpush1.bf16.msra.mxu0 0
    %3864 = vmatprep.subr.bf16.mxu0 0
    %3865 = vmatpush1.bf16.msra.mxu0 0
    %3866 = vmatprep.subr.bf16.mxu0 0
    %3867 = vmatpush1.bf16.msra.mxu0 0
    %3868 = vmatprep.subr.bf16.mxu0 0
    %3869 = vmatpush1.bf16.msra.mxu0 0
    %3870 = vmatprep.subr.bf16.mxu0 0
    %3871 = vmatpush1.bf16.msra.mxu0 0
    %3872 = vmatprep.subr.bf16.mxu0 0
    %3873 = vmatpush1.bf16.msra.mxu0 0
    %3874 = vmatprep.subr.bf16.mxu0 0
    %3875 = vmatpush1.bf16.msra.mxu0 0
    %3876 = vmatprep.subr.bf16.mxu0 0
    %3877 = vmatpush1.bf16.msra.mxu0 0
    %3878 = vmatprep.subr.bf16.mxu0 0
    %3879 = vmatpush1.bf16.msra.mxu0 0
    %3880 = vmatprep.subr.bf16.mxu0 0
    %3881 = vmatpush1.bf16.msra.mxu0 0
    %3882 = vmatprep.subr.bf16.mxu0 0
    %3883 = vmatpush1.bf16.msra.mxu0 0
    %3884 = vmatprep.subr.bf16.mxu0 0
    %3885 = vmatpush1.bf16.msra.mxu0 0
    %3886 = vmatprep.mubr.bf16.mxu0 0
    %3887 = vmatmul.mubr.bf16.gmra.mrb[0].mxu0 %v3606
    %v3888 = vpop.f32.mrb[0].mxu0
    %v3889 = vadd.f32 0.0, %v3888
    %v3890 = vpop.f32.mrb[0].mxu0
    %v3891 = vadd.f32 0.0, %v3890
    %v3892 = vpop.f32.mrb[0].mxu0
    %v3893 = vpop.f32.mrb[0].mxu0
    %3894 = vdwg.mxu0
    %3895 = vmatprep.subr.bf16.mxu0 %v3555
    %3896 = vmatpush1.bf16.msra.mxu0 %v3554
    %3897 = vmatprep.subr.bf16.mxu0 %v3571
    %3898 = vmatpush1.bf16.msra.mxu0 %v3570
    %3899 = vmatprep.subr.bf16.mxu0 0
    %3900 = vmatpush1.bf16.msra.mxu0 0
    %3901 = vmatprep.subr.bf16.mxu0 0
    %3902 = vmatpush1.bf16.msra.mxu0 0
    %3903 = vmatprep.subr.bf16.mxu0 0
    %3904 = vmatpush1.bf16.msra.mxu0 0
    %3905 = vmatprep.subr.bf16.mxu0 0
    %3906 = vmatpush1.bf16.msra.mxu0 0
    %3907 = vmatprep.subr.bf16.mxu0 0
    %3908 = vmatpush1.bf16.msra.mxu0 0
    %3909 = vmatprep.subr.bf16.mxu0 0
    %3910 = vmatpush1.bf16.msra.mxu0 0
    %3911 = vmatprep.subr.bf16.mxu0 0
    %3912 = vmatpush1.bf16.msra.mxu0 0
    %3913 = vmatprep.subr.bf16.mxu0 0
    %3914 = vmatpush1.bf16.msra.mxu0 0
    %3915 = vmatprep.subr.bf16.mxu0 0
    %3916 = vmatpush1.bf16.msra.mxu0 0
    %3917 = vmatprep.subr.bf16.mxu0 0
    %3918 = vmatpush1.bf16.msra.mxu0 0
    %3919 = vmatprep.subr.bf16.mxu0 0
    %3920 = vmatpush1.bf16.msra.mxu0 0
    %3921 = vmatprep.subr.bf16.mxu0 0
    %3922 = vmatpush1.bf16.msra.mxu0 0
    %3923 = vmatprep.subr.bf16.mxu0 0
    %3924 = vmatpush1.bf16.msra.mxu0 0
    %3925 = vmatprep.subr.bf16.mxu0 0
    %3926 = vmatpush1.bf16.msra.mxu0 0
    %3927 = vmatprep.mubr.bf16.mxu0 0
    %3928 = vmatmul.mubr.bf16.gmra.mrb[0].mxu0 %v3606
    %v3929 = vpop.f32.mrb[0].mxu0
    %v3930 = vadd.f32 0.0, %v3929
    %v3931 = vpop.f32.mrb[0].mxu0
    %v3932 = vadd.f32 0.0, %v3931
    %v3933 = vpop.f32.mrb[0].mxu0
    %v3934 = vpop.f32.mrb[0].mxu0
    %3935 = vdwg.mxu0
    %v3968 = vunpack.c.l.b16 %v3377
    %v3969 = vunpack.c.h.b16 %v3377
    %v3970 = vunpack.c.l.b16 %v3378
    %v3971 = vunpack.c.h.b16 %v3378
    %v3972 = vunpack.c.l.b16 %v3379
    %v3973 = vunpack.c.h.b16 %v3379
    %v3974 = vunpack.c.l.b16 %v3380
    %v3975 = vunpack.c.h.b16 %v3380
    %v3976 = vunpack.c.l.b16 %v3381
    %v3977 = vunpack.c.h.b16 %v3381
    %v3978 = vunpack.c.l.b16 %v3382
    %v3979 = vunpack.c.h.b16 %v3382
    %v3980 = vunpack.c.l.b16 %v3383
    %v3981 = vunpack.c.h.b16 %v3383
    %v3982 = vunpack.c.l.b16 %v3384
    %v3983 = vunpack.c.h.b16 %v3384
    %v3984 = vunpack.c.l.b16 %v3385
    %v3985 = vunpack.c.h.b16 %v3385
    %v3986 = vunpack.c.l.b16 %v3386
    %v3987 = vunpack.c.h.b16 %v3386
    %v3988 = vunpack.c.l.b16 %v3387
    %v3989 = vunpack.c.h.b16 %v3387
    %v3990 = vunpack.c.l.b16 %v3388
    %v3991 = vunpack.c.h.b16 %v3388
    %v3992 = vunpack.c.l.b16 %v3389
    %v3993 = vunpack.c.h.b16 %v3389
    %v3994 = vunpack.c.l.b16 %v3390
    %v3995 = vunpack.c.h.b16 %v3390
    %v3996 = vunpack.c.l.b16 %v3391
    %v3997 = vunpack.c.h.b16 %v3391
    %v3998 = vunpack.c.l.b16 %v3392
    %v3999 = vunpack.c.h.b16 %v3392
    %v4000 = vunpack.c.l.b16 %v3393
    %v4001 = vunpack.c.h.b16 %v3393
    %v4002 = vunpack.c.l.b16 %v3394
    %v4003 = vunpack.c.h.b16 %v3394
    %v4004 = vunpack.c.l.b16 %v3395
    %v4005 = vunpack.c.h.b16 %v3395
    %v4006 = vunpack.c.l.b16 %v3396
    %v4007 = vunpack.c.h.b16 %v3396
    %v4008 = vunpack.c.l.b16 %v3397
    %v4009 = vunpack.c.h.b16 %v3397
    %v4010 = vunpack.c.l.b16 %v3398
    %v4011 = vunpack.c.h.b16 %v3398
    %v4012 = vunpack.c.l.b16 %v3399
    %v4013 = vunpack.c.h.b16 %v3399
    %v4014 = vunpack.c.l.b16 %v3400
    %v4015 = vunpack.c.h.b16 %v3400
    %v4016 = vunpack.c.l.b16 %v3401
    %v4017 = vunpack.c.h.b16 %v3401
    %v4018 = vunpack.c.l.b16 %v3402
    %v4019 = vunpack.c.h.b16 %v3402
    %v4020 = vunpack.c.l.b16 %v3403
    %v4021 = vunpack.c.h.b16 %v3403
    %v4022 = vunpack.c.l.b16 %v3404
    %v4023 = vunpack.c.h.b16 %v3404
    %v4024 = vunpack.c.l.b16 %v3405
    %v4025 = vunpack.c.h.b16 %v3405
    %v4026 = vunpack.c.l.b16 %v3406
    %v4027 = vunpack.c.h.b16 %v3406
    %v4028 = vunpack.c.l.b16 %v3407
    %v4029 = vunpack.c.h.b16 %v3407
    %v4030 = vunpack.c.l.b16 %v3408
    %v4031 = vunpack.c.h.b16 %v3408
    %v4032 = vpack.c.b16 %v3984, %v3968
    %v4033 = vpack.c.b16 %v3985, %v3969
    %v4034 = vpack.c.b16 %v3986, %v3970
    %v4035 = vpack.c.b16 %v3987, %v3971
    %v4036 = vpack.c.b16 %v3988, %v3972
    %v4037 = vpack.c.b16 %v3989, %v3973
    %v4038 = vpack.c.b16 %v3990, %v3974
    %v4039 = vpack.c.b16 %v3991, %v3975
    %v4040 = vpack.c.b16 %v3992, %v3976
    %v4041 = vpack.c.b16 %v3993, %v3977
    %v4042 = vpack.c.b16 %v3994, %v3978
    %v4043 = vpack.c.b16 %v3995, %v3979
    %v4044 = vpack.c.b16 %v3996, %v3980
    %v4045 = vpack.c.b16 %v3997, %v3981
    %v4046 = vpack.c.b16 %v3998, %v3982
    %v4047 = vpack.c.b16 %v3999, %v3983
    %v4048 = vpack.c.b16 %v4016, %v4000
    %v4049 = vpack.c.b16 %v4017, %v4001
    %v4050 = vpack.c.b16 %v4018, %v4002
    %v4051 = vpack.c.b16 %v4019, %v4003
    %v4052 = vpack.c.b16 %v4020, %v4004
    %v4053 = vpack.c.b16 %v4021, %v4005
    %v4054 = vpack.c.b16 %v4022, %v4006
    %v4055 = vpack.c.b16 %v4023, %v4007
    %v4056 = vpack.c.b16 %v4024, %v4008
    %v4057 = vpack.c.b16 %v4025, %v4009
    %v4058 = vpack.c.b16 %v4026, %v4010
    %v4059 = vpack.c.b16 %v4027, %v4011
    %v4060 = vpack.c.b16 %v4028, %v4012
    %v4061 = vpack.c.b16 %v4029, %v4013
    %v4062 = vpack.c.b16 %v4030, %v4014
    %v4063 = vpack.c.b16 %v4031, %v4015
    %v4097 = vsel %vm3604, %v3376, 0
    %4099 = vmatprep.subr.bf16.mxu0 %v4033
    %4100 = vmatpush1.bf16.msra.mxu0 %v4032
    %4101 = vmatprep.subr.bf16.mxu0 %v4049
    %4102 = vmatpush1.bf16.msra.mxu0 %v4048
    %4103 = vmatprep.subr.bf16.mxu0 0
    %4104 = vmatpush1.bf16.msra.mxu0 0
    %4105 = vmatprep.subr.bf16.mxu0 0
    %4106 = vmatpush1.bf16.msra.mxu0 0
    %4107 = vmatprep.subr.bf16.mxu0 0
    %4108 = vmatpush1.bf16.msra.mxu0 0
    %4109 = vmatprep.subr.bf16.mxu0 0
    %4110 = vmatpush1.bf16.msra.mxu0 0
    %4111 = vmatprep.subr.bf16.mxu0 0
    %4112 = vmatpush1.bf16.msra.mxu0 0
    %4113 = vmatprep.subr.bf16.mxu0 0
    %4114 = vmatpush1.bf16.msra.mxu0 0
    %4115 = vmatprep.subr.bf16.mxu0 0
    %4116 = vmatpush1.bf16.msra.mxu0 0
    %4117 = vmatprep.subr.bf16.mxu0 0
    %4118 = vmatpush1.bf16.msra.mxu0 0
    %4119 = vmatprep.subr.bf16.mxu0 0
    %4120 = vmatpush1.bf16.msra.mxu0 0
    %4121 = vmatprep.subr.bf16.mxu0 0
    %4122 = vmatpush1.bf16.msra.mxu0 0
    %4123 = vmatprep.subr.bf16.mxu0 0
    %4124 = vmatpush1.bf16.msra.mxu0 0
    %4125 = vmatprep.subr.bf16.mxu0 0
    %4126 = vmatpush1.bf16.msra.mxu0 0
    %4127 = vmatprep.subr.bf16.mxu0 0
    %4128 = vmatpush1.bf16.msra.mxu0 0
    %4129 = vmatprep.subr.bf16.mxu0 0
    %4130 = vmatpush1.bf16.msra.mxu0 0
    %4131 = vmatprep.mubr.bf16.mxu0 0
    %4132 = vmatmul.mubr.bf16.gmra.mrb[0].mxu0 %v4097
    %v4133 = vpop.f32.mrb[0].mxu0
    %v4134 = vadd.f32 %v3643, %v4133
    %v4135 = vpop.f32.mrb[0].mxu0
    %v4136 = vadd.f32 %v3645, %v4135
    %v4137 = vpop.f32.mrb[0].mxu0
    %v4138 = vpop.f32.mrb[0].mxu0
    %4139 = vdwg.mxu0
    %4140 = vmatprep.subr.bf16.mxu0 %v4035
    %4141 = vmatpush1.bf16.msra.mxu0 %v4034
    %4142 = vmatprep.subr.bf16.mxu0 %v4051
    %4143 = vmatpush1.bf16.msra.mxu0 %v4050
    %4144 = vmatprep.subr.bf16.mxu0 0
    %4145 = vmatpush1.bf16.msra.mxu0 0
    %4146 = vmatprep.subr.bf16.mxu0 0
    %4147 = vmatpush1.bf16.msra.mxu0 0
    %4148 = vmatprep.subr.bf16.mxu0 0
    %4149 = vmatpush1.bf16.msra.mxu0 0
    %4150 = vmatprep.subr.bf16.mxu0 0
    %4151 = vmatpush1.bf16.msra.mxu0 0
    %4152 = vmatprep.subr.bf16.mxu0 0
    %4153 = vmatpush1.bf16.msra.mxu0 0
    %4154 = vmatprep.subr.bf16.mxu0 0
    %4155 = vmatpush1.bf16.msra.mxu0 0
    %4156 = vmatprep.subr.bf16.mxu0 0
    %4157 = vmatpush1.bf16.msra.mxu0 0
    %4158 = vmatprep.subr.bf16.mxu0 0
    %4159 = vmatpush1.bf16.msra.mxu0 0
    %4160 = vmatprep.subr.bf16.mxu0 0
    %4161 = vmatpush1.bf16.msra.mxu0 0
    %4162 = vmatprep.subr.bf16.mxu0 0
    %4163 = vmatpush1.bf16.msra.mxu0 0
    %4164 = vmatprep.subr.bf16.mxu0 0
    %4165 = vmatpush1.bf16.msra.mxu0 0
    %4166 = vmatprep.subr.bf16.mxu0 0
    %4167 = vmatpush1.bf16.msra.mxu0 0
    %4168 = vmatprep.subr.bf16.mxu0 0
    %4169 = vmatpush1.bf16.msra.mxu0 0
    %4170 = vmatprep.subr.bf16.mxu0 0
    %4171 = vmatpush1.bf16.msra.mxu0 0
    %4172 = vmatprep.mubr.bf16.mxu0 0
    %4173 = vmatmul.mubr.bf16.gmra.mrb[0].mxu0 %v4097
    %v4174 = vpop.f32.mrb[0].mxu0
    %v4175 = vadd.f32 %v3684, %v4174
    %v4176 = vpop.f32.mrb[0].mxu0
    %v4177 = vadd.f32 %v3686, %v4176
    %v4178 = vpop.f32.mrb[0].mxu0
    %v4179 = vpop.f32.mrb[0].mxu0
    %4180 = vdwg.mxu0
    %4181 = vmatprep.subr.bf16.mxu0 %v4037
    %4182 = vmatpush1.bf16.msra.mxu0 %v4036
    %4183 = vmatprep.subr.bf16.mxu0 %v4053
    %4184 = vmatpush1.bf16.msra.mxu0 %v4052
    %4185 = vmatprep.subr.bf16.mxu0 0
    %4186 = vmatpush1.bf16.msra.mxu0 0
    %4187 = vmatprep.subr.bf16.mxu0 0
    %4188 = vmatpush1.bf16.msra.mxu0 0
    %4189 = vmatprep.subr.bf16.mxu0 0
    %4190 = vmatpush1.bf16.msra.mxu0 0
    %4191 = vmatprep.subr.bf16.mxu0 0
    %4192 = vmatpush1.bf16.msra.mxu0 0
    %4193 = vmatprep.subr.bf16.mxu0 0
    %4194 = vmatpush1.bf16.msra.mxu0 0
    %4195 = vmatprep.subr.bf16.mxu0 0
    %4196 = vmatpush1.bf16.msra.mxu0 0
    %4197 = vmatprep.subr.bf16.mxu0 0
    %4198 = vmatpush1.bf16.msra.mxu0 0
    %4199 = vmatprep.subr.bf16.mxu0 0
    %4200 = vmatpush1.bf16.msra.mxu0 0
    %4201 = vmatprep.subr.bf16.mxu0 0
    %4202 = vmatpush1.bf16.msra.mxu0 0
    %4203 = vmatprep.subr.bf16.mxu0 0
    %4204 = vmatpush1.bf16.msra.mxu0 0
    %4205 = vmatprep.subr.bf16.mxu0 0
    %4206 = vmatpush1.bf16.msra.mxu0 0
    %4207 = vmatprep.subr.bf16.mxu0 0
    %4208 = vmatpush1.bf16.msra.mxu0 0
    %4209 = vmatprep.subr.bf16.mxu0 0
    %4210 = vmatpush1.bf16.msra.mxu0 0
    %4211 = vmatprep.subr.bf16.mxu0 0
    %4212 = vmatpush1.bf16.msra.mxu0 0
    %4213 = vmatprep.mubr.bf16.mxu0 0
    %4214 = vmatmul.mubr.bf16.gmra.mrb[0].mxu0 %v4097
    %v4215 = vpop.f32.mrb[0].mxu0
    %v4216 = vadd.f32 %v3725, %v4215
    %v4217 = vpop.f32.mrb[0].mxu0
    %v4218 = vadd.f32 %v3727, %v4217
    %v4219 = vpop.f32.mrb[0].mxu0
    %v4220 = vpop.f32.mrb[0].mxu0
    %4221 = vdwg.mxu0
    %4222 = vmatprep.subr.bf16.mxu0 %v4039
    %4223 = vmatpush1.bf16.msra.mxu0 %v4038
    %4224 = vmatprep.subr.bf16.mxu0 %v4055
    %4225 = vmatpush1.bf16.msra.mxu0 %v4054
    %4226 = vmatprep.subr.bf16.mxu0 0
    %4227 = vmatpush1.bf16.msra.mxu0 0
    %4228 = vmatprep.subr.bf16.mxu0 0
    %4229 = vmatpush1.bf16.msra.mxu0 0
    %4230 = vmatprep.subr.bf16.mxu0 0
    %4231 = vmatpush1.bf16.msra.mxu0 0
    %4232 = vmatprep.subr.bf16.mxu0 0
    %4233 = vmatpush1.bf16.msra.mxu0 0
    %4234 = vmatprep.subr.bf16.mxu0 0
    %4235 = vmatpush1.bf16.msra.mxu0 0
    %4236 = vmatprep.subr.bf16.mxu0 0
    %4237 = vmatpush1.bf16.msra.mxu0 0
    %4238 = vmatprep.subr.bf16.mxu0 0
    %4239 = vmatpush1.bf16.msra.mxu0 0
    %4240 = vmatprep.subr.bf16.mxu0 0
    %4241 = vmatpush1.bf16.msra.mxu0 0
    %4242 = vmatprep.subr.bf16.mxu0 0
    %4243 = vmatpush1.bf16.msra.mxu0 0
    %4244 = vmatprep.subr.bf16.mxu0 0
    %4245 = vmatpush1.bf16.msra.mxu0 0
    %4246 = vmatprep.subr.bf16.mxu0 0
    %4247 = vmatpush1.bf16.msra.mxu0 0
    %4248 = vmatprep.subr.bf16.mxu0 0
    %4249 = vmatpush1.bf16.msra.mxu0 0
    %4250 = vmatprep.subr.bf16.mxu0 0
    %4251 = vmatpush1.bf16.msra.mxu0 0
    %4252 = vmatprep.subr.bf16.mxu0 0
    %4253 = vmatpush1.bf16.msra.mxu0 0
    %4254 = vmatprep.mubr.bf16.mxu0 0
    %4255 = vmatmul.mubr.bf16.gmra.mrb[0].mxu0 %v4097
    %v4256 = vpop.f32.mrb[0].mxu0
    %v4257 = vadd.f32 %v3766, %v4256
    %v4258 = vpop.f32.mrb[0].mxu0
    %v4259 = vadd.f32 %v3768, %v4258
    %v4260 = vpop.f32.mrb[0].mxu0
    %v4261 = vpop.f32.mrb[0].mxu0
    %4262 = vdwg.mxu0
    %4263 = vmatprep.subr.bf16.mxu0 %v4041
    %4264 = vmatpush1.bf16.msra.mxu0 %v4040
    %4265 = vmatprep.subr.bf16.mxu0 %v4057
    %4266 = vmatpush1.bf16.msra.mxu0 %v4056
    %4267 = vmatprep.subr.bf16.mxu0 0
    %4268 = vmatpush1.bf16.msra.mxu0 0
    %4269 = vmatprep.subr.bf16.mxu0 0
    %4270 = vmatpush1.bf16.msra.mxu0 0
    %4271 = vmatprep.subr.bf16.mxu0 0
    %4272 = vmatpush1.bf16.msra.mxu0 0
    %4273 = vmatprep.subr.bf16.mxu0 0
    %4274 = vmatpush1.bf16.msra.mxu0 0
    %4275 = vmatprep.subr.bf16.mxu0 0
    %4276 = vmatpush1.bf16.msra.mxu0 0
    %4277 = vmatprep.subr.bf16.mxu0 0
    %4278 = vmatpush1.bf16.msra.mxu0 0
    %4279 = vmatprep.subr.bf16.mxu0 0
    %4280 = vmatpush1.bf16.msra.mxu0 0
    %4281 = vmatprep.subr.bf16.mxu0 0
    %4282 = vmatpush1.bf16.msra.mxu0 0
    %4283 = vmatprep.subr.bf16.mxu0 0
    %4284 = vmatpush1.bf16.msra.mxu0 0
    %4285 = vmatprep.subr.bf16.mxu0 0
    %4286 = vmatpush1.bf16.msra.mxu0 0
    %4287 = vmatprep.subr.bf16.mxu0 0
    %4288 = vmatpush1.bf16.msra.mxu0 0
    %4289 = vmatprep.subr.bf16.mxu0 0
    %4290 = vmatpush1.bf16.msra.mxu0 0
    %4291 = vmatprep.subr.bf16.mxu0 0
    %4292 = vmatpush1.bf16.msra.mxu0 0
    %4293 = vmatprep.subr.bf16.mxu0 0
    %4294 = vmatpush1.bf16.msra.mxu0 0
    %4295 = vmatprep.mubr.bf16.mxu0 0
    %4296 = vmatmul.mubr.bf16.gmra.mrb[0].mxu0 %v4097
    %v4297 = vpop.f32.mrb[0].mxu0
    %v4298 = vadd.f32 %v3807, %v4297
    %v4299 = vpop.f32.mrb[0].mxu0
    %v4300 = vadd.f32 %v3809, %v4299
    %v4301 = vpop.f32.mrb[0].mxu0
    %v4302 = vpop.f32.mrb[0].mxu0
    %4303 = vdwg.mxu0
    %4304 = vmatprep.subr.bf16.mxu0 %v4043
    %4305 = vmatpush1.bf16.msra.mxu0 %v4042
    %4306 = vmatprep.subr.bf16.mxu0 %v4059
    %4307 = vmatpush1.bf16.msra.mxu0 %v4058
    %4308 = vmatprep.subr.bf16.mxu0 0
    %4309 = vmatpush1.bf16.msra.mxu0 0
    %4310 = vmatprep.subr.bf16.mxu0 0
    %4311 = vmatpush1.bf16.msra.mxu0 0
    %4312 = vmatprep.subr.bf16.mxu0 0
    %4313 = vmatpush1.bf16.msra.mxu0 0
    %4314 = vmatprep.subr.bf16.mxu0 0
    %4315 = vmatpush1.bf16.msra.mxu0 0
    %4316 = vmatprep.subr.bf16.mxu0 0
    %4317 = vmatpush1.bf16.msra.mxu0 0
    %4318 = vmatprep.subr.bf16.mxu0 0
    %4319 = vmatpush1.bf16.msra.mxu0 0
    %4320 = vmatprep.subr.bf16.mxu0 0
    %4321 = vmatpush1.bf16.msra.mxu0 0
    %4322 = vmatprep.subr.bf16.mxu0 0
    %4323 = vmatpush1.bf16.msra.mxu0 0
    %4324 = vmatprep.subr.bf16.mxu0 0
    %4325 = vmatpush1.bf16.msra.mxu0 0
    %4326 = vmatprep.subr.bf16.mxu0 0
    %4327 = vmatpush1.bf16.msra.mxu0 0
    %4328 = vmatprep.subr.bf16.mxu0 0
    %4329 = vmatpush1.bf16.msra.mxu0 0
    %4330 = vmatprep.subr.bf16.mxu0 0
    %4331 = vmatpush1.bf16.msra.mxu0 0
    %4332 = vmatprep.subr.bf16.mxu0 0
    %4333 = vmatpush1.bf16.msra.mxu0 0
    %4334 = vmatprep.subr.bf16.mxu0 0
    %4335 = vmatpush1.bf16.msra.mxu0 0
    %4336 = vmatprep.mubr.bf16.mxu0 0
    %4337 = vmatmul.mubr.bf16.gmra.mrb[0].mxu0 %v4097
    %v4338 = vpop.f32.mrb[0].mxu0
    %v4339 = vadd.f32 %v3848, %v4338
    %v4340 = vpop.f32.mrb[0].mxu0
    %v4341 = vadd.f32 %v3850, %v4340
    %v4342 = vpop.f32.mrb[0].mxu0
    %v4343 = vpop.f32.mrb[0].mxu0
    %4344 = vdwg.mxu0
    %4345 = vmatprep.subr.bf16.mxu0 %v4045
    %4346 = vmatpush1.bf16.msra.mxu0 %v4044
    %4347 = vmatprep.subr.bf16.mxu0 %v4061
    %4348 = vmatpush1.bf16.msra.mxu0 %v4060
    %4349 = vmatprep.subr.bf16.mxu0 0
    %4350 = vmatpush1.bf16.msra.mxu0 0
    %4351 = vmatprep.subr.bf16.mxu0 0
    %4352 = vmatpush1.bf16.msra.mxu0 0
    %4353 = vmatprep.subr.bf16.mxu0 0
    %4354 = vmatpush1.bf16.msra.mxu0 0
    %4355 = vmatprep.subr.bf16.mxu0 0
    %4356 = vmatpush1.bf16.msra.mxu0 0
    %4357 = vmatprep.subr.bf16.mxu0 0
    %4358 = vmatpush1.bf16.msra.mxu0 0
    %4359 = vmatprep.subr.bf16.mxu0 0
    %4360 = vmatpush1.bf16.msra.mxu0 0
    %4361 = vmatprep.subr.bf16.mxu0 0
    %4362 = vmatpush1.bf16.msra.mxu0 0
    %4363 = vmatprep.subr.bf16.mxu0 0
    %4364 = vmatpush1.bf16.msra.mxu0 0
    %4365 = vmatprep.subr.bf16.mxu0 0
    %4366 = vmatpush1.bf16.msra.mxu0 0
    %4367 = vmatprep.subr.bf16.mxu0 0
    %4368 = vmatpush1.bf16.msra.mxu0 0
    %4369 = vmatprep.subr.bf16.mxu0 0
    %4370 = vmatpush1.bf16.msra.mxu0 0
    %4371 = vmatprep.subr.bf16.mxu0 0
    %4372 = vmatpush1.bf16.msra.mxu0 0
    %4373 = vmatprep.subr.bf16.mxu0 0
    %4374 = vmatpush1.bf16.msra.mxu0 0
    %4375 = vmatprep.subr.bf16.mxu0 0
    %4376 = vmatpush1.bf16.msra.mxu0 0
    %4377 = vmatprep.mubr.bf16.mxu0 0
    %4378 = vmatmul.mubr.bf16.gmra.mrb[0].mxu0 %v4097
    %v4379 = vpop.f32.mrb[0].mxu0
    %v4380 = vadd.f32 %v3889, %v4379
    %v4381 = vpop.f32.mrb[0].mxu0
    %v4382 = vadd.f32 %v3891, %v4381
    %v4383 = vpop.f32.mrb[0].mxu0
    %v4384 = vpop.f32.mrb[0].mxu0
    %4385 = vdwg.mxu0
    %4386 = vmatprep.subr.bf16.mxu0 %v4047
    %4387 = vmatpush1.bf16.msra.mxu0 %v4046
    %4388 = vmatprep.subr.bf16.mxu0 %v4063
    %4389 = vmatpush1.bf16.msra.mxu0 %v4062
    %4390 = vmatprep.subr.bf16.mxu0 0
    %4391 = vmatpush1.bf16.msra.mxu0 0
    %4392 = vmatprep.subr.bf16.mxu0 0
    %4393 = vmatpush1.bf16.msra.mxu0 0
    %4394 = vmatprep.subr.bf16.mxu0 0
    %4395 = vmatpush1.bf16.msra.mxu0 0
    %4396 = vmatprep.subr.bf16.mxu0 0
    %4397 = vmatpush1.bf16.msra.mxu0 0
    %4398 = vmatprep.subr.bf16.mxu0 0
    %4399 = vmatpush1.bf16.msra.mxu0 0
    %4400 = vmatprep.subr.bf16.mxu0 0
    %4401 = vmatpush1.bf16.msra.mxu0 0
    %4402 = vmatprep.subr.bf16.mxu0 0
    %4403 = vmatpush1.bf16.msra.mxu0 0
    %4404 = vmatprep.subr.bf16.mxu0 0
    %4405 = vmatpush1.bf16.msra.mxu0 0
    %4406 = vmatprep.subr.bf16.mxu0 0
    %4407 = vmatpush1.bf16.msra.mxu0 0
    %4408 = vmatprep.subr.bf16.mxu0 0
    %4409 = vmatpush1.bf16.msra.mxu0 0
    %4410 = vmatprep.subr.bf16.mxu0 0
    %4411 = vmatpush1.bf16.msra.mxu0 0
    %4412 = vmatprep.subr.bf16.mxu0 0
    %4413 = vmatpush1.bf16.msra.mxu0 0
    %4414 = vmatprep.subr.bf16.mxu0 0
    %4415 = vmatpush1.bf16.msra.mxu0 0
    %4416 = vmatprep.subr.bf16.mxu0 0
    %4417 = vmatpush1.bf16.msra.mxu0 0
    %4418 = vmatprep.mubr.bf16.mxu0 0
    %4419 = vmatmul.mubr.bf16.gmra.mrb[0].mxu0 %v4097
    %v4420 = vpop.f32.mrb[0].mxu0
    %v4421 = vadd.f32 %v3930, %v4420
    %v4422 = vpop.f32.mrb[0].mxu0
    %v4423 = vadd.f32 %v3932, %v4422
    %v4424 = vpop.f32.mrb[0].mxu0
    %v4425 = vpop.f32.mrb[0].mxu0
    %4426 = vdwg.mxu0
    %s4427 = scalar_lea.vmem [#allocation11], 512
    %v4428 = vld [vmem:[%s4427] sm:$0xff]
    %v4429 = vld [vmem:[%s4427 + $0x8] sm:$0xff]
    %v4430 = vld [vmem:[%s4427 + $0x10] sm:$0xff]
    %v4431 = vld [vmem:[%s4427 + $0x18] sm:$0xff]
    %v4432 = vld [vmem:[%s4427 + $0x20] sm:$0xff]
    %v4433 = vld [vmem:[%s4427 + $0x28] sm:$0xff]
    %v4434 = vld [vmem:[%s4427 + $0x30] sm:$0xff]
    %v4435 = vld [vmem:[%s4427 + $0x38] sm:$0xff]
    %v4436 = vld [vmem:[%s4427 + $0x40] sm:$0xff]
    %v4437 = vld [vmem:[%s4427 + $0x48] sm:$0xff]
    %v4438 = vld [vmem:[%s4427 + $0x50] sm:$0xff]
    %v4439 = vld [vmem:[%s4427 + $0x58] sm:$0xff]
    %v4440 = vld [vmem:[%s4427 + $0x60] sm:$0xff]
    %v4441 = vld [vmem:[%s4427 + $0x68] sm:$0xff]
    %v4442 = vld [vmem:[%s4427 + $0x70] sm:$0xff]
    %v4443 = vld [vmem:[%s4427 + $0x78] sm:$0xff]
    %v4444 = vld [vmem:[%s4427 + $0x80] sm:$0xff]
    %v4445 = vld [vmem:[%s4427 + $0x88] sm:$0xff]
    %v4446 = vld [vmem:[%s4427 + $0x90] sm:$0xff]
    %v4447 = vld [vmem:[%s4427 + $0x98] sm:$0xff]
    %v4448 = vld [vmem:[%s4427 + $0xa0] sm:$0xff]
    %v4449 = vld [vmem:[%s4427 + $0xa8] sm:$0xff]
    %v4450 = vld [vmem:[%s4427 + $0xb0] sm:$0xff]
    %v4451 = vld [vmem:[%s4427 + $0xb8] sm:$0xff]
    %v4452 = vld [vmem:[%s4427 + $0xc0] sm:$0xff]
    %v4453 = vld [vmem:[%s4427 + $0xc8] sm:$0xff]
    %v4454 = vld [vmem:[%s4427 + $0xd0] sm:$0xff]
    %v4455 = vld [vmem:[%s4427 + $0xd8] sm:$0xff]
    %v4456 = vld [vmem:[%s4427 + $0xe0] sm:$0xff]
    %v4457 = vld [vmem:[%s4427 + $0xe8] sm:$0xff]
    %v4458 = vld [vmem:[%s4427 + $0xf0] sm:$0xff]
    %v4459 = vld [vmem:[%s4427 + $0xf8] sm:$0xff]
    %v4460 = vrot.slane %v3376, 2
    %v4493 = vunpack.c.l.b16 %v4428
    %v4494 = vunpack.c.h.b16 %v4428
    %v4495 = vunpack.c.l.b16 %v4429
    %v4496 = vunpack.c.h.b16 %v4429
    %v4497 = vunpack.c.l.b16 %v4430
    %v4498 = vunpack.c.h.b16 %v4430
    %v4499 = vunpack.c.l.b16 %v4431
    %v4500 = vunpack.c.h.b16 %v4431
    %v4501 = vunpack.c.l.b16 %v4432
    %v4502 = vunpack.c.h.b16 %v4432
    %v4503 = vunpack.c.l.b16 %v4433
    %v4504 = vunpack.c.h.b16 %v4433
    %v4505 = vunpack.c.l.b16 %v4434
    %v4506 = vunpack.c.h.b16 %v4434
    %v4507 = vunpack.c.l.b16 %v4435
    %v4508 = vunpack.c.h.b16 %v4435
    %v4509 = vunpack.c.l.b16 %v4436
    %v4510 = vunpack.c.h.b16 %v4436
    %v4511 = vunpack.c.l.b16 %v4437
    %v4512 = vunpack.c.h.b16 %v4437
    %v4513 = vunpack.c.l.b16 %v4438
    %v4514 = vunpack.c.h.b16 %v4438
    %v4515 = vunpack.c.l.b16 %v4439
    %v4516 = vunpack.c.h.b16 %v4439
    %v4517 = vunpack.c.l.b16 %v4440
    %v4518 = vunpack.c.h.b16 %v4440
    %v4519 = vunpack.c.l.b16 %v4441
    %v4520 = vunpack.c.h.b16 %v4441
    %v4521 = vunpack.c.l.b16 %v4442
    %v4522 = vunpack.c.h.b16 %v4442
    %v4523 = vunpack.c.l.b16 %v4443
    %v4524 = vunpack.c.h.b16 %v4443
    %v4525 = vunpack.c.l.b16 %v4444
    %v4526 = vunpack.c.h.b16 %v4444
    %v4527 = vunpack.c.l.b16 %v4445
    %v4528 = vunpack.c.h.b16 %v4445
    %v4529 = vunpack.c.l.b16 %v4446
    %v4530 = vunpack.c.h.b16 %v4446
    %v4531 = vunpack.c.l.b16 %v4447
    %v4532 = vunpack.c.h.b16 %v4447
    %v4533 = vunpack.c.l.b16 %v4448
    %v4534 = vunpack.c.h.b16 %v4448
    %v4535 = vunpack.c.l.b16 %v4449
    %v4536 = vunpack.c.h.b16 %v4449
    %v4537 = vunpack.c.l.b16 %v4450
    %v4538 = vunpack.c.h.b16 %v4450
    %v4539 = vunpack.c.l.b16 %v4451
    %v4540 = vunpack.c.h.b16 %v4451
    %v4541 = vunpack.c.l.b16 %v4452
    %v4542 = vunpack.c.h.b16 %v4452
    %v4543 = vunpack.c.l.b16 %v4453
    %v4544 = vunpack.c.h.b16 %v4453
    %v4545 = vunpack.c.l.b16 %v4454
    %v4546 = vunpack.c.h.b16 %v4454
    %v4547 = vunpack.c.l.b16 %v4455
    %v4548 = vunpack.c.h.b16 %v4455
    %v4549 = vunpack.c.l.b16 %v4456
    %v4550 = vunpack.c.h.b16 %v4456
    %v4551 = vunpack.c.l.b16 %v4457
    %v4552 = vunpack.c.h.b16 %v4457
    %v4553 = vunpack.c.l.b16 %v4458
    %v4554 = vunpack.c.h.b16 %v4458
    %v4555 = vunpack.c.l.b16 %v4459
    %v4556 = vunpack.c.h.b16 %v4459
    %v4557 = vpack.c.b16 %v4509, %v4493
    %v4558 = vpack.c.b16 %v4510, %v4494
    %v4559 = vpack.c.b16 %v4511, %v4495
    %v4560 = vpack.c.b16 %v4512, %v4496
    %v4561 = vpack.c.b16 %v4513, %v4497
    %v4562 = vpack.c.b16 %v4514, %v4498
    %v4563 = vpack.c.b16 %v4515, %v4499
    %v4564 = vpack.c.b16 %v4516, %v4500
    %v4565 = vpack.c.b16 %v4517, %v4501
    %v4566 = vpack.c.b16 %v4518, %v4502
    %v4567 = vpack.c.b16 %v4519, %v4503
    %v4568 = vpack.c.b16 %v4520, %v4504
    %v4569 = vpack.c.b16 %v4521, %v4505
    %v4570 = vpack.c.b16 %v4522, %v4506
    %v4571 = vpack.c.b16 %v4523, %v4507
    %v4572 = vpack.c.b16 %v4524, %v4508
    %v4573 = vpack.c.b16 %v4541, %v4525
    %v4574 = vpack.c.b16 %v4542, %v4526
    %v4575 = vpack.c.b16 %v4543, %v4527
    %v4576 = vpack.c.b16 %v4544, %v4528
    %v4577 = vpack.c.b16 %v4545, %v4529
    %v4578 = vpack.c.b16 %v4546, %v4530
    %v4579 = vpack.c.b16 %v4547, %v4531
    %v4580 = vpack.c.b16 %v4548, %v4532
    %v4581 = vpack.c.b16 %v4549, %v4533
    %v4582 = vpack.c.b16 %v4550, %v4534
    %v4583 = vpack.c.b16 %v4551, %v4535
    %v4584 = vpack.c.b16 %v4552, %v4536
    %v4585 = vpack.c.b16 %v4553, %v4537
    %v4586 = vpack.c.b16 %v4554, %v4538
    %v4587 = vpack.c.b16 %v4555, %v4539
    %v4588 = vpack.c.b16 %v4556, %v4540
    %v4622 = vsel %vm3604, %v4460, 0
    %4624 = vmatprep.subr.bf16.mxu0 %v4558
    %4625 = vmatpush1.bf16.msra.mxu0 %v4557
    %4626 = vmatprep.subr.bf16.mxu0 %v4574
    %4627 = vmatpush1.bf16.msra.mxu0 %v4573
    %4628 = vmatprep.subr.bf16.mxu0 0
    %4629 = vmatpush1.bf16.msra.mxu0 0
    %4630 = vmatprep.subr.bf16.mxu0 0
    %4631 = vmatpush1.bf16.msra.mxu0 0
    %4632 = vmatprep.subr.bf16.mxu0 0
    %4633 = vmatpush1.bf16.msra.mxu0 0
    %4634 = vmatprep.subr.bf16.mxu0 0
    %4635 = vmatpush1.bf16.msra.mxu0 0
    %4636 = vmatprep.subr.bf16.mxu0 0
    %4637 = vmatpush1.bf16.msra.mxu0 0
    %4638 = vmatprep.subr.bf16.mxu0 0
    %4639 = vmatpush1.bf16.msra.mxu0 0
    %4640 = vmatprep.subr.bf16.mxu0 0
    %4641 = vmatpush1.bf16.msra.mxu0 0
    %4642 = vmatprep.subr.bf16.mxu0 0
    %4643 = vmatpush1.bf16.msra.mxu0 0
    %4644 = vmatprep.subr.bf16.mxu0 0
    %4645 = vmatpush1.bf16.msra.mxu0 0
    %4646 = vmatprep.subr.bf16.mxu0 0
    %4647 = vmatpush1.bf16.msra.mxu0 0
    %4648 = vmatprep.subr.bf16.mxu0 0
    %4649 = vmatpush1.bf16.msra.mxu0 0
    %4650 = vmatprep.subr.bf16.mxu0 0
    %4651 = vmatpush1.bf16.msra.mxu0 0
    %4652 = vmatprep.subr.bf16.mxu0 0
    %4653 = vmatpush1.bf16.msra.mxu0 0
    %4654 = vmatprep.subr.bf16.mxu0 0
    %4655 = vmatpush1.bf16.msra.mxu0 0
    %4656 = vmatprep.mubr.bf16.mxu0 0
    %4657 = vmatmul.mubr.bf16.gmra.mrb[0].mxu0 %v4622
    %v4658 = vpop.f32.mrb[0].mxu0
    %v4659 = vadd.f32 0.0, %v4658
    %v4660 = vpop.f32.mrb[0].mxu0
    %v4661 = vadd.f32 0.0, %v4660
    %v4662 = vpop.f32.mrb[0].mxu0
    %v4663 = vpop.f32.mrb[0].mxu0
    %4664 = vdwg.mxu0
    %4665 = vmatprep.subr.bf16.mxu0 %v4560
    %4666 = vmatpush1.bf16.msra.mxu0 %v4559
    %4667 = vmatprep.subr.bf16.mxu0 %v4576
    %4668 = vmatpush1.bf16.msra.mxu0 %v4575
    %4669 = vmatprep.subr.bf16.mxu0 0
    %4670 = vmatpush1.bf16.msra.mxu0 0
    %4671 = vmatprep.subr.bf16.mxu0 0
    %4672 = vmatpush1.bf16.msra.mxu0 0
    %4673 = vmatprep.subr.bf16.mxu0 0
    %4674 = vmatpush1.bf16.msra.mxu0 0
    %4675 = vmatprep.subr.bf16.mxu0 0
    %4676 = vmatpush1.bf16.msra.mxu0 0
    %4677 = vmatprep.subr.bf16.mxu0 0
    %4678 = vmatpush1.bf16.msra.mxu0 0
    %4679 = vmatprep.subr.bf16.mxu0 0
    %4680 = vmatpush1.bf16.msra.mxu0 0
    %4681 = vmatprep.subr.bf16.mxu0 0
    %4682 = vmatpush1.bf16.msra.mxu0 0
    %4683 = vmatprep.subr.bf16.mxu0 0
    %4684 = vmatpush1.bf16.msra.mxu0 0
    %4685 = vmatprep.subr.bf16.mxu0 0
    %4686 = vmatpush1.bf16.msra.mxu0 0
    %4687 = vmatprep.subr.bf16.mxu0 0
    %4688 = vmatpush1.bf16.msra.mxu0 0
    %4689 = vmatprep.subr.bf16.mxu0 0
    %4690 = vmatpush1.bf16.msra.mxu0 0
    %4691 = vmatprep.subr.bf16.mxu0 0
    %4692 = vmatpush1.bf16.msra.mxu0 0
    %4693 = vmatprep.subr.bf16.mxu0 0
    %4694 = vmatpush1.bf16.msra.mxu0 0
    %4695 = vmatprep.subr.bf16.mxu0 0
    %4696 = vmatpush1.bf16.msra.mxu0 0
    %4697 = vmatprep.mubr.bf16.mxu0 0
    %4698 = vmatmul.mubr.bf16.gmra.mrb[0].mxu0 %v4622
    %v4699 = vpop.f32.mrb[0].mxu0
    %v4700 = vadd.f32 0.0, %v4699
    %v4701 = vpop.f32.mrb[0].mxu0
    %v4702 = vadd.f32 0.0, %v4701
    %v4703 = vpop.f32.mrb[0].mxu0
    %v4704 = vpop.f32.mrb[0].mxu0
    %4705 = vdwg.mxu0
    %4706 = vmatprep.subr.bf16.mxu0 %v4562
    %4707 = vmatpush1.bf16.msra.mxu0 %v4561
    %4708 = vmatprep.subr.bf16.mxu0 %v4578
    %4709 = vmatpush1.bf16.msra.mxu0 %v4577
    %4710 = vmatprep.subr.bf16.mxu0 0
    %4711 = vmatpush1.bf16.msra.mxu0 0
    %4712 = vmatprep.subr.bf16.mxu0 0
    %4713 = vmatpush1.bf16.msra.mxu0 0
    %4714 = vmatprep.subr.bf16.mxu0 0
    %4715 = vmatpush1.bf16.msra.mxu0 0
    %4716 = vmatprep.subr.bf16.mxu0 0
    %4717 = vmatpush1.bf16.msra.mxu0 0
    %4718 = vmatprep.subr.bf16.mxu0 0
    %4719 = vmatpush1.bf16.msra.mxu0 0
    %4720 = vmatprep.subr.bf16.mxu0 0
    %4721 = vmatpush1.bf16.msra.mxu0 0
    %4722 = vmatprep.subr.bf16.mxu0 0
    %4723 = vmatpush1.bf16.msra.mxu0 0
    %4724 = vmatprep.subr.bf16.mxu0 0
    %4725 = vmatpush1.bf16.msra.mxu0 0
    %4726 = vmatprep.subr.bf16.mxu0 0
    %4727 = vmatpush1.bf16.msra.mxu0 0
    %4728 = vmatprep.subr.bf16.mxu0 0
    %4729 = vmatpush1.bf16.msra.mxu0 0
    %4730 = vmatprep.subr.bf16.mxu0 0
    %4731 = vmatpush1.bf16.msra.mxu0 0
    %4732 = vmatprep.subr.bf16.mxu0 0
    %4733 = vmatpush1.bf16.msra.mxu0 0
    %4734 = vmatprep.subr.bf16.mxu0 0
    %4735 = vmatpush1.bf16.msra.mxu0 0
    %4736 = vmatprep.subr.bf16.mxu0 0
    %4737 = vmatpush1.bf16.msra.mxu0 0
    %4738 = vmatprep.mubr.bf16.mxu0 0
    %4739 = vmatmul.mubr.bf16.gmra.mrb[0].mxu0 %v4622
    %v4740 = vpop.f32.mrb[0].mxu0
    %v4741 = vadd.f32 0.0, %v4740
    %v4742 = vpop.f32.mrb[0].mxu0
    %v4743 = vadd.f32 0.0, %v4742
    %v4744 = vpop.f32.mrb[0].mxu0
    %v4745 = vpop.f32.mrb[0].mxu0
    %4746 = vdwg.mxu0
    %4747 = vmatprep.subr.bf16.mxu0 %v4564
    %4748 = vmatpush1.bf16.msra.mxu0 %v4563
    %4749 = vmatprep.subr.bf16.mxu0 %v4580
    %4750 = vmatpush1.bf16.msra.mxu0 %v4579
    %4751 = vmatprep.subr.bf16.mxu0 0
    %4752 = vmatpush1.bf16.msra.mxu0 0
    %4753 = vmatprep.subr.bf16.mxu0 0
    %4754 = vmatpush1.bf16.msra.mxu0 0
    %4755 = vmatprep.subr.bf16.mxu0 0
    %4756 = vmatpush1.bf16.msra.mxu0 0
    %4757 = vmatprep.subr.bf16.mxu0 0
    %4758 = vmatpush1.bf16.msra.mxu0 0
    %4759 = vmatprep.subr.bf16.mxu0 0
    %4760 = vmatpush1.bf16.msra.mxu0 0
    %4761 = vmatprep.subr.bf16.mxu0 0
    %4762 = vmatpush1.bf16.msra.mxu0 0
    %4763 = vmatprep.subr.bf16.mxu0 0
    %4764 = vmatpush1.bf16.msra.mxu0 0
    %4765 = vmatprep.subr.bf16.mxu0 0
    %4766 = vmatpush1.bf16.msra.mxu0 0
    %4767 = vmatprep.subr.bf16.mxu0 0
    %4768 = vmatpush1.bf16.msra.mxu0 0
    %4769 = vmatprep.subr.bf16.mxu0 0
    %4770 = vmatpush1.bf16.msra.mxu0 0
    %4771 = vmatprep.subr.bf16.mxu0 0
    %4772 = vmatpush1.bf16.msra.mxu0 0
    %4773 = vmatprep.subr.bf16.mxu0 0
    %4774 = vmatpush1.bf16.msra.mxu0 0
    %4775 = vmatprep.subr.bf16.mxu0 0
    %4776 = vmatpush1.bf16.msra.mxu0 0
    %4777 = vmatprep.subr.bf16.mxu0 0
    %4778 = vmatpush1.bf16.msra.mxu0 0
    %4779 = vmatprep.mubr.bf16.mxu0 0
    %4780 = vmatmul.mubr.bf16.gmra.mrb[0].mxu0 %v4622
    %v4781 = vpop.f32.mrb[0].mxu0
    %v4782 = vadd.f32 0.0, %v4781
    %v4783 = vpop.f32.mrb[0].mxu0
    %v4784 = vadd.f32 0.0, %v4783
    %v4785 = vpop.f32.mrb[0].mxu0
    %v4786 = vpop.f32.mrb[0].mxu0
    %4787 = vdwg.mxu0
    %4788 = vmatprep.subr.bf16.mxu0 %v4566
    %4789 = vmatpush1.bf16.msra.mxu0 %v4565
    %4790 = vmatprep.subr.bf16.mxu0 %v4582
    %4791 = vmatpush1.bf16.msra.mxu0 %v4581
    %4792 = vmatprep.subr.bf16.mxu0 0
    %4793 = vmatpush1.bf16.msra.mxu0 0
    %4794 = vmatprep.subr.bf16.mxu0 0
    %4795 = vmatpush1.bf16.msra.mxu0 0
    %4796 = vmatprep.subr.bf16.mxu0 0
    %4797 = vmatpush1.bf16.msra.mxu0 0
    %4798 = vmatprep.subr.bf16.mxu0 0
    %4799 = vmatpush1.bf16.msra.mxu0 0
    %4800 = vmatprep.subr.bf16.mxu0 0
    %4801 = vmatpush1.bf16.msra.mxu0 0
    %4802 = vmatprep.subr.bf16.mxu0 0
    %4803 = vmatpush1.bf16.msra.mxu0 0
    %4804 = vmatprep.subr.bf16.mxu0 0
    %4805 = vmatpush1.bf16.msra.mxu0 0
    %4806 = vmatprep.subr.bf16.mxu0 0
    %4807 = vmatpush1.bf16.msra.mxu0 0
    %4808 = vmatprep.subr.bf16.mxu0 0
    %4809 = vmatpush1.bf16.msra.mxu0 0
    %4810 = vmatprep.subr.bf16.mxu0 0
    %4811 = vmatpush1.bf16.msra.mxu0 0
    %4812 = vmatprep.subr.bf16.mxu0 0
    %4813 = vmatpush1.bf16.msra.mxu0 0
    %4814 = vmatprep.subr.bf16.mxu0 0
    %4815 = vmatpush1.bf16.msra.mxu0 0
    %4816 = vmatprep.subr.bf16.mxu0 0
    %4817 = vmatpush1.bf16.msra.mxu0 0
    %4818 = vmatprep.subr.bf16.mxu0 0
    %4819 = vmatpush1.bf16.msra.mxu0 0
    %4820 = vmatprep.mubr.bf16.mxu0 0
    %4821 = vmatmul.mubr.bf16.gmra.mrb[0].mxu0 %v4622
    %v4822 = vpop.f32.mrb[0].mxu0
    %v4823 = vadd.f32 0.0, %v4822
    %v4824 = vpop.f32.mrb[0].mxu0
    %v4825 = vadd.f32 0.0, %v4824
    %v4826 = vpop.f32.mrb[0].mxu0
    %v4827 = vpop.f32.mrb[0].mxu0
    %4828 = vdwg.mxu0
    %4829 = vmatprep.subr.bf16.mxu0 %v4568
    %4830 = vmatpush1.bf16.msra.mxu0 %v4567
    %4831 = vmatprep.subr.bf16.mxu0 %v4584
    %4832 = vmatpush1.bf16.msra.mxu0 %v4583
    %4833 = vmatprep.subr.bf16.mxu0 0
    %4834 = vmatpush1.bf16.msra.mxu0 0
    %4835 = vmatprep.subr.bf16.mxu0 0
    %4836 = vmatpush1.bf16.msra.mxu0 0
    %4837 = vmatprep.subr.bf16.mxu0 0
    %4838 = vmatpush1.bf16.msra.mxu0 0
    %4839 = vmatprep.subr.bf16.mxu0 0
    %4840 = vmatpush1.bf16.msra.mxu0 0
    %4841 = vmatprep.subr.bf16.mxu0 0
    %4842 = vmatpush1.bf16.msra.mxu0 0
    %4843 = vmatprep.subr.bf16.mxu0 0
    %4844 = vmatpush1.bf16.msra.mxu0 0
    %4845 = vmatprep.subr.bf16.mxu0 0
    %4846 = vmatpush1.bf16.msra.mxu0 0
    %4847 = vmatprep.subr.bf16.mxu0 0
    %4848 = vmatpush1.bf16.msra.mxu0 0
    %4849 = vmatprep.subr.bf16.mxu0 0
    %4850 = vmatpush1.bf16.msra.mxu0 0
    %4851 = vmatprep.subr.bf16.mxu0 0
    %4852 = vmatpush1.bf16.msra.mxu0 0
    %4853 = vmatprep.subr.bf16.mxu0 0
    %4854 = vmatpush1.bf16.msra.mxu0 0
    %4855 = vmatprep.subr.bf16.mxu0 0
    %4856 = vmatpush1.bf16.msra.mxu0 0
    %4857 = vmatprep.subr.bf16.mxu0 0
    %4858 = vmatpush1.bf16.msra.mxu0 0
    %4859 = vmatprep.subr.bf16.mxu0 0
    %4860 = vmatpush1.bf16.msra.mxu0 0
    %4861 = vmatprep.mubr.bf16.mxu0 0
    %4862 = vmatmul.mubr.bf16.gmra.mrb[0].mxu0 %v4622
    %v4863 = vpop.f32.mrb[0].mxu0
    %v4864 = vadd.f32 0.0, %v4863
    %v4865 = vpop.f32.mrb[0].mxu0
    %v4866 = vadd.f32 0.0, %v4865
    %v4867 = vpop.f32.mrb[0].mxu0
    %v4868 = vpop.f32.mrb[0].mxu0
    %4869 = vdwg.mxu0
    %4870 = vmatprep.subr.bf16.mxu0 %v4570
    %4871 = vmatpush1.bf16.msra.mxu0 %v4569
    %4872 = vmatprep.subr.bf16.mxu0 %v4586
    %4873 = vmatpush1.bf16.msra.mxu0 %v4585
    %4874 = vmatprep.subr.bf16.mxu0 0
    %4875 = vmatpush1.bf16.msra.mxu0 0
    %4876 = vmatprep.subr.bf16.mxu0 0
    %4877 = vmatpush1.bf16.msra.mxu0 0
    %4878 = vmatprep.subr.bf16.mxu0 0
    %4879 = vmatpush1.bf16.msra.mxu0 0
    %4880 = vmatprep.subr.bf16.mxu0 0
    %4881 = vmatpush1.bf16.msra.mxu0 0
    %4882 = vmatprep.subr.bf16.mxu0 0
    %4883 = vmatpush1.bf16.msra.mxu0 0
    %4884 = vmatprep.subr.bf16.mxu0 0
    %4885 = vmatpush1.bf16.msra.mxu0 0
    %4886 = vmatprep.subr.bf16.mxu0 0
    %4887 = vmatpush1.bf16.msra.mxu0 0
    %4888 = vmatprep.subr.bf16.mxu0 0
    %4889 = vmatpush1.bf16.msra.mxu0 0
    %4890 = vmatprep.subr.bf16.mxu0 0
    %4891 = vmatpush1.bf16.msra.mxu0 0
    %4892 = vmatprep.subr.bf16.mxu0 0
    %4893 = vmatpush1.bf16.msra.mxu0 0
    %4894 = vmatprep.subr.bf16.mxu0 0
    %4895 = vmatpush1.bf16.msra.mxu0 0
    %4896 = vmatprep.subr.bf16.mxu0 0
    %4897 = vmatpush1.bf16.msra.mxu0 0
    %4898 = vmatprep.subr.bf16.mxu0 0
    %4899 = vmatpush1.bf16.msra.mxu0 0
    %4900 = vmatprep.subr.bf16.mxu0 0
    %4901 = vmatpush1.bf16.msra.mxu0 0
    %4902 = vmatprep.mubr.bf16.mxu0 0
    %4903 = vmatmul.mubr.bf16.gmra.mrb[0].mxu0 %v4622
    %v4904 = vpop.f32.mrb[0].mxu0
    %v4905 = vadd.f32 0.0, %v4904
    %v4906 = vpop.f32.mrb[0].mxu0
    %v4907 = vadd.f32 0.0, %v4906
    %v4908 = vpop.f32.mrb[0].mxu0
    %v4909 = vpop.f32.mrb[0].mxu0
    %4910 = vdwg.mxu0
    %4911 = vmatprep.subr.bf16.mxu0 %v4572
    %4912 = vmatpush1.bf16.msra.mxu0 %v4571
    %4913 = vmatprep.subr.bf16.mxu0 %v4588
    %4914 = vmatpush1.bf16.msra.mxu0 %v4587
    %4915 = vmatprep.subr.bf16.mxu0 0
    %4916 = vmatpush1.bf16.msra.mxu0 0
    %4917 = vmatprep.subr.bf16.mxu0 0
    %4918 = vmatpush1.bf16.msra.mxu0 0
    %4919 = vmatprep.subr.bf16.mxu0 0
    %4920 = vmatpush1.bf16.msra.mxu0 0
    %4921 = vmatprep.subr.bf16.mxu0 0
    %4922 = vmatpush1.bf16.msra.mxu0 0
    %4923 = vmatprep.subr.bf16.mxu0 0
    %4924 = vmatpush1.bf16.msra.mxu0 0
    %4925 = vmatprep.subr.bf16.mxu0 0
    %4926 = vmatpush1.bf16.msra.mxu0 0
    %4927 = vmatprep.subr.bf16.mxu0 0
    %4928 = vmatpush1.bf16.msra.mxu0 0
    %4929 = vmatprep.subr.bf16.mxu0 0
    %4930 = vmatpush1.bf16.msra.mxu0 0
    %4931 = vmatprep.subr.bf16.mxu0 0
    %4932 = vmatpush1.bf16.msra.mxu0 0
    %4933 = vmatprep.subr.bf16.mxu0 0
    %4934 = vmatpush1.bf16.msra.mxu0 0
    %4935 = vmatprep.subr.bf16.mxu0 0
    %4936 = vmatpush1.bf16.msra.mxu0 0
    %4937 = vmatprep.subr.bf16.mxu0 0
    %4938 = vmatpush1.bf16.msra.mxu0 0
    %4939 = vmatprep.subr.bf16.mxu0 0
    %4940 = vmatpush1.bf16.msra.mxu0 0
    %4941 = vmatprep.subr.bf16.mxu0 0
    %4942 = vmatpush1.bf16.msra.mxu0 0
    %4943 = vmatprep.mubr.bf16.mxu0 0
    %4944 = vmatmul.mubr.bf16.gmra.mrb[0].mxu0 %v4622
    %v4945 = vpop.f32.mrb[0].mxu0
    %v4946 = vadd.f32 0.0, %v4945
    %v4947 = vpop.f32.mrb[0].mxu0
    %v4948 = vadd.f32 0.0, %v4947
    %v4949 = vpop.f32.mrb[0].mxu0
    %v4950 = vpop.f32.mrb[0].mxu0
    %4951 = vdwg.mxu0
    %v4952 = vadd.f32 %v4134, %v4659
    %v4953 = vadd.f32 %v4136, %v4661
    %v4954 = vadd.f32 %v4175, %v4700
    %v4955 = vadd.f32 %v4177, %v4702
    %v4956 = vadd.f32 %v4216, %v4741
    %v4957 = vadd.f32 %v4218, %v4743
    %v4958 = vadd.f32 %v4257, %v4782
    %v4959 = vadd.f32 %v4259, %v4784
    %v4960 = vadd.f32 %v4298, %v4823
    %v4961 = vadd.f32 %v4300, %v4825
    %v4962 = vadd.f32 %v4339, %v4864
    %v4963 = vadd.f32 %v4341, %v4866
    %v4964 = vadd.f32 %v4380, %v4905
    %v4965 = vadd.f32 %v4382, %v4907
    %v4966 = vadd.f32 %v4421, %v4946
    %v4967 = vadd.f32 %v4423, %v4948
    %s4968 = scalar_lea.vmem [#allocation11], 768
    %v4969 = vld [vmem:[%s4968] sm:$0xff]
    %v4970 = vld [vmem:[%s4968 + $0x8] sm:$0xff]
    %v4971 = vld [vmem:[%s4968 + $0x10] sm:$0xff]
    %v4972 = vld [vmem:[%s4968 + $0x18] sm:$0xff]
    %v4973 = vld [vmem:[%s4968 + $0x20] sm:$0xff]
    %v4974 = vld [vmem:[%s4968 + $0x28] sm:$0xff]
    %v4975 = vld [vmem:[%s4968 + $0x30] sm:$0xff]
    %v4976 = vld [vmem:[%s4968 + $0x38] sm:$0xff]
    %v4977 = vld [vmem:[%s4968 + $0x40] sm:$0xff]
    %v4978 = vld [vmem:[%s4968 + $0x48] sm:$0xff]
    %v4979 = vld [vmem:[%s4968 + $0x50] sm:$0xff]
    %v4980 = vld [vmem:[%s4968 + $0x58] sm:$0xff]
    %v4981 = vld [vmem:[%s4968 + $0x60] sm:$0xff]
    %v4982 = vld [vmem:[%s4968 + $0x68] sm:$0xff]
    %v4983 = vld [vmem:[%s4968 + $0x70] sm:$0xff]
    %v4984 = vld [vmem:[%s4968 + $0x78] sm:$0xff]
    %v4985 = vld [vmem:[%s4968 + $0x80] sm:$0xff]
    %v4986 = vld [vmem:[%s4968 + $0x88] sm:$0xff]
    %v4987 = vld [vmem:[%s4968 + $0x90] sm:$0xff]
    %v4988 = vld [vmem:[%s4968 + $0x98] sm:$0xff]
    %v4989 = vld [vmem:[%s4968 + $0xa0] sm:$0xff]
    %v4990 = vld [vmem:[%s4968 + $0xa8] sm:$0xff]
    %v4991 = vld [vmem:[%s4968 + $0xb0] sm:$0xff]
    %v4992 = vld [vmem:[%s4968 + $0xb8] sm:$0xff]
    %v4993 = vld [vmem:[%s4968 + $0xc0] sm:$0xff]
    %v4994 = vld [vmem:[%s4968 + $0xc8] sm:$0xff]
    %v4995 = vld [vmem:[%s4968 + $0xd0] sm:$0xff]
    %v4996 = vld [vmem:[%s4968 + $0xd8] sm:$0xff]
    %v4997 = vld [vmem:[%s4968 + $0xe0] sm:$0xff]
    %v4998 = vld [vmem:[%s4968 + $0xe8] sm:$0xff]
    %v4999 = vld [vmem:[%s4968 + $0xf0] sm:$0xff]
    %v5000 = vld [vmem:[%s4968 + $0xf8] sm:$0xff]
    %v5001 = vrot.slane %v3376, 3
    %v5034 = vunpack.c.l.b16 %v4969
    %v5035 = vunpack.c.h.b16 %v4969
    %v5036 = vunpack.c.l.b16 %v4970
    %v5037 = vunpack.c.h.b16 %v4970
    %v5038 = vunpack.c.l.b16 %v4971
    %v5039 = vunpack.c.h.b16 %v4971
    %v5040 = vunpack.c.l.b16 %v4972
    %v5041 = vunpack.c.h.b16 %v4972
    %v5042 = vunpack.c.l.b16 %v4973
    %v5043 = vunpack.c.h.b16 %v4973
    %v5044 = vunpack.c.l.b16 %v4974
    %v5045 = vunpack.c.h.b16 %v4974
    %v5046 = vunpack.c.l.b16 %v4975
    %v5047 = vunpack.c.h.b16 %v4975
    %v5048 = vunpack.c.l.b16 %v4976
    %v5049 = vunpack.c.h.b16 %v4976
    %v5050 = vunpack.c.l.b16 %v4977
    %v5051 = vunpack.c.h.b16 %v4977
    %v5052 = vunpack.c.l.b16 %v4978
    %v5053 = vunpack.c.h.b16 %v4978
    %v5054 = vunpack.c.l.b16 %v4979
    %v5055 = vunpack.c.h.b16 %v4979
    %v5056 = vunpack.c.l.b16 %v4980
    %v5057 = vunpack.c.h.b16 %v4980
    %v5058 = vunpack.c.l.b16 %v4981
    %v5059 = vunpack.c.h.b16 %v4981
    %v5060 = vunpack.c.l.b16 %v4982
    %v5061 = vunpack.c.h.b16 %v4982
    %v5062 = vunpack.c.l.b16 %v4983
    %v5063 = vunpack.c.h.b16 %v4983
    %v5064 = vunpack.c.l.b16 %v4984
    %v5065 = vunpack.c.h.b16 %v4984
    %v5066 = vunpack.c.l.b16 %v4985
    %v5067 = vunpack.c.h.b16 %v4985
    %v5068 = vunpack.c.l.b16 %v4986
    %v5069 = vunpack.c.h.b16 %v4986
    %v5070 = vunpack.c.l.b16 %v4987
    %v5071 = vunpack.c.h.b16 %v4987
    %v5072 = vunpack.c.l.b16 %v4988
    %v5073 = vunpack.c.h.b16 %v4988
    %v5074 = vunpack.c.l.b16 %v4989
    %v5075 = vunpack.c.h.b16 %v4989
    %v5076 = vunpack.c.l.b16 %v4990
    %v5077 = vunpack.c.h.b16 %v4990
    %v5078 = vunpack.c.l.b16 %v4991
    %v5079 = vunpack.c.h.b16 %v4991
    %v5080 = vunpack.c.l.b16 %v4992
    %v5081 = vunpack.c.h.b16 %v4992
    %v5082 = vunpack.c.l.b16 %v4993
    %v5083 = vunpack.c.h.b16 %v4993
    %v5084 = vunpack.c.l.b16 %v4994
    %v5085 = vunpack.c.h.b16 %v4994
    %v5086 = vunpack.c.l.b16 %v4995
    %v5087 = vunpack.c.h.b16 %v4995
    %v5088 = vunpack.c.l.b16 %v4996
    %v5089 = vunpack.c.h.b16 %v4996
    %v5090 = vunpack.c.l.b16 %v4997
    %v5091 = vunpack.c.h.b16 %v4997
    %v5092 = vunpack.c.l.b16 %v4998
    %v5093 = vunpack.c.h.b16 %v4998
    %v5094 = vunpack.c.l.b16 %v4999
    %v5095 = vunpack.c.h.b16 %v4999
    %v5096 = vunpack.c.l.b16 %v5000
    %v5097 = vunpack.c.h.b16 %v5000
    %v5098 = vpack.c.b16 %v5050, %v5034
    %v5099 = vpack.c.b16 %v5051, %v5035
    %v5100 = vpack.c.b16 %v5052, %v5036
    %v5101 = vpack.c.b16 %v5053, %v5037
    %v5102 = vpack.c.b16 %v5054, %v5038
    %v5103 = vpack.c.b16 %v5055, %v5039
    %v5104 = vpack.c.b16 %v5056, %v5040
    %v5105 = vpack.c.b16 %v5057, %v5041
    %v5106 = vpack.c.b16 %v5058, %v5042
    %v5107 = vpack.c.b16 %v5059, %v5043
    %v5108 = vpack.c.b16 %v5060, %v5044
    %v5109 = vpack.c.b16 %v5061, %v5045
    %v5110 = vpack.c.b16 %v5062, %v5046
    %v5111 = vpack.c.b16 %v5063, %v5047
    %v5112 = vpack.c.b16 %v5064, %v5048
    %v5113 = vpack.c.b16 %v5065, %v5049
    %v5114 = vpack.c.b16 %v5082, %v5066
    %v5115 = vpack.c.b16 %v5083, %v5067
    %v5116 = vpack.c.b16 %v5084, %v5068
    %v5117 = vpack.c.b16 %v5085, %v5069
    %v5118 = vpack.c.b16 %v5086, %v5070
    %v5119 = vpack.c.b16 %v5087, %v5071
    %v5120 = vpack.c.b16 %v5088, %v5072
    %v5121 = vpack.c.b16 %v5089, %v5073
    %v5122 = vpack.c.b16 %v5090, %v5074
    %v5123 = vpack.c.b16 %v5091, %v5075
    %v5124 = vpack.c.b16 %v5092, %v5076
    %v5125 = vpack.c.b16 %v5093, %v5077
    %v5126 = vpack.c.b16 %v5094, %v5078
    %v5127 = vpack.c.b16 %v5095, %v5079
    %v5128 = vpack.c.b16 %v5096, %v5080
    %v5129 = vpack.c.b16 %v5097, %v5081
    %v5163 = vsel %vm3604, %v5001, 0
    %5165 = vmatprep.subr.bf16.mxu0 %v5099
    %5166 = vmatpush1.bf16.msra.mxu0 %v5098
    %5167 = vmatprep.subr.bf16.mxu0 %v5115
    %5168 = vmatpush1.bf16.msra.mxu0 %v5114
    %5169 = vmatprep.subr.bf16.mxu0 0
    %5170 = vmatpush1.bf16.msra.mxu0 0
    %5171 = vmatprep.subr.bf16.mxu0 0
    %5172 = vmatpush1.bf16.msra.mxu0 0
    %5173 = vmatprep.subr.bf16.mxu0 0
    %5174 = vmatpush1.bf16.msra.mxu0 0
    %5175 = vmatprep.subr.bf16.mxu0 0
    %5176 = vmatpush1.bf16.msra.mxu0 0
    %5177 = vmatprep.subr.bf16.mxu0 0
    %5178 = vmatpush1.bf16.msra.mxu0 0
    %5179 = vmatprep.subr.bf16.mxu0 0
    %5180 = vmatpush1.bf16.msra.mxu0 0
    %5181 = vmatprep.subr.bf16.mxu0 0
    %5182 = vmatpush1.bf16.msra.mxu0 0
    %5183 = vmatprep.subr.bf16.mxu0 0
    %5184 = vmatpush1.bf16.msra.mxu0 0
    %5185 = vmatprep.subr.bf16.mxu0 0
    %5186 = vmatpush1.bf16.msra.mxu0 0
    %5187 = vmatprep.subr.bf16.mxu0 0
    %5188 = vmatpush1.bf16.msra.mxu0 0
    %5189 = vmatprep.subr.bf16.mxu0 0
    %5190 = vmatpush1.bf16.msra.mxu0 0
    %5191 = vmatprep.subr.bf16.mxu0 0
    %5192 = vmatpush1.bf16.msra.mxu0 0
    %5193 = vmatprep.subr.bf16.mxu0 0
    %5194 = vmatpush1.bf16.msra.mxu0 0
    %5195 = vmatprep.subr.bf16.mxu0 0
    %5196 = vmatpush1.bf16.msra.mxu0 0
    %5197 = vmatprep.mubr.bf16.mxu0 0
    %5198 = vmatmul.mubr.bf16.gmra.mrb[0].mxu0 %v5163
    %v5199 = vpop.f32.mrb[0].mxu0
    %v5200 = vadd.f32 0.0, %v5199
    %v5201 = vpop.f32.mrb[0].mxu0
    %v5202 = vadd.f32 0.0, %v5201
    %v5203 = vpop.f32.mrb[0].mxu0
    %v5204 = vpop.f32.mrb[0].mxu0
    %5205 = vdwg.mxu0
    %5206 = vmatprep.subr.bf16.mxu0 %v5101
    %5207 = vmatpush1.bf16.msra.mxu0 %v5100
    %5208 = vmatprep.subr.bf16.mxu0 %v5117
    %5209 = vmatpush1.bf16.msra.mxu0 %v5116
    %5210 = vmatprep.subr.bf16.mxu0 0
    %5211 = vmatpush1.bf16.msra.mxu0 0
    %5212 = vmatprep.subr.bf16.mxu0 0
    %5213 = vmatpush1.bf16.msra.mxu0 0
    %5214 = vmatprep.subr.bf16.mxu0 0
    %5215 = vmatpush1.bf16.msra.mxu0 0
    %5216 = vmatprep.subr.bf16.mxu0 0
    %5217 = vmatpush1.bf16.msra.mxu0 0
    %5218 = vmatprep.subr.bf16.mxu0 0
    %5219 = vmatpush1.bf16.msra.mxu0 0
    %5220 = vmatprep.subr.bf16.mxu0 0
    %5221 = vmatpush1.bf16.msra.mxu0 0
    %5222 = vmatprep.subr.bf16.mxu0 0
    %5223 = vmatpush1.bf16.msra.mxu0 0
    %5224 = vmatprep.subr.bf16.mxu0 0
    %5225 = vmatpush1.bf16.msra.mxu0 0
    %5226 = vmatprep.subr.bf16.mxu0 0
    %5227 = vmatpush1.bf16.msra.mxu0 0
    %5228 = vmatprep.subr.bf16.mxu0 0
    %5229 = vmatpush1.bf16.msra.mxu0 0
    %5230 = vmatprep.subr.bf16.mxu0 0
    %5231 = vmatpush1.bf16.msra.mxu0 0
    %5232 = vmatprep.subr.bf16.mxu0 0
    %5233 = vmatpush1.bf16.msra.mxu0 0
    %5234 = vmatprep.subr.bf16.mxu0 0
    %5235 = vmatpush1.bf16.msra.mxu0 0
    %5236 = vmatprep.subr.bf16.mxu0 0
    %5237 = vmatpush1.bf16.msra.mxu0 0
    %5238 = vmatprep.mubr.bf16.mxu0 0
    %5239 = vmatmul.mubr.bf16.gmra.mrb[0].mxu0 %v5163
    %v5240 = vpop.f32.mrb[0].mxu0
    %v5241 = vadd.f32 0.0, %v5240
    %v5242 = vpop.f32.mrb[0].mxu0
    %v5243 = vadd.f32 0.0, %v5242
    %v5244 = vpop.f32.mrb[0].mxu0
    %v5245 = vpop.f32.mrb[0].mxu0
    %5246 = vdwg.mxu0
    %5247 = vmatprep.subr.bf16.mxu0 %v5103
    %5248 = vmatpush1.bf16.msra.mxu0 %v5102
    %5249 = vmatprep.subr.bf16.mxu0 %v5119
    %5250 = vmatpush1.bf16.msra.mxu0 %v5118
    %5251 = vmatprep.subr.bf16.mxu0 0
    %5252 = vmatpush1.bf16.msra.mxu0 0
    %5253 = vmatprep.subr.bf16.mxu0 0
    %5254 = vmatpush1.bf16.msra.mxu0 0
    %5255 = vmatprep.subr.bf16.mxu0 0
    %5256 = vmatpush1.bf16.msra.mxu0 0
    %5257 = vmatprep.subr.bf16.mxu0 0
    %5258 = vmatpush1.bf16.msra.mxu0 0
    %5259 = vmatprep.subr.bf16.mxu0 0
    %5260 = vmatpush1.bf16.msra.mxu0 0
    %5261 = vmatprep.subr.bf16.mxu0 0
    %5262 = vmatpush1.bf16.msra.mxu0 0
    %5263 = vmatprep.subr.bf16.mxu0 0
    %5264 = vmatpush1.bf16.msra.mxu0 0
    %5265 = vmatprep.subr.bf16.mxu0 0
    %5266 = vmatpush1.bf16.msra.mxu0 0
    %5267 = vmatprep.subr.bf16.mxu0 0
    %5268 = vmatpush1.bf16.msra.mxu0 0
    %5269 = vmatprep.subr.bf16.mxu0 0
    %5270 = vmatpush1.bf16.msra.mxu0 0
    %5271 = vmatprep.subr.bf16.mxu0 0
    %5272 = vmatpush1.bf16.msra.mxu0 0
    %5273 = vmatprep.subr.bf16.mxu0 0
    %5274 = vmatpush1.bf16.msra.mxu0 0
    %5275 = vmatprep.subr.bf16.mxu0 0
    %5276 = vmatpush1.bf16.msra.mxu0 0
    %5277 = vmatprep.subr.bf16.mxu0 0
    %5278 = vmatpush1.bf16.msra.mxu0 0
    %5279 = vmatprep.mubr.bf16.mxu0 0
    %5280 = vmatmul.mubr.bf16.gmra.mrb[0].mxu0 %v5163
    %v5281 = vpop.f32.mrb[0].mxu0
    %v5282 = vadd.f32 0.0, %v5281
    %v5283 = vpop.f32.mrb[0].mxu0
    %v5284 = vadd.f32 0.0, %v5283
    %v5285 = vpop.f32.mrb[0].mxu0
    %v5286 = vpop.f32.mrb[0].mxu0
    %5287 = vdwg.mxu0
    %5288 = vmatprep.subr.bf16.mxu0 %v5105
    %5289 = vmatpush1.bf16.msra.mxu0 %v5104
    %5290 = vmatprep.subr.bf16.mxu0 %v5121
    %5291 = vmatpush1.bf16.msra.mxu0 %v5120
    %5292 = vmatprep.subr.bf16.mxu0 0
    %5293 = vmatpush1.bf16.msra.mxu0 0
    %5294 = vmatprep.subr.bf16.mxu0 0
    %5295 = vmatpush1.bf16.msra.mxu0 0
    %5296 = vmatprep.subr.bf16.mxu0 0
    %5297 = vmatpush1.bf16.msra.mxu0 0
    %5298 = vmatprep.subr.bf16.mxu0 0
    %5299 = vmatpush1.bf16.msra.mxu0 0
    %5300 = vmatprep.subr.bf16.mxu0 0
    %5301 = vmatpush1.bf16.msra.mxu0 0
    %5302 = vmatprep.subr.bf16.mxu0 0
    %5303 = vmatpush1.bf16.msra.mxu0 0
    %5304 = vmatprep.subr.bf16.mxu0 0
    %5305 = vmatpush1.bf16.msra.mxu0 0
    %5306 = vmatprep.subr.bf16.mxu0 0
    %5307 = vmatpush1.bf16.msra.mxu0 0
    %5308 = vmatprep.subr.bf16.mxu0 0
    %5309 = vmatpush1.bf16.msra.mxu0 0
    %5310 = vmatprep.subr.bf16.mxu0 0
    %5311 = vmatpush1.bf16.msra.mxu0 0
    %5312 = vmatprep.subr.bf16.mxu0 0
    %5313 = vmatpush1.bf16.msra.mxu0 0
    %5314 = vmatprep.subr.bf16.mxu0 0
    %5315 = vmatpush1.bf16.msra.mxu0 0
    %5316 = vmatprep.subr.bf16.mxu0 0
    %5317 = vmatpush1.bf16.msra.mxu0 0
    %5318 = vmatprep.subr.bf16.mxu0 0
    %5319 = vmatpush1.bf16.msra.mxu0 0
    %5320 = vmatprep.mubr.bf16.mxu0 0
    %5321 = vmatmul.mubr.bf16.gmra.mrb[0].mxu0 %v5163
    %v5322 = vpop.f32.mrb[0].mxu0
    %v5323 = vadd.f32 0.0, %v5322
    %v5324 = vpop.f32.mrb[0].mxu0
    %v5325 = vadd.f32 0.0, %v5324
    %v5326 = vpop.f32.mrb[0].mxu0
    %v5327 = vpop.f32.mrb[0].mxu0
    %5328 = vdwg.mxu0
    %5329 = vmatprep.subr.bf16.mxu0 %v5107
    %5330 = vmatpush1.bf16.msra.mxu0 %v5106
    %5331 = vmatprep.subr.bf16.mxu0 %v5123
    %5332 = vmatpush1.bf16.msra.mxu0 %v5122
    %5333 = vmatprep.subr.bf16.mxu0 0
    %5334 = vmatpush1.bf16.msra.mxu0 0
    %5335 = vmatprep.subr.bf16.mxu0 0
    %5336 = vmatpush1.bf16.msra.mxu0 0
    %5337 = vmatprep.subr.bf16.mxu0 0
    %5338 = vmatpush1.bf16.msra.mxu0 0
    %5339 = vmatprep.subr.bf16.mxu0 0
    %5340 = vmatpush1.bf16.msra.mxu0 0
    %5341 = vmatprep.subr.bf16.mxu0 0
    %5342 = vmatpush1.bf16.msra.mxu0 0
    %5343 = vmatprep.subr.bf16.mxu0 0
    %5344 = vmatpush1.bf16.msra.mxu0 0
    %5345 = vmatprep.subr.bf16.mxu0 0
    %5346 = vmatpush1.bf16.msra.mxu0 0
    %5347 = vmatprep.subr.bf16.mxu0 0
    %5348 = vmatpush1.bf16.msra.mxu0 0
    %5349 = vmatprep.subr.bf16.mxu0 0
    %5350 = vmatpush1.bf16.msra.mxu0 0
    %5351 = vmatprep.subr.bf16.mxu0 0
    %5352 = vmatpush1.bf16.msra.mxu0 0
    %5353 = vmatprep.subr.bf16.mxu0 0
    %5354 = vmatpush1.bf16.msra.mxu0 0
    %5355 = vmatprep.subr.bf16.mxu0 0
    %5356 = vmatpush1.bf16.msra.mxu0 0
    %5357 = vmatprep.subr.bf16.mxu0 0
    %5358 = vmatpush1.bf16.msra.mxu0 0
    %5359 = vmatprep.subr.bf16.mxu0 0
    %5360 = vmatpush1.bf16.msra.mxu0 0
    %5361 = vmatprep.mubr.bf16.mxu0 0
    %5362 = vmatmul.mubr.bf16.gmra.mrb[0].mxu0 %v5163
    %v5363 = vpop.f32.mrb[0].mxu0
    %v5364 = vadd.f32 0.0, %v5363
    %v5365 = vpop.f32.mrb[0].mxu0
    %v5366 = vadd.f32 0.0, %v5365
    %v5367 = vpop.f32.mrb[0].mxu0
    %v5368 = vpop.f32.mrb[0].mxu0
    %5369 = vdwg.mxu0
    %5370 = vmatprep.subr.bf16.mxu0 %v5109
    %5371 = vmatpush1.bf16.msra.mxu0 %v5108
    %5372 = vmatprep.subr.bf16.mxu0 %v5125
    %5373 = vmatpush1.bf16.msra.mxu0 %v5124
    %5374 = vmatprep.subr.bf16.mxu0 0
    %5375 = vmatpush1.bf16.msra.mxu0 0
    %5376 = vmatprep.subr.bf16.mxu0 0
    %5377 = vmatpush1.bf16.msra.mxu0 0
    %5378 = vmatprep.subr.bf16.mxu0 0
    %5379 = vmatpush1.bf16.msra.mxu0 0
    %5380 = vmatprep.subr.bf16.mxu0 0
    %5381 = vmatpush1.bf16.msra.mxu0 0
    %5382 = vmatprep.subr.bf16.mxu0 0
    %5383 = vmatpush1.bf16.msra.mxu0 0
    %5384 = vmatprep.subr.bf16.mxu0 0
    %5385 = vmatpush1.bf16.msra.mxu0 0
    %5386 = vmatprep.subr.bf16.mxu0 0
    %5387 = vmatpush1.bf16.msra.mxu0 0
    %5388 = vmatprep.subr.bf16.mxu0 0
    %5389 = vmatpush1.bf16.msra.mxu0 0
    %5390 = vmatprep.subr.bf16.mxu0 0
    %5391 = vmatpush1.bf16.msra.mxu0 0
    %5392 = vmatprep.subr.bf16.mxu0 0
    %5393 = vmatpush1.bf16.msra.mxu0 0
    %5394 = vmatprep.subr.bf16.mxu0 0
    %5395 = vmatpush1.bf16.msra.mxu0 0
    %5396 = vmatprep.subr.bf16.mxu0 0
    %5397 = vmatpush1.bf16.msra.mxu0 0
    %5398 = vmatprep.subr.bf16.mxu0 0
    %5399 = vmatpush1.bf16.msra.mxu0 0
    %5400 = vmatprep.subr.bf16.mxu0 0
    %5401 = vmatpush1.bf16.msra.mxu0 0
    %5402 = vmatprep.mubr.bf16.mxu0 0
    %5403 = vmatmul.mubr.bf16.gmra.mrb[0].mxu0 %v5163
    %v5404 = vpop.f32.mrb[0].mxu0
    %v5405 = vadd.f32 0.0, %v5404
    %v5406 = vpop.f32.mrb[0].mxu0
    %v5407 = vadd.f32 0.0, %v5406
    %v5408 = vpop.f32.mrb[0].mxu0
    %v5409 = vpop.f32.mrb[0].mxu0
    %5410 = vdwg.mxu0
    %5411 = vmatprep.subr.bf16.mxu0 %v5111
    %5412 = vmatpush1.bf16.msra.mxu0 %v5110
    %5413 = vmatprep.subr.bf16.mxu0 %v5127
    %5414 = vmatpush1.bf16.msra.mxu0 %v5126
    %5415 = vmatprep.subr.bf16.mxu0 0
    %5416 = vmatpush1.bf16.msra.mxu0 0
    %5417 = vmatprep.subr.bf16.mxu0 0
    %5418 = vmatpush1.bf16.msra.mxu0 0
    %5419 = vmatprep.subr.bf16.mxu0 0
    %5420 = vmatpush1.bf16.msra.mxu0 0
    %5421 = vmatprep.subr.bf16.mxu0 0
    %5422 = vmatpush1.bf16.msra.mxu0 0
    %5423 = vmatprep.subr.bf16.mxu0 0
    %5424 = vmatpush1.bf16.msra.mxu0 0
    %5425 = vmatprep.subr.bf16.mxu0 0
    %5426 = vmatpush1.bf16.msra.mxu0 0
    %5427 = vmatprep.subr.bf16.mxu0 0
    %5428 = vmatpush1.bf16.msra.mxu0 0
    %5429 = vmatprep.subr.bf16.mxu0 0
    %5430 = vmatpush1.bf16.msra.mxu0 0
    %5431 = vmatprep.subr.bf16.mxu0 0
    %5432 = vmatpush1.bf16.msra.mxu0 0
    %5433 = vmatprep.subr.bf16.mxu0 0
    %5434 = vmatpush1.bf16.msra.mxu0 0
    %5435 = vmatprep.subr.bf16.mxu0 0
    %5436 = vmatpush1.bf16.msra.mxu0 0
    %5437 = vmatprep.subr.bf16.mxu0 0
    %5438 = vmatpush1.bf16.msra.mxu0 0
    %5439 = vmatprep.subr.bf16.mxu0 0
    %5440 = vmatpush1.bf16.msra.mxu0 0
    %5441 = vmatprep.subr.bf16.mxu0 0
    %5442 = vmatpush1.bf16.msra.mxu0 0
    %5443 = vmatprep.mubr.bf16.mxu0 0
    %5444 = vmatmul.mubr.bf16.gmra.mrb[0].mxu0 %v5163
    %v5445 = vpop.f32.mrb[0].mxu0
    %v5446 = vadd.f32 0.0, %v5445
    %v5447 = vpop.f32.mrb[0].mxu0
    %v5448 = vadd.f32 0.0, %v5447
    %v5449 = vpop.f32.mrb[0].mxu0
    %v5450 = vpop.f32.mrb[0].mxu0
    %5451 = vdwg.mxu0
    %5452 = vmatprep.subr.bf16.mxu0 %v5113
    %5453 = vmatpush1.bf16.msra.mxu0 %v5112
    %5454 = vmatprep.subr.bf16.mxu0 %v5129
    %5455 = vmatpush1.bf16.msra.mxu0 %v5128
    %5456 = vmatprep.subr.bf16.mxu0 0
    %5457 = vmatpush1.bf16.msra.mxu0 0
    %5458 = vmatprep.subr.bf16.mxu0 0
    %5459 = vmatpush1.bf16.msra.mxu0 0
    %5460 = vmatprep.subr.bf16.mxu0 0
    %5461 = vmatpush1.bf16.msra.mxu0 0
    %5462 = vmatprep.subr.bf16.mxu0 0
    %5463 = vmatpush1.bf16.msra.mxu0 0
    %5464 = vmatprep.subr.bf16.mxu0 0
    %5465 = vmatpush1.bf16.msra.mxu0 0
    %5466 = vmatprep.subr.bf16.mxu0 0
    %5467 = vmatpush1.bf16.msra.mxu0 0
    %5468 = vmatprep.subr.bf16.mxu0 0
    %5469 = vmatpush1.bf16.msra.mxu0 0
    %5470 = vmatprep.subr.bf16.mxu0 0
    %5471 = vmatpush1.bf16.msra.mxu0 0
    %5472 = vmatprep.subr.bf16.mxu0 0
    %5473 = vmatpush1.bf16.msra.mxu0 0
    %5474 = vmatprep.subr.bf16.mxu0 0
    %5475 = vmatpush1.bf16.msra.mxu0 0
    %5476 = vmatprep.subr.bf16.mxu0 0
    %5477 = vmatpush1.bf16.msra.mxu0 0
    %5478 = vmatprep.subr.bf16.mxu0 0
    %5479 = vmatpush1.bf16.msra.mxu0 0
    %5480 = vmatprep.subr.bf16.mxu0 0
    %5481 = vmatpush1.bf16.msra.mxu0 0
    %5482 = vmatprep.subr.bf16.mxu0 0
    %5483 = vmatpush1.bf16.msra.mxu0 0
    %5484 = vmatprep.mubr.bf16.mxu0 0
    %5485 = vmatmul.mubr.bf16.gmra.mrb[0].mxu0 %v5163
    %v5486 = vpop.f32.mrb[0].mxu0
    %v5487 = vadd.f32 0.0, %v5486
    %v5488 = vpop.f32.mrb[0].mxu0
    %v5489 = vadd.f32 0.0, %v5488
    %v5490 = vpop.f32.mrb[0].mxu0
    %v5491 = vpop.f32.mrb[0].mxu0
    %5492 = vdwg.mxu0
    %v5493 = vadd.f32 %v4952, %v5200
    %v5494 = vadd.f32 %v4953, %v5202
    %v5495 = vadd.f32 %v4954, %v5241
    %v5496 = vadd.f32 %v4955, %v5243
    %v5497 = vadd.f32 %v4956, %v5282
    %v5498 = vadd.f32 %v4957, %v5284
    %v5499 = vadd.f32 %v4958, %v5323
    %v5500 = vadd.f32 %v4959, %v5325
    %v5501 = vadd.f32 %v4960, %v5364
    %v5502 = vadd.f32 %v4961, %v5366
    %v5503 = vadd.f32 %v4962, %v5405
    %v5504 = vadd.f32 %v4963, %v5407
    %v5505 = vadd.f32 %v4964, %v5446
    %v5506 = vadd.f32 %v4965, %v5448
    %v5507 = vadd.f32 %v4966, %v5487
    %v5508 = vadd.f32 %v4967, %v5489
    %v5509 = vpack.c.bf16 %v3374, %v3374
    %s5510 = scalar_lea.vmem [#allocation11], 1024
    %v5511 = vld [vmem:[%s5510] sm:$0xff]
    %v5512 = vld [vmem:[%s5510 + $0x8] sm:$0xff]
    %v5513 = vld [vmem:[%s5510 + $0x10] sm:$0xff]
    %v5514 = vld [vmem:[%s5510 + $0x18] sm:$0xff]
    %v5515 = vld [vmem:[%s5510 + $0x20] sm:$0xff]
    %v5516 = vld [vmem:[%s5510 + $0x28] sm:$0xff]
    %v5517 = vld [vmem:[%s5510 + $0x30] sm:$0xff]
    %v5518 = vld [vmem:[%s5510 + $0x38] sm:$0xff]
    %v5519 = vld [vmem:[%s5510 + $0x40] sm:$0xff]
    %v5520 = vld [vmem:[%s5510 + $0x48] sm:$0xff]
    %v5521 = vld [vmem:[%s5510 + $0x50] sm:$0xff]
    %v5522 = vld [vmem:[%s5510 + $0x58] sm:$0xff]
    %v5523 = vld [vmem:[%s5510 + $0x60] sm:$0xff]
    %v5524 = vld [vmem:[%s5510 + $0x68] sm:$0xff]
    %v5525 = vld [vmem:[%s5510 + $0x70] sm:$0xff]
    %v5526 = vld [vmem:[%s5510 + $0x78] sm:$0xff]
    %v5527 = vld [vmem:[%s5510 + $0x80] sm:$0xff]
    %v5528 = vld [vmem:[%s5510 + $0x88] sm:$0xff]
    %v5529 = vld [vmem:[%s5510 + $0x90] sm:$0xff]
    %v5530 = vld [vmem:[%s5510 + $0x98] sm:$0xff]
    %v5531 = vld [vmem:[%s5510 + $0xa0] sm:$0xff]
    %v5532 = vld [vmem:[%s5510 + $0xa8] sm:$0xff]
    %v5533 = vld [vmem:[%s5510 + $0xb0] sm:$0xff]
    %v5534 = vld [vmem:[%s5510 + $0xb8] sm:$0xff]
    %v5535 = vld [vmem:[%s5510 + $0xc0] sm:$0xff]
    %v5536 = vld [vmem:[%s5510 + $0xc8] sm:$0xff]
    %v5537 = vld [vmem:[%s5510 + $0xd0] sm:$0xff]
    %v5538 = vld [vmem:[%s5510 + $0xd8] sm:$0xff]
    %v5539 = vld [vmem:[%s5510 + $0xe0] sm:$0xff]
    %v5540 = vld [vmem:[%s5510 + $0xe8] sm:$0xff]
    %v5541 = vld [vmem:[%s5510 + $0xf0] sm:$0xff]
    %v5542 = vld [vmem:[%s5510 + $0xf8] sm:$0xff]
    %v5575 = vunpack.c.l.b16 %v5511
    %v5576 = vunpack.c.h.b16 %v5511
    %v5577 = vunpack.c.l.b16 %v5512
    %v5578 = vunpack.c.h.b16 %v5512
    %v5579 = vunpack.c.l.b16 %v5513
    %v5580 = vunpack.c.h.b16 %v5513
    %v5581 = vunpack.c.l.b16 %v5514
    %v5582 = vunpack.c.h.b16 %v5514
    %v5583 = vunpack.c.l.b16 %v5515
    %v5584 = vunpack.c.h.b16 %v5515
    %v5585 = vunpack.c.l.b16 %v5516
    %v5586 = vunpack.c.h.b16 %v5516
    %v5587 = vunpack.c.l.b16 %v5517
    %v5588 = vunpack.c.h.b16 %v5517
    %v5589 = vunpack.c.l.b16 %v5518
    %v5590 = vunpack.c.h.b16 %v5518
    %v5591 = vunpack.c.l.b16 %v5519
    %v5592 = vunpack.c.h.b16 %v5519
    %v5593 = vunpack.c.l.b16 %v5520
    %v5594 = vunpack.c.h.b16 %v5520
    %v5595 = vunpack.c.l.b16 %v5521
    %v5596 = vunpack.c.h.b16 %v5521
    %v5597 = vunpack.c.l.b16 %v5522
    %v5598 = vunpack.c.h.b16 %v5522
    %v5599 = vunpack.c.l.b16 %v5523
    %v5600 = vunpack.c.h.b16 %v5523
    %v5601 = vunpack.c.l.b16 %v5524
    %v5602 = vunpack.c.h.b16 %v5524
    %v5603 = vunpack.c.l.b16 %v5525
    %v5604 = vunpack.c.h.b16 %v5525
    %v5605 = vunpack.c.l.b16 %v5526
    %v5606 = vunpack.c.h.b16 %v5526
    %v5607 = vunpack.c.l.b16 %v5527
    %v5608 = vunpack.c.h.b16 %v5527
    %v5609 = vunpack.c.l.b16 %v5528
    %v5610 = vunpack.c.h.b16 %v5528
    %v5611 = vunpack.c.l.b16 %v5529
    %v5612 = vunpack.c.h.b16 %v5529
    %v5613 = vunpack.c.l.b16 %v5530
    %v5614 = vunpack.c.h.b16 %v5530
    %v5615 = vunpack.c.l.b16 %v5531
    %v5616 = vunpack.c.h.b16 %v5531
    %v5617 = vunpack.c.l.b16 %v5532
    %v5618 = vunpack.c.h.b16 %v5532
    %v5619 = vunpack.c.l.b16 %v5533
    %v5620 = vunpack.c.h.b16 %v5533
    %v5621 = vunpack.c.l.b16 %v5534
    %v5622 = vunpack.c.h.b16 %v5534
    %v5623 = vunpack.c.l.b16 %v5535
    %v5624 = vunpack.c.h.b16 %v5535
    %v5625 = vunpack.c.l.b16 %v5536
    %v5626 = vunpack.c.h.b16 %v5536
    %v5627 = vunpack.c.l.b16 %v5537
    %v5628 = vunpack.c.h.b16 %v5537
    %v5629 = vunpack.c.l.b16 %v5538
    %v5630 = vunpack.c.h.b16 %v5538
    %v5631 = vunpack.c.l.b16 %v5539
    %v5632 = vunpack.c.h.b16 %v5539
    %v5633 = vunpack.c.l.b16 %v5540
    %v5634 = vunpack.c.h.b16 %v5540
    %v5635 = vunpack.c.l.b16 %v5541
    %v5636 = vunpack.c.h.b16 %v5541
    %v5637 = vunpack.c.l.b16 %v5542
    %v5638 = vunpack.c.h.b16 %v5542
    %v5639 = vpack.c.b16 %v5591, %v5575
    %v5640 = vpack.c.b16 %v5592, %v5576
    %v5641 = vpack.c.b16 %v5593, %v5577
    %v5642 = vpack.c.b16 %v5594, %v5578
    %v5643 = vpack.c.b16 %v5595, %v5579
    %v5644 = vpack.c.b16 %v5596, %v5580
    %v5645 = vpack.c.b16 %v5597, %v5581
    %v5646 = vpack.c.b16 %v5598, %v5582
    %v5647 = vpack.c.b16 %v5599, %v5583
    %v5648 = vpack.c.b16 %v5600, %v5584
    %v5649 = vpack.c.b16 %v5601, %v5585
    %v5650 = vpack.c.b16 %v5602, %v5586
    %v5651 = vpack.c.b16 %v5603, %v5587
    %v5652 = vpack.c.b16 %v5604, %v5588
    %v5653 = vpack.c.b16 %v5605, %v5589
    %v5654 = vpack.c.b16 %v5606, %v5590
    %v5655 = vpack.c.b16 %v5623, %v5607
    %v5656 = vpack.c.b16 %v5624, %v5608
    %v5657 = vpack.c.b16 %v5625, %v5609
    %v5658 = vpack.c.b16 %v5626, %v5610
    %v5659 = vpack.c.b16 %v5627, %v5611
    %v5660 = vpack.c.b16 %v5628, %v5612
    %v5661 = vpack.c.b16 %v5629, %v5613
    %v5662 = vpack.c.b16 %v5630, %v5614
    %v5663 = vpack.c.b16 %v5631, %v5615
    %v5664 = vpack.c.b16 %v5632, %v5616
    %v5665 = vpack.c.b16 %v5633, %v5617
    %v5666 = vpack.c.b16 %v5634, %v5618
    %v5667 = vpack.c.b16 %v5635, %v5619
    %v5668 = vpack.c.b16 %v5636, %v5620
    %v5669 = vpack.c.b16 %v5637, %v5621
    %v5670 = vpack.c.b16 %v5638, %v5622
    %v5704 = vsel %vm3604, %v5509, 0
    %5706 = vmatprep.subr.bf16.mxu0 %v5640
    %5707 = vmatpush1.bf16.msra.mxu0 %v5639
    %5708 = vmatprep.subr.bf16.mxu0 %v5656
    %5709 = vmatpush1.bf16.msra.mxu0 %v5655
    %5710 = vmatprep.subr.bf16.mxu0 0
    %5711 = vmatpush1.bf16.msra.mxu0 0
    %5712 = vmatprep.subr.bf16.mxu0 0
    %5713 = vmatpush1.bf16.msra.mxu0 0
    %5714 = vmatprep.subr.bf16.mxu0 0
    %5715 = vmatpush1.bf16.msra.mxu0 0
    %5716 = vmatprep.subr.bf16.mxu0 0
    %5717 = vmatpush1.bf16.msra.mxu0 0
    %5718 = vmatprep.subr.bf16.mxu0 0
    %5719 = vmatpush1.bf16.msra.mxu0 0
    %5720 = vmatprep.subr.bf16.mxu0 0
    %5721 = vmatpush1.bf16.msra.mxu0 0
    %5722 = vmatprep.subr.bf16.mxu0 0
    %5723 = vmatpush1.bf16.msra.mxu0 0
    %5724 = vmatprep.subr.bf16.mxu0 0
    %5725 = vmatpush1.bf16.msra.mxu0 0
    %5726 = vmatprep.subr.bf16.mxu0 0
    %5727 = vmatpush1.bf16.msra.mxu0 0
    %5728 = vmatprep.subr.bf16.mxu0 0
    %5729 = vmatpush1.bf16.msra.mxu0 0
    %5730 = vmatprep.subr.bf16.mxu0 0
    %5731 = vmatpush1.bf16.msra.mxu0 0
    %5732 = vmatprep.subr.bf16.mxu0 0
    %5733 = vmatpush1.bf16.msra.mxu0 0
    %5734 = vmatprep.subr.bf16.mxu0 0
    %5735 = vmatpush1.bf16.msra.mxu0 0
    %5736 = vmatprep.subr.bf16.mxu0 0
    %5737 = vmatpush1.bf16.msra.mxu0 0
    %5738 = vmatprep.mubr.bf16.mxu0 0
    %5739 = vmatmul.mubr.bf16.gmra.mrb[0].mxu0 %v5704
    %v5740 = vpop.f32.mrb[0].mxu0
    %v5741 = vadd.f32 0.0, %v5740
    %v5742 = vpop.f32.mrb[0].mxu0
    %v5743 = vadd.f32 0.0, %v5742
    %v5744 = vpop.f32.mrb[0].mxu0
    %v5745 = vpop.f32.mrb[0].mxu0
    %5746 = vdwg.mxu0
    %5747 = vmatprep.subr.bf16.mxu0 %v5642
    %5748 = vmatpush1.bf16.msra.mxu0 %v5641
    %5749 = vmatprep.subr.bf16.mxu0 %v5658
    %5750 = vmatpush1.bf16.msra.mxu0 %v5657
    %5751 = vmatprep.subr.bf16.mxu0 0
    %5752 = vmatpush1.bf16.msra.mxu0 0
    %5753 = vmatprep.subr.bf16.mxu0 0
    %5754 = vmatpush1.bf16.msra.mxu0 0
    %5755 = vmatprep.subr.bf16.mxu0 0
    %5756 = vmatpush1.bf16.msra.mxu0 0
    %5757 = vmatprep.subr.bf16.mxu0 0
    %5758 = vmatpush1.bf16.msra.mxu0 0
    %5759 = vmatprep.subr.bf16.mxu0 0
    %5760 = vmatpush1.bf16.msra.mxu0 0
    %5761 = vmatprep.subr.bf16.mxu0 0
    %5762 = vmatpush1.bf16.msra.mxu0 0
    %5763 = vmatprep.subr.bf16.mxu0 0
    %5764 = vmatpush1.bf16.msra.mxu0 0
    %5765 = vmatprep.subr.bf16.mxu0 0
    %5766 = vmatpush1.bf16.msra.mxu0 0
    %5767 = vmatprep.subr.bf16.mxu0 0
    %5768 = vmatpush1.bf16.msra.mxu0 0
    %5769 = vmatprep.subr.bf16.mxu0 0
    %5770 = vmatpush1.bf16.msra.mxu0 0
    %5771 = vmatprep.subr.bf16.mxu0 0
    %5772 = vmatpush1.bf16.msra.mxu0 0
    %5773 = vmatprep.subr.bf16.mxu0 0
    %5774 = vmatpush1.bf16.msra.mxu0 0
    %5775 = vmatprep.subr.bf16.mxu0 0
    %5776 = vmatpush1.bf16.msra.mxu0 0
    %5777 = vmatprep.subr.bf16.mxu0 0
    %5778 = vmatpush1.bf16.msra.mxu0 0
    %5779 = vmatprep.mubr.bf16.mxu0 0
    %5780 = vmatmul.mubr.bf16.gmra.mrb[0].mxu0 %v5704
    %v5781 = vpop.f32.mrb[0].mxu0
    %v5782 = vadd.f32 0.0, %v5781
    %v5783 = vpop.f32.mrb[0].mxu0
    %v5784 = vadd.f32 0.0, %v5783
    %v5785 = vpop.f32.mrb[0].mxu0
    %v5786 = vpop.f32.mrb[0].mxu0
    %5787 = vdwg.mxu0
    %5788 = vmatprep.subr.bf16.mxu0 %v5644
    %5789 = vmatpush1.bf16.msra.mxu0 %v5643
    %5790 = vmatprep.subr.bf16.mxu0 %v5660
    %5791 = vmatpush1.bf16.msra.mxu0 %v5659
    %5792 = vmatprep.subr.bf16.mxu0 0
    %5793 = vmatpush1.bf16.msra.mxu0 0
    %5794 = vmatprep.subr.bf16.mxu0 0
    %5795 = vmatpush1.bf16.msra.mxu0 0
    %5796 = vmatprep.subr.bf16.mxu0 0
    %5797 = vmatpush1.bf16.msra.mxu0 0
    %5798 = vmatprep.subr.bf16.mxu0 0
    %5799 = vmatpush1.bf16.msra.mxu0 0
    %5800 = vmatprep.subr.bf16.mxu0 0
    %5801 = vmatpush1.bf16.msra.mxu0 0
    %5802 = vmatprep.subr.bf16.mxu0 0
    %5803 = vmatpush1.bf16.msra.mxu0 0
    %5804 = vmatprep.subr.bf16.mxu0 0
    %5805 = vmatpush1.bf16.msra.mxu0 0
    %5806 = vmatprep.subr.bf16.mxu0 0
    %5807 = vmatpush1.bf16.msra.mxu0 0
    %5808 = vmatprep.subr.bf16.mxu0 0
    %5809 = vmatpush1.bf16.msra.mxu0 0
    %5810 = vmatprep.subr.bf16.mxu0 0
    %5811 = vmatpush1.bf16.msra.mxu0 0
    %5812 = vmatprep.subr.bf16.mxu0 0
    %5813 = vmatpush1.bf16.msra.mxu0 0
    %5814 = vmatprep.subr.bf16.mxu0 0
    %5815 = vmatpush1.bf16.msra.mxu0 0
    %5816 = vmatprep.subr.bf16.mxu0 0
    %5817 = vmatpush1.bf16.msra.mxu0 0
    %5818 = vmatprep.subr.bf16.mxu0 0
    %5819 = vmatpush1.bf16.msra.mxu0 0
    %5820 = vmatprep.mubr.bf16.mxu0 0
    %5821 = vmatmul.mubr.bf16.gmra.mrb[0].mxu0 %v5704
    %v5822 = vpop.f32.mrb[0].mxu0
    %v5823 = vadd.f32 0.0, %v5822
    %v5824 = vpop.f32.mrb[0].mxu0
    %v5825 = vadd.f32 0.0, %v5824
    %v5826 = vpop.f32.mrb[0].mxu0
    %v5827 = vpop.f32.mrb[0].mxu0
    %5828 = vdwg.mxu0
    %5829 = vmatprep.subr.bf16.mxu0 %v5646
    %5830 = vmatpush1.bf16.msra.mxu0 %v5645
    %5831 = vmatprep.subr.bf16.mxu0 %v5662
    %5832 = vmatpush1.bf16.msra.mxu0 %v5661
    %5833 = vmatprep.subr.bf16.mxu0 0
    %5834 = vmatpush1.bf16.msra.mxu0 0
    %5835 = vmatprep.subr.bf16.mxu0 0
    %5836 = vmatpush1.bf16.msra.mxu0 0
    %5837 = vmatprep.subr.bf16.mxu0 0
    %5838 = vmatpush1.bf16.msra.mxu0 0
    %5839 = vmatprep.subr.bf16.mxu0 0
    %5840 = vmatpush1.bf16.msra.mxu0 0
    %5841 = vmatprep.subr.bf16.mxu0 0
    %5842 = vmatpush1.bf16.msra.mxu0 0
    %5843 = vmatprep.subr.bf16.mxu0 0
    %5844 = vmatpush1.bf16.msra.mxu0 0
    %5845 = vmatprep.subr.bf16.mxu0 0
    %5846 = vmatpush1.bf16.msra.mxu0 0
    %5847 = vmatprep.subr.bf16.mxu0 0
    %5848 = vmatpush1.bf16.msra.mxu0 0
    %5849 = vmatprep.subr.bf16.mxu0 0
    %5850 = vmatpush1.bf16.msra.mxu0 0
    %5851 = vmatprep.subr.bf16.mxu0 0
    %5852 = vmatpush1.bf16.msra.mxu0 0
    %5853 = vmatprep.subr.bf16.mxu0 0
    %5854 = vmatpush1.bf16.msra.mxu0 0
    %5855 = vmatprep.subr.bf16.mxu0 0
    %5856 = vmatpush1.bf16.msra.mxu0 0
    %5857 = vmatprep.subr.bf16.mxu0 0
    %5858 = vmatpush1.bf16.msra.mxu0 0
    %5859 = vmatprep.subr.bf16.mxu0 0
    %5860 = vmatpush1.bf16.msra.mxu0 0
    %5861 = vmatprep.mubr.bf16.mxu0 0
    %5862 = vmatmul.mubr.bf16.gmra.mrb[0].mxu0 %v5704
    %v5863 = vpop.f32.mrb[0].mxu0
    %v5864 = vadd.f32 0.0, %v5863
    %v5865 = vpop.f32.mrb[0].mxu0
    %v5866 = vadd.f32 0.0, %v5865
    %v5867 = vpop.f32.mrb[0].mxu0
    %v5868 = vpop.f32.mrb[0].mxu0
    %5869 = vdwg.mxu0
    %5870 = vmatprep.subr.bf16.mxu0 %v5648
    %5871 = vmatpush1.bf16.msra.mxu0 %v5647
    %5872 = vmatprep.subr.bf16.mxu0 %v5664
    %5873 = vmatpush1.bf16.msra.mxu0 %v5663
    %5874 = vmatprep.subr.bf16.mxu0 0
    %5875 = vmatpush1.bf16.msra.mxu0 0
    %5876 = vmatprep.subr.bf16.mxu0 0
    %5877 = vmatpush1.bf16.msra.mxu0 0
    %5878 = vmatprep.subr.bf16.mxu0 0
    %5879 = vmatpush1.bf16.msra.mxu0 0
    %5880 = vmatprep.subr.bf16.mxu0 0
    %5881 = vmatpush1.bf16.msra.mxu0 0
    %5882 = vmatprep.subr.bf16.mxu0 0
    %5883 = vmatpush1.bf16.msra.mxu0 0
    %5884 = vmatprep.subr.bf16.mxu0 0
    %5885 = vmatpush1.bf16.msra.mxu0 0
    %5886 = vmatprep.subr.bf16.mxu0 0
    %5887 = vmatpush1.bf16.msra.mxu0 0
    %5888 = vmatprep.subr.bf16.mxu0 0
    %5889 = vmatpush1.bf16.msra.mxu0 0
    %5890 = vmatprep.subr.bf16.mxu0 0
    %5891 = vmatpush1.bf16.msra.mxu0 0
    %5892 = vmatprep.subr.bf16.mxu0 0
    %5893 = vmatpush1.bf16.msra.mxu0 0
    %5894 = vmatprep.subr.bf16.mxu0 0
    %5895 = vmatpush1.bf16.msra.mxu0 0
    %5896 = vmatprep.subr.bf16.mxu0 0
    %5897 = vmatpush1.bf16.msra.mxu0 0
    %5898 = vmatprep.subr.bf16.mxu0 0
    %5899 = vmatpush1.bf16.msra.mxu0 0
    %5900 = vmatprep.subr.bf16.mxu0 0
    %5901 = vmatpush1.bf16.msra.mxu0 0
    %5902 = vmatprep.mubr.bf16.mxu0 0
    %5903 = vmatmul.mubr.bf16.gmra.mrb[0].mxu0 %v5704
    %v5904 = vpop.f32.mrb[0].mxu0
    %v5905 = vadd.f32 0.0, %v5904
    %v5906 = vpop.f32.mrb[0].mxu0
    %v5907 = vadd.f32 0.0, %v5906
    %v5908 = vpop.f32.mrb[0].mxu0
    %v5909 = vpop.f32.mrb[0].mxu0
    %5910 = vdwg.mxu0
    %5911 = vmatprep.subr.bf16.mxu0 %v5650
    %5912 = vmatpush1.bf16.msra.mxu0 %v5649
    %5913 = vmatprep.subr.bf16.mxu0 %v5666
    %5914 = vmatpush1.bf16.msra.mxu0 %v5665
    %5915 = vmatprep.subr.bf16.mxu0 0
    %5916 = vmatpush1.bf16.msra.mxu0 0
    %5917 = vmatprep.subr.bf16.mxu0 0
    %5918 = vmatpush1.bf16.msra.mxu0 0
    %5919 = vmatprep.subr.bf16.mxu0 0
    %5920 = vmatpush1.bf16.msra.mxu0 0
    %5921 = vmatprep.subr.bf16.mxu0 0
    %5922 = vmatpush1.bf16.msra.mxu0 0
    %5923 = vmatprep.subr.bf16.mxu0 0
    %5924 = vmatpush1.bf16.msra.mxu0 0
    %5925 = vmatprep.subr.bf16.mxu0 0
    %5926 = vmatpush1.bf16.msra.mxu0 0
    %5927 = vmatprep.subr.bf16.mxu0 0
    %5928 = vmatpush1.bf16.msra.mxu0 0
    %5929 = vmatprep.subr.bf16.mxu0 0
    %5930 = vmatpush1.bf16.msra.mxu0 0
    %5931 = vmatprep.subr.bf16.mxu0 0
    %5932 = vmatpush1.bf16.msra.mxu0 0
    %5933 = vmatprep.subr.bf16.mxu0 0
    %5934 = vmatpush1.bf16.msra.mxu0 0
    %5935 = vmatprep.subr.bf16.mxu0 0
    %5936 = vmatpush1.bf16.msra.mxu0 0
    %5937 = vmatprep.subr.bf16.mxu0 0
    %5938 = vmatpush1.bf16.msra.mxu0 0
    %5939 = vmatprep.subr.bf16.mxu0 0
    %5940 = vmatpush1.bf16.msra.mxu0 0
    %5941 = vmatprep.subr.bf16.mxu0 0
    %5942 = vmatpush1.bf16.msra.mxu0 0
    %5943 = vmatprep.mubr.bf16.mxu0 0
    %5944 = vmatmul.mubr.bf16.gmra.mrb[0].mxu0 %v5704
    %v5945 = vpop.f32.mrb[0].mxu0
    %v5946 = vadd.f32 0.0, %v5945
    %v5947 = vpop.f32.mrb[0].mxu0
    %v5948 = vadd.f32 0.0, %v5947
    %v5949 = vpop.f32.mrb[0].mxu0
    %v5950 = vpop.f32.mrb[0].mxu0
    %5951 = vdwg.mxu0
    %5952 = vmatprep.subr.bf16.mxu0 %v5652
    %5953 = vmatpush1.bf16.msra.mxu0 %v5651
    %5954 = vmatprep.subr.bf16.mxu0 %v5668
    %5955 = vmatpush1.bf16.msra.mxu0 %v5667
    %5956 = vmatprep.subr.bf16.mxu0 0
    %5957 = vmatpush1.bf16.msra.mxu0 0
    %5958 = vmatprep.subr.bf16.mxu0 0
    %5959 = vmatpush1.bf16.msra.mxu0 0
    %5960 = vmatprep.subr.bf16.mxu0 0
    %5961 = vmatpush1.bf16.msra.mxu0 0
    %5962 = vmatprep.subr.bf16.mxu0 0
    %5963 = vmatpush1.bf16.msra.mxu0 0
    %5964 = vmatprep.subr.bf16.mxu0 0
    %5965 = vmatpush1.bf16.msra.mxu0 0
    %5966 = vmatprep.subr.bf16.mxu0 0
    %5967 = vmatpush1.bf16.msra.mxu0 0
    %5968 = vmatprep.subr.bf16.mxu0 0
    %5969 = vmatpush1.bf16.msra.mxu0 0
    %5970 = vmatprep.subr.bf16.mxu0 0
    %5971 = vmatpush1.bf16.msra.mxu0 0
    %5972 = vmatprep.subr.bf16.mxu0 0
    %5973 = vmatpush1.bf16.msra.mxu0 0
    %5974 = vmatprep.subr.bf16.mxu0 0
    %5975 = vmatpush1.bf16.msra.mxu0 0
    %5976 = vmatprep.subr.bf16.mxu0 0
    %5977 = vmatpush1.bf16.msra.mxu0 0
    %5978 = vmatprep.subr.bf16.mxu0 0
    %5979 = vmatpush1.bf16.msra.mxu0 0
    %5980 = vmatprep.subr.bf16.mxu0 0
    %5981 = vmatpush1.bf16.msra.mxu0 0
    %5982 = vmatprep.subr.bf16.mxu0 0
    %5983 = vmatpush1.bf16.msra.mxu0 0
    %5984 = vmatprep.mubr.bf16.mxu0 0
    %5985 = vmatmul.mubr.bf16.gmra.mrb[0].mxu0 %v5704
    %v5986 = vpop.f32.mrb[0].mxu0
    %v5987 = vadd.f32 0.0, %v5986
    %v5988 = vpop.f32.mrb[0].mxu0
    %v5989 = vadd.f32 0.0, %v5988
    %v5990 = vpop.f32.mrb[0].mxu0
    %v5991 = vpop.f32.mrb[0].mxu0
    %5992 = vdwg.mxu0
    %5993 = vmatprep.subr.bf16.mxu0 %v5654
    %5994 = vmatpush1.bf16.msra.mxu0 %v5653
    %5995 = vmatprep.subr.bf16.mxu0 %v5670
    %5996 = vmatpush1.bf16.msra.mxu0 %v5669
    %5997 = vmatprep.subr.bf16.mxu0 0
    %5998 = vmatpush1.bf16.msra.mxu0 0
    %5999 = vmatprep.subr.bf16.mxu0 0
    %6000 = vmatpush1.bf16.msra.mxu0 0
    %6001 = vmatprep.subr.bf16.mxu0 0
    %6002 = vmatpush1.bf16.msra.mxu0 0
    %6003 = vmatprep.subr.bf16.mxu0 0
    %6004 = vmatpush1.bf16.msra.mxu0 0
    %6005 = vmatprep.subr.bf16.mxu0 0
    %6006 = vmatpush1.bf16.msra.mxu0 0
    %6007 = vmatprep.subr.bf16.mxu0 0
    %6008 = vmatpush1.bf16.msra.mxu0 0
    %6009 = vmatprep.subr.bf16.mxu0 0
    %6010 = vmatpush1.bf16.msra.mxu0 0
    %6011 = vmatprep.subr.bf16.mxu0 0
    %6012 = vmatpush1.bf16.msra.mxu0 0
    %6013 = vmatprep.subr.bf16.mxu0 0
    %6014 = vmatpush1.bf16.msra.mxu0 0
    %6015 = vmatprep.subr.bf16.mxu0 0
    %6016 = vmatpush1.bf16.msra.mxu0 0
    %6017 = vmatprep.subr.bf16.mxu0 0
    %6018 = vmatpush1.bf16.msra.mxu0 0
    %6019 = vmatprep.subr.bf16.mxu0 0
    %6020 = vmatpush1.bf16.msra.mxu0 0
    %6021 = vmatprep.subr.bf16.mxu0 0
    %6022 = vmatpush1.bf16.msra.mxu0 0
    %6023 = vmatprep.subr.bf16.mxu0 0
    %6024 = vmatpush1.bf16.msra.mxu0 0
    %6025 = vmatprep.mubr.bf16.mxu0 0
    %6026 = vmatmul.mubr.bf16.gmra.mrb[0].mxu0 %v5704
    %v6027 = vpop.f32.mrb[0].mxu0
    %v6028 = vadd.f32 0.0, %v6027
    %v6029 = vpop.f32.mrb[0].mxu0
    %v6030 = vadd.f32 0.0, %v6029
    %v6031 = vpop.f32.mrb[0].mxu0
    %v6032 = vpop.f32.mrb[0].mxu0
    %6033 = vdwg.mxu0
    %v6034 = vadd.f32 %v5493, %v5741
    %v6035 = vadd.f32 %v5494, %v5743
    %v6036 = vadd.f32 %v5495, %v5782
    %v6037 = vadd.f32 %v5496, %v5784
    %v6038 = vadd.f32 %v5497, %v5823
    %v6039 = vadd.f32 %v5498, %v5825
    %v6040 = vadd.f32 %v5499, %v5864
    %v6041 = vadd.f32 %v5500, %v5866
    %v6042 = vadd.f32 %v5501, %v5905
    %v6043 = vadd.f32 %v5502, %v5907
    %v6044 = vadd.f32 %v5503, %v5946
    %v6045 = vadd.f32 %v5504, %v5948
    %v6046 = vadd.f32 %v5505, %v5987
    %v6047 = vadd.f32 %v5506, %v5989
    %v6048 = vadd.f32 %v5507, %v6028
    %v6049 = vadd.f32 %v5508, %v6030
    %s6050 = scalar_lea.vmem [#allocation11], 1280
    %v6051 = vld [vmem:[%s6050] sm:$0xff]
    %v6052 = vld [vmem:[%s6050 + $0x8] sm:$0xff]
    %v6053 = vld [vmem:[%s6050 + $0x10] sm:$0xff]
    %v6054 = vld [vmem:[%s6050 + $0x18] sm:$0xff]
    %v6055 = vld [vmem:[%s6050 + $0x20] sm:$0xff]
    %v6056 = vld [vmem:[%s6050 + $0x28] sm:$0xff]
    %v6057 = vld [vmem:[%s6050 + $0x30] sm:$0xff]
    %v6058 = vld [vmem:[%s6050 + $0x38] sm:$0xff]
    %v6059 = vld [vmem:[%s6050 + $0x40] sm:$0xff]
    %v6060 = vld [vmem:[%s6050 + $0x48] sm:$0xff]
    %v6061 = vld [vmem:[%s6050 + $0x50] sm:$0xff]
    %v6062 = vld [vmem:[%s6050 + $0x58] sm:$0xff]
    %v6063 = vld [vmem:[%s6050 + $0x60] sm:$0xff]
    %v6064 = vld [vmem:[%s6050 + $0x68] sm:$0xff]
    %v6065 = vld [vmem:[%s6050 + $0x70] sm:$0xff]
    %v6066 = vld [vmem:[%s6050 + $0x78] sm:$0xff]
    %v6067 = vld [vmem:[%s6050 + $0x80] sm:$0xff]
    %v6068 = vld [vmem:[%s6050 + $0x88] sm:$0xff]
    %v6069 = vld [vmem:[%s6050 + $0x90] sm:$0xff]
    %v6070 = vld [vmem:[%s6050 + $0x98] sm:$0xff]
    %v6071 = vld [vmem:[%s6050 + $0xa0] sm:$0xff]
    %v6072 = vld [vmem:[%s6050 + $0xa8] sm:$0xff]
    %v6073 = vld [vmem:[%s6050 + $0xb0] sm:$0xff]
    %v6074 = vld [vmem:[%s6050 + $0xb8] sm:$0xff]
    %v6075 = vld [vmem:[%s6050 + $0xc0] sm:$0xff]
    %v6076 = vld [vmem:[%s6050 + $0xc8] sm:$0xff]
    %v6077 = vld [vmem:[%s6050 + $0xd0] sm:$0xff]
    %v6078 = vld [vmem:[%s6050 + $0xd8] sm:$0xff]
    %v6079 = vld [vmem:[%s6050 + $0xe0] sm:$0xff]
    %v6080 = vld [vmem:[%s6050 + $0xe8] sm:$0xff]
    %v6081 = vld [vmem:[%s6050 + $0xf0] sm:$0xff]
    %v6082 = vld [vmem:[%s6050 + $0xf8] sm:$0xff]
    %v6084 = vrot.slane %v5509, 1
    %v6117 = vunpack.c.l.b16 %v6051
    %v6118 = vunpack.c.h.b16 %v6051
    %v6119 = vunpack.c.l.b16 %v6052
    %v6120 = vunpack.c.h.b16 %v6052
    %v6121 = vunpack.c.l.b16 %v6053
    %v6122 = vunpack.c.h.b16 %v6053
    %v6123 = vunpack.c.l.b16 %v6054
    %v6124 = vunpack.c.h.b16 %v6054
    %v6125 = vunpack.c.l.b16 %v6055
    %v6126 = vunpack.c.h.b16 %v6055
    %v6127 = vunpack.c.l.b16 %v6056
    %v6128 = vunpack.c.h.b16 %v6056
    %v6129 = vunpack.c.l.b16 %v6057
    %v6130 = vunpack.c.h.b16 %v6057
    %v6131 = vunpack.c.l.b16 %v6058
    %v6132 = vunpack.c.h.b16 %v6058
    %v6133 = vunpack.c.l.b16 %v6059
    %v6134 = vunpack.c.h.b16 %v6059
    %v6135 = vunpack.c.l.b16 %v6060
    %v6136 = vunpack.c.h.b16 %v6060
    %v6137 = vunpack.c.l.b16 %v6061
    %v6138 = vunpack.c.h.b16 %v6061
    %v6139 = vunpack.c.l.b16 %v6062
    %v6140 = vunpack.c.h.b16 %v6062
    %v6141 = vunpack.c.l.b16 %v6063
    %v6142 = vunpack.c.h.b16 %v6063
    %v6143 = vunpack.c.l.b16 %v6064
    %v6144 = vunpack.c.h.b16 %v6064
    %v6145 = vunpack.c.l.b16 %v6065
    %v6146 = vunpack.c.h.b16 %v6065
    %v6147 = vunpack.c.l.b16 %v6066
    %v6148 = vunpack.c.h.b16 %v6066
    %v6149 = vunpack.c.l.b16 %v6067
    %v6150 = vunpack.c.h.b16 %v6067
    %v6151 = vunpack.c.l.b16 %v6068
    %v6152 = vunpack.c.h.b16 %v6068
    %v6153 = vunpack.c.l.b16 %v6069
    %v6154 = vunpack.c.h.b16 %v6069
    %v6155 = vunpack.c.l.b16 %v6070
    %v6156 = vunpack.c.h.b16 %v6070
    %v6157 = vunpack.c.l.b16 %v6071
    %v6158 = vunpack.c.h.b16 %v6071
    %v6159 = vunpack.c.l.b16 %v6072
    %v6160 = vunpack.c.h.b16 %v6072
    %v6161 = vunpack.c.l.b16 %v6073
    %v6162 = vunpack.c.h.b16 %v6073
    %v6163 = vunpack.c.l.b16 %v6074
    %v6164 = vunpack.c.h.b16 %v6074
    %v6165 = vunpack.c.l.b16 %v6075
    %v6166 = vunpack.c.h.b16 %v6075
    %v6167 = vunpack.c.l.b16 %v6076
    %v6168 = vunpack.c.h.b16 %v6076
    %v6169 = vunpack.c.l.b16 %v6077
    %v6170 = vunpack.c.h.b16 %v6077
    %v6171 = vunpack.c.l.b16 %v6078
    %v6172 = vunpack.c.h.b16 %v6078
    %v6173 = vunpack.c.l.b16 %v6079
    %v6174 = vunpack.c.h.b16 %v6079
    %v6175 = vunpack.c.l.b16 %v6080
    %v6176 = vunpack.c.h.b16 %v6080
    %v6177 = vunpack.c.l.b16 %v6081
    %v6178 = vunpack.c.h.b16 %v6081
    %v6179 = vunpack.c.l.b16 %v6082
    %v6180 = vunpack.c.h.b16 %v6082
    %v6181 = vpack.c.b16 %v6133, %v6117
    %v6182 = vpack.c.b16 %v6134, %v6118
    %v6183 = vpack.c.b16 %v6135, %v6119
    %v6184 = vpack.c.b16 %v6136, %v6120
    %v6185 = vpack.c.b16 %v6137, %v6121
    %v6186 = vpack.c.b16 %v6138, %v6122
    %v6187 = vpack.c.b16 %v6139, %v6123
    %v6188 = vpack.c.b16 %v6140, %v6124
    %v6189 = vpack.c.b16 %v6141, %v6125
    %v6190 = vpack.c.b16 %v6142, %v6126
    %v6191 = vpack.c.b16 %v6143, %v6127
    %v6192 = vpack.c.b16 %v6144, %v6128
    %v6193 = vpack.c.b16 %v6145, %v6129
    %v6194 = vpack.c.b16 %v6146, %v6130
    %v6195 = vpack.c.b16 %v6147, %v6131
    %v6196 = vpack.c.b16 %v6148, %v6132
    %v6197 = vpack.c.b16 %v6165, %v6149
    %v6198 = vpack.c.b16 %v6166, %v6150
    %v6199 = vpack.c.b16 %v6167, %v6151
    %v6200 = vpack.c.b16 %v6168, %v6152
    %v6201 = vpack.c.b16 %v6169, %v6153
    %v6202 = vpack.c.b16 %v6170, %v6154
    %v6203 = vpack.c.b16 %v6171, %v6155
    %v6204 = vpack.c.b16 %v6172, %v6156
    %v6205 = vpack.c.b16 %v6173, %v6157
    %v6206 = vpack.c.b16 %v6174, %v6158
    %v6207 = vpack.c.b16 %v6175, %v6159
    %v6208 = vpack.c.b16 %v6176, %v6160
    %v6209 = vpack.c.b16 %v6177, %v6161
    %v6210 = vpack.c.b16 %v6178, %v6162
    %v6211 = vpack.c.b16 %v6179, %v6163
    %v6212 = vpack.c.b16 %v6180, %v6164
    %v6246 = vsel %vm3604, %v6084, 0
    %6248 = vmatprep.subr.bf16.mxu0 %v6182
    %6249 = vmatpush1.bf16.msra.mxu0 %v6181
    %6250 = vmatprep.subr.bf16.mxu0 %v6198
    %6251 = vmatpush1.bf16.msra.mxu0 %v6197
    %6252 = vmatprep.subr.bf16.mxu0 0
    %6253 = vmatpush1.bf16.msra.mxu0 0
    %6254 = vmatprep.subr.bf16.mxu0 0
    %6255 = vmatpush1.bf16.msra.mxu0 0
    %6256 = vmatprep.subr.bf16.mxu0 0
    %6257 = vmatpush1.bf16.msra.mxu0 0
    %6258 = vmatprep.subr.bf16.mxu0 0
    %6259 = vmatpush1.bf16.msra.mxu0 0
    %6260 = vmatprep.subr.bf16.mxu0 0
    %6261 = vmatpush1.bf16.msra.mxu0 0
    %6262 = vmatprep.subr.bf16.mxu0 0
    %6263 = vmatpush1.bf16.msra.mxu0 0
    %6264 = vmatprep.subr.bf16.mxu0 0
    %6265 = vmatpush1.bf16.msra.mxu0 0
    %6266 = vmatprep.subr.bf16.mxu0 0
    %6267 = vmatpush1.bf16.msra.mxu0 0
    %6268 = vmatprep.subr.bf16.mxu0 0
    %6269 = vmatpush1.bf16.msra.mxu0 0
    %6270 = vmatprep.subr.bf16.mxu0 0
    %6271 = vmatpush1.bf16.msra.mxu0 0
    %6272 = vmatprep.subr.bf16.mxu0 0
    %6273 = vmatpush1.bf16.msra.mxu0 0
    %6274 = vmatprep.subr.bf16.mxu0 0
    %6275 = vmatpush1.bf16.msra.mxu0 0
    %6276 = vmatprep.subr.bf16.mxu0 0
    %6277 = vmatpush1.bf16.msra.mxu0 0
    %6278 = vmatprep.subr.bf16.mxu0 0
    %6279 = vmatpush1.bf16.msra.mxu0 0
    %6280 = vmatprep.mubr.bf16.mxu0 0
    %6281 = vmatmul.mubr.bf16.gmra.mrb[0].mxu0 %v6246
    %v6282 = vpop.f32.mrb[0].mxu0
    %v6283 = vadd.f32 0.0, %v6282
    %v6284 = vpop.f32.mrb[0].mxu0
    %v6285 = vadd.f32 0.0, %v6284
    %v6286 = vpop.f32.mrb[0].mxu0
    %v6287 = vpop.f32.mrb[0].mxu0
    %6288 = vdwg.mxu0
    %6289 = vmatprep.subr.bf16.mxu0 %v6184
    %6290 = vmatpush1.bf16.msra.mxu0 %v6183
    %6291 = vmatprep.subr.bf16.mxu0 %v6200
    %6292 = vmatpush1.bf16.msra.mxu0 %v6199
    %6293 = vmatprep.subr.bf16.mxu0 0
    %6294 = vmatpush1.bf16.msra.mxu0 0
    %6295 = vmatprep.subr.bf16.mxu0 0
    %6296 = vmatpush1.bf16.msra.mxu0 0
    %6297 = vmatprep.subr.bf16.mxu0 0
    %6298 = vmatpush1.bf16.msra.mxu0 0
    %6299 = vmatprep.subr.bf16.mxu0 0
    %6300 = vmatpush1.bf16.msra.mxu0 0
    %6301 = vmatprep.subr.bf16.mxu0 0
    %6302 = vmatpush1.bf16.msra.mxu0 0
    %6303 = vmatprep.subr.bf16.mxu0 0
    %6304 = vmatpush1.bf16.msra.mxu0 0
    %6305 = vmatprep.subr.bf16.mxu0 0
    %6306 = vmatpush1.bf16.msra.mxu0 0
    %6307 = vmatprep.subr.bf16.mxu0 0
    %6308 = vmatpush1.bf16.msra.mxu0 0
    %6309 = vmatprep.subr.bf16.mxu0 0
    %6310 = vmatpush1.bf16.msra.mxu0 0
    %6311 = vmatprep.subr.bf16.mxu0 0
    %6312 = vmatpush1.bf16.msra.mxu0 0
    %6313 = vmatprep.subr.bf16.mxu0 0
    %6314 = vmatpush1.bf16.msra.mxu0 0
    %6315 = vmatprep.subr.bf16.mxu0 0
    %6316 = vmatpush1.bf16.msra.mxu0 0
    %6317 = vmatprep.subr.bf16.mxu0 0
    %6318 = vmatpush1.bf16.msra.mxu0 0
    %6319 = vmatprep.subr.bf16.mxu0 0
    %6320 = vmatpush1.bf16.msra.mxu0 0
    %6321 = vmatprep.mubr.bf16.mxu0 0
    %6322 = vmatmul.mubr.bf16.gmra.mrb[0].mxu0 %v6246
    %v6323 = vpop.f32.mrb[0].mxu0
    %v6324 = vadd.f32 0.0, %v6323
    %v6325 = vpop.f32.mrb[0].mxu0
    %v6326 = vadd.f32 0.0, %v6325
    %v6327 = vpop.f32.mrb[0].mxu0
    %v6328 = vpop.f32.mrb[0].mxu0
    %6329 = vdwg.mxu0
    %6330 = vmatprep.subr.bf16.mxu0 %v6186
    %6331 = vmatpush1.bf16.msra.mxu0 %v6185
    %6332 = vmatprep.subr.bf16.mxu0 %v6202
    %6333 = vmatpush1.bf16.msra.mxu0 %v6201
    %6334 = vmatprep.subr.bf16.mxu0 0
    %6335 = vmatpush1.bf16.msra.mxu0 0
    %6336 = vmatprep.subr.bf16.mxu0 0
    %6337 = vmatpush1.bf16.msra.mxu0 0
    %6338 = vmatprep.subr.bf16.mxu0 0
    %6339 = vmatpush1.bf16.msra.mxu0 0
    %6340 = vmatprep.subr.bf16.mxu0 0
    %6341 = vmatpush1.bf16.msra.mxu0 0
    %6342 = vmatprep.subr.bf16.mxu0 0
    %6343 = vmatpush1.bf16.msra.mxu0 0
    %6344 = vmatprep.subr.bf16.mxu0 0
    %6345 = vmatpush1.bf16.msra.mxu0 0
    %6346 = vmatprep.subr.bf16.mxu0 0
    %6347 = vmatpush1.bf16.msra.mxu0 0
    %6348 = vmatprep.subr.bf16.mxu0 0
    %6349 = vmatpush1.bf16.msra.mxu0 0
    %6350 = vmatprep.subr.bf16.mxu0 0
    %6351 = vmatpush1.bf16.msra.mxu0 0
    %6352 = vmatprep.subr.bf16.mxu0 0
    %6353 = vmatpush1.bf16.msra.mxu0 0
    %6354 = vmatprep.subr.bf16.mxu0 0
    %6355 = vmatpush1.bf16.msra.mxu0 0
    %6356 = vmatprep.subr.bf16.mxu0 0
    %6357 = vmatpush1.bf16.msra.mxu0 0
    %6358 = vmatprep.subr.bf16.mxu0 0
    %6359 = vmatpush1.bf16.msra.mxu0 0
    %6360 = vmatprep.subr.bf16.mxu0 0
    %6361 = vmatpush1.bf16.msra.mxu0 0
    %6362 = vmatprep.mubr.bf16.mxu0 0
    %6363 = vmatmul.mubr.bf16.gmra.mrb[0].mxu0 %v6246
    %v6364 = vpop.f32.mrb[0].mxu0
    %v6365 = vadd.f32 0.0, %v6364
    %v6366 = vpop.f32.mrb[0].mxu0
    %v6367 = vadd.f32 0.0, %v6366
    %v6368 = vpop.f32.mrb[0].mxu0
    %v6369 = vpop.f32.mrb[0].mxu0
    %6370 = vdwg.mxu0
    %6371 = vmatprep.subr.bf16.mxu0 %v6188
    %6372 = vmatpush1.bf16.msra.mxu0 %v6187
    %6373 = vmatprep.subr.bf16.mxu0 %v6204
    %6374 = vmatpush1.bf16.msra.mxu0 %v6203
    %6375 = vmatprep.subr.bf16.mxu0 0
    %6376 = vmatpush1.bf16.msra.mxu0 0
    %6377 = vmatprep.subr.bf16.mxu0 0
    %6378 = vmatpush1.bf16.msra.mxu0 0
    %6379 = vmatprep.subr.bf16.mxu0 0
    %6380 = vmatpush1.bf16.msra.mxu0 0
    %6381 = vmatprep.subr.bf16.mxu0 0
    %6382 = vmatpush1.bf16.msra.mxu0 0
    %6383 = vmatprep.subr.bf16.mxu0 0
    %6384 = vmatpush1.bf16.msra.mxu0 0
    %6385 = vmatprep.subr.bf16.mxu0 0
    %6386 = vmatpush1.bf16.msra.mxu0 0
    %6387 = vmatprep.subr.bf16.mxu0 0
    %6388 = vmatpush1.bf16.msra.mxu0 0
    %6389 = vmatprep.subr.bf16.mxu0 0
    %6390 = vmatpush1.bf16.msra.mxu0 0
    %6391 = vmatprep.subr.bf16.mxu0 0
    %6392 = vmatpush1.bf16.msra.mxu0 0
    %6393 = vmatprep.subr.bf16.mxu0 0
    %6394 = vmatpush1.bf16.msra.mxu0 0
    %6395 = vmatprep.subr.bf16.mxu0 0
    %6396 = vmatpush1.bf16.msra.mxu0 0
    %6397 = vmatprep.subr.bf16.mxu0 0
    %6398 = vmatpush1.bf16.msra.mxu0 0
    %6399 = vmatprep.subr.bf16.mxu0 0
    %6400 = vmatpush1.bf16.msra.mxu0 0
    %6401 = vmatprep.subr.bf16.mxu0 0
    %6402 = vmatpush1.bf16.msra.mxu0 0
    %6403 = vmatprep.mubr.bf16.mxu0 0
    %6404 = vmatmul.mubr.bf16.gmra.mrb[0].mxu0 %v6246
    %v6405 = vpop.f32.mrb[0].mxu0
    %v6406 = vadd.f32 0.0, %v6405
    %v6407 = vpop.f32.mrb[0].mxu0
    %v6408 = vadd.f32 0.0, %v6407
    %v6409 = vpop.f32.mrb[0].mxu0
    %v6410 = vpop.f32.mrb[0].mxu0
    %6411 = vdwg.mxu0
    %6412 = vmatprep.subr.bf16.mxu0 %v6190
    %6413 = vmatpush1.bf16.msra.mxu0 %v6189
    %6414 = vmatprep.subr.bf16.mxu0 %v6206
    %6415 = vmatpush1.bf16.msra.mxu0 %v6205
    %6416 = vmatprep.subr.bf16.mxu0 0
    %6417 = vmatpush1.bf16.msra.mxu0 0
    %6418 = vmatprep.subr.bf16.mxu0 0
    %6419 = vmatpush1.bf16.msra.mxu0 0
    %6420 = vmatprep.subr.bf16.mxu0 0
    %6421 = vmatpush1.bf16.msra.mxu0 0
    %6422 = vmatprep.subr.bf16.mxu0 0
    %6423 = vmatpush1.bf16.msra.mxu0 0
    %6424 = vmatprep.subr.bf16.mxu0 0
    %6425 = vmatpush1.bf16.msra.mxu0 0
    %6426 = vmatprep.subr.bf16.mxu0 0
    %6427 = vmatpush1.bf16.msra.mxu0 0
    %6428 = vmatprep.subr.bf16.mxu0 0
    %6429 = vmatpush1.bf16.msra.mxu0 0
    %6430 = vmatprep.subr.bf16.mxu0 0
    %6431 = vmatpush1.bf16.msra.mxu0 0
    %6432 = vmatprep.subr.bf16.mxu0 0
    %6433 = vmatpush1.bf16.msra.mxu0 0
    %6434 = vmatprep.subr.bf16.mxu0 0
    %6435 = vmatpush1.bf16.msra.mxu0 0
    %6436 = vmatprep.subr.bf16.mxu0 0
    %6437 = vmatpush1.bf16.msra.mxu0 0
    %6438 = vmatprep.subr.bf16.mxu0 0
    %6439 = vmatpush1.bf16.msra.mxu0 0
    %6440 = vmatprep.subr.bf16.mxu0 0
    %6441 = vmatpush1.bf16.msra.mxu0 0
    %6442 = vmatprep.subr.bf16.mxu0 0
    %6443 = vmatpush1.bf16.msra.mxu0 0
    %6444 = vmatprep.mubr.bf16.mxu0 0
    %6445 = vmatmul.mubr.bf16.gmra.mrb[0].mxu0 %v6246
    %v6446 = vpop.f32.mrb[0].mxu0
    %v6447 = vadd.f32 0.0, %v6446
    %v6448 = vpop.f32.mrb[0].mxu0
    %v6449 = vadd.f32 0.0, %v6448
    %v6450 = vpop.f32.mrb[0].mxu0
    %v6451 = vpop.f32.mrb[0].mxu0
    %6452 = vdwg.mxu0
    %6453 = vmatprep.subr.bf16.mxu0 %v6192
    %6454 = vmatpush1.bf16.msra.mxu0 %v6191
    %6455 = vmatprep.subr.bf16.mxu0 %v6208
    %6456 = vmatpush1.bf16.msra.mxu0 %v6207
    %6457 = vmatprep.subr.bf16.mxu0 0
    %6458 = vmatpush1.bf16.msra.mxu0 0
    %6459 = vmatprep.subr.bf16.mxu0 0
    %6460 = vmatpush1.bf16.msra.mxu0 0
    %6461 = vmatprep.subr.bf16.mxu0 0
    %6462 = vmatpush1.bf16.msra.mxu0 0
    %6463 = vmatprep.subr.bf16.mxu0 0
    %6464 = vmatpush1.bf16.msra.mxu0 0
    %6465 = vmatprep.subr.bf16.mxu0 0
    %6466 = vmatpush1.bf16.msra.mxu0 0
    %6467 = vmatprep.subr.bf16.mxu0 0
    %6468 = vmatpush1.bf16.msra.mxu0 0
    %6469 = vmatprep.subr.bf16.mxu0 0
    %6470 = vmatpush1.bf16.msra.mxu0 0
    %6471 = vmatprep.subr.bf16.mxu0 0
    %6472 = vmatpush1.bf16.msra.mxu0 0
    %6473 = vmatprep.subr.bf16.mxu0 0
    %6474 = vmatpush1.bf16.msra.mxu0 0
    %6475 = vmatprep.subr.bf16.mxu0 0
    %6476 = vmatpush1.bf16.msra.mxu0 0
    %6477 = vmatprep.subr.bf16.mxu0 0
    %6478 = vmatpush1.bf16.msra.mxu0 0
    %6479 = vmatprep.subr.bf16.mxu0 0
    %6480 = vmatpush1.bf16.msra.mxu0 0
    %6481 = vmatprep.subr.bf16.mxu0 0
    %6482 = vmatpush1.bf16.msra.mxu0 0
    %6483 = vmatprep.subr.bf16.mxu0 0
    %6484 = vmatpush1.bf16.msra.mxu0 0
    %6485 = vmatprep.mubr.bf16.mxu0 0
    %6486 = vmatmul.mubr.bf16.gmra.mrb[0].mxu0 %v6246
    %v6487 = vpop.f32.mrb[0].mxu0
    %v6488 = vadd.f32 0.0, %v6487
    %v6489 = vpop.f32.mrb[0].mxu0
    %v6490 = vadd.f32 0.0, %v6489
    %v6491 = vpop.f32.mrb[0].mxu0
    %v6492 = vpop.f32.mrb[0].mxu0
    %6493 = vdwg.mxu0
    %6494 = vmatprep.subr.bf16.mxu0 %v6194
    %6495 = vmatpush1.bf16.msra.mxu0 %v6193
    %6496 = vmatprep.subr.bf16.mxu0 %v6210
    %6497 = vmatpush1.bf16.msra.mxu0 %v6209
    %6498 = vmatprep.subr.bf16.mxu0 0
    %6499 = vmatpush1.bf16.msra.mxu0 0
    %6500 = vmatprep.subr.bf16.mxu0 0
    %6501 = vmatpush1.bf16.msra.mxu0 0
    %6502 = vmatprep.subr.bf16.mxu0 0
    %6503 = vmatpush1.bf16.msra.mxu0 0
    %6504 = vmatprep.subr.bf16.mxu0 0
    %6505 = vmatpush1.bf16.msra.mxu0 0
    %6506 = vmatprep.subr.bf16.mxu0 0
    %6507 = vmatpush1.bf16.msra.mxu0 0
    %6508 = vmatprep.subr.bf16.mxu0 0
    %6509 = vmatpush1.bf16.msra.mxu0 0
    %6510 = vmatprep.subr.bf16.mxu0 0
    %6511 = vmatpush1.bf16.msra.mxu0 0
    %6512 = vmatprep.subr.bf16.mxu0 0
    %6513 = vmatpush1.bf16.msra.mxu0 0
    %6514 = vmatprep.subr.bf16.mxu0 0
    %6515 = vmatpush1.bf16.msra.mxu0 0
    %6516 = vmatprep.subr.bf16.mxu0 0
    %6517 = vmatpush1.bf16.msra.mxu0 0
    %6518 = vmatprep.subr.bf16.mxu0 0
    %6519 = vmatpush1.bf16.msra.mxu0 0
    %6520 = vmatprep.subr.bf16.mxu0 0
    %6521 = vmatpush1.bf16.msra.mxu0 0
    %6522 = vmatprep.subr.bf16.mxu0 0
    %6523 = vmatpush1.bf16.msra.mxu0 0
    %6524 = vmatprep.subr.bf16.mxu0 0
    %6525 = vmatpush1.bf16.msra.mxu0 0
    %6526 = vmatprep.mubr.bf16.mxu0 0
    %6527 = vmatmul.mubr.bf16.gmra.mrb[0].mxu0 %v6246
    %v6528 = vpop.f32.mrb[0].mxu0
    %v6529 = vadd.f32 0.0, %v6528
    %v6530 = vpop.f32.mrb[0].mxu0
    %v6531 = vadd.f32 0.0, %v6530
    %v6532 = vpop.f32.mrb[0].mxu0
    %v6533 = vpop.f32.mrb[0].mxu0
    %6534 = vdwg.mxu0
    %6535 = vmatprep.subr.bf16.mxu0 %v6196
    %6536 = vmatpush1.bf16.msra.mxu0 %v6195
    %6537 = vmatprep.subr.bf16.mxu0 %v6212
    %6538 = vmatpush1.bf16.msra.mxu0 %v6211
    %6539 = vmatprep.subr.bf16.mxu0 0
    %6540 = vmatpush1.bf16.msra.mxu0 0
    %6541 = vmatprep.subr.bf16.mxu0 0
    %6542 = vmatpush1.bf16.msra.mxu0 0
    %6543 = vmatprep.subr.bf16.mxu0 0
    %6544 = vmatpush1.bf16.msra.mxu0 0
    %6545 = vmatprep.subr.bf16.mxu0 0
    %6546 = vmatpush1.bf16.msra.mxu0 0
    %6547 = vmatprep.subr.bf16.mxu0 0
    %6548 = vmatpush1.bf16.msra.mxu0 0
    %6549 = vmatprep.subr.bf16.mxu0 0
    %6550 = vmatpush1.bf16.msra.mxu0 0
    %6551 = vmatprep.subr.bf16.mxu0 0
    %6552 = vmatpush1.bf16.msra.mxu0 0
    %6553 = vmatprep.subr.bf16.mxu0 0
    %6554 = vmatpush1.bf16.msra.mxu0 0
    %6555 = vmatprep.subr.bf16.mxu0 0
    %6556 = vmatpush1.bf16.msra.mxu0 0
    %6557 = vmatprep.subr.bf16.mxu0 0
    %6558 = vmatpush1.bf16.msra.mxu0 0
    %6559 = vmatprep.subr.bf16.mxu0 0
    %6560 = vmatpush1.bf16.msra.mxu0 0
    %6561 = vmatprep.subr.bf16.mxu0 0
    %6562 = vmatpush1.bf16.msra.mxu0 0
    %6563 = vmatprep.subr.bf16.mxu0 0
    %6564 = vmatpush1.bf16.msra.mxu0 0
    %6565 = vmatprep.subr.bf16.mxu0 0
    %6566 = vmatpush1.bf16.msra.mxu0 0
    %6567 = vmatprep.mubr.bf16.mxu0 0
    %6568 = vmatmul.mubr.bf16.gmra.mrb[0].mxu0 %v6246
    %v6569 = vpop.f32.mrb[0].mxu0
    %v6570 = vadd.f32 0.0, %v6569
    %v6571 = vpop.f32.mrb[0].mxu0
    %v6572 = vadd.f32 0.0, %v6571
    %v6573 = vpop.f32.mrb[0].mxu0
    %v6574 = vpop.f32.mrb[0].mxu0
    %6575 = vdwg.mxu0
    %v6576 = vadd.f32 %v6034, %v6283
    %v6577 = vadd.f32 %v6035, %v6285
    %v6578 = vadd.f32 %v6036, %v6324
    %v6579 = vadd.f32 %v6037, %v6326
    %v6580 = vadd.f32 %v6038, %v6365
    %v6581 = vadd.f32 %v6039, %v6367
    %v6582 = vadd.f32 %v6040, %v6406
    %v6583 = vadd.f32 %v6041, %v6408
    %v6584 = vadd.f32 %v6042, %v6447
    %v6585 = vadd.f32 %v6043, %v6449
    %v6586 = vadd.f32 %v6044, %v6488
    %v6587 = vadd.f32 %v6045, %v6490
    %v6588 = vadd.f32 %v6046, %v6529
    %v6589 = vadd.f32 %v6047, %v6531
    %v6590 = vadd.f32 %v6048, %v6570
    %v6591 = vadd.f32 %v6049, %v6572
    %s6592 = scalar_lea.vmem [#allocation11], 1536
    %v6593 = vld [vmem:[%s6592] sm:$0xff]
    %v6594 = vld [vmem:[%s6592 + $0x8] sm:$0xff]
    %v6595 = vld [vmem:[%s6592 + $0x10] sm:$0xff]
    %v6596 = vld [vmem:[%s6592 + $0x18] sm:$0xff]
    %v6597 = vld [vmem:[%s6592 + $0x20] sm:$0xff]
    %v6598 = vld [vmem:[%s6592 + $0x28] sm:$0xff]
    %v6599 = vld [vmem:[%s6592 + $0x30] sm:$0xff]
    %v6600 = vld [vmem:[%s6592 + $0x38] sm:$0xff]
    %v6601 = vld [vmem:[%s6592 + $0x40] sm:$0xff]
    %v6602 = vld [vmem:[%s6592 + $0x48] sm:$0xff]
    %v6603 = vld [vmem:[%s6592 + $0x50] sm:$0xff]
    %v6604 = vld [vmem:[%s6592 + $0x58] sm:$0xff]
    %v6605 = vld [vmem:[%s6592 + $0x60] sm:$0xff]
    %v6606 = vld [vmem:[%s6592 + $0x68] sm:$0xff]
    %v6607 = vld [vmem:[%s6592 + $0x70] sm:$0xff]
    %v6608 = vld [vmem:[%s6592 + $0x78] sm:$0xff]
    %v6609 = vld [vmem:[%s6592 + $0x80] sm:$0xff]
    %v6610 = vld [vmem:[%s6592 + $0x88] sm:$0xff]
    %v6611 = vld [vmem:[%s6592 + $0x90] sm:$0xff]
    %v6612 = vld [vmem:[%s6592 + $0x98] sm:$0xff]
    %v6613 = vld [vmem:[%s6592 + $0xa0] sm:$0xff]
    %v6614 = vld [vmem:[%s6592 + $0xa8] sm:$0xff]
    %v6615 = vld [vmem:[%s6592 + $0xb0] sm:$0xff]
    %v6616 = vld [vmem:[%s6592 + $0xb8] sm:$0xff]
    %v6617 = vld [vmem:[%s6592 + $0xc0] sm:$0xff]
    %v6618 = vld [vmem:[%s6592 + $0xc8] sm:$0xff]
    %v6619 = vld [vmem:[%s6592 + $0xd0] sm:$0xff]
    %v6620 = vld [vmem:[%s6592 + $0xd8] sm:$0xff]
    %v6621 = vld [vmem:[%s6592 + $0xe0] sm:$0xff]
    %v6622 = vld [vmem:[%s6592 + $0xe8] sm:$0xff]
    %v6623 = vld [vmem:[%s6592 + $0xf0] sm:$0xff]
    %v6624 = vld [vmem:[%s6592 + $0xf8] sm:$0xff]
    %v6625 = vrot.slane %v5509, 2
    %v6658 = vunpack.c.l.b16 %v6593
    %v6659 = vunpack.c.h.b16 %v6593
    %v6660 = vunpack.c.l.b16 %v6594
    %v6661 = vunpack.c.h.b16 %v6594
    %v6662 = vunpack.c.l.b16 %v6595
    %v6663 = vunpack.c.h.b16 %v6595
    %v6664 = vunpack.c.l.b16 %v6596
    %v6665 = vunpack.c.h.b16 %v6596
    %v6666 = vunpack.c.l.b16 %v6597
    %v6667 = vunpack.c.h.b16 %v6597
    %v6668 = vunpack.c.l.b16 %v6598
    %v6669 = vunpack.c.h.b16 %v6598
    %v6670 = vunpack.c.l.b16 %v6599
    %v6671 = vunpack.c.h.b16 %v6599
    %v6672 = vunpack.c.l.b16 %v6600
    %v6673 = vunpack.c.h.b16 %v6600
    %v6674 = vunpack.c.l.b16 %v6601
    %v6675 = vunpack.c.h.b16 %v6601
    %v6676 = vunpack.c.l.b16 %v6602
    %v6677 = vunpack.c.h.b16 %v6602
    %v6678 = vunpack.c.l.b16 %v6603
    %v6679 = vunpack.c.h.b16 %v6603
    %v6680 = vunpack.c.l.b16 %v6604
    %v6681 = vunpack.c.h.b16 %v6604
    %v6682 = vunpack.c.l.b16 %v6605
    %v6683 = vunpack.c.h.b16 %v6605
    %v6684 = vunpack.c.l.b16 %v6606
    %v6685 = vunpack.c.h.b16 %v6606
    %v6686 = vunpack.c.l.b16 %v6607
    %v6687 = vunpack.c.h.b16 %v6607
    %v6688 = vunpack.c.l.b16 %v6608
    %v6689 = vunpack.c.h.b16 %v6608
    %v6690 = vunpack.c.l.b16 %v6609
    %v6691 = vunpack.c.h.b16 %v6609
    %v6692 = vunpack.c.l.b16 %v6610
    %v6693 = vunpack.c.h.b16 %v6610
    %v6694 = vunpack.c.l.b16 %v6611
    %v6695 = vunpack.c.h.b16 %v6611
    %v6696 = vunpack.c.l.b16 %v6612
    %v6697 = vunpack.c.h.b16 %v6612
    %v6698 = vunpack.c.l.b16 %v6613
    %v6699 = vunpack.c.h.b16 %v6613
    %v6700 = vunpack.c.l.b16 %v6614
    %v6701 = vunpack.c.h.b16 %v6614
    %v6702 = vunpack.c.l.b16 %v6615
    %v6703 = vunpack.c.h.b16 %v6615
    %v6704 = vunpack.c.l.b16 %v6616
    %v6705 = vunpack.c.h.b16 %v6616
    %v6706 = vunpack.c.l.b16 %v6617
    %v6707 = vunpack.c.h.b16 %v6617
    %v6708 = vunpack.c.l.b16 %v6618
    %v6709 = vunpack.c.h.b16 %v6618
    %v6710 = vunpack.c.l.b16 %v6619
    %v6711 = vunpack.c.h.b16 %v6619
    %v6712 = vunpack.c.l.b16 %v6620
    %v6713 = vunpack.c.h.b16 %v6620
    %v6714 = vunpack.c.l.b16 %v6621
    %v6715 = vunpack.c.h.b16 %v6621
    %v6716 = vunpack.c.l.b16 %v6622
    %v6717 = vunpack.c.h.b16 %v6622
    %v6718 = vunpack.c.l.b16 %v6623
    %v6719 = vunpack.c.h.b16 %v6623
    %v6720 = vunpack.c.l.b16 %v6624
    %v6721 = vunpack.c.h.b16 %v6624
    %v6722 = vpack.c.b16 %v6674, %v6658
    %v6723 = vpack.c.b16 %v6675, %v6659
    %v6724 = vpack.c.b16 %v6676, %v6660
    %v6725 = vpack.c.b16 %v6677, %v6661
    %v6726 = vpack.c.b16 %v6678, %v6662
    %v6727 = vpack.c.b16 %v6679, %v6663
    %v6728 = vpack.c.b16 %v6680, %v6664
    %v6729 = vpack.c.b16 %v6681, %v6665
    %v6730 = vpack.c.b16 %v6682, %v6666
    %v6731 = vpack.c.b16 %v6683, %v6667
    %v6732 = vpack.c.b16 %v6684, %v6668
    %v6733 = vpack.c.b16 %v6685, %v6669
    %v6734 = vpack.c.b16 %v6686, %v6670
    %v6735 = vpack.c.b16 %v6687, %v6671
    %v6736 = vpack.c.b16 %v6688, %v6672
    %v6737 = vpack.c.b16 %v6689, %v6673
    %v6738 = vpack.c.b16 %v6706, %v6690
    %v6739 = vpack.c.b16 %v6707, %v6691
    %v6740 = vpack.c.b16 %v6708, %v6692
    %v6741 = vpack.c.b16 %v6709, %v6693
    %v6742 = vpack.c.b16 %v6710, %v6694
    %v6743 = vpack.c.b16 %v6711, %v6695
    %v6744 = vpack.c.b16 %v6712, %v6696
    %v6745 = vpack.c.b16 %v6713, %v6697
    %v6746 = vpack.c.b16 %v6714, %v6698
    %v6747 = vpack.c.b16 %v6715, %v6699
    %v6748 = vpack.c.b16 %v6716, %v6700
    %v6749 = vpack.c.b16 %v6717, %v6701
    %v6750 = vpack.c.b16 %v6718, %v6702
    %v6751 = vpack.c.b16 %v6719, %v6703
    %v6752 = vpack.c.b16 %v6720, %v6704
    %v6753 = vpack.c.b16 %v6721, %v6705
    %v6787 = vsel %vm3604, %v6625, 0
    %6789 = vmatprep.subr.bf16.mxu0 %v6723
    %6790 = vmatpush1.bf16.msra.mxu0 %v6722
    %6791 = vmatprep.subr.bf16.mxu0 %v6739
    %6792 = vmatpush1.bf16.msra.mxu0 %v6738
    %6793 = vmatprep.subr.bf16.mxu0 0
    %6794 = vmatpush1.bf16.msra.mxu0 0
    %6795 = vmatprep.subr.bf16.mxu0 0
    %6796 = vmatpush1.bf16.msra.mxu0 0
    %6797 = vmatprep.subr.bf16.mxu0 0
    %6798 = vmatpush1.bf16.msra.mxu0 0
    %6799 = vmatprep.subr.bf16.mxu0 0
    %6800 = vmatpush1.bf16.msra.mxu0 0
    %6801 = vmatprep.subr.bf16.mxu0 0
    %6802 = vmatpush1.bf16.msra.mxu0 0
    %6803 = vmatprep.subr.bf16.mxu0 0
    %6804 = vmatpush1.bf16.msra.mxu0 0
    %6805 = vmatprep.subr.bf16.mxu0 0
    %6806 = vmatpush1.bf16.msra.mxu0 0
    %6807 = vmatprep.subr.bf16.mxu0 0
    %6808 = vmatpush1.bf16.msra.mxu0 0
    %6809 = vmatprep.subr.bf16.mxu0 0
    %6810 = vmatpush1.bf16.msra.mxu0 0
    %6811 = vmatprep.subr.bf16.mxu0 0
    %6812 = vmatpush1.bf16.msra.mxu0 0
    %6813 = vmatprep.subr.bf16.mxu0 0
    %6814 = vmatpush1.bf16.msra.mxu0 0
    %6815 = vmatprep.subr.bf16.mxu0 0
    %6816 = vmatpush1.bf16.msra.mxu0 0
    %6817 = vmatprep.subr.bf16.mxu0 0
    %6818 = vmatpush1.bf16.msra.mxu0 0
    %6819 = vmatprep.subr.bf16.mxu0 0
    %6820 = vmatpush1.bf16.msra.mxu0 0
    %6821 = vmatprep.mubr.bf16.mxu0 0
    %6822 = vmatmul.mubr.bf16.gmra.mrb[0].mxu0 %v6787
    %v6823 = vpop.f32.mrb[0].mxu0
    %v6824 = vadd.f32 0.0, %v6823
    %v6825 = vpop.f32.mrb[0].mxu0
    %v6826 = vadd.f32 0.0, %v6825
    %v6827 = vpop.f32.mrb[0].mxu0
    %v6828 = vpop.f32.mrb[0].mxu0
    %6829 = vdwg.mxu0
    %6830 = vmatprep.subr.bf16.mxu0 %v6725
    %6831 = vmatpush1.bf16.msra.mxu0 %v6724
    %6832 = vmatprep.subr.bf16.mxu0 %v6741
    %6833 = vmatpush1.bf16.msra.mxu0 %v6740
    %6834 = vmatprep.subr.bf16.mxu0 0
    %6835 = vmatpush1.bf16.msra.mxu0 0
    %6836 = vmatprep.subr.bf16.mxu0 0
    %6837 = vmatpush1.bf16.msra.mxu0 0
    %6838 = vmatprep.subr.bf16.mxu0 0
    %6839 = vmatpush1.bf16.msra.mxu0 0
    %6840 = vmatprep.subr.bf16.mxu0 0
    %6841 = vmatpush1.bf16.msra.mxu0 0
    %6842 = vmatprep.subr.bf16.mxu0 0
    %6843 = vmatpush1.bf16.msra.mxu0 0
    %6844 = vmatprep.subr.bf16.mxu0 0
    %6845 = vmatpush1.bf16.msra.mxu0 0
    %6846 = vmatprep.subr.bf16.mxu0 0
    %6847 = vmatpush1.bf16.msra.mxu0 0
    %6848 = vmatprep.subr.bf16.mxu0 0
    %6849 = vmatpush1.bf16.msra.mxu0 0
    %6850 = vmatprep.subr.bf16.mxu0 0
    %6851 = vmatpush1.bf16.msra.mxu0 0
    %6852 = vmatprep.subr.bf16.mxu0 0
    %6853 = vmatpush1.bf16.msra.mxu0 0
    %6854 = vmatprep.subr.bf16.mxu0 0
    %6855 = vmatpush1.bf16.msra.mxu0 0
    %6856 = vmatprep.subr.bf16.mxu0 0
    %6857 = vmatpush1.bf16.msra.mxu0 0
    %6858 = vmatprep.subr.bf16.mxu0 0
    %6859 = vmatpush1.bf16.msra.mxu0 0
    %6860 = vmatprep.subr.bf16.mxu0 0
    %6861 = vmatpush1.bf16.msra.mxu0 0
    %6862 = vmatprep.mubr.bf16.mxu0 0
    %6863 = vmatmul.mubr.bf16.gmra.mrb[0].mxu0 %v6787
    %v6864 = vpop.f32.mrb[0].mxu0
    %v6865 = vadd.f32 0.0, %v6864
    %v6866 = vpop.f32.mrb[0].mxu0
    %v6867 = vadd.f32 0.0, %v6866
    %v6868 = vpop.f32.mrb[0].mxu0
    %v6869 = vpop.f32.mrb[0].mxu0
    %6870 = vdwg.mxu0
    %6871 = vmatprep.subr.bf16.mxu0 %v6727
    %6872 = vmatpush1.bf16.msra.mxu0 %v6726
    %6873 = vmatprep.subr.bf16.mxu0 %v6743
    %6874 = vmatpush1.bf16.msra.mxu0 %v6742
    %6875 = vmatprep.subr.bf16.mxu0 0
    %6876 = vmatpush1.bf16.msra.mxu0 0
    %6877 = vmatprep.subr.bf16.mxu0 0
    %6878 = vmatpush1.bf16.msra.mxu0 0
    %6879 = vmatprep.subr.bf16.mxu0 0
    %6880 = vmatpush1.bf16.msra.mxu0 0
    %6881 = vmatprep.subr.bf16.mxu0 0
    %6882 = vmatpush1.bf16.msra.mxu0 0
    %6883 = vmatprep.subr.bf16.mxu0 0
    %6884 = vmatpush1.bf16.msra.mxu0 0
    %6885 = vmatprep.subr.bf16.mxu0 0
    %6886 = vmatpush1.bf16.msra.mxu0 0
    %6887 = vmatprep.subr.bf16.mxu0 0
    %6888 = vmatpush1.bf16.msra.mxu0 0
    %6889 = vmatprep.subr.bf16.mxu0 0
    %6890 = vmatpush1.bf16.msra.mxu0 0
    %6891 = vmatprep.subr.bf16.mxu0 0
    %6892 = vmatpush1.bf16.msra.mxu0 0
    %6893 = vmatprep.subr.bf16.mxu0 0
    %6894 = vmatpush1.bf16.msra.mxu0 0
    %6895 = vmatprep.subr.bf16.mxu0 0
    %6896 = vmatpush1.bf16.msra.mxu0 0
    %6897 = vmatprep.subr.bf16.mxu0 0
    %6898 = vmatpush1.bf16.msra.mxu0 0
    %6899 = vmatprep.subr.bf16.mxu0 0
    %6900 = vmatpush1.bf16.msra.mxu0 0
    %6901 = vmatprep.subr.bf16.mxu0 0
    %6902 = vmatpush1.bf16.msra.mxu0 0
    %6903 = vmatprep.mubr.bf16.mxu0 0
    %6904 = vmatmul.mubr.bf16.gmra.mrb[0].mxu0 %v6787
    %v6905 = vpop.f32.mrb[0].mxu0
    %v6906 = vadd.f32 0.0, %v6905
    %v6907 = vpop.f32.mrb[0].mxu0
    %v6908 = vadd.f32 0.0, %v6907
    %v6909 = vpop.f32.mrb[0].mxu0
    %v6910 = vpop.f32.mrb[0].mxu0
    %6911 = vdwg.mxu0
    %6912 = vmatprep.subr.bf16.mxu0 %v6729
    %6913 = vmatpush1.bf16.msra.mxu0 %v6728
    %6914 = vmatprep.subr.bf16.mxu0 %v6745
    %6915 = vmatpush1.bf16.msra.mxu0 %v6744
    %6916 = vmatprep.subr.bf16.mxu0 0
    %6917 = vmatpush1.bf16.msra.mxu0 0
    %6918 = vmatprep.subr.bf16.mxu0 0
    %6919 = vmatpush1.bf16.msra.mxu0 0
    %6920 = vmatprep.subr.bf16.mxu0 0
    %6921 = vmatpush1.bf16.msra.mxu0 0
    %6922 = vmatprep.subr.bf16.mxu0 0
    %6923 = vmatpush1.bf16.msra.mxu0 0
    %6924 = vmatprep.subr.bf16.mxu0 0
    %6925 = vmatpush1.bf16.msra.mxu0 0
    %6926 = vmatprep.subr.bf16.mxu0 0
    %6927 = vmatpush1.bf16.msra.mxu0 0
    %6928 = vmatprep.subr.bf16.mxu0 0
    %6929 = vmatpush1.bf16.msra.mxu0 0
    %6930 = vmatprep.subr.bf16.mxu0 0
    %6931 = vmatpush1.bf16.msra.mxu0 0
    %6932 = vmatprep.subr.bf16.mxu0 0
    %6933 = vmatpush1.bf16.msra.mxu0 0
    %6934 = vmatprep.subr.bf16.mxu0 0
    %6935 = vmatpush1.bf16.msra.mxu0 0
    %6936 = vmatprep.subr.bf16.mxu0 0
    %6937 = vmatpush1.bf16.msra.mxu0 0
    %6938 = vmatprep.subr.bf16.mxu0 0
    %6939 = vmatpush1.bf16.msra.mxu0 0
    %6940 = vmatprep.subr.bf16.mxu0 0
    %6941 = vmatpush1.bf16.msra.mxu0 0
    %6942 = vmatprep.subr.bf16.mxu0 0
    %6943 = vmatpush1.bf16.msra.mxu0 0
    %6944 = vmatprep.mubr.bf16.mxu0 0
    %6945 = vmatmul.mubr.bf16.gmra.mrb[0].mxu0 %v6787
    %v6946 = vpop.f32.mrb[0].mxu0
    %v6947 = vadd.f32 0.0, %v6946
    %v6948 = vpop.f32.mrb[0].mxu0
    %v6949 = vadd.f32 0.0, %v6948
    %v6950 = vpop.f32.mrb[0].mxu0
    %v6951 = vpop.f32.mrb[0].mxu0
    %6952 = vdwg.mxu0
    %6953 = vmatprep.subr.bf16.mxu0 %v6731
    %6954 = vmatpush1.bf16.msra.mxu0 %v6730
    %6955 = vmatprep.subr.bf16.mxu0 %v6747
    %6956 = vmatpush1.bf16.msra.mxu0 %v6746
    %6957 = vmatprep.subr.bf16.mxu0 0
    %6958 = vmatpush1.bf16.msra.mxu0 0
    %6959 = vmatprep.subr.bf16.mxu0 0
    %6960 = vmatpush1.bf16.msra.mxu0 0
    %6961 = vmatprep.subr.bf16.mxu0 0
    %6962 = vmatpush1.bf16.msra.mxu0 0
    %6963 = vmatprep.subr.bf16.mxu0 0
    %6964 = vmatpush1.bf16.msra.mxu0 0
    %6965 = vmatprep.subr.bf16.mxu0 0
    %6966 = vmatpush1.bf16.msra.mxu0 0
    %6967 = vmatprep.subr.bf16.mxu0 0
    %6968 = vmatpush1.bf16.msra.mxu0 0
    %6969 = vmatprep.subr.bf16.mxu0 0
    %6970 = vmatpush1.bf16.msra.mxu0 0
    %6971 = vmatprep.subr.bf16.mxu0 0
    %6972 = vmatpush1.bf16.msra.mxu0 0
    %6973 = vmatprep.subr.bf16.mxu0 0
    %6974 = vmatpush1.bf16.msra.mxu0 0
    %6975 = vmatprep.subr.bf16.mxu0 0
    %6976 = vmatpush1.bf16.msra.mxu0 0
    %6977 = vmatprep.subr.bf16.mxu0 0
    %6978 = vmatpush1.bf16.msra.mxu0 0
    %6979 = vmatprep.subr.bf16.mxu0 0
    %6980 = vmatpush1.bf16.msra.mxu0 0
    %6981 = vmatprep.subr.bf16.mxu0 0
    %6982 = vmatpush1.bf16.msra.mxu0 0
    %6983 = vmatprep.subr.bf16.mxu0 0
    %6984 = vmatpush1.bf16.msra.mxu0 0
    %6985 = vmatprep.mubr.bf16.mxu0 0
    %6986 = vmatmul.mubr.bf16.gmra.mrb[0].mxu0 %v6787
    %v6987 = vpop.f32.mrb[0].mxu0
    %v6988 = vadd.f32 0.0, %v6987
    %v6989 = vpop.f32.mrb[0].mxu0
    %v6990 = vadd.f32 0.0, %v6989
    %v6991 = vpop.f32.mrb[0].mxu0
    %v6992 = vpop.f32.mrb[0].mxu0
    %6993 = vdwg.mxu0
    %6994 = vmatprep.subr.bf16.mxu0 %v6733
    %6995 = vmatpush1.bf16.msra.mxu0 %v6732
    %6996 = vmatprep.subr.bf16.mxu0 %v6749
    %6997 = vmatpush1.bf16.msra.mxu0 %v6748
    %6998 = vmatprep.subr.bf16.mxu0 0
    %6999 = vmatpush1.bf16.msra.mxu0 0
    %7000 = vmatprep.subr.bf16.mxu0 0
    %7001 = vmatpush1.bf16.msra.mxu0 0
    %7002 = vmatprep.subr.bf16.mxu0 0
    %7003 = vmatpush1.bf16.msra.mxu0 0
    %7004 = vmatprep.subr.bf16.mxu0 0
    %7005 = vmatpush1.bf16.msra.mxu0 0
    %7006 = vmatprep.subr.bf16.mxu0 0
    %7007 = vmatpush1.bf16.msra.mxu0 0
    %7008 = vmatprep.subr.bf16.mxu0 0
    %7009 = vmatpush1.bf16.msra.mxu0 0
    %7010 = vmatprep.subr.bf16.mxu0 0
    %7011 = vmatpush1.bf16.msra.mxu0 0
    %7012 = vmatprep.subr.bf16.mxu0 0
    %7013 = vmatpush1.bf16.msra.mxu0 0
    %7014 = vmatprep.subr.bf16.mxu0 0
    %7015 = vmatpush1.bf16.msra.mxu0 0
    %7016 = vmatprep.subr.bf16.mxu0 0
    %7017 = vmatpush1.bf16.msra.mxu0 0
    %7018 = vmatprep.subr.bf16.mxu0 0
    %7019 = vmatpush1.bf16.msra.mxu0 0
    %7020 = vmatprep.subr.bf16.mxu0 0
    %7021 = vmatpush1.bf16.msra.mxu0 0
    %7022 = vmatprep.subr.bf16.mxu0 0
    %7023 = vmatpush1.bf16.msra.mxu0 0
    %7024 = vmatprep.subr.bf16.mxu0 0
    %7025 = vmatpush1.bf16.msra.mxu0 0
    %7026 = vmatprep.mubr.bf16.mxu0 0
    %7027 = vmatmul.mubr.bf16.gmra.mrb[0].mxu0 %v6787
    %v7028 = vpop.f32.mrb[0].mxu0
    %v7029 = vadd.f32 0.0, %v7028
    %v7030 = vpop.f32.mrb[0].mxu0
    %v7031 = vadd.f32 0.0, %v7030
    %v7032 = vpop.f32.mrb[0].mxu0
    %v7033 = vpop.f32.mrb[0].mxu0
    %7034 = vdwg.mxu0
    %7035 = vmatprep.subr.bf16.mxu0 %v6735
    %7036 = vmatpush1.bf16.msra.mxu0 %v6734
    %7037 = vmatprep.subr.bf16.mxu0 %v6751
    %7038 = vmatpush1.bf16.msra.mxu0 %v6750
    %7039 = vmatprep.subr.bf16.mxu0 0
    %7040 = vmatpush1.bf16.msra.mxu0 0
    %7041 = vmatprep.subr.bf16.mxu0 0
    %7042 = vmatpush1.bf16.msra.mxu0 0
    %7043 = vmatprep.subr.bf16.mxu0 0
    %7044 = vmatpush1.bf16.msra.mxu0 0
    %7045 = vmatprep.subr.bf16.mxu0 0
    %7046 = vmatpush1.bf16.msra.mxu0 0
    %7047 = vmatprep.subr.bf16.mxu0 0
    %7048 = vmatpush1.bf16.msra.mxu0 0
    %7049 = vmatprep.subr.bf16.mxu0 0
    %7050 = vmatpush1.bf16.msra.mxu0 0
    %7051 = vmatprep.subr.bf16.mxu0 0
    %7052 = vmatpush1.bf16.msra.mxu0 0
    %7053 = vmatprep.subr.bf16.mxu0 0
    %7054 = vmatpush1.bf16.msra.mxu0 0
    %7055 = vmatprep.subr.bf16.mxu0 0
    %7056 = vmatpush1.bf16.msra.mxu0 0
    %7057 = vmatprep.subr.bf16.mxu0 0
    %7058 = vmatpush1.bf16.msra.mxu0 0
    %7059 = vmatprep.subr.bf16.mxu0 0
    %7060 = vmatpush1.bf16.msra.mxu0 0
    %7061 = vmatprep.subr.bf16.mxu0 0
    %7062 = vmatpush1.bf16.msra.mxu0 0
    %7063 = vmatprep.subr.bf16.mxu0 0
    %7064 = vmatpush1.bf16.msra.mxu0 0
    %7065 = vmatprep.subr.bf16.mxu0 0
    %7066 = vmatpush1.bf16.msra.mxu0 0
    %7067 = vmatprep.mubr.bf16.mxu0 0
    %7068 = vmatmul.mubr.bf16.gmra.mrb[0].mxu0 %v6787
    %v7069 = vpop.f32.mrb[0].mxu0
    %v7070 = vadd.f32 0.0, %v7069
    %v7071 = vpop.f32.mrb[0].mxu0
    %v7072 = vadd.f32 0.0, %v7071
    %v7073 = vpop.f32.mrb[0].mxu0
    %v7074 = vpop.f32.mrb[0].mxu0
    %7075 = vdwg.mxu0
    %7076 = vmatprep.subr.bf16.mxu0 %v6737
    %7077 = vmatpush1.bf16.msra.mxu0 %v6736
    %7078 = vmatprep.subr.bf16.mxu0 %v6753
    %7079 = vmatpush1.bf16.msra.mxu0 %v6752
    %7080 = vmatprep.subr.bf16.mxu0 0
    %7081 = vmatpush1.bf16.msra.mxu0 0
    %7082 = vmatprep.subr.bf16.mxu0 0
    %7083 = vmatpush1.bf16.msra.mxu0 0
    %7084 = vmatprep.subr.bf16.mxu0 0
    %7085 = vmatpush1.bf16.msra.mxu0 0
    %7086 = vmatprep.subr.bf16.mxu0 0
    %7087 = vmatpush1.bf16.msra.mxu0 0
    %7088 = vmatprep.subr.bf16.mxu0 0
    %7089 = vmatpush1.bf16.msra.mxu0 0
    %7090 = vmatprep.subr.bf16.mxu0 0
    %7091 = vmatpush1.bf16.msra.mxu0 0
    %7092 = vmatprep.subr.bf16.mxu0 0
    %7093 = vmatpush1.bf16.msra.mxu0 0
    %7094 = vmatprep.subr.bf16.mxu0 0
    %7095 = vmatpush1.bf16.msra.mxu0 0
    %7096 = vmatprep.subr.bf16.mxu0 0
    %7097 = vmatpush1.bf16.msra.mxu0 0
    %7098 = vmatprep.subr.bf16.mxu0 0
    %7099 = vmatpush1.bf16.msra.mxu0 0
    %7100 = vmatprep.subr.bf16.mxu0 0
    %7101 = vmatpush1.bf16.msra.mxu0 0
    %7102 = vmatprep.subr.bf16.mxu0 0
    %7103 = vmatpush1.bf16.msra.mxu0 0
    %7104 = vmatprep.subr.bf16.mxu0 0
    %7105 = vmatpush1.bf16.msra.mxu0 0
    %7106 = vmatprep.subr.bf16.mxu0 0
    %7107 = vmatpush1.bf16.msra.mxu0 0
    %7108 = vmatprep.mubr.bf16.mxu0 0
    %7109 = vmatmul.mubr.bf16.gmra.mrb[0].mxu0 %v6787
    %v7110 = vpop.f32.mrb[0].mxu0
    %v7111 = vadd.f32 0.0, %v7110
    %v7112 = vpop.f32.mrb[0].mxu0
    %v7113 = vadd.f32 0.0, %v7112
    %v7114 = vpop.f32.mrb[0].mxu0
    %v7115 = vpop.f32.mrb[0].mxu0
    %7116 = vdwg.mxu0
    %v7117 = vadd.f32 %v6576, %v6824
    %v7118 = vadd.f32 %v6577, %v6826
    %v7119 = vadd.f32 %v6578, %v6865
    %v7120 = vadd.f32 %v6579, %v6867
    %v7121 = vadd.f32 %v6580, %v6906
    %v7122 = vadd.f32 %v6581, %v6908
    %v7123 = vadd.f32 %v6582, %v6947
    %v7124 = vadd.f32 %v6583, %v6949
    %v7125 = vadd.f32 %v6584, %v6988
    %v7126 = vadd.f32 %v6585, %v6990
    %v7127 = vadd.f32 %v6586, %v7029
    %v7128 = vadd.f32 %v6587, %v7031
    %v7129 = vadd.f32 %v6588, %v7070
    %v7130 = vadd.f32 %v6589, %v7072
    %v7131 = vadd.f32 %v6590, %v7111
    %v7132 = vadd.f32 %v6591, %v7113
    %s7133 = scalar_lea.vmem [#allocation11], 1792
    %v7134 = vld [vmem:[%s7133] sm:$0xff]
    %v7135 = vld [vmem:[%s7133 + $0x8] sm:$0xff]
    %v7136 = vld [vmem:[%s7133 + $0x10] sm:$0xff]
    %v7137 = vld [vmem:[%s7133 + $0x18] sm:$0xff]
    %v7138 = vld [vmem:[%s7133 + $0x20] sm:$0xff]
    %v7139 = vld [vmem:[%s7133 + $0x28] sm:$0xff]
    %v7140 = vld [vmem:[%s7133 + $0x30] sm:$0xff]
    %v7141 = vld [vmem:[%s7133 + $0x38] sm:$0xff]
    %v7142 = vld [vmem:[%s7133 + $0x40] sm:$0xff]
    %v7143 = vld [vmem:[%s7133 + $0x48] sm:$0xff]
    %v7144 = vld [vmem:[%s7133 + $0x50] sm:$0xff]
    %v7145 = vld [vmem:[%s7133 + $0x58] sm:$0xff]
    %v7146 = vld [vmem:[%s7133 + $0x60] sm:$0xff]
    %v7147 = vld [vmem:[%s7133 + $0x68] sm:$0xff]
    %v7148 = vld [vmem:[%s7133 + $0x70] sm:$0xff]
    %v7149 = vld [vmem:[%s7133 + $0x78] sm:$0xff]
    %v7150 = vld [vmem:[%s7133 + $0x80] sm:$0xff]
    %v7151 = vld [vmem:[%s7133 + $0x88] sm:$0xff]
    %v7152 = vld [vmem:[%s7133 + $0x90] sm:$0xff]
    %v7153 = vld [vmem:[%s7133 + $0x98] sm:$0xff]
    %v7154 = vld [vmem:[%s7133 + $0xa0] sm:$0xff]
    %v7155 = vld [vmem:[%s7133 + $0xa8] sm:$0xff]
    %v7156 = vld [vmem:[%s7133 + $0xb0] sm:$0xff]
    %v7157 = vld [vmem:[%s7133 + $0xb8] sm:$0xff]
    %v7158 = vld [vmem:[%s7133 + $0xc0] sm:$0xff]
    %v7159 = vld [vmem:[%s7133 + $0xc8] sm:$0xff]
    %v7160 = vld [vmem:[%s7133 + $0xd0] sm:$0xff]
    %v7161 = vld [vmem:[%s7133 + $0xd8] sm:$0xff]
    %v7162 = vld [vmem:[%s7133 + $0xe0] sm:$0xff]
    %v7163 = vld [vmem:[%s7133 + $0xe8] sm:$0xff]
    %v7164 = vld [vmem:[%s7133 + $0xf0] sm:$0xff]
    %v7165 = vld [vmem:[%s7133 + $0xf8] sm:$0xff]
    %v7166 = vrot.slane %v5509, 3
    %v7199 = vunpack.c.l.b16 %v7134
    %v7200 = vunpack.c.h.b16 %v7134
    %v7201 = vunpack.c.l.b16 %v7135
    %v7202 = vunpack.c.h.b16 %v7135
    %v7203 = vunpack.c.l.b16 %v7136
    %v7204 = vunpack.c.h.b16 %v7136
    %v7205 = vunpack.c.l.b16 %v7137
    %v7206 = vunpack.c.h.b16 %v7137
    %v7207 = vunpack.c.l.b16 %v7138
    %v7208 = vunpack.c.h.b16 %v7138
    %v7209 = vunpack.c.l.b16 %v7139
    %v7210 = vunpack.c.h.b16 %v7139
    %v7211 = vunpack.c.l.b16 %v7140
    %v7212 = vunpack.c.h.b16 %v7140
    %v7213 = vunpack.c.l.b16 %v7141
    %v7214 = vunpack.c.h.b16 %v7141
    %v7215 = vunpack.c.l.b16 %v7142
    %v7216 = vunpack.c.h.b16 %v7142
    %v7217 = vunpack.c.l.b16 %v7143
    %v7218 = vunpack.c.h.b16 %v7143
    %v7219 = vunpack.c.l.b16 %v7144
    %v7220 = vunpack.c.h.b16 %v7144
    %v7221 = vunpack.c.l.b16 %v7145
    %v7222 = vunpack.c.h.b16 %v7145
    %v7223 = vunpack.c.l.b16 %v7146
    %v7224 = vunpack.c.h.b16 %v7146
    %v7225 = vunpack.c.l.b16 %v7147
    %v7226 = vunpack.c.h.b16 %v7147
    %v7227 = vunpack.c.l.b16 %v7148
    %v7228 = vunpack.c.h.b16 %v7148
    %v7229 = vunpack.c.l.b16 %v7149
    %v7230 = vunpack.c.h.b16 %v7149
    %v7231 = vunpack.c.l.b16 %v7150
    %v7232 = vunpack.c.h.b16 %v7150
    %v7233 = vunpack.c.l.b16 %v7151
    %v7234 = vunpack.c.h.b16 %v7151
    %v7235 = vunpack.c.l.b16 %v7152
    %v7236 = vunpack.c.h.b16 %v7152
    %v7237 = vunpack.c.l.b16 %v7153
    %v7238 = vunpack.c.h.b16 %v7153
    %v7239 = vunpack.c.l.b16 %v7154
    %v7240 = vunpack.c.h.b16 %v7154
    %v7241 = vunpack.c.l.b16 %v7155
    %v7242 = vunpack.c.h.b16 %v7155
    %v7243 = vunpack.c.l.b16 %v7156
    %v7244 = vunpack.c.h.b16 %v7156
    %v7245 = vunpack.c.l.b16 %v7157
    %v7246 = vunpack.c.h.b16 %v7157
    %v7247 = vunpack.c.l.b16 %v7158
    %v7248 = vunpack.c.h.b16 %v7158
    %v7249 = vunpack.c.l.b16 %v7159
    %v7250 = vunpack.c.h.b16 %v7159
    %v7251 = vunpack.c.l.b16 %v7160
    %v7252 = vunpack.c.h.b16 %v7160
    %v7253 = vunpack.c.l.b16 %v7161
    %v7254 = vunpack.c.h.b16 %v7161
    %v7255 = vunpack.c.l.b16 %v7162
    %v7256 = vunpack.c.h.b16 %v7162
    %v7257 = vunpack.c.l.b16 %v7163
    %v7258 = vunpack.c.h.b16 %v7163
    %v7259 = vunpack.c.l.b16 %v7164
    %v7260 = vunpack.c.h.b16 %v7164
    %v7261 = vunpack.c.l.b16 %v7165
    %v7262 = vunpack.c.h.b16 %v7165
    %v7263 = vpack.c.b16 %v7215, %v7199
    %v7264 = vpack.c.b16 %v7216, %v7200
    %v7265 = vpack.c.b16 %v7217, %v7201
    %v7266 = vpack.c.b16 %v7218, %v7202
    %v7267 = vpack.c.b16 %v7219, %v7203
    %v7268 = vpack.c.b16 %v7220, %v7204
    %v7269 = vpack.c.b16 %v7221, %v7205
    %v7270 = vpack.c.b16 %v7222, %v7206
    %v7271 = vpack.c.b16 %v7223, %v7207
    %v7272 = vpack.c.b16 %v7224, %v7208
    %v7273 = vpack.c.b16 %v7225, %v7209
    %v7274 = vpack.c.b16 %v7226, %v7210
    %v7275 = vpack.c.b16 %v7227, %v7211
    %v7276 = vpack.c.b16 %v7228, %v7212
    %v7277 = vpack.c.b16 %v7229, %v7213
    %v7278 = vpack.c.b16 %v7230, %v7214
    %v7279 = vpack.c.b16 %v7247, %v7231
    %v7280 = vpack.c.b16 %v7248, %v7232
    %v7281 = vpack.c.b16 %v7249, %v7233
    %v7282 = vpack.c.b16 %v7250, %v7234
    %v7283 = vpack.c.b16 %v7251, %v7235
    %v7284 = vpack.c.b16 %v7252, %v7236
    %v7285 = vpack.c.b16 %v7253, %v7237
    %v7286 = vpack.c.b16 %v7254, %v7238
    %v7287 = vpack.c.b16 %v7255, %v7239
    %v7288 = vpack.c.b16 %v7256, %v7240
    %v7289 = vpack.c.b16 %v7257, %v7241
    %v7290 = vpack.c.b16 %v7258, %v7242
    %v7291 = vpack.c.b16 %v7259, %v7243
    %v7292 = vpack.c.b16 %v7260, %v7244
    %v7293 = vpack.c.b16 %v7261, %v7245
    %v7294 = vpack.c.b16 %v7262, %v7246
    %v7328 = vsel %vm3604, %v7166, 0
    %7330 = vmatprep.subr.bf16.mxu0 %v7264
    %7331 = vmatpush1.bf16.msra.mxu0 %v7263
    %7332 = vmatprep.subr.bf16.mxu0 %v7280
    %7333 = vmatpush1.bf16.msra.mxu0 %v7279
    %7334 = vmatprep.subr.bf16.mxu0 0
    %7335 = vmatpush1.bf16.msra.mxu0 0
    %7336 = vmatprep.subr.bf16.mxu0 0
    %7337 = vmatpush1.bf16.msra.mxu0 0
    %7338 = vmatprep.subr.bf16.mxu0 0
    %7339 = vmatpush1.bf16.msra.mxu0 0
    %7340 = vmatprep.subr.bf16.mxu0 0
    %7341 = vmatpush1.bf16.msra.mxu0 0
    %7342 = vmatprep.subr.bf16.mxu0 0
    %7343 = vmatpush1.bf16.msra.mxu0 0
    %7344 = vmatprep.subr.bf16.mxu0 0
    %7345 = vmatpush1.bf16.msra.mxu0 0
    %7346 = vmatprep.subr.bf16.mxu0 0
    %7347 = vmatpush1.bf16.msra.mxu0 0
    %7348 = vmatprep.subr.bf16.mxu0 0
    %7349 = vmatpush1.bf16.msra.mxu0 0
    %7350 = vmatprep.subr.bf16.mxu0 0
    %7351 = vmatpush1.bf16.msra.mxu0 0
    %7352 = vmatprep.subr.bf16.mxu0 0
    %7353 = vmatpush1.bf16.msra.mxu0 0
    %7354 = vmatprep.subr.bf16.mxu0 0
    %7355 = vmatpush1.bf16.msra.mxu0 0
    %7356 = vmatprep.subr.bf16.mxu0 0
    %7357 = vmatpush1.bf16.msra.mxu0 0
    %7358 = vmatprep.subr.bf16.mxu0 0
    %7359 = vmatpush1.bf16.msra.mxu0 0
    %7360 = vmatprep.subr.bf16.mxu0 0
    %7361 = vmatpush1.bf16.msra.mxu0 0
    %7362 = vmatprep.mubr.bf16.mxu0 0
    %7363 = vmatmul.mubr.bf16.gmra.mrb[0].mxu0 %v7328
    %v7364 = vpop.f32.mrb[0].mxu0
    %v7365 = vadd.f32 0.0, %v7364
    %v7366 = vpop.f32.mrb[0].mxu0
    %v7367 = vadd.f32 0.0, %v7366
    %v7368 = vpop.f32.mrb[0].mxu0
    %v7369 = vpop.f32.mrb[0].mxu0
    %7370 = vdwg.mxu0
    %7371 = vmatprep.subr.bf16.mxu0 %v7266
    %7372 = vmatpush1.bf16.msra.mxu0 %v7265
    %7373 = vmatprep.subr.bf16.mxu0 %v7282
    %7374 = vmatpush1.bf16.msra.mxu0 %v7281
    %7375 = vmatprep.subr.bf16.mxu0 0
    %7376 = vmatpush1.bf16.msra.mxu0 0
    %7377 = vmatprep.subr.bf16.mxu0 0
    %7378 = vmatpush1.bf16.msra.mxu0 0
    %7379 = vmatprep.subr.bf16.mxu0 0
    %7380 = vmatpush1.bf16.msra.mxu0 0
    %7381 = vmatprep.subr.bf16.mxu0 0
    %7382 = vmatpush1.bf16.msra.mxu0 0
    %7383 = vmatprep.subr.bf16.mxu0 0
    %7384 = vmatpush1.bf16.msra.mxu0 0
    %7385 = vmatprep.subr.bf16.mxu0 0
    %7386 = vmatpush1.bf16.msra.mxu0 0
    %7387 = vmatprep.subr.bf16.mxu0 0
    %7388 = vmatpush1.bf16.msra.mxu0 0
    %7389 = vmatprep.subr.bf16.mxu0 0
    %7390 = vmatpush1.bf16.msra.mxu0 0
    %7391 = vmatprep.subr.bf16.mxu0 0
    %7392 = vmatpush1.bf16.msra.mxu0 0
    %7393 = vmatprep.subr.bf16.mxu0 0
    %7394 = vmatpush1.bf16.msra.mxu0 0
    %7395 = vmatprep.subr.bf16.mxu0 0
    %7396 = vmatpush1.bf16.msra.mxu0 0
    %7397 = vmatprep.subr.bf16.mxu0 0
    %7398 = vmatpush1.bf16.msra.mxu0 0
    %7399 = vmatprep.subr.bf16.mxu0 0
    %7400 = vmatpush1.bf16.msra.mxu0 0
    %7401 = vmatprep.subr.bf16.mxu0 0
    %7402 = vmatpush1.bf16.msra.mxu0 0
    %7403 = vmatprep.mubr.bf16.mxu0 0
    %7404 = vmatmul.mubr.bf16.gmra.mrb[0].mxu0 %v7328
    %v7405 = vpop.f32.mrb[0].mxu0
    %v7406 = vadd.f32 0.0, %v7405
    %v7407 = vpop.f32.mrb[0].mxu0
    %v7408 = vadd.f32 0.0, %v7407
    %v7409 = vpop.f32.mrb[0].mxu0
    %v7410 = vpop.f32.mrb[0].mxu0
    %7411 = vdwg.mxu0
    %7412 = vmatprep.subr.bf16.mxu0 %v7268
    %7413 = vmatpush1.bf16.msra.mxu0 %v7267
    %7414 = vmatprep.subr.bf16.mxu0 %v7284
    %7415 = vmatpush1.bf16.msra.mxu0 %v7283
    %7416 = vmatprep.subr.bf16.mxu0 0
    %7417 = vmatpush1.bf16.msra.mxu0 0
    %7418 = vmatprep.subr.bf16.mxu0 0
    %7419 = vmatpush1.bf16.msra.mxu0 0
    %7420 = vmatprep.subr.bf16.mxu0 0
    %7421 = vmatpush1.bf16.msra.mxu0 0
    %7422 = vmatprep.subr.bf16.mxu0 0
    %7423 = vmatpush1.bf16.msra.mxu0 0
    %7424 = vmatprep.subr.bf16.mxu0 0
    %7425 = vmatpush1.bf16.msra.mxu0 0
    %7426 = vmatprep.subr.bf16.mxu0 0
    %7427 = vmatpush1.bf16.msra.mxu0 0
    %7428 = vmatprep.subr.bf16.mxu0 0
    %7429 = vmatpush1.bf16.msra.mxu0 0
    %7430 = vmatprep.subr.bf16.mxu0 0
    %7431 = vmatpush1.bf16.msra.mxu0 0
    %7432 = vmatprep.subr.bf16.mxu0 0
    %7433 = vmatpush1.bf16.msra.mxu0 0
    %7434 = vmatprep.subr.bf16.mxu0 0
    %7435 = vmatpush1.bf16.msra.mxu0 0
    %7436 = vmatprep.subr.bf16.mxu0 0
    %7437 = vmatpush1.bf16.msra.mxu0 0
    %7438 = vmatprep.subr.bf16.mxu0 0
    %7439 = vmatpush1.bf16.msra.mxu0 0
    %7440 = vmatprep.subr.bf16.mxu0 0
    %7441 = vmatpush1.bf16.msra.mxu0 0
    %7442 = vmatprep.subr.bf16.mxu0 0
    %7443 = vmatpush1.bf16.msra.mxu0 0
    %7444 = vmatprep.mubr.bf16.mxu0 0
    %7445 = vmatmul.mubr.bf16.gmra.mrb[0].mxu0 %v7328
    %v7446 = vpop.f32.mrb[0].mxu0
    %v7447 = vadd.f32 0.0, %v7446
    %v7448 = vpop.f32.mrb[0].mxu0
    %v7449 = vadd.f32 0.0, %v7448
    %v7450 = vpop.f32.mrb[0].mxu0
    %v7451 = vpop.f32.mrb[0].mxu0
    %7452 = vdwg.mxu0
    %7453 = vmatprep.subr.bf16.mxu0 %v7270
    %7454 = vmatpush1.bf16.msra.mxu0 %v7269
    %7455 = vmatprep.subr.bf16.mxu0 %v7286
    %7456 = vmatpush1.bf16.msra.mxu0 %v7285
    %7457 = vmatprep.subr.bf16.mxu0 0
    %7458 = vmatpush1.bf16.msra.mxu0 0
    %7459 = vmatprep.subr.bf16.mxu0 0
    %7460 = vmatpush1.bf16.msra.mxu0 0
    %7461 = vmatprep.subr.bf16.mxu0 0
    %7462 = vmatpush1.bf16.msra.mxu0 0
    %7463 = vmatprep.subr.bf16.mxu0 0
    %7464 = vmatpush1.bf16.msra.mxu0 0
    %7465 = vmatprep.subr.bf16.mxu0 0
    %7466 = vmatpush1.bf16.msra.mxu0 0
    %7467 = vmatprep.subr.bf16.mxu0 0
    %7468 = vmatpush1.bf16.msra.mxu0 0
    %7469 = vmatprep.subr.bf16.mxu0 0
    %7470 = vmatpush1.bf16.msra.mxu0 0
    %7471 = vmatprep.subr.bf16.mxu0 0
    %7472 = vmatpush1.bf16.msra.mxu0 0
    %7473 = vmatprep.subr.bf16.mxu0 0
    %7474 = vmatpush1.bf16.msra.mxu0 0
    %7475 = vmatprep.subr.bf16.mxu0 0
    %7476 = vmatpush1.bf16.msra.mxu0 0
    %7477 = vmatprep.subr.bf16.mxu0 0
    %7478 = vmatpush1.bf16.msra.mxu0 0
    %7479 = vmatprep.subr.bf16.mxu0 0
    %7480 = vmatpush1.bf16.msra.mxu0 0
    %7481 = vmatprep.subr.bf16.mxu0 0
    %7482 = vmatpush1.bf16.msra.mxu0 0
    %7483 = vmatprep.subr.bf16.mxu0 0
    %7484 = vmatpush1.bf16.msra.mxu0 0
    %7485 = vmatprep.mubr.bf16.mxu0 0
    %7486 = vmatmul.mubr.bf16.gmra.mrb[0].mxu0 %v7328
    %v7487 = vpop.f32.mrb[0].mxu0
    %v7488 = vadd.f32 0.0, %v7487
    %v7489 = vpop.f32.mrb[0].mxu0
    %v7490 = vadd.f32 0.0, %v7489
    %v7491 = vpop.f32.mrb[0].mxu0
    %v7492 = vpop.f32.mrb[0].mxu0
    %7493 = vdwg.mxu0
    %7494 = vmatprep.subr.bf16.mxu0 %v7272
    %7495 = vmatpush1.bf16.msra.mxu0 %v7271
    %7496 = vmatprep.subr.bf16.mxu0 %v7288
    %7497 = vmatpush1.bf16.msra.mxu0 %v7287
    %7498 = vmatprep.subr.bf16.mxu0 0
    %7499 = vmatpush1.bf16.msra.mxu0 0
    %7500 = vmatprep.subr.bf16.mxu0 0
    %7501 = vmatpush1.bf16.msra.mxu0 0
    %7502 = vmatprep.subr.bf16.mxu0 0
    %7503 = vmatpush1.bf16.msra.mxu0 0
    %7504 = vmatprep.subr.bf16.mxu0 0
    %7505 = vmatpush1.bf16.msra.mxu0 0
    %7506 = vmatprep.subr.bf16.mxu0 0
    %7507 = vmatpush1.bf16.msra.mxu0 0
    %7508 = vmatprep.subr.bf16.mxu0 0
    %7509 = vmatpush1.bf16.msra.mxu0 0
    %7510 = vmatprep.subr.bf16.mxu0 0
    %7511 = vmatpush1.bf16.msra.mxu0 0
    %7512 = vmatprep.subr.bf16.mxu0 0
    %7513 = vmatpush1.bf16.msra.mxu0 0
    %7514 = vmatprep.subr.bf16.mxu0 0
    %7515 = vmatpush1.bf16.msra.mxu0 0
    %7516 = vmatprep.subr.bf16.mxu0 0
    %7517 = vmatpush1.bf16.msra.mxu0 0
    %7518 = vmatprep.subr.bf16.mxu0 0
    %7519 = vmatpush1.bf16.msra.mxu0 0
    %7520 = vmatprep.subr.bf16.mxu0 0
    %7521 = vmatpush1.bf16.msra.mxu0 0
    %7522 = vmatprep.subr.bf16.mxu0 0
    %7523 = vmatpush1.bf16.msra.mxu0 0
    %7524 = vmatprep.subr.bf16.mxu0 0
    %7525 = vmatpush1.bf16.msra.mxu0 0
    %7526 = vmatprep.mubr.bf16.mxu0 0
    %7527 = vmatmul.mubr.bf16.gmra.mrb[0].mxu0 %v7328
    %v7528 = vpop.f32.mrb[0].mxu0
    %v7529 = vadd.f32 0.0, %v7528
    %v7530 = vpop.f32.mrb[0].mxu0
    %v7531 = vadd.f32 0.0, %v7530
    %v7532 = vpop.f32.mrb[0].mxu0
    %v7533 = vpop.f32.mrb[0].mxu0
    %7534 = vdwg.mxu0
    %7535 = vmatprep.subr.bf16.mxu0 %v7274
    %7536 = vmatpush1.bf16.msra.mxu0 %v7273
    %7537 = vmatprep.subr.bf16.mxu0 %v7290
    %7538 = vmatpush1.bf16.msra.mxu0 %v7289
    %7539 = vmatprep.subr.bf16.mxu0 0
    %7540 = vmatpush1.bf16.msra.mxu0 0
    %7541 = vmatprep.subr.bf16.mxu0 0
    %7542 = vmatpush1.bf16.msra.mxu0 0
    %7543 = vmatprep.subr.bf16.mxu0 0
    %7544 = vmatpush1.bf16.msra.mxu0 0
    %7545 = vmatprep.subr.bf16.mxu0 0
    %7546 = vmatpush1.bf16.msra.mxu0 0
    %7547 = vmatprep.subr.bf16.mxu0 0
    %7548 = vmatpush1.bf16.msra.mxu0 0
    %7549 = vmatprep.subr.bf16.mxu0 0
    %7550 = vmatpush1.bf16.msra.mxu0 0
    %7551 = vmatprep.subr.bf16.mxu0 0
    %7552 = vmatpush1.bf16.msra.mxu0 0
    %7553 = vmatprep.subr.bf16.mxu0 0
    %7554 = vmatpush1.bf16.msra.mxu0 0
    %7555 = vmatprep.subr.bf16.mxu0 0
    %7556 = vmatpush1.bf16.msra.mxu0 0
    %7557 = vmatprep.subr.bf16.mxu0 0
    %7558 = vmatpush1.bf16.msra.mxu0 0
    %7559 = vmatprep.subr.bf16.mxu0 0
    %7560 = vmatpush1.bf16.msra.mxu0 0
    %7561 = vmatprep.subr.bf16.mxu0 0
    %7562 = vmatpush1.bf16.msra.mxu0 0
    %7563 = vmatprep.subr.bf16.mxu0 0
    %7564 = vmatpush1.bf16.msra.mxu0 0
    %7565 = vmatprep.subr.bf16.mxu0 0
    %7566 = vmatpush1.bf16.msra.mxu0 0
    %7567 = vmatprep.mubr.bf16.mxu0 0
    %7568 = vmatmul.mubr.bf16.gmra.mrb[0].mxu0 %v7328
    %v7569 = vpop.f32.mrb[0].mxu0
    %v7570 = vadd.f32 0.0, %v7569
    %v7571 = vpop.f32.mrb[0].mxu0
    %v7572 = vadd.f32 0.0, %v7571
    %v7573 = vpop.f32.mrb[0].mxu0
    %v7574 = vpop.f32.mrb[0].mxu0
    %7575 = vdwg.mxu0
    %7576 = vmatprep.subr.bf16.mxu0 %v7276
    %7577 = vmatpush1.bf16.msra.mxu0 %v7275
    %7578 = vmatprep.subr.bf16.mxu0 %v7292
    %7579 = vmatpush1.bf16.msra.mxu0 %v7291
    %7580 = vmatprep.subr.bf16.mxu0 0
    %7581 = vmatpush1.bf16.msra.mxu0 0
    %7582 = vmatprep.subr.bf16.mxu0 0
    %7583 = vmatpush1.bf16.msra.mxu0 0
    %7584 = vmatprep.subr.bf16.mxu0 0
    %7585 = vmatpush1.bf16.msra.mxu0 0
    %7586 = vmatprep.subr.bf16.mxu0 0
    %7587 = vmatpush1.bf16.msra.mxu0 0
    %7588 = vmatprep.subr.bf16.mxu0 0
    %7589 = vmatpush1.bf16.msra.mxu0 0
    %7590 = vmatprep.subr.bf16.mxu0 0
    %7591 = vmatpush1.bf16.msra.mxu0 0
    %7592 = vmatprep.subr.bf16.mxu0 0
    %7593 = vmatpush1.bf16.msra.mxu0 0
    %7594 = vmatprep.subr.bf16.mxu0 0
    %7595 = vmatpush1.bf16.msra.mxu0 0
    %7596 = vmatprep.subr.bf16.mxu0 0
    %7597 = vmatpush1.bf16.msra.mxu0 0
    %7598 = vmatprep.subr.bf16.mxu0 0
    %7599 = vmatpush1.bf16.msra.mxu0 0
    %7600 = vmatprep.subr.bf16.mxu0 0
    %7601 = vmatpush1.bf16.msra.mxu0 0
    %7602 = vmatprep.subr.bf16.mxu0 0
    %7603 = vmatpush1.bf16.msra.mxu0 0
    %7604 = vmatprep.subr.bf16.mxu0 0
    %7605 = vmatpush1.bf16.msra.mxu0 0
    %7606 = vmatprep.subr.bf16.mxu0 0
    %7607 = vmatpush1.bf16.msra.mxu0 0
    %7608 = vmatprep.mubr.bf16.mxu0 0
    %7609 = vmatmul.mubr.bf16.gmra.mrb[0].mxu0 %v7328
    %v7610 = vpop.f32.mrb[0].mxu0
    %v7611 = vadd.f32 0.0, %v7610
    %v7612 = vpop.f32.mrb[0].mxu0
    %v7613 = vadd.f32 0.0, %v7612
    %v7614 = vpop.f32.mrb[0].mxu0
    %v7615 = vpop.f32.mrb[0].mxu0
    %7616 = vdwg.mxu0
    %7617 = vmatprep.subr.bf16.mxu0 %v7278
    %7618 = vmatpush1.bf16.msra.mxu0 %v7277
    %7619 = vmatprep.subr.bf16.mxu0 %v7294
    %7620 = vmatpush1.bf16.msra.mxu0 %v7293
    %7621 = vmatprep.subr.bf16.mxu0 0
    %7622 = vmatpush1.bf16.msra.mxu0 0
    %7623 = vmatprep.subr.bf16.mxu0 0
    %7624 = vmatpush1.bf16.msra.mxu0 0
    %7625 = vmatprep.subr.bf16.mxu0 0
    %7626 = vmatpush1.bf16.msra.mxu0 0
    %7627 = vmatprep.subr.bf16.mxu0 0
    %7628 = vmatpush1.bf16.msra.mxu0 0
    %7629 = vmatprep.subr.bf16.mxu0 0
    %7630 = vmatpush1.bf16.msra.mxu0 0
    %7631 = vmatprep.subr.bf16.mxu0 0
    %7632 = vmatpush1.bf16.msra.mxu0 0
    %7633 = vmatprep.subr.bf16.mxu0 0
    %7634 = vmatpush1.bf16.msra.mxu0 0
    %7635 = vmatprep.subr.bf16.mxu0 0
    %7636 = vmatpush1.bf16.msra.mxu0 0
    %7637 = vmatprep.subr.bf16.mxu0 0
    %7638 = vmatpush1.bf16.msra.mxu0 0
    %7639 = vmatprep.subr.bf16.mxu0 0
    %7640 = vmatpush1.bf16.msra.mxu0 0
    %7641 = vmatprep.subr.bf16.mxu0 0
    %7642 = vmatpush1.bf16.msra.mxu0 0
    %7643 = vmatprep.subr.bf16.mxu0 0
    %7644 = vmatpush1.bf16.msra.mxu0 0
    %7645 = vmatprep.subr.bf16.mxu0 0
    %7646 = vmatpush1.bf16.msra.mxu0 0
    %7647 = vmatprep.subr.bf16.mxu0 0
    %7648 = vmatpush1.bf16.msra.mxu0 0
    %7649 = vmatprep.mubr.bf16.mxu0 0
    %7650 = vmatmul.mubr.bf16.gmra.mrb[0].mxu0 %v7328
    %v7651 = vpop.f32.mrb[0].mxu0
    %v7652 = vadd.f32 0.0, %v7651
    %v7653 = vpop.f32.mrb[0].mxu0
    %v7654 = vadd.f32 0.0, %v7653
    %v7655 = vpop.f32.mrb[0].mxu0
    %v7656 = vpop.f32.mrb[0].mxu0
    %7657 = vdwg.mxu0
    %v7658 = vadd.f32 %v7117, %v7365
    %v7659 = vadd.f32 %v7118, %v7367
    %v7660 = vadd.f32 %v7119, %v7406
    %v7661 = vadd.f32 %v7120, %v7408
    %v7662 = vadd.f32 %v7121, %v7447
    %v7663 = vadd.f32 %v7122, %v7449
    %v7664 = vadd.f32 %v7123, %v7488
    %v7665 = vadd.f32 %v7124, %v7490
    %v7666 = vadd.f32 %v7125, %v7529
    %v7667 = vadd.f32 %v7126, %v7531
    %v7668 = vadd.f32 %v7127, %v7570
    %v7669 = vadd.f32 %v7128, %v7572
    %v7670 = vadd.f32 %v7129, %v7611
    %v7671 = vadd.f32 %v7130, %v7613
    %v7672 = vadd.f32 %v7131, %v7652
    %v7673 = vadd.f32 %v7132, %v7654
    %v7674 = vpack.c.bf16 %v3375, %v3375
    %s7675 = scalar_lea.vmem [#allocation11], 2048
    %v7676 = vld [vmem:[%s7675] sm:$0xff]
    %v7677 = vld [vmem:[%s7675 + $0x8] sm:$0xff]
    %v7678 = vld [vmem:[%s7675 + $0x10] sm:$0xff]
    %v7679 = vld [vmem:[%s7675 + $0x18] sm:$0xff]
    %v7680 = vld [vmem:[%s7675 + $0x20] sm:$0xff]
    %v7681 = vld [vmem:[%s7675 + $0x28] sm:$0xff]
    %v7682 = vld [vmem:[%s7675 + $0x30] sm:$0xff]
    %v7683 = vld [vmem:[%s7675 + $0x38] sm:$0xff]
    %v7684 = vld [vmem:[%s7675 + $0x40] sm:$0xff]
    %v7685 = vld [vmem:[%s7675 + $0x48] sm:$0xff]
    %v7686 = vld [vmem:[%s7675 + $0x50] sm:$0xff]
    %v7687 = vld [vmem:[%s7675 + $0x58] sm:$0xff]
    %v7688 = vld [vmem:[%s7675 + $0x60] sm:$0xff]
    %v7689 = vld [vmem:[%s7675 + $0x68] sm:$0xff]
    %v7690 = vld [vmem:[%s7675 + $0x70] sm:$0xff]
    %v7691 = vld [vmem:[%s7675 + $0x78] sm:$0xff]
    %v7692 = vld [vmem:[%s7675 + $0x80] sm:$0xff]
    %v7693 = vld [vmem:[%s7675 + $0x88] sm:$0xff]
    %v7694 = vld [vmem:[%s7675 + $0x90] sm:$0xff]
    %v7695 = vld [vmem:[%s7675 + $0x98] sm:$0xff]
    %v7696 = vld [vmem:[%s7675 + $0xa0] sm:$0xff]
    %v7697 = vld [vmem:[%s7675 + $0xa8] sm:$0xff]
    %v7698 = vld [vmem:[%s7675 + $0xb0] sm:$0xff]
    %v7699 = vld [vmem:[%s7675 + $0xb8] sm:$0xff]
    %v7700 = vld [vmem:[%s7675 + $0xc0] sm:$0xff]
    %v7701 = vld [vmem:[%s7675 + $0xc8] sm:$0xff]
    %v7702 = vld [vmem:[%s7675 + $0xd0] sm:$0xff]
    %v7703 = vld [vmem:[%s7675 + $0xd8] sm:$0xff]
    %v7704 = vld [vmem:[%s7675 + $0xe0] sm:$0xff]
    %v7705 = vld [vmem:[%s7675 + $0xe8] sm:$0xff]
    %v7706 = vld [vmem:[%s7675 + $0xf0] sm:$0xff]
    %v7707 = vld [vmem:[%s7675 + $0xf8] sm:$0xff]
    %v7740 = vunpack.c.l.b16 %v7676
    %v7741 = vunpack.c.h.b16 %v7676
    %v7742 = vunpack.c.l.b16 %v7677
    %v7743 = vunpack.c.h.b16 %v7677
    %v7744 = vunpack.c.l.b16 %v7678
    %v7745 = vunpack.c.h.b16 %v7678
    %v7746 = vunpack.c.l.b16 %v7679
    %v7747 = vunpack.c.h.b16 %v7679
    %v7748 = vunpack.c.l.b16 %v7680
    %v7749 = vunpack.c.h.b16 %v7680
    %v7750 = vunpack.c.l.b16 %v7681
    %v7751 = vunpack.c.h.b16 %v7681
    %v7752 = vunpack.c.l.b16 %v7682
    %v7753 = vunpack.c.h.b16 %v7682
    %v7754 = vunpack.c.l.b16 %v7683
    %v7755 = vunpack.c.h.b16 %v7683
    %v7756 = vunpack.c.l.b16 %v7684
    %v7757 = vunpack.c.h.b16 %v7684
    %v7758 = vunpack.c.l.b16 %v7685
    %v7759 = vunpack.c.h.b16 %v7685
    %v7760 = vunpack.c.l.b16 %v7686
    %v7761 = vunpack.c.h.b16 %v7686
    %v7762 = vunpack.c.l.b16 %v7687
    %v7763 = vunpack.c.h.b16 %v7687
    %v7764 = vunpack.c.l.b16 %v7688
    %v7765 = vunpack.c.h.b16 %v7688
    %v7766 = vunpack.c.l.b16 %v7689
    %v7767 = vunpack.c.h.b16 %v7689
    %v7768 = vunpack.c.l.b16 %v7690
    %v7769 = vunpack.c.h.b16 %v7690
    %v7770 = vunpack.c.l.b16 %v7691
    %v7771 = vunpack.c.h.b16 %v7691
    %v7772 = vunpack.c.l.b16 %v7692
    %v7773 = vunpack.c.h.b16 %v7692
    %v7774 = vunpack.c.l.b16 %v7693
    %v7775 = vunpack.c.h.b16 %v7693
    %v7776 = vunpack.c.l.b16 %v7694
    %v7777 = vunpack.c.h.b16 %v7694
    %v7778 = vunpack.c.l.b16 %v7695
    %v7779 = vunpack.c.h.b16 %v7695
    %v7780 = vunpack.c.l.b16 %v7696
    %v7781 = vunpack.c.h.b16 %v7696
    %v7782 = vunpack.c.l.b16 %v7697
    %v7783 = vunpack.c.h.b16 %v7697
    %v7784 = vunpack.c.l.b16 %v7698
    %v7785 = vunpack.c.h.b16 %v7698
    %v7786 = vunpack.c.l.b16 %v7699
    %v7787 = vunpack.c.h.b16 %v7699
    %v7788 = vunpack.c.l.b16 %v7700
    %v7789 = vunpack.c.h.b16 %v7700
    %v7790 = vunpack.c.l.b16 %v7701
    %v7791 = vunpack.c.h.b16 %v7701
    %v7792 = vunpack.c.l.b16 %v7702
    %v7793 = vunpack.c.h.b16 %v7702
    %v7794 = vunpack.c.l.b16 %v7703
    %v7795 = vunpack.c.h.b16 %v7703
    %v7796 = vunpack.c.l.b16 %v7704
    %v7797 = vunpack.c.h.b16 %v7704
    %v7798 = vunpack.c.l.b16 %v7705
    %v7799 = vunpack.c.h.b16 %v7705
    %v7800 = vunpack.c.l.b16 %v7706
    %v7801 = vunpack.c.h.b16 %v7706
    %v7802 = vunpack.c.l.b16 %v7707
    %v7803 = vunpack.c.h.b16 %v7707
    %v7804 = vpack.c.b16 %v7756, %v7740
    %v7805 = vpack.c.b16 %v7757, %v7741
    %v7806 = vpack.c.b16 %v7758, %v7742
    %v7807 = vpack.c.b16 %v7759, %v7743
    %v7808 = vpack.c.b16 %v7760, %v7744
    %v7809 = vpack.c.b16 %v7761, %v7745
    %v7810 = vpack.c.b16 %v7762, %v7746
    %v7811 = vpack.c.b16 %v7763, %v7747
    %v7812 = vpack.c.b16 %v7764, %v7748
    %v7813 = vpack.c.b16 %v7765, %v7749
    %v7814 = vpack.c.b16 %v7766, %v7750
    %v7815 = vpack.c.b16 %v7767, %v7751
    %v7816 = vpack.c.b16 %v7768, %v7752
    %v7817 = vpack.c.b16 %v7769, %v7753
    %v7818 = vpack.c.b16 %v7770, %v7754
    %v7819 = vpack.c.b16 %v7771, %v7755
    %v7820 = vpack.c.b16 %v7788, %v7772
    %v7821 = vpack.c.b16 %v7789, %v7773
    %v7822 = vpack.c.b16 %v7790, %v7774
    %v7823 = vpack.c.b16 %v7791, %v7775
    %v7824 = vpack.c.b16 %v7792, %v7776
    %v7825 = vpack.c.b16 %v7793, %v7777
    %v7826 = vpack.c.b16 %v7794, %v7778
    %v7827 = vpack.c.b16 %v7795, %v7779
    %v7828 = vpack.c.b16 %v7796, %v7780
    %v7829 = vpack.c.b16 %v7797, %v7781
    %v7830 = vpack.c.b16 %v7798, %v7782
    %v7831 = vpack.c.b16 %v7799, %v7783
    %v7832 = vpack.c.b16 %v7800, %v7784
    %v7833 = vpack.c.b16 %v7801, %v7785
    %v7834 = vpack.c.b16 %v7802, %v7786
    %v7835 = vpack.c.b16 %v7803, %v7787
    %v7869 = vsel %vm3604, %v7674, 0
    %7871 = vmatprep.subr.bf16.mxu0 %v7805
    %7872 = vmatpush1.bf16.msra.mxu0 %v7804
    %7873 = vmatprep.subr.bf16.mxu0 %v7821
    %7874 = vmatpush1.bf16.msra.mxu0 %v7820
    %7875 = vmatprep.subr.bf16.mxu0 0
    %7876 = vmatpush1.bf16.msra.mxu0 0
    %7877 = vmatprep.subr.bf16.mxu0 0
    %7878 = vmatpush1.bf16.msra.mxu0 0
    %7879 = vmatprep.subr.bf16.mxu0 0
    %7880 = vmatpush1.bf16.msra.mxu0 0
    %7881 = vmatprep.subr.bf16.mxu0 0
    %7882 = vmatpush1.bf16.msra.mxu0 0
    %7883 = vmatprep.subr.bf16.mxu0 0
    %7884 = vmatpush1.bf16.msra.mxu0 0
    %7885 = vmatprep.subr.bf16.mxu0 0
    %7886 = vmatpush1.bf16.msra.mxu0 0
    %7887 = vmatprep.subr.bf16.mxu0 0
    %7888 = vmatpush1.bf16.msra.mxu0 0
    %7889 = vmatprep.subr.bf16.mxu0 0
    %7890 = vmatpush1.bf16.msra.mxu0 0
    %7891 = vmatprep.subr.bf16.mxu0 0
    %7892 = vmatpush1.bf16.msra.mxu0 0
    %7893 = vmatprep.subr.bf16.mxu0 0
    %7894 = vmatpush1.bf16.msra.mxu0 0
    %7895 = vmatprep.subr.bf16.mxu0 0
    %7896 = vmatpush1.bf16.msra.mxu0 0
    %7897 = vmatprep.subr.bf16.mxu0 0
    %7898 = vmatpush1.bf16.msra.mxu0 0
    %7899 = vmatprep.subr.bf16.mxu0 0
    %7900 = vmatpush1.bf16.msra.mxu0 0
    %7901 = vmatprep.subr.bf16.mxu0 0
    %7902 = vmatpush1.bf16.msra.mxu0 0
    %7903 = vmatprep.mubr.bf16.mxu0 0
    %7904 = vmatmul.mubr.bf16.gmra.mrb[0].mxu0 %v7869
    %v7905 = vpop.f32.mrb[0].mxu0
    %v7906 = vadd.f32 0.0, %v7905
    %v7907 = vpop.f32.mrb[0].mxu0
    %v7908 = vadd.f32 0.0, %v7907
    %v7909 = vpop.f32.mrb[0].mxu0
    %v7910 = vpop.f32.mrb[0].mxu0
    %7911 = vdwg.mxu0
    %7912 = vmatprep.subr.bf16.mxu0 %v7807
    %7913 = vmatpush1.bf16.msra.mxu0 %v7806
    %7914 = vmatprep.subr.bf16.mxu0 %v7823
    %7915 = vmatpush1.bf16.msra.mxu0 %v7822
    %7916 = vmatprep.subr.bf16.mxu0 0
    %7917 = vmatpush1.bf16.msra.mxu0 0
    %7918 = vmatprep.subr.bf16.mxu0 0
    %7919 = vmatpush1.bf16.msra.mxu0 0
    %7920 = vmatprep.subr.bf16.mxu0 0
    %7921 = vmatpush1.bf16.msra.mxu0 0
    %7922 = vmatprep.subr.bf16.mxu0 0
    %7923 = vmatpush1.bf16.msra.mxu0 0
    %7924 = vmatprep.subr.bf16.mxu0 0
    %7925 = vmatpush1.bf16.msra.mxu0 0
    %7926 = vmatprep.subr.bf16.mxu0 0
    %7927 = vmatpush1.bf16.msra.mxu0 0
    %7928 = vmatprep.subr.bf16.mxu0 0
    %7929 = vmatpush1.bf16.msra.mxu0 0
    %7930 = vmatprep.subr.bf16.mxu0 0
    %7931 = vmatpush1.bf16.msra.mxu0 0
    %7932 = vmatprep.subr.bf16.mxu0 0
    %7933 = vmatpush1.bf16.msra.mxu0 0
    %7934 = vmatprep.subr.bf16.mxu0 0
    %7935 = vmatpush1.bf16.msra.mxu0 0
    %7936 = vmatprep.subr.bf16.mxu0 0
    %7937 = vmatpush1.bf16.msra.mxu0 0
    %7938 = vmatprep.subr.bf16.mxu0 0
    %7939 = vmatpush1.bf16.msra.mxu0 0
    %7940 = vmatprep.subr.bf16.mxu0 0
    %7941 = vmatpush1.bf16.msra.mxu0 0
    %7942 = vmatprep.subr.bf16.mxu0 0
    %7943 = vmatpush1.bf16.msra.mxu0 0
    %7944 = vmatprep.mubr.bf16.mxu0 0
    %7945 = vmatmul.mubr.bf16.gmra.mrb[0].mxu0 %v7869
    %v7946 = vpop.f32.mrb[0].mxu0
    %v7947 = vadd.f32 0.0, %v7946
    %v7948 = vpop.f32.mrb[0].mxu0
    %v7949 = vadd.f32 0.0, %v7948
    %v7950 = vpop.f32.mrb[0].mxu0
    %v7951 = vpop.f32.mrb[0].mxu0
    %7952 = vdwg.mxu0
    %7953 = vmatprep.subr.bf16.mxu0 %v7809
    %7954 = vmatpush1.bf16.msra.mxu0 %v7808
    %7955 = vmatprep.subr.bf16.mxu0 %v7825
    %7956 = vmatpush1.bf16.msra.mxu0 %v7824
    %7957 = vmatprep.subr.bf16.mxu0 0
    %7958 = vmatpush1.bf16.msra.mxu0 0
    %7959 = vmatprep.subr.bf16.mxu0 0
    %7960 = vmatpush1.bf16.msra.mxu0 0
    %7961 = vmatprep.subr.bf16.mxu0 0
    %7962 = vmatpush1.bf16.msra.mxu0 0
    %7963 = vmatprep.subr.bf16.mxu0 0
    %7964 = vmatpush1.bf16.msra.mxu0 0
    %7965 = vmatprep.subr.bf16.mxu0 0
    %7966 = vmatpush1.bf16.msra.mxu0 0
    %7967 = vmatprep.subr.bf16.mxu0 0
    %7968 = vmatpush1.bf16.msra.mxu0 0
    %7969 = vmatprep.subr.bf16.mxu0 0
    %7970 = vmatpush1.bf16.msra.mxu0 0
    %7971 = vmatprep.subr.bf16.mxu0 0
    %7972 = vmatpush1.bf16.msra.mxu0 0
    %7973 = vmatprep.subr.bf16.mxu0 0
    %7974 = vmatpush1.bf16.msra.mxu0 0
    %7975 = vmatprep.subr.bf16.mxu0 0
    %7976 = vmatpush1.bf16.msra.mxu0 0
    %7977 = vmatprep.subr.bf16.mxu0 0
    %7978 = vmatpush1.bf16.msra.mxu0 0
    %7979 = vmatprep.subr.bf16.mxu0 0
    %7980 = vmatpush1.bf16.msra.mxu0 0
    %7981 = vmatprep.subr.bf16.mxu0 0
    %7982 = vmatpush1.bf16.msra.mxu0 0
    %7983 = vmatprep.subr.bf16.mxu0 0
    %7984 = vmatpush1.bf16.msra.mxu0 0
    %7985 = vmatprep.mubr.bf16.mxu0 0
    %7986 = vmatmul.mubr.bf16.gmra.mrb[0].mxu0 %v7869
    %v7987 = vpop.f32.mrb[0].mxu0
    %v7988 = vadd.f32 0.0, %v7987
    %v7989 = vpop.f32.mrb[0].mxu0
    %v7990 = vadd.f32 0.0, %v7989
    %v7991 = vpop.f32.mrb[0].mxu0
    %v7992 = vpop.f32.mrb[0].mxu0
    %7993 = vdwg.mxu0
    %7994 = vmatprep.subr.bf16.mxu0 %v7811
    %7995 = vmatpush1.bf16.msra.mxu0 %v7810
    %7996 = vmatprep.subr.bf16.mxu0 %v7827
    %7997 = vmatpush1.bf16.msra.mxu0 %v7826
    %7998 = vmatprep.subr.bf16.mxu0 0
    %7999 = vmatpush1.bf16.msra.mxu0 0
    %8000 = vmatprep.subr.bf16.mxu0 0
    %8001 = vmatpush1.bf16.msra.mxu0 0
    %8002 = vmatprep.subr.bf16.mxu0 0
    %8003 = vmatpush1.bf16.msra.mxu0 0
    %8004 = vmatprep.subr.bf16.mxu0 0
    %8005 = vmatpush1.bf16.msra.mxu0 0
    %8006 = vmatprep.subr.bf16.mxu0 0
    %8007 = vmatpush1.bf16.msra.mxu0 0
    %8008 = vmatprep.subr.bf16.mxu0 0
    %8009 = vmatpush1.bf16.msra.mxu0 0
    %8010 = vmatprep.subr.bf16.mxu0 0
    %8011 = vmatpush1.bf16.msra.mxu0 0
    %8012 = vmatprep.subr.bf16.mxu0 0
    %8013 = vmatpush1.bf16.msra.mxu0 0
    %8014 = vmatprep.subr.bf16.mxu0 0
    %8015 = vmatpush1.bf16.msra.mxu0 0
    %8016 = vmatprep.subr.bf16.mxu0 0
    %8017 = vmatpush1.bf16.msra.mxu0 0
    %8018 = vmatprep.subr.bf16.mxu0 0
    %8019 = vmatpush1.bf16.msra.mxu0 0
    %8020 = vmatprep.subr.bf16.mxu0 0
    %8021 = vmatpush1.bf16.msra.mxu0 0
    %8022 = vmatprep.subr.bf16.mxu0 0
    %8023 = vmatpush1.bf16.msra.mxu0 0
    %8024 = vmatprep.subr.bf16.mxu0 0
    %8025 = vmatpush1.bf16.msra.mxu0 0
    %8026 = vmatprep.mubr.bf16.mxu0 0
    %8027 = vmatmul.mubr.bf16.gmra.mrb[0].mxu0 %v7869
    %v8028 = vpop.f32.mrb[0].mxu0
    %v8029 = vadd.f32 0.0, %v8028
    %v8030 = vpop.f32.mrb[0].mxu0
    %v8031 = vadd.f32 0.0, %v8030
    %v8032 = vpop.f32.mrb[0].mxu0
    %v8033 = vpop.f32.mrb[0].mxu0
    %8034 = vdwg.mxu0
    %8035 = vmatprep.subr.bf16.mxu0 %v7813
    %8036 = vmatpush1.bf16.msra.mxu0 %v7812
    %8037 = vmatprep.subr.bf16.mxu0 %v7829
    %8038 = vmatpush1.bf16.msra.mxu0 %v7828
    %8039 = vmatprep.subr.bf16.mxu0 0
    %8040 = vmatpush1.bf16.msra.mxu0 0
    %8041 = vmatprep.subr.bf16.mxu0 0
    %8042 = vmatpush1.bf16.msra.mxu0 0
    %8043 = vmatprep.subr.bf16.mxu0 0
    %8044 = vmatpush1.bf16.msra.mxu0 0
    %8045 = vmatprep.subr.bf16.mxu0 0
    %8046 = vmatpush1.bf16.msra.mxu0 0
    %8047 = vmatprep.subr.bf16.mxu0 0
    %8048 = vmatpush1.bf16.msra.mxu0 0
    %8049 = vmatprep.subr.bf16.mxu0 0
    %8050 = vmatpush1.bf16.msra.mxu0 0
    %8051 = vmatprep.subr.bf16.mxu0 0
    %8052 = vmatpush1.bf16.msra.mxu0 0
    %8053 = vmatprep.subr.bf16.mxu0 0
    %8054 = vmatpush1.bf16.msra.mxu0 0
    %8055 = vmatprep.subr.bf16.mxu0 0
    %8056 = vmatpush1.bf16.msra.mxu0 0
    %8057 = vmatprep.subr.bf16.mxu0 0
    %8058 = vmatpush1.bf16.msra.mxu0 0
    %8059 = vmatprep.subr.bf16.mxu0 0
    %8060 = vmatpush1.bf16.msra.mxu0 0
    %8061 = vmatprep.subr.bf16.mxu0 0
    %8062 = vmatpush1.bf16.msra.mxu0 0
    %8063 = vmatprep.subr.bf16.mxu0 0
    %8064 = vmatpush1.bf16.msra.mxu0 0
    %8065 = vmatprep.subr.bf16.mxu0 0
    %8066 = vmatpush1.bf16.msra.mxu0 0
    %8067 = vmatprep.mubr.bf16.mxu0 0
    %8068 = vmatmul.mubr.bf16.gmra.mrb[0].mxu0 %v7869
    %v8069 = vpop.f32.mrb[0].mxu0
    %v8070 = vadd.f32 0.0, %v8069
    %v8071 = vpop.f32.mrb[0].mxu0
    %v8072 = vadd.f32 0.0, %v8071
    %v8073 = vpop.f32.mrb[0].mxu0
    %v8074 = vpop.f32.mrb[0].mxu0
    %8075 = vdwg.mxu0
    %8076 = vmatprep.subr.bf16.mxu0 %v7815
    %8077 = vmatpush1.bf16.msra.mxu0 %v7814
    %8078 = vmatprep.subr.bf16.mxu0 %v7831
    %8079 = vmatpush1.bf16.msra.mxu0 %v7830
    %8080 = vmatprep.subr.bf16.mxu0 0
    %8081 = vmatpush1.bf16.msra.mxu0 0
    %8082 = vmatprep.subr.bf16.mxu0 0
    %8083 = vmatpush1.bf16.msra.mxu0 0
    %8084 = vmatprep.subr.bf16.mxu0 0
    %8085 = vmatpush1.bf16.msra.mxu0 0
    %8086 = vmatprep.subr.bf16.mxu0 0
    %8087 = vmatpush1.bf16.msra.mxu0 0
    %8088 = vmatprep.subr.bf16.mxu0 0
    %8089 = vmatpush1.bf16.msra.mxu0 0
    %8090 = vmatprep.subr.bf16.mxu0 0
    %8091 = vmatpush1.bf16.msra.mxu0 0
    %8092 = vmatprep.subr.bf16.mxu0 0
    %8093 = vmatpush1.bf16.msra.mxu0 0
    %8094 = vmatprep.subr.bf16.mxu0 0
    %8095 = vmatpush1.bf16.msra.mxu0 0
    %8096 = vmatprep.subr.bf16.mxu0 0
    %8097 = vmatpush1.bf16.msra.mxu0 0
    %8098 = vmatprep.subr.bf16.mxu0 0
    %8099 = vmatpush1.bf16.msra.mxu0 0
    %8100 = vmatprep.subr.bf16.mxu0 0
    %8101 = vmatpush1.bf16.msra.mxu0 0
    %8102 = vmatprep.subr.bf16.mxu0 0
    %8103 = vmatpush1.bf16.msra.mxu0 0
    %8104 = vmatprep.subr.bf16.mxu0 0
    %8105 = vmatpush1.bf16.msra.mxu0 0
    %8106 = vmatprep.subr.bf16.mxu0 0
    %8107 = vmatpush1.bf16.msra.mxu0 0
    %8108 = vmatprep.mubr.bf16.mxu0 0
    %8109 = vmatmul.mubr.bf16.gmra.mrb[0].mxu0 %v7869
    %v8110 = vpop.f32.mrb[0].mxu0
    %v8111 = vadd.f32 0.0, %v8110
    %v8112 = vpop.f32.mrb[0].mxu0
    %v8113 = vadd.f32 0.0, %v8112
    %v8114 = vpop.f32.mrb[0].mxu0
    %v8115 = vpop.f32.mrb[0].mxu0
    %8116 = vdwg.mxu0
    %8117 = vmatprep.subr.bf16.mxu0 %v7817
    %8118 = vmatpush1.bf16.msra.mxu0 %v7816
    %8119 = vmatprep.subr.bf16.mxu0 %v7833
    %8120 = vmatpush1.bf16.msra.mxu0 %v7832
    %8121 = vmatprep.subr.bf16.mxu0 0
    %8122 = vmatpush1.bf16.msra.mxu0 0
    %8123 = vmatprep.subr.bf16.mxu0 0
    %8124 = vmatpush1.bf16.msra.mxu0 0
    %8125 = vmatprep.subr.bf16.mxu0 0
    %8126 = vmatpush1.bf16.msra.mxu0 0
    %8127 = vmatprep.subr.bf16.mxu0 0
    %8128 = vmatpush1.bf16.msra.mxu0 0
    %8129 = vmatprep.subr.bf16.mxu0 0
    %8130 = vmatpush1.bf16.msra.mxu0 0
    %8131 = vmatprep.subr.bf16.mxu0 0
    %8132 = vmatpush1.bf16.msra.mxu0 0
    %8133 = vmatprep.subr.bf16.mxu0 0
    %8134 = vmatpush1.bf16.msra.mxu0 0
    %8135 = vmatprep.subr.bf16.mxu0 0
    %8136 = vmatpush1.bf16.msra.mxu0 0
    %8137 = vmatprep.subr.bf16.mxu0 0
    %8138 = vmatpush1.bf16.msra.mxu0 0
    %8139 = vmatprep.subr.bf16.mxu0 0
    %8140 = vmatpush1.bf16.msra.mxu0 0
    %8141 = vmatprep.subr.bf16.mxu0 0
    %8142 = vmatpush1.bf16.msra.mxu0 0
    %8143 = vmatprep.subr.bf16.mxu0 0
    %8144 = vmatpush1.bf16.msra.mxu0 0
    %8145 = vmatprep.subr.bf16.mxu0 0
    %8146 = vmatpush1.bf16.msra.mxu0 0
    %8147 = vmatprep.subr.bf16.mxu0 0
    %8148 = vmatpush1.bf16.msra.mxu0 0
    %8149 = vmatprep.mubr.bf16.mxu0 0
    %8150 = vmatmul.mubr.bf16.gmra.mrb[0].mxu0 %v7869
    %v8151 = vpop.f32.mrb[0].mxu0
    %v8152 = vadd.f32 0.0, %v8151
    %v8153 = vpop.f32.mrb[0].mxu0
    %v8154 = vadd.f32 0.0, %v8153
    %v8155 = vpop.f32.mrb[0].mxu0
    %v8156 = vpop.f32.mrb[0].mxu0
    %8157 = vdwg.mxu0
    %8158 = vmatprep.subr.bf16.mxu0 %v7819
    %8159 = vmatpush1.bf16.msra.mxu0 %v7818
    %8160 = vmatprep.subr.bf16.mxu0 %v7835
    %8161 = vmatpush1.bf16.msra.mxu0 %v7834
    %8162 = vmatprep.subr.bf16.mxu0 0
    %8163 = vmatpush1.bf16.msra.mxu0 0
    %8164 = vmatprep.subr.bf16.mxu0 0
    %8165 = vmatpush1.bf16.msra.mxu0 0
    %8166 = vmatprep.subr.bf16.mxu0 0
    %8167 = vmatpush1.bf16.msra.mxu0 0
    %8168 = vmatprep.subr.bf16.mxu0 0
    %8169 = vmatpush1.bf16.msra.mxu0 0
    %8170 = vmatprep.subr.bf16.mxu0 0
    %8171 = vmatpush1.bf16.msra.mxu0 0
    %8172 = vmatprep.subr.bf16.mxu0 0
    %8173 = vmatpush1.bf16.msra.mxu0 0
    %8174 = vmatprep.subr.bf16.mxu0 0
    %8175 = vmatpush1.bf16.msra.mxu0 0
    %8176 = vmatprep.subr.bf16.mxu0 0
    %8177 = vmatpush1.bf16.msra.mxu0 0
    %8178 = vmatprep.subr.bf16.mxu0 0
    %8179 = vmatpush1.bf16.msra.mxu0 0
    %8180 = vmatprep.subr.bf16.mxu0 0
    %8181 = vmatpush1.bf16.msra.mxu0 0
    %8182 = vmatprep.subr.bf16.mxu0 0
    %8183 = vmatpush1.bf16.msra.mxu0 0
    %8184 = vmatprep.subr.bf16.mxu0 0
    %8185 = vmatpush1.bf16.msra.mxu0 0
    %8186 = vmatprep.subr.bf16.mxu0 0
    %8187 = vmatpush1.bf16.msra.mxu0 0
    %8188 = vmatprep.subr.bf16.mxu0 0
    %8189 = vmatpush1.bf16.msra.mxu0 0
    %8190 = vmatprep.mubr.bf16.mxu0 0
    %8191 = vmatmul.mubr.bf16.gmra.mrb[0].mxu0 %v7869
    %v8192 = vpop.f32.mrb[0].mxu0
    %v8193 = vadd.f32 0.0, %v8192
    %v8194 = vpop.f32.mrb[0].mxu0
    %v8195 = vadd.f32 0.0, %v8194
    %v8196 = vpop.f32.mrb[0].mxu0
    %v8197 = vpop.f32.mrb[0].mxu0
    %8198 = vdwg.mxu0
    %v8199 = vadd.f32 %v7658, %v7906
    %v8200 = vadd.f32 %v7659, %v7908
    %v8201 = vadd.f32 %v7660, %v7947
    %v8202 = vadd.f32 %v7661, %v7949
    %v8203 = vadd.f32 %v7662, %v7988
    %v8204 = vadd.f32 %v7663, %v7990
    %v8205 = vadd.f32 %v7664, %v8029
    %v8206 = vadd.f32 %v7665, %v8031
    %v8207 = vadd.f32 %v7666, %v8070
    %v8208 = vadd.f32 %v7667, %v8072
    %v8209 = vadd.f32 %v7668, %v8111
    %v8210 = vadd.f32 %v7669, %v8113
    %v8211 = vadd.f32 %v7670, %v8152
    %v8212 = vadd.f32 %v7671, %v8154
    %v8213 = vadd.f32 %v7672, %v8193
    %v8214 = vadd.f32 %v7673, %v8195
    %s8215 = scalar_lea.vmem [#allocation11], 2304
    %v8216 = vld [vmem:[%s8215] sm:$0xff]
    %v8217 = vld [vmem:[%s8215 + $0x8] sm:$0xff]
    %v8218 = vld [vmem:[%s8215 + $0x10] sm:$0xff]
    %v8219 = vld [vmem:[%s8215 + $0x18] sm:$0xff]
    %v8220 = vld [vmem:[%s8215 + $0x20] sm:$0xff]
    %v8221 = vld [vmem:[%s8215 + $0x28] sm:$0xff]
    %v8222 = vld [vmem:[%s8215 + $0x30] sm:$0xff]
    %v8223 = vld [vmem:[%s8215 + $0x38] sm:$0xff]
    %v8224 = vld [vmem:[%s8215 + $0x40] sm:$0xff]
    %v8225 = vld [vmem:[%s8215 + $0x48] sm:$0xff]
    %v8226 = vld [vmem:[%s8215 + $0x50] sm:$0xff]
    %v8227 = vld [vmem:[%s8215 + $0x58] sm:$0xff]
    %v8228 = vld [vmem:[%s8215 + $0x60] sm:$0xff]
    %v8229 = vld [vmem:[%s8215 + $0x68] sm:$0xff]
    %v8230 = vld [vmem:[%s8215 + $0x70] sm:$0xff]
    %v8231 = vld [vmem:[%s8215 + $0x78] sm:$0xff]
    %v8232 = vld [vmem:[%s8215 + $0x80] sm:$0xff]
    %v8233 = vld [vmem:[%s8215 + $0x88] sm:$0xff]
    %v8234 = vld [vmem:[%s8215 + $0x90] sm:$0xff]
    %v8235 = vld [vmem:[%s8215 + $0x98] sm:$0xff]
    %v8236 = vld [vmem:[%s8215 + $0xa0] sm:$0xff]
    %v8237 = vld [vmem:[%s8215 + $0xa8] sm:$0xff]
    %v8238 = vld [vmem:[%s8215 + $0xb0] sm:$0xff]
    %v8239 = vld [vmem:[%s8215 + $0xb8] sm:$0xff]
    %v8240 = vld [vmem:[%s8215 + $0xc0] sm:$0xff]
    %v8241 = vld [vmem:[%s8215 + $0xc8] sm:$0xff]
    %v8242 = vld [vmem:[%s8215 + $0xd0] sm:$0xff]
    %v8243 = vld [vmem:[%s8215 + $0xd8] sm:$0xff]
    %v8244 = vld [vmem:[%s8215 + $0xe0] sm:$0xff]
    %v8245 = vld [vmem:[%s8215 + $0xe8] sm:$0xff]
    %v8246 = vld [vmem:[%s8215 + $0xf0] sm:$0xff]
    %v8247 = vld [vmem:[%s8215 + $0xf8] sm:$0xff]
    %v8249 = vrot.slane %v7674, 1
    %v8282 = vunpack.c.l.b16 %v8216
    %v8283 = vunpack.c.h.b16 %v8216
    %v8284 = vunpack.c.l.b16 %v8217
    %v8285 = vunpack.c.h.b16 %v8217
    %v8286 = vunpack.c.l.b16 %v8218
    %v8287 = vunpack.c.h.b16 %v8218
    %v8288 = vunpack.c.l.b16 %v8219
    %v8289 = vunpack.c.h.b16 %v8219
    %v8290 = vunpack.c.l.b16 %v8220
    %v8291 = vunpack.c.h.b16 %v8220
    %v8292 = vunpack.c.l.b16 %v8221
    %v8293 = vunpack.c.h.b16 %v8221
    %v8294 = vunpack.c.l.b16 %v8222
    %v8295 = vunpack.c.h.b16 %v8222
    %v8296 = vunpack.c.l.b16 %v8223
    %v8297 = vunpack.c.h.b16 %v8223
    %v8298 = vunpack.c.l.b16 %v8224
    %v8299 = vunpack.c.h.b16 %v8224
    %v8300 = vunpack.c.l.b16 %v8225
    %v8301 = vunpack.c.h.b16 %v8225
    %v8302 = vunpack.c.l.b16 %v8226
    %v8303 = vunpack.c.h.b16 %v8226
    %v8304 = vunpack.c.l.b16 %v8227
    %v8305 = vunpack.c.h.b16 %v8227
    %v8306 = vunpack.c.l.b16 %v8228
    %v8307 = vunpack.c.h.b16 %v8228
    %v8308 = vunpack.c.l.b16 %v8229
    %v8309 = vunpack.c.h.b16 %v8229
    %v8310 = vunpack.c.l.b16 %v8230
    %v8311 = vunpack.c.h.b16 %v8230
    %v8312 = vunpack.c.l.b16 %v8231
    %v8313 = vunpack.c.h.b16 %v8231
    %v8314 = vunpack.c.l.b16 %v8232
    %v8315 = vunpack.c.h.b16 %v8232
    %v8316 = vunpack.c.l.b16 %v8233
    %v8317 = vunpack.c.h.b16 %v8233
    %v8318 = vunpack.c.l.b16 %v8234
    %v8319 = vunpack.c.h.b16 %v8234
    %v8320 = vunpack.c.l.b16 %v8235
    %v8321 = vunpack.c.h.b16 %v8235
    %v8322 = vunpack.c.l.b16 %v8236
    %v8323 = vunpack.c.h.b16 %v8236
    %v8324 = vunpack.c.l.b16 %v8237
    %v8325 = vunpack.c.h.b16 %v8237
    %v8326 = vunpack.c.l.b16 %v8238
    %v8327 = vunpack.c.h.b16 %v8238
    %v8328 = vunpack.c.l.b16 %v8239
    %v8329 = vunpack.c.h.b16 %v8239
    %v8330 = vunpack.c.l.b16 %v8240
    %v8331 = vunpack.c.h.b16 %v8240
    %v8332 = vunpack.c.l.b16 %v8241
    %v8333 = vunpack.c.h.b16 %v8241
    %v8334 = vunpack.c.l.b16 %v8242
    %v8335 = vunpack.c.h.b16 %v8242
    %v8336 = vunpack.c.l.b16 %v8243
    %v8337 = vunpack.c.h.b16 %v8243
    %v8338 = vunpack.c.l.b16 %v8244
    %v8339 = vunpack.c.h.b16 %v8244
    %v8340 = vunpack.c.l.b16 %v8245
    %v8341 = vunpack.c.h.b16 %v8245
    %v8342 = vunpack.c.l.b16 %v8246
    %v8343 = vunpack.c.h.b16 %v8246
    %v8344 = vunpack.c.l.b16 %v8247
    %v8345 = vunpack.c.h.b16 %v8247
    %v8346 = vpack.c.b16 %v8298, %v8282
    %v8347 = vpack.c.b16 %v8299, %v8283
    %v8348 = vpack.c.b16 %v8300, %v8284
    %v8349 = vpack.c.b16 %v8301, %v8285
    %v8350 = vpack.c.b16 %v8302, %v8286
    %v8351 = vpack.c.b16 %v8303, %v8287
    %v8352 = vpack.c.b16 %v8304, %v8288
    %v8353 = vpack.c.b16 %v8305, %v8289
    %v8354 = vpack.c.b16 %v8306, %v8290
    %v8355 = vpack.c.b16 %v8307, %v8291
    %v8356 = vpack.c.b16 %v8308, %v8292
    %v8357 = vpack.c.b16 %v8309, %v8293
    %v8358 = vpack.c.b16 %v8310, %v8294
    %v8359 = vpack.c.b16 %v8311, %v8295
    %v8360 = vpack.c.b16 %v8312, %v8296
    %v8361 = vpack.c.b16 %v8313, %v8297
    %v8362 = vpack.c.b16 %v8330, %v8314
    %v8363 = vpack.c.b16 %v8331, %v8315
    %v8364 = vpack.c.b16 %v8332, %v8316
    %v8365 = vpack.c.b16 %v8333, %v8317
    %v8366 = vpack.c.b16 %v8334, %v8318
    %v8367 = vpack.c.b16 %v8335, %v8319
    %v8368 = vpack.c.b16 %v8336, %v8320
    %v8369 = vpack.c.b16 %v8337, %v8321
    %v8370 = vpack.c.b16 %v8338, %v8322
    %v8371 = vpack.c.b16 %v8339, %v8323
    %v8372 = vpack.c.b16 %v8340, %v8324
    %v8373 = vpack.c.b16 %v8341, %v8325
    %v8374 = vpack.c.b16 %v8342, %v8326
    %v8375 = vpack.c.b16 %v8343, %v8327
    %v8376 = vpack.c.b16 %v8344, %v8328
    %v8377 = vpack.c.b16 %v8345, %v8329
    %v8411 = vsel %vm3604, %v8249, 0
    %8413 = vmatprep.subr.bf16.mxu0 %v8347
    %8414 = vmatpush1.bf16.msra.mxu0 %v8346
    %8415 = vmatprep.subr.bf16.mxu0 %v8363
    %8416 = vmatpush1.bf16.msra.mxu0 %v8362
    %8417 = vmatprep.subr.bf16.mxu0 0
    %8418 = vmatpush1.bf16.msra.mxu0 0
    %8419 = vmatprep.subr.bf16.mxu0 0
    %8420 = vmatpush1.bf16.msra.mxu0 0
    %8421 = vmatprep.subr.bf16.mxu0 0
    %8422 = vmatpush1.bf16.msra.mxu0 0
    %8423 = vmatprep.subr.bf16.mxu0 0
    %8424 = vmatpush1.bf16.msra.mxu0 0
    %8425 = vmatprep.subr.bf16.mxu0 0
    %8426 = vmatpush1.bf16.msra.mxu0 0
    %8427 = vmatprep.subr.bf16.mxu0 0
    %8428 = vmatpush1.bf16.msra.mxu0 0
    %8429 = vmatprep.subr.bf16.mxu0 0
    %8430 = vmatpush1.bf16.msra.mxu0 0
    %8431 = vmatprep.subr.bf16.mxu0 0
    %8432 = vmatpush1.bf16.msra.mxu0 0
    %8433 = vmatprep.subr.bf16.mxu0 0
    %8434 = vmatpush1.bf16.msra.mxu0 0
    %8435 = vmatprep.subr.bf16.mxu0 0
    %8436 = vmatpush1.bf16.msra.mxu0 0
    %8437 = vmatprep.subr.bf16.mxu0 0
    %8438 = vmatpush1.bf16.msra.mxu0 0
    %8439 = vmatprep.subr.bf16.mxu0 0
    %8440 = vmatpush1.bf16.msra.mxu0 0
    %8441 = vmatprep.subr.bf16.mxu0 0
    %8442 = vmatpush1.bf16.msra.mxu0 0
    %8443 = vmatprep.subr.bf16.mxu0 0
    %8444 = vmatpush1.bf16.msra.mxu0 0
    %8445 = vmatprep.mubr.bf16.mxu0 0
    %8446 = vmatmul.mubr.bf16.gmra.mrb[0].mxu0 %v8411
    %v8447 = vpop.f32.mrb[0].mxu0
    %v8448 = vadd.f32 0.0, %v8447
    %v8449 = vpop.f32.mrb[0].mxu0
    %v8450 = vadd.f32 0.0, %v8449
    %v8451 = vpop.f32.mrb[0].mxu0
    %v8452 = vpop.f32.mrb[0].mxu0
    %8453 = vdwg.mxu0
    %8454 = vmatprep.subr.bf16.mxu0 %v8349
    %8455 = vmatpush1.bf16.msra.mxu0 %v8348
    %8456 = vmatprep.subr.bf16.mxu0 %v8365
    %8457 = vmatpush1.bf16.msra.mxu0 %v8364
    %8458 = vmatprep.subr.bf16.mxu0 0
    %8459 = vmatpush1.bf16.msra.mxu0 0
    %8460 = vmatprep.subr.bf16.mxu0 0
    %8461 = vmatpush1.bf16.msra.mxu0 0
    %8462 = vmatprep.subr.bf16.mxu0 0
    %8463 = vmatpush1.bf16.msra.mxu0 0
    %8464 = vmatprep.subr.bf16.mxu0 0
    %8465 = vmatpush1.bf16.msra.mxu0 0
    %8466 = vmatprep.subr.bf16.mxu0 0
    %8467 = vmatpush1.bf16.msra.mxu0 0
    %8468 = vmatprep.subr.bf16.mxu0 0
    %8469 = vmatpush1.bf16.msra.mxu0 0
    %8470 = vmatprep.subr.bf16.mxu0 0
    %8471 = vmatpush1.bf16.msra.mxu0 0
    %8472 = vmatprep.subr.bf16.mxu0 0
    %8473 = vmatpush1.bf16.msra.mxu0 0
    %8474 = vmatprep.subr.bf16.mxu0 0
    %8475 = vmatpush1.bf16.msra.mxu0 0
    %8476 = vmatprep.subr.bf16.mxu0 0
    %8477 = vmatpush1.bf16.msra.mxu0 0
    %8478 = vmatprep.subr.bf16.mxu0 0
    %8479 = vmatpush1.bf16.msra.mxu0 0
    %8480 = vmatprep.subr.bf16.mxu0 0
    %8481 = vmatpush1.bf16.msra.mxu0 0
    %8482 = vmatprep.subr.bf16.mxu0 0
    %8483 = vmatpush1.bf16.msra.mxu0 0
    %8484 = vmatprep.subr.bf16.mxu0 0
    %8485 = vmatpush1.bf16.msra.mxu0 0
    %8486 = vmatprep.mubr.bf16.mxu0 0
    %8487 = vmatmul.mubr.bf16.gmra.mrb[0].mxu0 %v8411
    %v8488 = vpop.f32.mrb[0].mxu0
    %v8489 = vadd.f32 0.0, %v8488
    %v8490 = vpop.f32.mrb[0].mxu0
    %v8491 = vadd.f32 0.0, %v8490
    %v8492 = vpop.f32.mrb[0].mxu0
    %v8493 = vpop.f32.mrb[0].mxu0
    %8494 = vdwg.mxu0
    %8495 = vmatprep.subr.bf16.mxu0 %v8351
    %8496 = vmatpush1.bf16.msra.mxu0 %v8350
    %8497 = vmatprep.subr.bf16.mxu0 %v8367
    %8498 = vmatpush1.bf16.msra.mxu0 %v8366
    %8499 = vmatprep.subr.bf16.mxu0 0
    %8500 = vmatpush1.bf16.msra.mxu0 0
    %8501 = vmatprep.subr.bf16.mxu0 0
    %8502 = vmatpush1.bf16.msra.mxu0 0
    %8503 = vmatprep.subr.bf16.mxu0 0
    %8504 = vmatpush1.bf16.msra.mxu0 0
    %8505 = vmatprep.subr.bf16.mxu0 0
    %8506 = vmatpush1.bf16.msra.mxu0 0
    %8507 = vmatprep.subr.bf16.mxu0 0
    %8508 = vmatpush1.bf16.msra.mxu0 0
    %8509 = vmatprep.subr.bf16.mxu0 0
    %8510 = vmatpush1.bf16.msra.mxu0 0
    %8511 = vmatprep.subr.bf16.mxu0 0
    %8512 = vmatpush1.bf16.msra.mxu0 0
    %8513 = vmatprep.subr.bf16.mxu0 0
    %8514 = vmatpush1.bf16.msra.mxu0 0
    %8515 = vmatprep.subr.bf16.mxu0 0
    %8516 = vmatpush1.bf16.msra.mxu0 0
    %8517 = vmatprep.subr.bf16.mxu0 0
    %8518 = vmatpush1.bf16.msra.mxu0 0
    %8519 = vmatprep.subr.bf16.mxu0 0
    %8520 = vmatpush1.bf16.msra.mxu0 0
    %8521 = vmatprep.subr.bf16.mxu0 0
    %8522 = vmatpush1.bf16.msra.mxu0 0
    %8523 = vmatprep.subr.bf16.mxu0 0
    %8524 = vmatpush1.bf16.msra.mxu0 0
    %8525 = vmatprep.subr.bf16.mxu0 0
    %8526 = vmatpush1.bf16.msra.mxu0 0
    %8527 = vmatprep.mubr.bf16.mxu0 0
    %8528 = vmatmul.mubr.bf16.gmra.mrb[0].mxu0 %v8411
    %v8529 = vpop.f32.mrb[0].mxu0
    %v8530 = vadd.f32 0.0, %v8529
    %v8531 = vpop.f32.mrb[0].mxu0
    %v8532 = vadd.f32 0.0, %v8531
    %v8533 = vpop.f32.mrb[0].mxu0
    %v8534 = vpop.f32.mrb[0].mxu0
    %8535 = vdwg.mxu0
    %8536 = vmatprep.subr.bf16.mxu0 %v8353
    %8537 = vmatpush1.bf16.msra.mxu0 %v8352
    %8538 = vmatprep.subr.bf16.mxu0 %v8369
    %8539 = vmatpush1.bf16.msra.mxu0 %v8368
    %8540 = vmatprep.subr.bf16.mxu0 0
    %8541 = vmatpush1.bf16.msra.mxu0 0
    %8542 = vmatprep.subr.bf16.mxu0 0
    %8543 = vmatpush1.bf16.msra.mxu0 0
    %8544 = vmatprep.subr.bf16.mxu0 0
    %8545 = vmatpush1.bf16.msra.mxu0 0
    %8546 = vmatprep.subr.bf16.mxu0 0
    %8547 = vmatpush1.bf16.msra.mxu0 0
    %8548 = vmatprep.subr.bf16.mxu0 0
    %8549 = vmatpush1.bf16.msra.mxu0 0
    %8550 = vmatprep.subr.bf16.mxu0 0
    %8551 = vmatpush1.bf16.msra.mxu0 0
    %8552 = vmatprep.subr.bf16.mxu0 0
    %8553 = vmatpush1.bf16.msra.mxu0 0
    %8554 = vmatprep.subr.bf16.mxu0 0
    %8555 = vmatpush1.bf16.msra.mxu0 0
    %8556 = vmatprep.subr.bf16.mxu0 0
    %8557 = vmatpush1.bf16.msra.mxu0 0
    %8558 = vmatprep.subr.bf16.mxu0 0
    %8559 = vmatpush1.bf16.msra.mxu0 0
    %8560 = vmatprep.subr.bf16.mxu0 0
    %8561 = vmatpush1.bf16.msra.mxu0 0
    %8562 = vmatprep.subr.bf16.mxu0 0
    %8563 = vmatpush1.bf16.msra.mxu0 0
    %8564 = vmatprep.subr.bf16.mxu0 0
    %8565 = vmatpush1.bf16.msra.mxu0 0
    %8566 = vmatprep.subr.bf16.mxu0 0
    %8567 = vmatpush1.bf16.msra.mxu0 0
    %8568 = vmatprep.mubr.bf16.mxu0 0
    %8569 = vmatmul.mubr.bf16.gmra.mrb[0].mxu0 %v8411
    %v8570 = vpop.f32.mrb[0].mxu0
    %v8571 = vadd.f32 0.0, %v8570
    %v8572 = vpop.f32.mrb[0].mxu0
    %v8573 = vadd.f32 0.0, %v8572
    %v8574 = vpop.f32.mrb[0].mxu0
    %v8575 = vpop.f32.mrb[0].mxu0
    %8576 = vdwg.mxu0
    %8577 = vmatprep.subr.bf16.mxu0 %v8355
    %8578 = vmatpush1.bf16.msra.mxu0 %v8354
    %8579 = vmatprep.subr.bf16.mxu0 %v8371
    %8580 = vmatpush1.bf16.msra.mxu0 %v8370
    %8581 = vmatprep.subr.bf16.mxu0 0
    %8582 = vmatpush1.bf16.msra.mxu0 0
    %8583 = vmatprep.subr.bf16.mxu0 0
    %8584 = vmatpush1.bf16.msra.mxu0 0
    %8585 = vmatprep.subr.bf16.mxu0 0
    %8586 = vmatpush1.bf16.msra.mxu0 0
    %8587 = vmatprep.subr.bf16.mxu0 0
    %8588 = vmatpush1.bf16.msra.mxu0 0
    %8589 = vmatprep.subr.bf16.mxu0 0
    %8590 = vmatpush1.bf16.msra.mxu0 0
    %8591 = vmatprep.subr.bf16.mxu0 0
    %8592 = vmatpush1.bf16.msra.mxu0 0
    %8593 = vmatprep.subr.bf16.mxu0 0
    %8594 = vmatpush1.bf16.msra.mxu0 0
    %8595 = vmatprep.subr.bf16.mxu0 0
    %8596 = vmatpush1.bf16.msra.mxu0 0
    %8597 = vmatprep.subr.bf16.mxu0 0
    %8598 = vmatpush1.bf16.msra.mxu0 0
    %8599 = vmatprep.subr.bf16.mxu0 0
    %8600 = vmatpush1.bf16.msra.mxu0 0
    %8601 = vmatprep.subr.bf16.mxu0 0
    %8602 = vmatpush1.bf16.msra.mxu0 0
    %8603 = vmatprep.subr.bf16.mxu0 0
    %8604 = vmatpush1.bf16.msra.mxu0 0
    %8605 = vmatprep.subr.bf16.mxu0 0
    %8606 = vmatpush1.bf16.msra.mxu0 0
    %8607 = vmatprep.subr.bf16.mxu0 0
    %8608 = vmatpush1.bf16.msra.mxu0 0
    %8609 = vmatprep.mubr.bf16.mxu0 0
    %8610 = vmatmul.mubr.bf16.gmra.mrb[0].mxu0 %v8411
    %v8611 = vpop.f32.mrb[0].mxu0
    %v8612 = vadd.f32 0.0, %v8611
    %v8613 = vpop.f32.mrb[0].mxu0
    %v8614 = vadd.f32 0.0, %v8613
    %v8615 = vpop.f32.mrb[0].mxu0
    %v8616 = vpop.f32.mrb[0].mxu0
    %8617 = vdwg.mxu0
    %8618 = vmatprep.subr.bf16.mxu0 %v8357
    %8619 = vmatpush1.bf16.msra.mxu0 %v8356
    %8620 = vmatprep.subr.bf16.mxu0 %v8373
    %8621 = vmatpush1.bf16.msra.mxu0 %v8372
    %8622 = vmatprep.subr.bf16.mxu0 0
    %8623 = vmatpush1.bf16.msra.mxu0 0
    %8624 = vmatprep.subr.bf16.mxu0 0
    %8625 = vmatpush1.bf16.msra.mxu0 0
    %8626 = vmatprep.subr.bf16.mxu0 0
    %8627 = vmatpush1.bf16.msra.mxu0 0
    %8628 = vmatprep.subr.bf16.mxu0 0
    %8629 = vmatpush1.bf16.msra.mxu0 0
    %8630 = vmatprep.subr.bf16.mxu0 0
    %8631 = vmatpush1.bf16.msra.mxu0 0
    %8632 = vmatprep.subr.bf16.mxu0 0
    %8633 = vmatpush1.bf16.msra.mxu0 0
    %8634 = vmatprep.subr.bf16.mxu0 0
    %8635 = vmatpush1.bf16.msra.mxu0 0
    %8636 = vmatprep.subr.bf16.mxu0 0
    %8637 = vmatpush1.bf16.msra.mxu0 0
    %8638 = vmatprep.subr.bf16.mxu0 0
    %8639 = vmatpush1.bf16.msra.mxu0 0
    %8640 = vmatprep.subr.bf16.mxu0 0
    %8641 = vmatpush1.bf16.msra.mxu0 0
    %8642 = vmatprep.subr.bf16.mxu0 0
    %8643 = vmatpush1.bf16.msra.mxu0 0
    %8644 = vmatprep.subr.bf16.mxu0 0
    %8645 = vmatpush1.bf16.msra.mxu0 0
    %8646 = vmatprep.subr.bf16.mxu0 0
    %8647 = vmatpush1.bf16.msra.mxu0 0
    %8648 = vmatprep.subr.bf16.mxu0 0
    %8649 = vmatpush1.bf16.msra.mxu0 0
    %8650 = vmatprep.mubr.bf16.mxu0 0
    %8651 = vmatmul.mubr.bf16.gmra.mrb[0].mxu0 %v8411
    %v8652 = vpop.f32.mrb[0].mxu0
    %v8653 = vadd.f32 0.0, %v8652
    %v8654 = vpop.f32.mrb[0].mxu0
    %v8655 = vadd.f32 0.0, %v8654
    %v8656 = vpop.f32.mrb[0].mxu0
    %v8657 = vpop.f32.mrb[0].mxu0
    %8658 = vdwg.mxu0
    %8659 = vmatprep.subr.bf16.mxu0 %v8359
    %8660 = vmatpush1.bf16.msra.mxu0 %v8358
    %8661 = vmatprep.subr.bf16.mxu0 %v8375
    %8662 = vmatpush1.bf16.msra.mxu0 %v8374
    %8663 = vmatprep.subr.bf16.mxu0 0
    %8664 = vmatpush1.bf16.msra.mxu0 0
    %8665 = vmatprep.subr.bf16.mxu0 0
    %8666 = vmatpush1.bf16.msra.mxu0 0
    %8667 = vmatprep.subr.bf16.mxu0 0
    %8668 = vmatpush1.bf16.msra.mxu0 0
    %8669 = vmatprep.subr.bf16.mxu0 0
    %8670 = vmatpush1.bf16.msra.mxu0 0
    %8671 = vmatprep.subr.bf16.mxu0 0
    %8672 = vmatpush1.bf16.msra.mxu0 0
    %8673 = vmatprep.subr.bf16.mxu0 0
    %8674 = vmatpush1.bf16.msra.mxu0 0
    %8675 = vmatprep.subr.bf16.mxu0 0
    %8676 = vmatpush1.bf16.msra.mxu0 0
    %8677 = vmatprep.subr.bf16.mxu0 0
    %8678 = vmatpush1.bf16.msra.mxu0 0
    %8679 = vmatprep.subr.bf16.mxu0 0
    %8680 = vmatpush1.bf16.msra.mxu0 0
    %8681 = vmatprep.subr.bf16.mxu0 0
    %8682 = vmatpush1.bf16.msra.mxu0 0
    %8683 = vmatprep.subr.bf16.mxu0 0
    %8684 = vmatpush1.bf16.msra.mxu0 0
    %8685 = vmatprep.subr.bf16.mxu0 0
    %8686 = vmatpush1.bf16.msra.mxu0 0
    %8687 = vmatprep.subr.bf16.mxu0 0
    %8688 = vmatpush1.bf16.msra.mxu0 0
    %8689 = vmatprep.subr.bf16.mxu0 0
    %8690 = vmatpush1.bf16.msra.mxu0 0
    %8691 = vmatprep.mubr.bf16.mxu0 0
    %8692 = vmatmul.mubr.bf16.gmra.mrb[0].mxu0 %v8411
    %v8693 = vpop.f32.mrb[0].mxu0
    %v8694 = vadd.f32 0.0, %v8693
    %v8695 = vpop.f32.mrb[0].mxu0
    %v8696 = vadd.f32 0.0, %v8695
    %v8697 = vpop.f32.mrb[0].mxu0
    %v8698 = vpop.f32.mrb[0].mxu0
    %8699 = vdwg.mxu0
    %8700 = vmatprep.subr.bf16.mxu0 %v8361
    %8701 = vmatpush1.bf16.msra.mxu0 %v8360
    %8702 = vmatprep.subr.bf16.mxu0 %v8377
    %8703 = vmatpush1.bf16.msra.mxu0 %v8376
    %8704 = vmatprep.subr.bf16.mxu0 0
    %8705 = vmatpush1.bf16.msra.mxu0 0
    %8706 = vmatprep.subr.bf16.mxu0 0
    %8707 = vmatpush1.bf16.msra.mxu0 0
    %8708 = vmatprep.subr.bf16.mxu0 0
    %8709 = vmatpush1.bf16.msra.mxu0 0
    %8710 = vmatprep.subr.bf16.mxu0 0
    %8711 = vmatpush1.bf16.msra.mxu0 0
    %8712 = vmatprep.subr.bf16.mxu0 0
    %8713 = vmatpush1.bf16.msra.mxu0 0
    %8714 = vmatprep.subr.bf16.mxu0 0
    %8715 = vmatpush1.bf16.msra.mxu0 0
    %8716 = vmatprep.subr.bf16.mxu0 0
    %8717 = vmatpush1.bf16.msra.mxu0 0
    %8718 = vmatprep.subr.bf16.mxu0 0
    %8719 = vmatpush1.bf16.msra.mxu0 0
    %8720 = vmatprep.subr.bf16.mxu0 0
    %8721 = vmatpush1.bf16.msra.mxu0 0
    %8722 = vmatprep.subr.bf16.mxu0 0
    %8723 = vmatpush1.bf16.msra.mxu0 0
    %8724 = vmatprep.subr.bf16.mxu0 0
    %8725 = vmatpush1.bf16.msra.mxu0 0
    %8726 = vmatprep.subr.bf16.mxu0 0
    %8727 = vmatpush1.bf16.msra.mxu0 0
    %8728 = vmatprep.subr.bf16.mxu0 0
    %8729 = vmatpush1.bf16.msra.mxu0 0
    %8730 = vmatprep.subr.bf16.mxu0 0
    %8731 = vmatpush1.bf16.msra.mxu0 0
    %8732 = vmatprep.mubr.bf16.mxu0 0
    %8733 = vmatmul.mubr.bf16.gmra.mrb[0].mxu0 %v8411
    %v8734 = vpop.f32.mrb[0].mxu0
    %v8735 = vadd.f32 0.0, %v8734
    %v8736 = vpop.f32.mrb[0].mxu0
    %v8737 = vadd.f32 0.0, %v8736
    %v8738 = vpop.f32.mrb[0].mxu0
    %v8739 = vpop.f32.mrb[0].mxu0
    %8740 = vdwg.mxu0
    %v8741 = vadd.f32 %v8199, %v8448
    %v8742 = vadd.f32 %v8200, %v8450
    %v8743 = vadd.f32 %v8201, %v8489
    %v8744 = vadd.f32 %v8202, %v8491
    %v8745 = vadd.f32 %v8203, %v8530
    %v8746 = vadd.f32 %v8204, %v8532
    %v8747 = vadd.f32 %v8205, %v8571
    %v8748 = vadd.f32 %v8206, %v8573
    %v8749 = vadd.f32 %v8207, %v8612
    %v8750 = vadd.f32 %v8208, %v8614
    %v8751 = vadd.f32 %v8209, %v8653
    %v8752 = vadd.f32 %v8210, %v8655
    %v8753 = vadd.f32 %v8211, %v8694
    %v8754 = vadd.f32 %v8212, %v8696
    %v8755 = vadd.f32 %v8213, %v8735
    %v8756 = vadd.f32 %v8214, %v8737
    %v8757 = vld [vmem:[#allocation13] sm:$0xff]
    %v8758 = vld [vmem:[#allocation13 + $0x8] sm:$0xff]
    %v8761 = vlaneseq
    %v8762 = vshrl.u32 %v8761, 7
    %v8763 = vsub.s32 0, %v8762
    %v8764 = vrot.slane %v8757, %v8763
    %v8765 = vlaneseq
    %v8766 = vshrl.u32 %v8765, 7
    %v8767 = vsub.s32 1, %v8766
    %v8768 = vrot.slane %v8757, %v8767
    %v8769 = vlaneseq
    %v8770 = vshrl.u32 %v8769, 7
    %v8771 = vsub.s32 2, %v8770
    %v8772 = vrot.slane %v8757, %v8771
    %v8773 = vlaneseq
    %v8774 = vshrl.u32 %v8773, 7
    %v8775 = vsub.s32 3, %v8774
    %v8776 = vrot.slane %v8757, %v8775
    %v8777 = vlaneseq
    %v8778 = vshrl.u32 %v8777, 7
    %v8779 = vsub.s32 4, %v8778
    %v8780 = vrot.slane %v8757, %v8779
    %v8781 = vlaneseq
    %v8782 = vshrl.u32 %v8781, 7
    %v8783 = vsub.s32 5, %v8782
    %v8784 = vrot.slane %v8757, %v8783
    %v8785 = vlaneseq
    %v8786 = vshrl.u32 %v8785, 7
    %v8787 = vsub.s32 6, %v8786
    %v8788 = vrot.slane %v8757, %v8787
    %v8789 = vlaneseq
    %v8790 = vshrl.u32 %v8789, 7
    %v8791 = vsub.s32 7, %v8790
    %v8792 = vrot.slane %v8757, %v8791
    %v8793 = vlaneseq
    %v8794 = vshrl.u32 %v8793, 7
    %v8795 = vsub.s32 0, %v8794
    %v8796 = vrot.slane %v8758, %v8795
    %v8797 = vlaneseq
    %v8798 = vshrl.u32 %v8797, 7
    %v8799 = vsub.s32 1, %v8798
    %v8800 = vrot.slane %v8758, %v8799
    %v8801 = vlaneseq
    %v8802 = vshrl.u32 %v8801, 7
    %v8803 = vsub.s32 2, %v8802
    %v8804 = vrot.slane %v8758, %v8803
    %v8805 = vlaneseq
    %v8806 = vshrl.u32 %v8805, 7
    %v8807 = vsub.s32 3, %v8806
    %v8808 = vrot.slane %v8758, %v8807
    %v8809 = vlaneseq
    %v8810 = vshrl.u32 %v8809, 7
    %v8811 = vsub.s32 4, %v8810
    %v8812 = vrot.slane %v8758, %v8811
    %v8813 = vlaneseq
    %v8814 = vshrl.u32 %v8813, 7
    %v8815 = vsub.s32 5, %v8814
    %v8816 = vrot.slane %v8758, %v8815
    %v8817 = vlaneseq
    %v8818 = vshrl.u32 %v8817, 7
    %v8819 = vsub.s32 6, %v8818
    %v8820 = vrot.slane %v8758, %v8819
    %v8821 = vlaneseq
    %v8822 = vshrl.u32 %v8821, 7
    %v8823 = vsub.s32 7, %v8822
    %v8824 = vrot.slane %v8758, %v8823
    %v8841 = vadd.f32 %v8741, %v8764
    %v8842 = vadd.f32 %v8742, %v8768
    %v8843 = vadd.f32 %v8743, %v8772
    %v8844 = vadd.f32 %v8744, %v8776
    %v8845 = vadd.f32 %v8745, %v8780
    %v8846 = vadd.f32 %v8746, %v8784
    %v8847 = vadd.f32 %v8747, %v8788
    %v8848 = vadd.f32 %v8748, %v8792
    %v8849 = vadd.f32 %v8749, %v8796
    %v8850 = vadd.f32 %v8750, %v8800
    %v8851 = vadd.f32 %v8751, %v8804
    %v8852 = vadd.f32 %v8752, %v8808
    %v8853 = vadd.f32 %v8753, %v8812
    %v8854 = vadd.f32 %v8754, %v8816
    %v8855 = vadd.f32 %v8755, %v8820
    %v8856 = vadd.f32 %v8756, %v8824
    %vm8857 = vcmp.ge.f32.partialorder %v8841, 0.0
    %vm8858 = vcmp.ge.f32.partialorder %v8842, 0.0
    %vm8859 = vcmp.ge.f32.partialorder %v8843, 0.0
    %vm8860 = vcmp.ge.f32.partialorder %v8844, 0.0
    %vm8861 = vcmp.ge.f32.partialorder %v8845, 0.0
    %vm8862 = vcmp.ge.f32.partialorder %v8846, 0.0
    %vm8863 = vcmp.ge.f32.partialorder %v8847, 0.0
    %vm8864 = vcmp.ge.f32.partialorder %v8848, 0.0
    %vm8865 = vcmp.ge.f32.partialorder %v8849, 0.0
    %vm8866 = vcmp.ge.f32.partialorder %v8850, 0.0
    %vm8867 = vcmp.ge.f32.partialorder %v8851, 0.0
    %vm8868 = vcmp.ge.f32.partialorder %v8852, 0.0
    %vm8869 = vcmp.ge.f32.partialorder %v8853, 0.0
    %vm8870 = vcmp.ge.f32.partialorder %v8854, 0.0
    %vm8871 = vcmp.ge.f32.partialorder %v8855, 0.0
    %vm8872 = vcmp.ge.f32.partialorder %v8856, 0.0
    %v8873 = vmul.f32 %v8841, 0.2
    %v8874 = vmul.f32 %v8842, 0.2
    %v8875 = vmul.f32 %v8843, 0.2
    %v8876 = vmul.f32 %v8844, 0.2
    %v8877 = vmul.f32 %v8845, 0.2
    %v8878 = vmul.f32 %v8846, 0.2
    %v8879 = vmul.f32 %v8847, 0.2
    %v8880 = vmul.f32 %v8848, 0.2
    %v8881 = vmul.f32 %v8849, 0.2
    %v8882 = vmul.f32 %v8850, 0.2
    %v8883 = vmul.f32 %v8851, 0.2
    %v8884 = vmul.f32 %v8852, 0.2
    %v8885 = vmul.f32 %v8853, 0.2
    %v8886 = vmul.f32 %v8854, 0.2
    %v8887 = vmul.f32 %v8855, 0.2
    %v8888 = vmul.f32 %v8856, 0.2
    %v8889 = vsel %vm8857, %v8841, %v8873
    %v8890 = vsel %vm8858, %v8842, %v8874
    %v8891 = vsel %vm8859, %v8843, %v8875
    %v8892 = vsel %vm8860, %v8844, %v8876
    %v8893 = vsel %vm8861, %v8845, %v8877
    %v8894 = vsel %vm8862, %v8846, %v8878
    %v8895 = vsel %vm8863, %v8847, %v8879
    %v8896 = vsel %vm8864, %v8848, %v8880
    %v8897 = vsel %vm8865, %v8849, %v8881
    %v8898 = vsel %vm8866, %v8850, %v8882
    %v8899 = vsel %vm8867, %v8851, %v8883
    %v8900 = vsel %vm8868, %v8852, %v8884
    %v8901 = vsel %vm8869, %v8853, %v8885
    %v8902 = vsel %vm8870, %v8854, %v8886
    %v8903 = vsel %vm8871, %v8855, %v8887
    %v8904 = vsel %vm8872, %v8856, %v8888
    %v8905 = vpack.c.bf16 %v8889, %v8889
    %v8906 = vpack.c.bf16 %v8890, %v8890
    %v8907 = vpack.c.bf16 %v8891, %v8891
    %v8908 = vpack.c.bf16 %v8892, %v8892
    %v8909 = vpack.c.bf16 %v8893, %v8893
    %v8910 = vpack.c.bf16 %v8894, %v8894
    %v8911 = vpack.c.bf16 %v8895, %v8895
    %v8912 = vpack.c.bf16 %v8896, %v8896
    %v8913 = vpack.c.bf16 %v8897, %v8897
    %v8914 = vpack.c.bf16 %v8898, %v8898
    %v8915 = vpack.c.bf16 %v8899, %v8899
    %v8916 = vpack.c.bf16 %v8900, %v8900
    %v8917 = vpack.c.bf16 %v8901, %v8901
    %v8918 = vpack.c.bf16 %v8902, %v8902
    %v8919 = vpack.c.bf16 %v8903, %v8903
    %v8920 = vpack.c.bf16 %v8904, %v8904
    %v8921 = vld [vmem:[#allocation14] sm:$0xff]
    %v8922 = vld [vmem:[#allocation14 + $0x8] sm:$0xff]
    %v8923 = vld [vmem:[#allocation14 + $0x10] sm:$0xff]
    %v8924 = vld [vmem:[#allocation14 + $0x18] sm:$0xff]
    %v8925 = vld [vmem:[#allocation14 + $0x20] sm:$0xff]
    %v8926 = vld [vmem:[#allocation14 + $0x28] sm:$0xff]
    %v8927 = vld [vmem:[#allocation14 + $0x30] sm:$0xff]
    %v8928 = vld [vmem:[#allocation14 + $0x38] sm:$0xff]
    %v8929 = vld [vmem:[#allocation14 + $0x40] sm:$0xff]
    %v8930 = vld [vmem:[#allocation14 + $0x48] sm:$0xff]
    %v8931 = vld [vmem:[#allocation14 + $0x50] sm:$0xff]
    %v8932 = vld [vmem:[#allocation14 + $0x58] sm:$0xff]
    %v8933 = vld [vmem:[#allocation14 + $0x60] sm:$0xff]
    %v8934 = vld [vmem:[#allocation14 + $0x68] sm:$0xff]
    %v8935 = vld [vmem:[#allocation14 + $0x70] sm:$0xff]
    %v8936 = vld [vmem:[#allocation14 + $0x78] sm:$0xff]
    %v8937 = vld [vmem:[#allocation14 + $0x80] sm:$0xff]
    %v8938 = vld [vmem:[#allocation14 + $0x88] sm:$0xff]
    %v8939 = vld [vmem:[#allocation14 + $0x90] sm:$0xff]
    %v8940 = vld [vmem:[#allocation14 + $0x98] sm:$0xff]
    %v8941 = vld [vmem:[#allocation14 + $0xa0] sm:$0xff]
    %v8942 = vld [vmem:[#allocation14 + $0xa8] sm:$0xff]
    %v8943 = vld [vmem:[#allocation14 + $0xb0] sm:$0xff]
    %v8944 = vld [vmem:[#allocation14 + $0xb8] sm:$0xff]
    %v8945 = vld [vmem:[#allocation14 + $0xc0] sm:$0xff]
    %v8946 = vld [vmem:[#allocation14 + $0xc8] sm:$0xff]
    %v8947 = vld [vmem:[#allocation14 + $0xd0] sm:$0xff]
    %v8948 = vld [vmem:[#allocation14 + $0xd8] sm:$0xff]
    %v8949 = vld [vmem:[#allocation14 + $0xe0] sm:$0xff]
    %v8950 = vld [vmem:[#allocation14 + $0xe8] sm:$0xff]
    %v8951 = vld [vmem:[#allocation14 + $0xf0] sm:$0xff]
    %v8952 = vld [vmem:[#allocation14 + $0xf8] sm:$0xff]
    %v8953 = vld [vmem:[#allocation14 + $0x100] sm:$0xff]
    %v8954 = vld [vmem:[#allocation14 + $0x108] sm:$0xff]
    %v8955 = vld [vmem:[#allocation14 + $0x110] sm:$0xff]
    %v8956 = vld [vmem:[#allocation14 + $0x118] sm:$0xff]
    %v8957 = vld [vmem:[#allocation14 + $0x120] sm:$0xff]
    %v8958 = vld [vmem:[#allocation14 + $0x128] sm:$0xff]
    %v8959 = vld [vmem:[#allocation14 + $0x130] sm:$0xff]
    %v8960 = vld [vmem:[#allocation14 + $0x138] sm:$0xff]
    %v8961 = vld [vmem:[#allocation14 + $0x140] sm:$0xff]
    %v8962 = vld [vmem:[#allocation14 + $0x148] sm:$0xff]
    %v8963 = vld [vmem:[#allocation14 + $0x150] sm:$0xff]
    %v8964 = vld [vmem:[#allocation14 + $0x158] sm:$0xff]
    %v8965 = vld [vmem:[#allocation14 + $0x160] sm:$0xff]
    %v8966 = vld [vmem:[#allocation14 + $0x168] sm:$0xff]
    %v8967 = vld [vmem:[#allocation14 + $0x170] sm:$0xff]
    %v8968 = vld [vmem:[#allocation14 + $0x178] sm:$0xff]
    %v8969 = vld [vmem:[#allocation14 + $0x180] sm:$0xff]
    %v8970 = vld [vmem:[#allocation14 + $0x188] sm:$0xff]
    %v8971 = vld [vmem:[#allocation14 + $0x190] sm:$0xff]
    %v8972 = vld [vmem:[#allocation14 + $0x198] sm:$0xff]
    %v8973 = vld [vmem:[#allocation14 + $0x1a0] sm:$0xff]
    %v8974 = vld [vmem:[#allocation14 + $0x1a8] sm:$0xff]
    %v8975 = vld [vmem:[#allocation14 + $0x1b0] sm:$0xff]
    %v8976 = vld [vmem:[#allocation14 + $0x1b8] sm:$0xff]
    %v8977 = vld [vmem:[#allocation14 + $0x1c0] sm:$0xff]
    %v8978 = vld [vmem:[#allocation14 + $0x1c8] sm:$0xff]
    %v8979 = vld [vmem:[#allocation14 + $0x1d0] sm:$0xff]
    %v8980 = vld [vmem:[#allocation14 + $0x1d8] sm:$0xff]
    %v8981 = vld [vmem:[#allocation14 + $0x1e0] sm:$0xff]
    %v8982 = vld [vmem:[#allocation14 + $0x1e8] sm:$0xff]
    %v8983 = vld [vmem:[#allocation14 + $0x1f0] sm:$0xff]
    %v8984 = vld [vmem:[#allocation14 + $0x1f8] sm:$0xff]
    %v8985 = vld [vmem:[#allocation14 + $0x200] sm:$0xff]
    %v8986 = vld [vmem:[#allocation14 + $0x208] sm:$0xff]
    %v8987 = vld [vmem:[#allocation14 + $0x210] sm:$0xff]
    %v8988 = vld [vmem:[#allocation14 + $0x218] sm:$0xff]
    %v8989 = vld [vmem:[#allocation14 + $0x220] sm:$0xff]
    %v8990 = vld [vmem:[#allocation14 + $0x228] sm:$0xff]
    %v8991 = vld [vmem:[#allocation14 + $0x230] sm:$0xff]
    %v8992 = vld [vmem:[#allocation14 + $0x238] sm:$0xff]
    %v8993 = vld [vmem:[#allocation14 + $0x240] sm:$0xff]
    %v8994 = vld [vmem:[#allocation14 + $0x248] sm:$0xff]
    %v8995 = vld [vmem:[#allocation14 + $0x250] sm:$0xff]
    %v8996 = vld [vmem:[#allocation14 + $0x258] sm:$0xff]
    %v8997 = vld [vmem:[#allocation14 + $0x260] sm:$0xff]
    %v8998 = vld [vmem:[#allocation14 + $0x268] sm:$0xff]
    %v8999 = vld [vmem:[#allocation14 + $0x270] sm:$0xff]
    %v9000 = vld [vmem:[#allocation14 + $0x278] sm:$0xff]
    %v9001 = vld [vmem:[#allocation14 + $0x280] sm:$0xff]
    %v9002 = vld [vmem:[#allocation14 + $0x288] sm:$0xff]
    %v9003 = vld [vmem:[#allocation14 + $0x290] sm:$0xff]
    %v9004 = vld [vmem:[#allocation14 + $0x298] sm:$0xff]
    %v9005 = vld [vmem:[#allocation14 + $0x2a0] sm:$0xff]
    %v9006 = vld [vmem:[#allocation14 + $0x2a8] sm:$0xff]
    %v9007 = vld [vmem:[#allocation14 + $0x2b0] sm:$0xff]
    %v9008 = vld [vmem:[#allocation14 + $0x2b8] sm:$0xff]
    %v9009 = vld [vmem:[#allocation14 + $0x2c0] sm:$0xff]
    %v9010 = vld [vmem:[#allocation14 + $0x2c8] sm:$0xff]
    %v9011 = vld [vmem:[#allocation14 + $0x2d0] sm:$0xff]
    %v9012 = vld [vmem:[#allocation14 + $0x2d8] sm:$0xff]
    %v9013 = vld [vmem:[#allocation14 + $0x2e0] sm:$0xff]
    %v9014 = vld [vmem:[#allocation14 + $0x2e8] sm:$0xff]
    %v9015 = vld [vmem:[#allocation14 + $0x2f0] sm:$0xff]
    %v9016 = vld [vmem:[#allocation14 + $0x2f8] sm:$0xff]
    %v9017 = vld [vmem:[#allocation14 + $0x300] sm:$0xff]
    %v9018 = vld [vmem:[#allocation14 + $0x308] sm:$0xff]
    %v9019 = vld [vmem:[#allocation14 + $0x310] sm:$0xff]
    %v9020 = vld [vmem:[#allocation14 + $0x318] sm:$0xff]
    %v9021 = vld [vmem:[#allocation14 + $0x320] sm:$0xff]
    %v9022 = vld [vmem:[#allocation14 + $0x328] sm:$0xff]
    %v9023 = vld [vmem:[#allocation14 + $0x330] sm:$0xff]
    %v9024 = vld [vmem:[#allocation14 + $0x338] sm:$0xff]
    %v9025 = vld [vmem:[#allocation14 + $0x340] sm:$0xff]
    %v9026 = vld [vmem:[#allocation14 + $0x348] sm:$0xff]
    %v9027 = vld [vmem:[#allocation14 + $0x350] sm:$0xff]
    %v9028 = vld [vmem:[#allocation14 + $0x358] sm:$0xff]
    %v9029 = vld [vmem:[#allocation14 + $0x360] sm:$0xff]
    %v9030 = vld [vmem:[#allocation14 + $0x368] sm:$0xff]
    %v9031 = vld [vmem:[#allocation14 + $0x370] sm:$0xff]
    %v9032 = vld [vmem:[#allocation14 + $0x378] sm:$0xff]
    %v9033 = vld [vmem:[#allocation14 + $0x380] sm:$0xff]
    %v9034 = vld [vmem:[#allocation14 + $0x388] sm:$0xff]
    %v9035 = vld [vmem:[#allocation14 + $0x390] sm:$0xff]
    %v9036 = vld [vmem:[#allocation14 + $0x398] sm:$0xff]
    %v9037 = vld [vmem:[#allocation14 + $0x3a0] sm:$0xff]
    %v9038 = vld [vmem:[#allocation14 + $0x3a8] sm:$0xff]
    %v9039 = vld [vmem:[#allocation14 + $0x3b0] sm:$0xff]
    %v9040 = vld [vmem:[#allocation14 + $0x3b8] sm:$0xff]
    %v9041 = vld [vmem:[#allocation14 + $0x3c0] sm:$0xff]
    %v9042 = vld [vmem:[#allocation14 + $0x3c8] sm:$0xff]
    %v9043 = vld [vmem:[#allocation14 + $0x3d0] sm:$0xff]
    %v9044 = vld [vmem:[#allocation14 + $0x3d8] sm:$0xff]
    %v9045 = vld [vmem:[#allocation14 + $0x3e0] sm:$0xff]
    %v9046 = vld [vmem:[#allocation14 + $0x3e8] sm:$0xff]
    %v9047 = vld [vmem:[#allocation14 + $0x3f0] sm:$0xff]
    %v9048 = vld [vmem:[#allocation14 + $0x3f8] sm:$0xff]
    %v9049 = vld [vmem:[#allocation14 + $0x400] sm:$0xff]
    %v9050 = vld [vmem:[#allocation14 + $0x408] sm:$0xff]
    %v9051 = vld [vmem:[#allocation14 + $0x410] sm:$0xff]
    %v9052 = vld [vmem:[#allocation14 + $0x418] sm:$0xff]
    %v9053 = vld [vmem:[#allocation14 + $0x420] sm:$0xff]
    %v9054 = vld [vmem:[#allocation14 + $0x428] sm:$0xff]
    %v9055 = vld [vmem:[#allocation14 + $0x430] sm:$0xff]
    %v9056 = vld [vmem:[#allocation14 + $0x438] sm:$0xff]
    %v9057 = vld [vmem:[#allocation14 + $0x440] sm:$0xff]
    %v9058 = vld [vmem:[#allocation14 + $0x448] sm:$0xff]
    %v9059 = vld [vmem:[#allocation14 + $0x450] sm:$0xff]
    %v9060 = vld [vmem:[#allocation14 + $0x458] sm:$0xff]
    %v9061 = vld [vmem:[#allocation14 + $0x460] sm:$0xff]
    %v9062 = vld [vmem:[#allocation14 + $0x468] sm:$0xff]
    %v9063 = vld [vmem:[#allocation14 + $0x470] sm:$0xff]
    %v9064 = vld [vmem:[#allocation14 + $0x478] sm:$0xff]
    %v9065 = vld [vmem:[#allocation14 + $0x480] sm:$0xff]
    %v9066 = vld [vmem:[#allocation14 + $0x488] sm:$0xff]
    %v9067 = vld [vmem:[#allocation14 + $0x490] sm:$0xff]
    %v9068 = vld [vmem:[#allocation14 + $0x498] sm:$0xff]
    %v9069 = vld [vmem:[#allocation14 + $0x4a0] sm:$0xff]
    %v9070 = vld [vmem:[#allocation14 + $0x4a8] sm:$0xff]
    %v9071 = vld [vmem:[#allocation14 + $0x4b0] sm:$0xff]
    %v9072 = vld [vmem:[#allocation14 + $0x4b8] sm:$0xff]
    %v9073 = vld [vmem:[#allocation14 + $0x4c0] sm:$0xff]
    %v9074 = vld [vmem:[#allocation14 + $0x4c8] sm:$0xff]
    %v9075 = vld [vmem:[#allocation14 + $0x4d0] sm:$0xff]
    %v9076 = vld [vmem:[#allocation14 + $0x4d8] sm:$0xff]
    %v9077 = vld [vmem:[#allocation14 + $0x4e0] sm:$0xff]
    %v9078 = vld [vmem:[#allocation14 + $0x4e8] sm:$0xff]
    %v9079 = vld [vmem:[#allocation14 + $0x4f0] sm:$0xff]
    %v9080 = vld [vmem:[#allocation14 + $0x4f8] sm:$0xff]
    %v9081 = vld [vmem:[#allocation14 + $0x500] sm:$0xff]
    %v9082 = vld [vmem:[#allocation14 + $0x508] sm:$0xff]
    %v9083 = vld [vmem:[#allocation14 + $0x510] sm:$0xff]
    %v9084 = vld [vmem:[#allocation14 + $0x518] sm:$0xff]
    %v9085 = vld [vmem:[#allocation14 + $0x520] sm:$0xff]
    %v9086 = vld [vmem:[#allocation14 + $0x528] sm:$0xff]
    %v9087 = vld [vmem:[#allocation14 + $0x530] sm:$0xff]
    %v9088 = vld [vmem:[#allocation14 + $0x538] sm:$0xff]
    %v9089 = vld [vmem:[#allocation14 + $0x540] sm:$0xff]
    %v9090 = vld [vmem:[#allocation14 + $0x548] sm:$0xff]
    %v9091 = vld [vmem:[#allocation14 + $0x550] sm:$0xff]
    %v9092 = vld [vmem:[#allocation14 + $0x558] sm:$0xff]
    %v9093 = vld [vmem:[#allocation14 + $0x560] sm:$0xff]
    %v9094 = vld [vmem:[#allocation14 + $0x568] sm:$0xff]
    %v9095 = vld [vmem:[#allocation14 + $0x570] sm:$0xff]
    %v9096 = vld [vmem:[#allocation14 + $0x578] sm:$0xff]
    %v9097 = vld [vmem:[#allocation14 + $0x580] sm:$0xff]
    %v9098 = vld [vmem:[#allocation14 + $0x588] sm:$0xff]
    %v9099 = vld [vmem:[#allocation14 + $0x590] sm:$0xff]
    %v9100 = vld [vmem:[#allocation14 + $0x598] sm:$0xff]
    %v9101 = vld [vmem:[#allocation14 + $0x5a0] sm:$0xff]
    %v9102 = vld [vmem:[#allocation14 + $0x5a8] sm:$0xff]
    %v9103 = vld [vmem:[#allocation14 + $0x5b0] sm:$0xff]
    %v9104 = vld [vmem:[#allocation14 + $0x5b8] sm:$0xff]
    %v9105 = vld [vmem:[#allocation14 + $0x5c0] sm:$0xff]
    %v9106 = vld [vmem:[#allocation14 + $0x5c8] sm:$0xff]
    %v9107 = vld [vmem:[#allocation14 + $0x5d0] sm:$0xff]
    %v9108 = vld [vmem:[#allocation14 + $0x5d8] sm:$0xff]
    %v9109 = vld [vmem:[#allocation14 + $0x5e0] sm:$0xff]
    %v9110 = vld [vmem:[#allocation14 + $0x5e8] sm:$0xff]
    %v9111 = vld [vmem:[#allocation14 + $0x5f0] sm:$0xff]
    %v9112 = vld [vmem:[#allocation14 + $0x5f8] sm:$0xff]
    %v9113 = vld [vmem:[#allocation14 + $0x600] sm:$0xff]
    %v9114 = vld [vmem:[#allocation14 + $0x608] sm:$0xff]
    %v9115 = vld [vmem:[#allocation14 + $0x610] sm:$0xff]
    %v9116 = vld [vmem:[#allocation14 + $0x618] sm:$0xff]
    %v9117 = vld [vmem:[#allocation14 + $0x620] sm:$0xff]
    %v9118 = vld [vmem:[#allocation14 + $0x628] sm:$0xff]
    %v9119 = vld [vmem:[#allocation14 + $0x630] sm:$0xff]
    %v9120 = vld [vmem:[#allocation14 + $0x638] sm:$0xff]
    %v9121 = vld [vmem:[#allocation14 + $0x640] sm:$0xff]
    %v9122 = vld [vmem:[#allocation14 + $0x648] sm:$0xff]
    %v9123 = vld [vmem:[#allocation14 + $0x650] sm:$0xff]
    %v9124 = vld [vmem:[#allocation14 + $0x658] sm:$0xff]
    %v9125 = vld [vmem:[#allocation14 + $0x660] sm:$0xff]
    %v9126 = vld [vmem:[#allocation14 + $0x668] sm:$0xff]
    %v9127 = vld [vmem:[#allocation14 + $0x670] sm:$0xff]
    %v9128 = vld [vmem:[#allocation14 + $0x678] sm:$0xff]
    %v9129 = vld [vmem:[#allocation14 + $0x680] sm:$0xff]
    %v9130 = vld [vmem:[#allocation14 + $0x688] sm:$0xff]
    %v9131 = vld [vmem:[#allocation14 + $0x690] sm:$0xff]
    %v9132 = vld [vmem:[#allocation14 + $0x698] sm:$0xff]
    %v9133 = vld [vmem:[#allocation14 + $0x6a0] sm:$0xff]
    %v9134 = vld [vmem:[#allocation14 + $0x6a8] sm:$0xff]
    %v9135 = vld [vmem:[#allocation14 + $0x6b0] sm:$0xff]
    %v9136 = vld [vmem:[#allocation14 + $0x6b8] sm:$0xff]
    %v9137 = vld [vmem:[#allocation14 + $0x6c0] sm:$0xff]
    %v9138 = vld [vmem:[#allocation14 + $0x6c8] sm:$0xff]
    %v9139 = vld [vmem:[#allocation14 + $0x6d0] sm:$0xff]
    %v9140 = vld [vmem:[#allocation14 + $0x6d8] sm:$0xff]
    %v9141 = vld [vmem:[#allocation14 + $0x6e0] sm:$0xff]
    %v9142 = vld [vmem:[#allocation14 + $0x6e8] sm:$0xff]
    %v9143 = vld [vmem:[#allocation14 + $0x6f0] sm:$0xff]
    %v9144 = vld [vmem:[#allocation14 + $0x6f8] sm:$0xff]
    %v9145 = vld [vmem:[#allocation14 + $0x700] sm:$0xff]
    %v9146 = vld [vmem:[#allocation14 + $0x708] sm:$0xff]
    %v9147 = vld [vmem:[#allocation14 + $0x710] sm:$0xff]
    %v9148 = vld [vmem:[#allocation14 + $0x718] sm:$0xff]
    %v9149 = vld [vmem:[#allocation14 + $0x720] sm:$0xff]
    %v9150 = vld [vmem:[#allocation14 + $0x728] sm:$0xff]
    %v9151 = vld [vmem:[#allocation14 + $0x730] sm:$0xff]
    %v9152 = vld [vmem:[#allocation14 + $0x738] sm:$0xff]
    %v9153 = vld [vmem:[#allocation14 + $0x740] sm:$0xff]
    %v9154 = vld [vmem:[#allocation14 + $0x748] sm:$0xff]
    %v9155 = vld [vmem:[#allocation14 + $0x750] sm:$0xff]
    %v9156 = vld [vmem:[#allocation14 + $0x758] sm:$0xff]
    %v9157 = vld [vmem:[#allocation14 + $0x760] sm:$0xff]
    %v9158 = vld [vmem:[#allocation14 + $0x768] sm:$0xff]
    %v9159 = vld [vmem:[#allocation14 + $0x770] sm:$0xff]
    %v9160 = vld [vmem:[#allocation14 + $0x778] sm:$0xff]
    %v9161 = vld [vmem:[#allocation14 + $0x780] sm:$0xff]
    %v9162 = vld [vmem:[#allocation14 + $0x788] sm:$0xff]
    %v9163 = vld [vmem:[#allocation14 + $0x790] sm:$0xff]
    %v9164 = vld [vmem:[#allocation14 + $0x798] sm:$0xff]
    %v9165 = vld [vmem:[#allocation14 + $0x7a0] sm:$0xff]
    %v9166 = vld [vmem:[#allocation14 + $0x7a8] sm:$0xff]
    %v9167 = vld [vmem:[#allocation14 + $0x7b0] sm:$0xff]
    %v9168 = vld [vmem:[#allocation14 + $0x7b8] sm:$0xff]
    %v9169 = vld [vmem:[#allocation14 + $0x7c0] sm:$0xff]
    %v9170 = vld [vmem:[#allocation14 + $0x7c8] sm:$0xff]
    %v9171 = vld [vmem:[#allocation14 + $0x7d0] sm:$0xff]
    %v9172 = vld [vmem:[#allocation14 + $0x7d8] sm:$0xff]
    %v9173 = vld [vmem:[#allocation14 + $0x7e0] sm:$0xff]
    %v9174 = vld [vmem:[#allocation14 + $0x7e8] sm:$0xff]
    %v9175 = vld [vmem:[#allocation14 + $0x7f0] sm:$0xff]
    %v9176 = vld [vmem:[#allocation14 + $0x7f8] sm:$0xff]
    %v9177 = vld [vmem:[#allocation14 + $0x800] sm:$0xff]
    %v9178 = vld [vmem:[#allocation14 + $0x808] sm:$0xff]
    %v9179 = vld [vmem:[#allocation14 + $0x810] sm:$0xff]
    %v9180 = vld [vmem:[#allocation14 + $0x818] sm:$0xff]
    %v9181 = vld [vmem:[#allocation14 + $0x820] sm:$0xff]
    %v9182 = vld [vmem:[#allocation14 + $0x828] sm:$0xff]
    %v9183 = vld [vmem:[#allocation14 + $0x830] sm:$0xff]
    %v9184 = vld [vmem:[#allocation14 + $0x838] sm:$0xff]
    %v9185 = vld [vmem:[#allocation14 + $0x840] sm:$0xff]
    %v9186 = vld [vmem:[#allocation14 + $0x848] sm:$0xff]
    %v9187 = vld [vmem:[#allocation14 + $0x850] sm:$0xff]
    %v9188 = vld [vmem:[#allocation14 + $0x858] sm:$0xff]
    %v9189 = vld [vmem:[#allocation14 + $0x860] sm:$0xff]
    %v9190 = vld [vmem:[#allocation14 + $0x868] sm:$0xff]
    %v9191 = vld [vmem:[#allocation14 + $0x870] sm:$0xff]
    %v9192 = vld [vmem:[#allocation14 + $0x878] sm:$0xff]
    %v9193 = vld [vmem:[#allocation14 + $0x880] sm:$0xff]
    %v9194 = vld [vmem:[#allocation14 + $0x888] sm:$0xff]
    %v9195 = vld [vmem:[#allocation14 + $0x890] sm:$0xff]
    %v9196 = vld [vmem:[#allocation14 + $0x898] sm:$0xff]
    %v9197 = vld [vmem:[#allocation14 + $0x8a0] sm:$0xff]
    %v9198 = vld [vmem:[#allocation14 + $0x8a8] sm:$0xff]
    %v9199 = vld [vmem:[#allocation14 + $0x8b0] sm:$0xff]
    %v9200 = vld [vmem:[#allocation14 + $0x8b8] sm:$0xff]
    %v9201 = vld [vmem:[#allocation14 + $0x8c0] sm:$0xff]
    %v9202 = vld [vmem:[#allocation14 + $0x8c8] sm:$0xff]
    %v9203 = vld [vmem:[#allocation14 + $0x8d0] sm:$0xff]
    %v9204 = vld [vmem:[#allocation14 + $0x8d8] sm:$0xff]
    %v9205 = vld [vmem:[#allocation14 + $0x8e0] sm:$0xff]
    %v9206 = vld [vmem:[#allocation14 + $0x8e8] sm:$0xff]
    %v9207 = vld [vmem:[#allocation14 + $0x8f0] sm:$0xff]
    %v9208 = vld [vmem:[#allocation14 + $0x8f8] sm:$0xff]
    %v9209 = vld [vmem:[#allocation14 + $0x900] sm:$0xff]
    %v9210 = vld [vmem:[#allocation14 + $0x908] sm:$0xff]
    %v9211 = vld [vmem:[#allocation14 + $0x910] sm:$0xff]
    %v9212 = vld [vmem:[#allocation14 + $0x918] sm:$0xff]
    %v9213 = vld [vmem:[#allocation14 + $0x920] sm:$0xff]
    %v9214 = vld [vmem:[#allocation14 + $0x928] sm:$0xff]
    %v9215 = vld [vmem:[#allocation14 + $0x930] sm:$0xff]
    %v9216 = vld [vmem:[#allocation14 + $0x938] sm:$0xff]
    %v9217 = vld [vmem:[#allocation14 + $0x940] sm:$0xff]
    %v9218 = vld [vmem:[#allocation14 + $0x948] sm:$0xff]
    %v9219 = vld [vmem:[#allocation14 + $0x950] sm:$0xff]
    %v9220 = vld [vmem:[#allocation14 + $0x958] sm:$0xff]
    %v9221 = vld [vmem:[#allocation14 + $0x960] sm:$0xff]
    %v9222 = vld [vmem:[#allocation14 + $0x968] sm:$0xff]
    %v9223 = vld [vmem:[#allocation14 + $0x970] sm:$0xff]
    %v9224 = vld [vmem:[#allocation14 + $0x978] sm:$0xff]
    %v9225 = vld [vmem:[#allocation14 + $0x980] sm:$0xff]
    %v9226 = vld [vmem:[#allocation14 + $0x988] sm:$0xff]
    %v9227 = vld [vmem:[#allocation14 + $0x990] sm:$0xff]
    %v9228 = vld [vmem:[#allocation14 + $0x998] sm:$0xff]
    %v9229 = vld [vmem:[#allocation14 + $0x9a0] sm:$0xff]
    %v9230 = vld [vmem:[#allocation14 + $0x9a8] sm:$0xff]
    %v9231 = vld [vmem:[#allocation14 + $0x9b0] sm:$0xff]
    %v9232 = vld [vmem:[#allocation14 + $0x9b8] sm:$0xff]
    %v9233 = vld [vmem:[#allocation14 + $0x9c0] sm:$0xff]
    %v9234 = vld [vmem:[#allocation14 + $0x9c8] sm:$0xff]
    %v9235 = vld [vmem:[#allocation14 + $0x9d0] sm:$0xff]
    %v9236 = vld [vmem:[#allocation14 + $0x9d8] sm:$0xff]
    %v9237 = vld [vmem:[#allocation14 + $0x9e0] sm:$0xff]
    %v9238 = vld [vmem:[#allocation14 + $0x9e8] sm:$0xff]
    %v9239 = vld [vmem:[#allocation14 + $0x9f0] sm:$0xff]
    %v9240 = vld [vmem:[#allocation14 + $0x9f8] sm:$0xff]
    %v9241 = vld [vmem:[#allocation14 + $0xa00] sm:$0xff]
    %v9242 = vld [vmem:[#allocation14 + $0xa08] sm:$0xff]
    %v9243 = vld [vmem:[#allocation14 + $0xa10] sm:$0xff]
    %v9244 = vld [vmem:[#allocation14 + $0xa18] sm:$0xff]
    %v9245 = vld [vmem:[#allocation14 + $0xa20] sm:$0xff]
    %v9246 = vld [vmem:[#allocation14 + $0xa28] sm:$0xff]
    %v9247 = vld [vmem:[#allocation14 + $0xa30] sm:$0xff]
    %v9248 = vld [vmem:[#allocation14 + $0xa38] sm:$0xff]
    %v9249 = vld [vmem:[#allocation14 + $0xa40] sm:$0xff]
    %v9250 = vld [vmem:[#allocation14 + $0xa48] sm:$0xff]
    %v9251 = vld [vmem:[#allocation14 + $0xa50] sm:$0xff]
    %v9252 = vld [vmem:[#allocation14 + $0xa58] sm:$0xff]
    %v9253 = vld [vmem:[#allocation14 + $0xa60] sm:$0xff]
    %v9254 = vld [vmem:[#allocation14 + $0xa68] sm:$0xff]
    %v9255 = vld [vmem:[#allocation14 + $0xa70] sm:$0xff]
    %v9256 = vld [vmem:[#allocation14 + $0xa78] sm:$0xff]
    %v9257 = vld [vmem:[#allocation14 + $0xa80] sm:$0xff]
    %v9258 = vld [vmem:[#allocation14 + $0xa88] sm:$0xff]
    %v9259 = vld [vmem:[#allocation14 + $0xa90] sm:$0xff]
    %v9260 = vld [vmem:[#allocation14 + $0xa98] sm:$0xff]
    %v9261 = vld [vmem:[#allocation14 + $0xaa0] sm:$0xff]
    %v9262 = vld [vmem:[#allocation14 + $0xaa8] sm:$0xff]
    %v9263 = vld [vmem:[#allocation14 + $0xab0] sm:$0xff]
    %v9264 = vld [vmem:[#allocation14 + $0xab8] sm:$0xff]
    %v9265 = vld [vmem:[#allocation14 + $0xac0] sm:$0xff]
    %v9266 = vld [vmem:[#allocation14 + $0xac8] sm:$0xff]
    %v9267 = vld [vmem:[#allocation14 + $0xad0] sm:$0xff]
    %v9268 = vld [vmem:[#allocation14 + $0xad8] sm:$0xff]
    %v9269 = vld [vmem:[#allocation14 + $0xae0] sm:$0xff]
    %v9270 = vld [vmem:[#allocation14 + $0xae8] sm:$0xff]
    %v9271 = vld [vmem:[#allocation14 + $0xaf0] sm:$0xff]
    %v9272 = vld [vmem:[#allocation14 + $0xaf8] sm:$0xff]
    %v9273 = vld [vmem:[#allocation14 + $0xb00] sm:$0xff]
    %v9274 = vld [vmem:[#allocation14 + $0xb08] sm:$0xff]
    %v9275 = vld [vmem:[#allocation14 + $0xb10] sm:$0xff]
    %v9276 = vld [vmem:[#allocation14 + $0xb18] sm:$0xff]
    %v9277 = vld [vmem:[#allocation14 + $0xb20] sm:$0xff]
    %v9278 = vld [vmem:[#allocation14 + $0xb28] sm:$0xff]
    %v9279 = vld [vmem:[#allocation14 + $0xb30] sm:$0xff]
    %v9280 = vld [vmem:[#allocation14 + $0xb38] sm:$0xff]
    %v9281 = vld [vmem:[#allocation14 + $0xb40] sm:$0xff]
    %v9282 = vld [vmem:[#allocation14 + $0xb48] sm:$0xff]
    %v9283 = vld [vmem:[#allocation14 + $0xb50] sm:$0xff]
    %v9284 = vld [vmem:[#allocation14 + $0xb58] sm:$0xff]
    %v9285 = vld [vmem:[#allocation14 + $0xb60] sm:$0xff]
    %v9286 = vld [vmem:[#allocation14 + $0xb68] sm:$0xff]
    %v9287 = vld [vmem:[#allocation14 + $0xb70] sm:$0xff]
    %v9288 = vld [vmem:[#allocation14 + $0xb78] sm:$0xff]
    %v9289 = vld [vmem:[#allocation14 + $0xb80] sm:$0xff]
    %v9290 = vld [vmem:[#allocation14 + $0xb88] sm:$0xff]
    %v9291 = vld [vmem:[#allocation14 + $0xb90] sm:$0xff]
    %v9292 = vld [vmem:[#allocation14 + $0xb98] sm:$0xff]
    %v9293 = vld [vmem:[#allocation14 + $0xba0] sm:$0xff]
    %v9294 = vld [vmem:[#allocation14 + $0xba8] sm:$0xff]
    %v9295 = vld [vmem:[#allocation14 + $0xbb0] sm:$0xff]
    %v9296 = vld [vmem:[#allocation14 + $0xbb8] sm:$0xff]
    %v9297 = vld [vmem:[#allocation14 + $0xbc0] sm:$0xff]
    %v9298 = vld [vmem:[#allocation14 + $0xbc8] sm:$0xff]
    %v9299 = vld [vmem:[#allocation14 + $0xbd0] sm:$0xff]
    %v9300 = vld [vmem:[#allocation14 + $0xbd8] sm:$0xff]
    %v9301 = vld [vmem:[#allocation14 + $0xbe0] sm:$0xff]
    %v9302 = vld [vmem:[#allocation14 + $0xbe8] sm:$0xff]
    %v9303 = vld [vmem:[#allocation14 + $0xbf0] sm:$0xff]
    %v9304 = vld [vmem:[#allocation14 + $0xbf8] sm:$0xff]
    %v9305 = vld [vmem:[#allocation14 + $0xc00] sm:$0xff]
    %v9306 = vld [vmem:[#allocation14 + $0xc08] sm:$0xff]
    %v9307 = vld [vmem:[#allocation14 + $0xc10] sm:$0xff]
    %v9308 = vld [vmem:[#allocation14 + $0xc18] sm:$0xff]
    %v9309 = vld [vmem:[#allocation14 + $0xc20] sm:$0xff]
    %v9310 = vld [vmem:[#allocation14 + $0xc28] sm:$0xff]
    %v9311 = vld [vmem:[#allocation14 + $0xc30] sm:$0xff]
    %v9312 = vld [vmem:[#allocation14 + $0xc38] sm:$0xff]
    %v9313 = vld [vmem:[#allocation14 + $0xc40] sm:$0xff]
    %v9314 = vld [vmem:[#allocation14 + $0xc48] sm:$0xff]
    %v9315 = vld [vmem:[#allocation14 + $0xc50] sm:$0xff]
    %v9316 = vld [vmem:[#allocation14 + $0xc58] sm:$0xff]
    %v9317 = vld [vmem:[#allocation14 + $0xc60] sm:$0xff]
    %v9318 = vld [vmem:[#allocation14 + $0xc68] sm:$0xff]
    %v9319 = vld [vmem:[#allocation14 + $0xc70] sm:$0xff]
    %v9320 = vld [vmem:[#allocation14 + $0xc78] sm:$0xff]
    %v9321 = vld [vmem:[#allocation14 + $0xc80] sm:$0xff]
    %v9322 = vld [vmem:[#allocation14 + $0xc88] sm:$0xff]
    %v9323 = vld [vmem:[#allocation14 + $0xc90] sm:$0xff]
    %v9324 = vld [vmem:[#allocation14 + $0xc98] sm:$0xff]
    %v9325 = vld [vmem:[#allocation14 + $0xca0] sm:$0xff]
    %v9326 = vld [vmem:[#allocation14 + $0xca8] sm:$0xff]
    %v9327 = vld [vmem:[#allocation14 + $0xcb0] sm:$0xff]
    %v9328 = vld [vmem:[#allocation14 + $0xcb8] sm:$0xff]
    %v9329 = vld [vmem:[#allocation14 + $0xcc0] sm:$0xff]
    %v9330 = vld [vmem:[#allocation14 + $0xcc8] sm:$0xff]
    %v9331 = vld [vmem:[#allocation14 + $0xcd0] sm:$0xff]
    %v9332 = vld [vmem:[#allocation14 + $0xcd8] sm:$0xff]
    %v9333 = vld [vmem:[#allocation14 + $0xce0] sm:$0xff]
    %v9334 = vld [vmem:[#allocation14 + $0xce8] sm:$0xff]
    %v9335 = vld [vmem:[#allocation14 + $0xcf0] sm:$0xff]
    %v9336 = vld [vmem:[#allocation14 + $0xcf8] sm:$0xff]
    %v9337 = vld [vmem:[#allocation14 + $0xd00] sm:$0xff]
    %v9338 = vld [vmem:[#allocation14 + $0xd08] sm:$0xff]
    %v9339 = vld [vmem:[#allocation14 + $0xd10] sm:$0xff]
    %v9340 = vld [vmem:[#allocation14 + $0xd18] sm:$0xff]
    %v9341 = vld [vmem:[#allocation14 + $0xd20] sm:$0xff]
    %v9342 = vld [vmem:[#allocation14 + $0xd28] sm:$0xff]
    %v9343 = vld [vmem:[#allocation14 + $0xd30] sm:$0xff]
    %v9344 = vld [vmem:[#allocation14 + $0xd38] sm:$0xff]
    %v9345 = vld [vmem:[#allocation14 + $0xd40] sm:$0xff]
    %v9346 = vld [vmem:[#allocation14 + $0xd48] sm:$0xff]
    %v9347 = vld [vmem:[#allocation14 + $0xd50] sm:$0xff]
    %v9348 = vld [vmem:[#allocation14 + $0xd58] sm:$0xff]
    %v9349 = vld [vmem:[#allocation14 + $0xd60] sm:$0xff]
    %v9350 = vld [vmem:[#allocation14 + $0xd68] sm:$0xff]
    %v9351 = vld [vmem:[#allocation14 + $0xd70] sm:$0xff]
    %v9352 = vld [vmem:[#allocation14 + $0xd78] sm:$0xff]
    %v9353 = vld [vmem:[#allocation14 + $0xd80] sm:$0xff]
    %v9354 = vld [vmem:[#allocation14 + $0xd88] sm:$0xff]
    %v9355 = vld [vmem:[#allocation14 + $0xd90] sm:$0xff]
    %v9356 = vld [vmem:[#allocation14 + $0xd98] sm:$0xff]
    %v9357 = vld [vmem:[#allocation14 + $0xda0] sm:$0xff]
    %v9358 = vld [vmem:[#allocation14 + $0xda8] sm:$0xff]
    %v9359 = vld [vmem:[#allocation14 + $0xdb0] sm:$0xff]
    %v9360 = vld [vmem:[#allocation14 + $0xdb8] sm:$0xff]
    %v9361 = vld [vmem:[#allocation14 + $0xdc0] sm:$0xff]
    %v9362 = vld [vmem:[#allocation14 + $0xdc8] sm:$0xff]
    %v9363 = vld [vmem:[#allocation14 + $0xdd0] sm:$0xff]
    %v9364 = vld [vmem:[#allocation14 + $0xdd8] sm:$0xff]
    %v9365 = vld [vmem:[#allocation14 + $0xde0] sm:$0xff]
    %v9366 = vld [vmem:[#allocation14 + $0xde8] sm:$0xff]
    %v9367 = vld [vmem:[#allocation14 + $0xdf0] sm:$0xff]
    %v9368 = vld [vmem:[#allocation14 + $0xdf8] sm:$0xff]
    %v9369 = vld [vmem:[#allocation14 + $0xe00] sm:$0xff]
    %v9370 = vld [vmem:[#allocation14 + $0xe08] sm:$0xff]
    %v9371 = vld [vmem:[#allocation14 + $0xe10] sm:$0xff]
    %v9372 = vld [vmem:[#allocation14 + $0xe18] sm:$0xff]
    %v9373 = vld [vmem:[#allocation14 + $0xe20] sm:$0xff]
    %v9374 = vld [vmem:[#allocation14 + $0xe28] sm:$0xff]
    %v9375 = vld [vmem:[#allocation14 + $0xe30] sm:$0xff]
    %v9376 = vld [vmem:[#allocation14 + $0xe38] sm:$0xff]
    %v9377 = vld [vmem:[#allocation14 + $0xe40] sm:$0xff]
    %v9378 = vld [vmem:[#allocation14 + $0xe48] sm:$0xff]
    %v9379 = vld [vmem:[#allocation14 + $0xe50] sm:$0xff]
    %v9380 = vld [vmem:[#allocation14 + $0xe58] sm:$0xff]
    %v9381 = vld [vmem:[#allocation14 + $0xe60] sm:$0xff]
    %v9382 = vld [vmem:[#allocation14 + $0xe68] sm:$0xff]
    %v9383 = vld [vmem:[#allocation14 + $0xe70] sm:$0xff]
    %v9384 = vld [vmem:[#allocation14 + $0xe78] sm:$0xff]
    %v9385 = vld [vmem:[#allocation14 + $0xe80] sm:$0xff]
    %v9386 = vld [vmem:[#allocation14 + $0xe88] sm:$0xff]
    %v9387 = vld [vmem:[#allocation14 + $0xe90] sm:$0xff]
    %v9388 = vld [vmem:[#allocation14 + $0xe98] sm:$0xff]
    %v9389 = vld [vmem:[#allocation14 + $0xea0] sm:$0xff]
    %v9390 = vld [vmem:[#allocation14 + $0xea8] sm:$0xff]
    %v9391 = vld [vmem:[#allocation14 + $0xeb0] sm:$0xff]
    %v9392 = vld [vmem:[#allocation14 + $0xeb8] sm:$0xff]
    %v9393 = vld [vmem:[#allocation14 + $0xec0] sm:$0xff]
    %v9394 = vld [vmem:[#allocation14 + $0xec8] sm:$0xff]
    %v9395 = vld [vmem:[#allocation14 + $0xed0] sm:$0xff]
    %v9396 = vld [vmem:[#allocation14 + $0xed8] sm:$0xff]
    %v9397 = vld [vmem:[#allocation14 + $0xee0] sm:$0xff]
    %v9398 = vld [vmem:[#allocation14 + $0xee8] sm:$0xff]
    %v9399 = vld [vmem:[#allocation14 + $0xef0] sm:$0xff]
    %v9400 = vld [vmem:[#allocation14 + $0xef8] sm:$0xff]
    %v9401 = vld [vmem:[#allocation14 + $0xf00] sm:$0xff]
    %v9402 = vld [vmem:[#allocation14 + $0xf08] sm:$0xff]
    %v9403 = vld [vmem:[#allocation14 + $0xf10] sm:$0xff]
    %v9404 = vld [vmem:[#allocation14 + $0xf18] sm:$0xff]
    %v9405 = vld [vmem:[#allocation14 + $0xf20] sm:$0xff]
    %v9406 = vld [vmem:[#allocation14 + $0xf28] sm:$0xff]
    %v9407 = vld [vmem:[#allocation14 + $0xf30] sm:$0xff]
    %v9408 = vld [vmem:[#allocation14 + $0xf38] sm:$0xff]
    %v9409 = vld [vmem:[#allocation14 + $0xf40] sm:$0xff]
    %v9410 = vld [vmem:[#allocation14 + $0xf48] sm:$0xff]
    %v9411 = vld [vmem:[#allocation14 + $0xf50] sm:$0xff]
    %v9412 = vld [vmem:[#allocation14 + $0xf58] sm:$0xff]
    %v9413 = vld [vmem:[#allocation14 + $0xf60] sm:$0xff]
    %v9414 = vld [vmem:[#allocation14 + $0xf68] sm:$0xff]
    %v9415 = vld [vmem:[#allocation14 + $0xf70] sm:$0xff]
    %v9416 = vld [vmem:[#allocation14 + $0xf78] sm:$0xff]
    %v9417 = vld [vmem:[#allocation14 + $0xf80] sm:$0xff]
    %v9418 = vld [vmem:[#allocation14 + $0xf88] sm:$0xff]
    %v9419 = vld [vmem:[#allocation14 + $0xf90] sm:$0xff]
    %v9420 = vld [vmem:[#allocation14 + $0xf98] sm:$0xff]
    %v9421 = vld [vmem:[#allocation14 + $0xfa0] sm:$0xff]
    %v9422 = vld [vmem:[#allocation14 + $0xfa8] sm:$0xff]
    %v9423 = vld [vmem:[#allocation14 + $0xfb0] sm:$0xff]
    %v9424 = vld [vmem:[#allocation14 + $0xfb8] sm:$0xff]
    %v9425 = vld [vmem:[#allocation14 + $0xfc0] sm:$0xff]
    %v9426 = vld [vmem:[#allocation14 + $0xfc8] sm:$0xff]
    %v9427 = vld [vmem:[#allocation14 + $0xfd0] sm:$0xff]
    %v9428 = vld [vmem:[#allocation14 + $0xfd8] sm:$0xff]
    %v9429 = vld [vmem:[#allocation14 + $0xfe0] sm:$0xff]
    %v9430 = vld [vmem:[#allocation14 + $0xfe8] sm:$0xff]
    %v9431 = vld [vmem:[#allocation14 + $0xff0] sm:$0xff]
    %v9432 = vld [vmem:[#allocation14 + $0xff8] sm:$0xff]
    %v9433 = vld [vmem:[#allocation16] sm:$0xf]
    %v9435 = vlaneseq
    %v9436 = vshrl.u32 %v9435, 7
    %v9437 = vsub.s32 0, %v9436
    %v9438 = vrot.slane %v9433, %v9437
    %v9439 = vlaneseq
    %v9440 = vshrl.u32 %v9439, 7
    %v9441 = vsub.s32 1, %v9440
    %v9442 = vrot.slane %v9433, %v9441
    %v9443 = vlaneseq
    %v9444 = vshrl.u32 %v9443, 7
    %v9445 = vsub.s32 2, %v9444
    %v9446 = vrot.slane %v9433, %v9445
    %v9447 = vlaneseq
    %v9448 = vshrl.u32 %v9447, 7
    %v9449 = vsub.s32 3, %v9448
    %v9450 = vrot.slane %v9433, %v9449
    %v9967 = vunpack.c.l.b16 %v8921
    %v9968 = vunpack.c.h.b16 %v8921
    %v9969 = vunpack.c.l.b16 %v8922
    %v9970 = vunpack.c.h.b16 %v8922
    %v9971 = vunpack.c.l.b16 %v8923
    %v9972 = vunpack.c.h.b16 %v8923
    %v9973 = vunpack.c.l.b16 %v8924
    %v9974 = vunpack.c.h.b16 %v8924
    %v9975 = vunpack.c.l.b16 %v8925
    %v9976 = vunpack.c.h.b16 %v8925
    %v9977 = vunpack.c.l.b16 %v8926
    %v9978 = vunpack.c.h.b16 %v8926
    %v9979 = vunpack.c.l.b16 %v8927
    %v9980 = vunpack.c.h.b16 %v8927
    %v9981 = vunpack.c.l.b16 %v8928
    %v9982 = vunpack.c.h.b16 %v8928
    %v9983 = vunpack.c.l.b16 %v8929
    %v9984 = vunpack.c.h.b16 %v8929
    %v9985 = vunpack.c.l.b16 %v8930
    %v9986 = vunpack.c.h.b16 %v8930
    %v9987 = vunpack.c.l.b16 %v8931
    %v9988 = vunpack.c.h.b16 %v8931
    %v9989 = vunpack.c.l.b16 %v8932
    %v9990 = vunpack.c.h.b16 %v8932
    %v9991 = vunpack.c.l.b16 %v8933
    %v9992 = vunpack.c.h.b16 %v8933
    %v9993 = vunpack.c.l.b16 %v8934
    %v9994 = vunpack.c.h.b16 %v8934
    %v9995 = vunpack.c.l.b16 %v8935
    %v9996 = vunpack.c.h.b16 %v8935
    %v9997 = vunpack.c.l.b16 %v8936
    %v9998 = vunpack.c.h.b16 %v8936
    %v9999 = vunpack.c.l.b16 %v8937
    %v10000 = vunpack.c.h.b16 %v8937
    %v10001 = vunpack.c.l.b16 %v8938
    %v10002 = vunpack.c.h.b16 %v8938
    %v10003 = vunpack.c.l.b16 %v8939
    %v10004 = vunpack.c.h.b16 %v8939
    %v10005 = vunpack.c.l.b16 %v8940
    %v10006 = vunpack.c.h.b16 %v8940
    %v10007 = vunpack.c.l.b16 %v8941
    %v10008 = vunpack.c.h.b16 %v8941
    %v10009 = vunpack.c.l.b16 %v8942
    %v10010 = vunpack.c.h.b16 %v8942
    %v10011 = vunpack.c.l.b16 %v8943
    %v10012 = vunpack.c.h.b16 %v8943
    %v10013 = vunpack.c.l.b16 %v8944
    %v10014 = vunpack.c.h.b16 %v8944
    %v10015 = vunpack.c.l.b16 %v8945
    %v10016 = vunpack.c.h.b16 %v8945
    %v10017 = vunpack.c.l.b16 %v8946
    %v10018 = vunpack.c.h.b16 %v8946
    %v10019 = vunpack.c.l.b16 %v8947
    %v10020 = vunpack.c.h.b16 %v8947
    %v10021 = vunpack.c.l.b16 %v8948
    %v10022 = vunpack.c.h.b16 %v8948
    %v10023 = vunpack.c.l.b16 %v8949
    %v10024 = vunpack.c.h.b16 %v8949
    %v10025 = vunpack.c.l.b16 %v8950
    %v10026 = vunpack.c.h.b16 %v8950
    %v10027 = vunpack.c.l.b16 %v8951
    %v10028 = vunpack.c.h.b16 %v8951
    %v10029 = vunpack.c.l.b16 %v8952
    %v10030 = vunpack.c.h.b16 %v8952
    %v10031 = vunpack.c.l.b16 %v8953
    %v10032 = vunpack.c.h.b16 %v8953
    %v10033 = vunpack.c.l.b16 %v8954
    %v10034 = vunpack.c.h.b16 %v8954
    %v10035 = vunpack.c.l.b16 %v8955
    %v10036 = vunpack.c.h.b16 %v8955
    %v10037 = vunpack.c.l.b16 %v8956
    %v10038 = vunpack.c.h.b16 %v8956
    %v10039 = vunpack.c.l.b16 %v8957
    %v10040 = vunpack.c.h.b16 %v8957
    %v10041 = vunpack.c.l.b16 %v8958
    %v10042 = vunpack.c.h.b16 %v8958
    %v10043 = vunpack.c.l.b16 %v8959
    %v10044 = vunpack.c.h.b16 %v8959
    %v10045 = vunpack.c.l.b16 %v8960
    %v10046 = vunpack.c.h.b16 %v8960
    %v10047 = vunpack.c.l.b16 %v8961
    %v10048 = vunpack.c.h.b16 %v8961
    %v10049 = vunpack.c.l.b16 %v8962
    %v10050 = vunpack.c.h.b16 %v8962
    %v10051 = vunpack.c.l.b16 %v8963
    %v10052 = vunpack.c.h.b16 %v8963
    %v10053 = vunpack.c.l.b16 %v8964
    %v10054 = vunpack.c.h.b16 %v8964
    %v10055 = vunpack.c.l.b16 %v8965
    %v10056 = vunpack.c.h.b16 %v8965
    %v10057 = vunpack.c.l.b16 %v8966
    %v10058 = vunpack.c.h.b16 %v8966
    %v10059 = vunpack.c.l.b16 %v8967
    %v10060 = vunpack.c.h.b16 %v8967
    %v10061 = vunpack.c.l.b16 %v8968
    %v10062 = vunpack.c.h.b16 %v8968
    %v10063 = vunpack.c.l.b16 %v8969
    %v10064 = vunpack.c.h.b16 %v8969
    %v10065 = vunpack.c.l.b16 %v8970
    %v10066 = vunpack.c.h.b16 %v8970
    %v10067 = vunpack.c.l.b16 %v8971
    %v10068 = vunpack.c.h.b16 %v8971
    %v10069 = vunpack.c.l.b16 %v8972
    %v10070 = vunpack.c.h.b16 %v8972
    %v10071 = vunpack.c.l.b16 %v8973
    %v10072 = vunpack.c.h.b16 %v8973
    %v10073 = vunpack.c.l.b16 %v8974
    %v10074 = vunpack.c.h.b16 %v8974
    %v10075 = vunpack.c.l.b16 %v8975
    %v10076 = vunpack.c.h.b16 %v8975
    %v10077 = vunpack.c.l.b16 %v8976
    %v10078 = vunpack.c.h.b16 %v8976
    %v10079 = vunpack.c.l.b16 %v8977
    %v10080 = vunpack.c.h.b16 %v8977
    %v10081 = vunpack.c.l.b16 %v8978
    %v10082 = vunpack.c.h.b16 %v8978
    %v10083 = vunpack.c.l.b16 %v8979
    %v10084 = vunpack.c.h.b16 %v8979
    %v10085 = vunpack.c.l.b16 %v8980
    %v10086 = vunpack.c.h.b16 %v8980
    %v10087 = vunpack.c.l.b16 %v8981
    %v10088 = vunpack.c.h.b16 %v8981
    %v10089 = vunpack.c.l.b16 %v8982
    %v10090 = vunpack.c.h.b16 %v8982
    %v10091 = vunpack.c.l.b16 %v8983
    %v10092 = vunpack.c.h.b16 %v8983
    %v10093 = vunpack.c.l.b16 %v8984
    %v10094 = vunpack.c.h.b16 %v8984
    %v10095 = vunpack.c.l.b16 %v8985
    %v10096 = vunpack.c.h.b16 %v8985
    %v10097 = vunpack.c.l.b16 %v8986
    %v10098 = vunpack.c.h.b16 %v8986
    %v10099 = vunpack.c.l.b16 %v8987
    %v10100 = vunpack.c.h.b16 %v8987
    %v10101 = vunpack.c.l.b16 %v8988
    %v10102 = vunpack.c.h.b16 %v8988
    %v10103 = vunpack.c.l.b16 %v8989
    %v10104 = vunpack.c.h.b16 %v8989
    %v10105 = vunpack.c.l.b16 %v8990
    %v10106 = vunpack.c.h.b16 %v8990
    %v10107 = vunpack.c.l.b16 %v8991
    %v10108 = vunpack.c.h.b16 %v8991
    %v10109 = vunpack.c.l.b16 %v8992
    %v10110 = vunpack.c.h.b16 %v8992
    %v10111 = vunpack.c.l.b16 %v8993
    %v10112 = vunpack.c.h.b16 %v8993
    %v10113 = vunpack.c.l.b16 %v8994
    %v10114 = vunpack.c.h.b16 %v8994
    %v10115 = vunpack.c.l.b16 %v8995
    %v10116 = vunpack.c.h.b16 %v8995
    %v10117 = vunpack.c.l.b16 %v8996
    %v10118 = vunpack.c.h.b16 %v8996
    %v10119 = vunpack.c.l.b16 %v8997
    %v10120 = vunpack.c.h.b16 %v8997
    %v10121 = vunpack.c.l.b16 %v8998
    %v10122 = vunpack.c.h.b16 %v8998
    %v10123 = vunpack.c.l.b16 %v8999
    %v10124 = vunpack.c.h.b16 %v8999
    %v10125 = vunpack.c.l.b16 %v9000
    %v10126 = vunpack.c.h.b16 %v9000
    %v10127 = vunpack.c.l.b16 %v9001
    %v10128 = vunpack.c.h.b16 %v9001
    %v10129 = vunpack.c.l.b16 %v9002
    %v10130 = vunpack.c.h.b16 %v9002
    %v10131 = vunpack.c.l.b16 %v9003
    %v10132 = vunpack.c.h.b16 %v9003
    %v10133 = vunpack.c.l.b16 %v9004
    %v10134 = vunpack.c.h.b16 %v9004
    %v10135 = vunpack.c.l.b16 %v9005
    %v10136 = vunpack.c.h.b16 %v9005
    %v10137 = vunpack.c.l.b16 %v9006
    %v10138 = vunpack.c.h.b16 %v9006
    %v10139 = vunpack.c.l.b16 %v9007
    %v10140 = vunpack.c.h.b16 %v9007
    %v10141 = vunpack.c.l.b16 %v9008
    %v10142 = vunpack.c.h.b16 %v9008
    %v10143 = vunpack.c.l.b16 %v9009
    %v10144 = vunpack.c.h.b16 %v9009
    %v10145 = vunpack.c.l.b16 %v9010
    %v10146 = vunpack.c.h.b16 %v9010
    %v10147 = vunpack.c.l.b16 %v9011
    %v10148 = vunpack.c.h.b16 %v9011
    %v10149 = vunpack.c.l.b16 %v9012
    %v10150 = vunpack.c.h.b16 %v9012
    %v10151 = vunpack.c.l.b16 %v9013
    %v10152 = vunpack.c.h.b16 %v9013
    %v10153 = vunpack.c.l.b16 %v9014
    %v10154 = vunpack.c.h.b16 %v9014
    %v10155 = vunpack.c.l.b16 %v9015
    %v10156 = vunpack.c.h.b16 %v9015
    %v10157 = vunpack.c.l.b16 %v9016
    %v10158 = vunpack.c.h.b16 %v9016
    %v10159 = vunpack.c.l.b16 %v9017
    %v10160 = vunpack.c.h.b16 %v9017
    %v10161 = vunpack.c.l.b16 %v9018
    %v10162 = vunpack.c.h.b16 %v9018
    %v10163 = vunpack.c.l.b16 %v9019
    %v10164 = vunpack.c.h.b16 %v9019
    %v10165 = vunpack.c.l.b16 %v9020
    %v10166 = vunpack.c.h.b16 %v9020
    %v10167 = vunpack.c.l.b16 %v9021
    %v10168 = vunpack.c.h.b16 %v9021
    %v10169 = vunpack.c.l.b16 %v9022
    %v10170 = vunpack.c.h.b16 %v9022
    %v10171 = vunpack.c.l.b16 %v9023
    %v10172 = vunpack.c.h.b16 %v9023
    %v10173 = vunpack.c.l.b16 %v9024
    %v10174 = vunpack.c.h.b16 %v9024
    %v10175 = vunpack.c.l.b16 %v9025
    %v10176 = vunpack.c.h.b16 %v9025
    %v10177 = vunpack.c.l.b16 %v9026
    %v10178 = vunpack.c.h.b16 %v9026
    %v10179 = vunpack.c.l.b16 %v9027
    %v10180 = vunpack.c.h.b16 %v9027
    %v10181 = vunpack.c.l.b16 %v9028
    %v10182 = vunpack.c.h.b16 %v9028
    %v10183 = vunpack.c.l.b16 %v9029
    %v10184 = vunpack.c.h.b16 %v9029
    %v10185 = vunpack.c.l.b16 %v9030
    %v10186 = vunpack.c.h.b16 %v9030
    %v10187 = vunpack.c.l.b16 %v9031
    %v10188 = vunpack.c.h.b16 %v9031
    %v10189 = vunpack.c.l.b16 %v9032
    %v10190 = vunpack.c.h.b16 %v9032
    %v10191 = vunpack.c.l.b16 %v9033
    %v10192 = vunpack.c.h.b16 %v9033
    %v10193 = vunpack.c.l.b16 %v9034
    %v10194 = vunpack.c.h.b16 %v9034
    %v10195 = vunpack.c.l.b16 %v9035
    %v10196 = vunpack.c.h.b16 %v9035
    %v10197 = vunpack.c.l.b16 %v9036
    %v10198 = vunpack.c.h.b16 %v9036
    %v10199 = vunpack.c.l.b16 %v9037
    %v10200 = vunpack.c.h.b16 %v9037
    %v10201 = vunpack.c.l.b16 %v9038
    %v10202 = vunpack.c.h.b16 %v9038
    %v10203 = vunpack.c.l.b16 %v9039
    %v10204 = vunpack.c.h.b16 %v9039
    %v10205 = vunpack.c.l.b16 %v9040
    %v10206 = vunpack.c.h.b16 %v9040
    %v10207 = vunpack.c.l.b16 %v9041
    %v10208 = vunpack.c.h.b16 %v9041
    %v10209 = vunpack.c.l.b16 %v9042
    %v10210 = vunpack.c.h.b16 %v9042
    %v10211 = vunpack.c.l.b16 %v9043
    %v10212 = vunpack.c.h.b16 %v9043
    %v10213 = vunpack.c.l.b16 %v9044
    %v10214 = vunpack.c.h.b16 %v9044
    %v10215 = vunpack.c.l.b16 %v9045
    %v10216 = vunpack.c.h.b16 %v9045
    %v10217 = vunpack.c.l.b16 %v9046
    %v10218 = vunpack.c.h.b16 %v9046
    %v10219 = vunpack.c.l.b16 %v9047
    %v10220 = vunpack.c.h.b16 %v9047
    %v10221 = vunpack.c.l.b16 %v9048
    %v10222 = vunpack.c.h.b16 %v9048
    %v10223 = vunpack.c.l.b16 %v9049
    %v10224 = vunpack.c.h.b16 %v9049
    %v10225 = vunpack.c.l.b16 %v9050
    %v10226 = vunpack.c.h.b16 %v9050
    %v10227 = vunpack.c.l.b16 %v9051
    %v10228 = vunpack.c.h.b16 %v9051
    %v10229 = vunpack.c.l.b16 %v9052
    %v10230 = vunpack.c.h.b16 %v9052
    %v10231 = vunpack.c.l.b16 %v9053
    %v10232 = vunpack.c.h.b16 %v9053
    %v10233 = vunpack.c.l.b16 %v9054
    %v10234 = vunpack.c.h.b16 %v9054
    %v10235 = vunpack.c.l.b16 %v9055
    %v10236 = vunpack.c.h.b16 %v9055
    %v10237 = vunpack.c.l.b16 %v9056
    %v10238 = vunpack.c.h.b16 %v9056
    %v10239 = vunpack.c.l.b16 %v9057
    %v10240 = vunpack.c.h.b16 %v9057
    %v10241 = vunpack.c.l.b16 %v9058
    %v10242 = vunpack.c.h.b16 %v9058
    %v10243 = vunpack.c.l.b16 %v9059
    %v10244 = vunpack.c.h.b16 %v9059
    %v10245 = vunpack.c.l.b16 %v9060
    %v10246 = vunpack.c.h.b16 %v9060
    %v10247 = vunpack.c.l.b16 %v9061
    %v10248 = vunpack.c.h.b16 %v9061
    %v10249 = vunpack.c.l.b16 %v9062
    %v10250 = vunpack.c.h.b16 %v9062
    %v10251 = vunpack.c.l.b16 %v9063
    %v10252 = vunpack.c.h.b16 %v9063
    %v10253 = vunpack.c.l.b16 %v9064
    %v10254 = vunpack.c.h.b16 %v9064
    %v10255 = vunpack.c.l.b16 %v9065
    %v10256 = vunpack.c.h.b16 %v9065
    %v10257 = vunpack.c.l.b16 %v9066
    %v10258 = vunpack.c.h.b16 %v9066
    %v10259 = vunpack.c.l.b16 %v9067
    %v10260 = vunpack.c.h.b16 %v9067
    %v10261 = vunpack.c.l.b16 %v9068
    %v10262 = vunpack.c.h.b16 %v9068
    %v10263 = vunpack.c.l.b16 %v9069
    %v10264 = vunpack.c.h.b16 %v9069
    %v10265 = vunpack.c.l.b16 %v9070
    %v10266 = vunpack.c.h.b16 %v9070
    %v10267 = vunpack.c.l.b16 %v9071
    %v10268 = vunpack.c.h.b16 %v9071
    %v10269 = vunpack.c.l.b16 %v9072
    %v10270 = vunpack.c.h.b16 %v9072
    %v10271 = vunpack.c.l.b16 %v9073
    %v10272 = vunpack.c.h.b16 %v9073
    %v10273 = vunpack.c.l.b16 %v9074
    %v10274 = vunpack.c.h.b16 %v9074
    %v10275 = vunpack.c.l.b16 %v9075
    %v10276 = vunpack.c.h.b16 %v9075
    %v10277 = vunpack.c.l.b16 %v9076
    %v10278 = vunpack.c.h.b16 %v9076
    %v10279 = vunpack.c.l.b16 %v9077
    %v10280 = vunpack.c.h.b16 %v9077
    %v10281 = vunpack.c.l.b16 %v9078
    %v10282 = vunpack.c.h.b16 %v9078
    %v10283 = vunpack.c.l.b16 %v9079
    %v10284 = vunpack.c.h.b16 %v9079
    %v10285 = vunpack.c.l.b16 %v9080
    %v10286 = vunpack.c.h.b16 %v9080
    %v10287 = vunpack.c.l.b16 %v9081
    %v10288 = vunpack.c.h.b16 %v9081
    %v10289 = vunpack.c.l.b16 %v9082
    %v10290 = vunpack.c.h.b16 %v9082
    %v10291 = vunpack.c.l.b16 %v9083
    %v10292 = vunpack.c.h.b16 %v9083
    %v10293 = vunpack.c.l.b16 %v9084
    %v10294 = vunpack.c.h.b16 %v9084
    %v10295 = vunpack.c.l.b16 %v9085
    %v10296 = vunpack.c.h.b16 %v9085
    %v10297 = vunpack.c.l.b16 %v9086
    %v10298 = vunpack.c.h.b16 %v9086
    %v10299 = vunpack.c.l.b16 %v9087
    %v10300 = vunpack.c.h.b16 %v9087
    %v10301 = vunpack.c.l.b16 %v9088
    %v10302 = vunpack.c.h.b16 %v9088
    %v10303 = vunpack.c.l.b16 %v9089
    %v10304 = vunpack.c.h.b16 %v9089
    %v10305 = vunpack.c.l.b16 %v9090
    %v10306 = vunpack.c.h.b16 %v9090
    %v10307 = vunpack.c.l.b16 %v9091
    %v10308 = vunpack.c.h.b16 %v9091
    %v10309 = vunpack.c.l.b16 %v9092
    %v10310 = vunpack.c.h.b16 %v9092
    %v10311 = vunpack.c.l.b16 %v9093
    %v10312 = vunpack.c.h.b16 %v9093
    %v10313 = vunpack.c.l.b16 %v9094
    %v10314 = vunpack.c.h.b16 %v9094
    %v10315 = vunpack.c.l.b16 %v9095
    %v10316 = vunpack.c.h.b16 %v9095
    %v10317 = vunpack.c.l.b16 %v9096
    %v10318 = vunpack.c.h.b16 %v9096
    %v10319 = vunpack.c.l.b16 %v9097
    %v10320 = vunpack.c.h.b16 %v9097
    %v10321 = vunpack.c.l.b16 %v9098
    %v10322 = vunpack.c.h.b16 %v9098
    %v10323 = vunpack.c.l.b16 %v9099
    %v10324 = vunpack.c.h.b16 %v9099
    %v10325 = vunpack.c.l.b16 %v9100
    %v10326 = vunpack.c.h.b16 %v9100
    %v10327 = vunpack.c.l.b16 %v9101
    %v10328 = vunpack.c.h.b16 %v9101
    %v10329 = vunpack.c.l.b16 %v9102
    %v10330 = vunpack.c.h.b16 %v9102
    %v10331 = vunpack.c.l.b16 %v9103
    %v10332 = vunpack.c.h.b16 %v9103
    %v10333 = vunpack.c.l.b16 %v9104
    %v10334 = vunpack.c.h.b16 %v9104
    %v10335 = vunpack.c.l.b16 %v9105
    %v10336 = vunpack.c.h.b16 %v9105
    %v10337 = vunpack.c.l.b16 %v9106
    %v10338 = vunpack.c.h.b16 %v9106
    %v10339 = vunpack.c.l.b16 %v9107
    %v10340 = vunpack.c.h.b16 %v9107
    %v10341 = vunpack.c.l.b16 %v9108
    %v10342 = vunpack.c.h.b16 %v9108
    %v10343 = vunpack.c.l.b16 %v9109
    %v10344 = vunpack.c.h.b16 %v9109
    %v10345 = vunpack.c.l.b16 %v9110
    %v10346 = vunpack.c.h.b16 %v9110
    %v10347 = vunpack.c.l.b16 %v9111
    %v10348 = vunpack.c.h.b16 %v9111
    %v10349 = vunpack.c.l.b16 %v9112
    %v10350 = vunpack.c.h.b16 %v9112
    %v10351 = vunpack.c.l.b16 %v9113
    %v10352 = vunpack.c.h.b16 %v9113
    %v10353 = vunpack.c.l.b16 %v9114
    %v10354 = vunpack.c.h.b16 %v9114
    %v10355 = vunpack.c.l.b16 %v9115
    %v10356 = vunpack.c.h.b16 %v9115
    %v10357 = vunpack.c.l.b16 %v9116
    %v10358 = vunpack.c.h.b16 %v9116
    %v10359 = vunpack.c.l.b16 %v9117
    %v10360 = vunpack.c.h.b16 %v9117
    %v10361 = vunpack.c.l.b16 %v9118
    %v10362 = vunpack.c.h.b16 %v9118
    %v10363 = vunpack.c.l.b16 %v9119
    %v10364 = vunpack.c.h.b16 %v9119
    %v10365 = vunpack.c.l.b16 %v9120
    %v10366 = vunpack.c.h.b16 %v9120
    %v10367 = vunpack.c.l.b16 %v9121
    %v10368 = vunpack.c.h.b16 %v9121
    %v10369 = vunpack.c.l.b16 %v9122
    %v10370 = vunpack.c.h.b16 %v9122
    %v10371 = vunpack.c.l.b16 %v9123
    %v10372 = vunpack.c.h.b16 %v9123
    %v10373 = vunpack.c.l.b16 %v9124
    %v10374 = vunpack.c.h.b16 %v9124
    %v10375 = vunpack.c.l.b16 %v9125
    %v10376 = vunpack.c.h.b16 %v9125
    %v10377 = vunpack.c.l.b16 %v9126
    %v10378 = vunpack.c.h.b16 %v9126
    %v10379 = vunpack.c.l.b16 %v9127
    %v10380 = vunpack.c.h.b16 %v9127
    %v10381 = vunpack.c.l.b16 %v9128
    %v10382 = vunpack.c.h.b16 %v9128
    %v10383 = vunpack.c.l.b16 %v9129
    %v10384 = vunpack.c.h.b16 %v9129
    %v10385 = vunpack.c.l.b16 %v9130
    %v10386 = vunpack.c.h.b16 %v9130
    %v10387 = vunpack.c.l.b16 %v9131
    %v10388 = vunpack.c.h.b16 %v9131
    %v10389 = vunpack.c.l.b16 %v9132
    %v10390 = vunpack.c.h.b16 %v9132
    %v10391 = vunpack.c.l.b16 %v9133
    %v10392 = vunpack.c.h.b16 %v9133
    %v10393 = vunpack.c.l.b16 %v9134
    %v10394 = vunpack.c.h.b16 %v9134
    %v10395 = vunpack.c.l.b16 %v9135
    %v10396 = vunpack.c.h.b16 %v9135
    %v10397 = vunpack.c.l.b16 %v9136
    %v10398 = vunpack.c.h.b16 %v9136
    %v10399 = vunpack.c.l.b16 %v9137
    %v10400 = vunpack.c.h.b16 %v9137
    %v10401 = vunpack.c.l.b16 %v9138
    %v10402 = vunpack.c.h.b16 %v9138
    %v10403 = vunpack.c.l.b16 %v9139
    %v10404 = vunpack.c.h.b16 %v9139
    %v10405 = vunpack.c.l.b16 %v9140
    %v10406 = vunpack.c.h.b16 %v9140
    %v10407 = vunpack.c.l.b16 %v9141
    %v10408 = vunpack.c.h.b16 %v9141
    %v10409 = vunpack.c.l.b16 %v9142
    %v10410 = vunpack.c.h.b16 %v9142
    %v10411 = vunpack.c.l.b16 %v9143
    %v10412 = vunpack.c.h.b16 %v9143
    %v10413 = vunpack.c.l.b16 %v9144
    %v10414 = vunpack.c.h.b16 %v9144
    %v10415 = vunpack.c.l.b16 %v9145
    %v10416 = vunpack.c.h.b16 %v9145
    %v10417 = vunpack.c.l.b16 %v9146
    %v10418 = vunpack.c.h.b16 %v9146
    %v10419 = vunpack.c.l.b16 %v9147
    %v10420 = vunpack.c.h.b16 %v9147
    %v10421 = vunpack.c.l.b16 %v9148
    %v10422 = vunpack.c.h.b16 %v9148
    %v10423 = vunpack.c.l.b16 %v9149
    %v10424 = vunpack.c.h.b16 %v9149
    %v10425 = vunpack.c.l.b16 %v9150
    %v10426 = vunpack.c.h.b16 %v9150
    %v10427 = vunpack.c.l.b16 %v9151
    %v10428 = vunpack.c.h.b16 %v9151
    %v10429 = vunpack.c.l.b16 %v9152
    %v10430 = vunpack.c.h.b16 %v9152
    %v10431 = vunpack.c.l.b16 %v9153
    %v10432 = vunpack.c.h.b16 %v9153
    %v10433 = vunpack.c.l.b16 %v9154
    %v10434 = vunpack.c.h.b16 %v9154
    %v10435 = vunpack.c.l.b16 %v9155
    %v10436 = vunpack.c.h.b16 %v9155
    %v10437 = vunpack.c.l.b16 %v9156
    %v10438 = vunpack.c.h.b16 %v9156
    %v10439 = vunpack.c.l.b16 %v9157
    %v10440 = vunpack.c.h.b16 %v9157
    %v10441 = vunpack.c.l.b16 %v9158
    %v10442 = vunpack.c.h.b16 %v9158
    %v10443 = vunpack.c.l.b16 %v9159
    %v10444 = vunpack.c.h.b16 %v9159
    %v10445 = vunpack.c.l.b16 %v9160
    %v10446 = vunpack.c.h.b16 %v9160
    %v10447 = vunpack.c.l.b16 %v9161
    %v10448 = vunpack.c.h.b16 %v9161
    %v10449 = vunpack.c.l.b16 %v9162
    %v10450 = vunpack.c.h.b16 %v9162
    %v10451 = vunpack.c.l.b16 %v9163
    %v10452 = vunpack.c.h.b16 %v9163
    %v10453 = vunpack.c.l.b16 %v9164
    %v10454 = vunpack.c.h.b16 %v9164
    %v10455 = vunpack.c.l.b16 %v9165
    %v10456 = vunpack.c.h.b16 %v9165
    %v10457 = vunpack.c.l.b16 %v9166
    %v10458 = vunpack.c.h.b16 %v9166
    %v10459 = vunpack.c.l.b16 %v9167
    %v10460 = vunpack.c.h.b16 %v9167
    %v10461 = vunpack.c.l.b16 %v9168
    %v10462 = vunpack.c.h.b16 %v9168
    %v10463 = vunpack.c.l.b16 %v9169
    %v10464 = vunpack.c.h.b16 %v9169
    %v10465 = vunpack.c.l.b16 %v9170
    %v10466 = vunpack.c.h.b16 %v9170
    %v10467 = vunpack.c.l.b16 %v9171
    %v10468 = vunpack.c.h.b16 %v9171
    %v10469 = vunpack.c.l.b16 %v9172
    %v10470 = vunpack.c.h.b16 %v9172
    %v10471 = vunpack.c.l.b16 %v9173
    %v10472 = vunpack.c.h.b16 %v9173
    %v10473 = vunpack.c.l.b16 %v9174
    %v10474 = vunpack.c.h.b16 %v9174
    %v10475 = vunpack.c.l.b16 %v9175
    %v10476 = vunpack.c.h.b16 %v9175
    %v10477 = vunpack.c.l.b16 %v9176
    %v10478 = vunpack.c.h.b16 %v9176
    %v10479 = vunpack.c.l.b16 %v9177
    %v10480 = vunpack.c.h.b16 %v9177
    %v10481 = vunpack.c.l.b16 %v9178
    %v10482 = vunpack.c.h.b16 %v9178
    %v10483 = vunpack.c.l.b16 %v9179
    %v10484 = vunpack.c.h.b16 %v9179
    %v10485 = vunpack.c.l.b16 %v9180
    %v10486 = vunpack.c.h.b16 %v9180
    %v10487 = vunpack.c.l.b16 %v9181
    %v10488 = vunpack.c.h.b16 %v9181
    %v10489 = vunpack.c.l.b16 %v9182
    %v10490 = vunpack.c.h.b16 %v9182
    %v10491 = vunpack.c.l.b16 %v9183
    %v10492 = vunpack.c.h.b16 %v9183
    %v10493 = vunpack.c.l.b16 %v9184
    %v10494 = vunpack.c.h.b16 %v9184
    %v10495 = vunpack.c.l.b16 %v9185
    %v10496 = vunpack.c.h.b16 %v9185
    %v10497 = vunpack.c.l.b16 %v9186
    %v10498 = vunpack.c.h.b16 %v9186
    %v10499 = vunpack.c.l.b16 %v9187
    %v10500 = vunpack.c.h.b16 %v9187
    %v10501 = vunpack.c.l.b16 %v9188
    %v10502 = vunpack.c.h.b16 %v9188
    %v10503 = vunpack.c.l.b16 %v9189
    %v10504 = vunpack.c.h.b16 %v9189
    %v10505 = vunpack.c.l.b16 %v9190
    %v10506 = vunpack.c.h.b16 %v9190
    %v10507 = vunpack.c.l.b16 %v9191
    %v10508 = vunpack.c.h.b16 %v9191
    %v10509 = vunpack.c.l.b16 %v9192
    %v10510 = vunpack.c.h.b16 %v9192
    %v10511 = vunpack.c.l.b16 %v9193
    %v10512 = vunpack.c.h.b16 %v9193
    %v10513 = vunpack.c.l.b16 %v9194
    %v10514 = vunpack.c.h.b16 %v9194
    %v10515 = vunpack.c.l.b16 %v9195
    %v10516 = vunpack.c.h.b16 %v9195
    %v10517 = vunpack.c.l.b16 %v9196
    %v10518 = vunpack.c.h.b16 %v9196
    %v10519 = vunpack.c.l.b16 %v9197
    %v10520 = vunpack.c.h.b16 %v9197
    %v10521 = vunpack.c.l.b16 %v9198
    %v10522 = vunpack.c.h.b16 %v9198
    %v10523 = vunpack.c.l.b16 %v9199
    %v10524 = vunpack.c.h.b16 %v9199
    %v10525 = vunpack.c.l.b16 %v9200
    %v10526 = vunpack.c.h.b16 %v9200
    %v10527 = vunpack.c.l.b16 %v9201
    %v10528 = vunpack.c.h.b16 %v9201
    %v10529 = vunpack.c.l.b16 %v9202
    %v10530 = vunpack.c.h.b16 %v9202
    %v10531 = vunpack.c.l.b16 %v9203
    %v10532 = vunpack.c.h.b16 %v9203
    %v10533 = vunpack.c.l.b16 %v9204
    %v10534 = vunpack.c.h.b16 %v9204
    %v10535 = vunpack.c.l.b16 %v9205
    %v10536 = vunpack.c.h.b16 %v9205
    %v10537 = vunpack.c.l.b16 %v9206
    %v10538 = vunpack.c.h.b16 %v9206
    %v10539 = vunpack.c.l.b16 %v9207
    %v10540 = vunpack.c.h.b16 %v9207
    %v10541 = vunpack.c.l.b16 %v9208
    %v10542 = vunpack.c.h.b16 %v9208
    %v10543 = vunpack.c.l.b16 %v9209
    %v10544 = vunpack.c.h.b16 %v9209
    %v10545 = vunpack.c.l.b16 %v9210
    %v10546 = vunpack.c.h.b16 %v9210
    %v10547 = vunpack.c.l.b16 %v9211
    %v10548 = vunpack.c.h.b16 %v9211
    %v10549 = vunpack.c.l.b16 %v9212
    %v10550 = vunpack.c.h.b16 %v9212
    %v10551 = vunpack.c.l.b16 %v9213
    %v10552 = vunpack.c.h.b16 %v9213
    %v10553 = vunpack.c.l.b16 %v9214
    %v10554 = vunpack.c.h.b16 %v9214
    %v10555 = vunpack.c.l.b16 %v9215
    %v10556 = vunpack.c.h.b16 %v9215
    %v10557 = vunpack.c.l.b16 %v9216
    %v10558 = vunpack.c.h.b16 %v9216
    %v10559 = vunpack.c.l.b16 %v9217
    %v10560 = vunpack.c.h.b16 %v9217
    %v10561 = vunpack.c.l.b16 %v9218
    %v10562 = vunpack.c.h.b16 %v9218
    %v10563 = vunpack.c.l.b16 %v9219
    %v10564 = vunpack.c.h.b16 %v9219
    %v10565 = vunpack.c.l.b16 %v9220
    %v10566 = vunpack.c.h.b16 %v9220
    %v10567 = vunpack.c.l.b16 %v9221
    %v10568 = vunpack.c.h.b16 %v9221
    %v10569 = vunpack.c.l.b16 %v9222
    %v10570 = vunpack.c.h.b16 %v9222
    %v10571 = vunpack.c.l.b16 %v9223
    %v10572 = vunpack.c.h.b16 %v9223
    %v10573 = vunpack.c.l.b16 %v9224
    %v10574 = vunpack.c.h.b16 %v9224
    %v10575 = vunpack.c.l.b16 %v9225
    %v10576 = vunpack.c.h.b16 %v9225
    %v10577 = vunpack.c.l.b16 %v9226
    %v10578 = vunpack.c.h.b16 %v9226
    %v10579 = vunpack.c.l.b16 %v9227
    %v10580 = vunpack.c.h.b16 %v9227
    %v10581 = vunpack.c.l.b16 %v9228
    %v10582 = vunpack.c.h.b16 %v9228
    %v10583 = vunpack.c.l.b16 %v9229
    %v10584 = vunpack.c.h.b16 %v9229
    %v10585 = vunpack.c.l.b16 %v9230
    %v10586 = vunpack.c.h.b16 %v9230
    %v10587 = vunpack.c.l.b16 %v9231
    %v10588 = vunpack.c.h.b16 %v9231
    %v10589 = vunpack.c.l.b16 %v9232
    %v10590 = vunpack.c.h.b16 %v9232
    %v10591 = vunpack.c.l.b16 %v9233
    %v10592 = vunpack.c.h.b16 %v9233
    %v10593 = vunpack.c.l.b16 %v9234
    %v10594 = vunpack.c.h.b16 %v9234
    %v10595 = vunpack.c.l.b16 %v9235
    %v10596 = vunpack.c.h.b16 %v9235
    %v10597 = vunpack.c.l.b16 %v9236
    %v10598 = vunpack.c.h.b16 %v9236
    %v10599 = vunpack.c.l.b16 %v9237
    %v10600 = vunpack.c.h.b16 %v9237
    %v10601 = vunpack.c.l.b16 %v9238
    %v10602 = vunpack.c.h.b16 %v9238
    %v10603 = vunpack.c.l.b16 %v9239
    %v10604 = vunpack.c.h.b16 %v9239
    %v10605 = vunpack.c.l.b16 %v9240
    %v10606 = vunpack.c.h.b16 %v9240
    %v10607 = vunpack.c.l.b16 %v9241
    %v10608 = vunpack.c.h.b16 %v9241
    %v10609 = vunpack.c.l.b16 %v9242
    %v10610 = vunpack.c.h.b16 %v9242
    %v10611 = vunpack.c.l.b16 %v9243
    %v10612 = vunpack.c.h.b16 %v9243
    %v10613 = vunpack.c.l.b16 %v9244
    %v10614 = vunpack.c.h.b16 %v9244
    %v10615 = vunpack.c.l.b16 %v9245
    %v10616 = vunpack.c.h.b16 %v9245
    %v10617 = vunpack.c.l.b16 %v9246
    %v10618 = vunpack.c.h.b16 %v9246
    %v10619 = vunpack.c.l.b16 %v9247
    %v10620 = vunpack.c.h.b16 %v9247
    %v10621 = vunpack.c.l.b16 %v9248
    %v10622 = vunpack.c.h.b16 %v9248
    %v10623 = vunpack.c.l.b16 %v9249
    %v10624 = vunpack.c.h.b16 %v9249
    %v10625 = vunpack.c.l.b16 %v9250
    %v10626 = vunpack.c.h.b16 %v9250
    %v10627 = vunpack.c.l.b16 %v9251
    %v10628 = vunpack.c.h.b16 %v9251
    %v10629 = vunpack.c.l.b16 %v9252
    %v10630 = vunpack.c.h.b16 %v9252
    %v10631 = vunpack.c.l.b16 %v9253
    %v10632 = vunpack.c.h.b16 %v9253
    %v10633 = vunpack.c.l.b16 %v9254
    %v10634 = vunpack.c.h.b16 %v9254
    %v10635 = vunpack.c.l.b16 %v9255
    %v10636 = vunpack.c.h.b16 %v9255
    %v10637 = vunpack.c.l.b16 %v9256
    %v10638 = vunpack.c.h.b16 %v9256
    %v10639 = vunpack.c.l.b16 %v9257
    %v10640 = vunpack.c.h.b16 %v9257
    %v10641 = vunpack.c.l.b16 %v9258
    %v10642 = vunpack.c.h.b16 %v9258
    %v10643 = vunpack.c.l.b16 %v9259
    %v10644 = vunpack.c.h.b16 %v9259
    %v10645 = vunpack.c.l.b16 %v9260
    %v10646 = vunpack.c.h.b16 %v9260
    %v10647 = vunpack.c.l.b16 %v9261
    %v10648 = vunpack.c.h.b16 %v9261
    %v10649 = vunpack.c.l.b16 %v9262
    %v10650 = vunpack.c.h.b16 %v9262
    %v10651 = vunpack.c.l.b16 %v9263
    %v10652 = vunpack.c.h.b16 %v9263
    %v10653 = vunpack.c.l.b16 %v9264
    %v10654 = vunpack.c.h.b16 %v9264
    %v10655 = vunpack.c.l.b16 %v9265
    %v10656 = vunpack.c.h.b16 %v9265
    %v10657 = vunpack.c.l.b16 %v9266
    %v10658 = vunpack.c.h.b16 %v9266
    %v10659 = vunpack.c.l.b16 %v9267
    %v10660 = vunpack.c.h.b16 %v9267
    %v10661 = vunpack.c.l.b16 %v9268
    %v10662 = vunpack.c.h.b16 %v9268
    %v10663 = vunpack.c.l.b16 %v9269
    %v10664 = vunpack.c.h.b16 %v9269
    %v10665 = vunpack.c.l.b16 %v9270
    %v10666 = vunpack.c.h.b16 %v9270
    %v10667 = vunpack.c.l.b16 %v9271
    %v10668 = vunpack.c.h.b16 %v9271
    %v10669 = vunpack.c.l.b16 %v9272
    %v10670 = vunpack.c.h.b16 %v9272
    %v10671 = vunpack.c.l.b16 %v9273
    %v10672 = vunpack.c.h.b16 %v9273
    %v10673 = vunpack.c.l.b16 %v9274
    %v10674 = vunpack.c.h.b16 %v9274
    %v10675 = vunpack.c.l.b16 %v9275
    %v10676 = vunpack.c.h.b16 %v9275
    %v10677 = vunpack.c.l.b16 %v9276
    %v10678 = vunpack.c.h.b16 %v9276
    %v10679 = vunpack.c.l.b16 %v9277
    %v10680 = vunpack.c.h.b16 %v9277
    %v10681 = vunpack.c.l.b16 %v9278
    %v10682 = vunpack.c.h.b16 %v9278
    %v10683 = vunpack.c.l.b16 %v9279
    %v10684 = vunpack.c.h.b16 %v9279
    %v10685 = vunpack.c.l.b16 %v9280
    %v10686 = vunpack.c.h.b16 %v9280
    %v10687 = vunpack.c.l.b16 %v9281
    %v10688 = vunpack.c.h.b16 %v9281
    %v10689 = vunpack.c.l.b16 %v9282
    %v10690 = vunpack.c.h.b16 %v9282
    %v10691 = vunpack.c.l.b16 %v9283
    %v10692 = vunpack.c.h.b16 %v9283
    %v10693 = vunpack.c.l.b16 %v9284
    %v10694 = vunpack.c.h.b16 %v9284
    %v10695 = vunpack.c.l.b16 %v9285
    %v10696 = vunpack.c.h.b16 %v9285
    %v10697 = vunpack.c.l.b16 %v9286
    %v10698 = vunpack.c.h.b16 %v9286
    %v10699 = vunpack.c.l.b16 %v9287
    %v10700 = vunpack.c.h.b16 %v9287
    %v10701 = vunpack.c.l.b16 %v9288
    %v10702 = vunpack.c.h.b16 %v9288
    %v10703 = vunpack.c.l.b16 %v9289
    %v10704 = vunpack.c.h.b16 %v9289
    %v10705 = vunpack.c.l.b16 %v9290
    %v10706 = vunpack.c.h.b16 %v9290
    %v10707 = vunpack.c.l.b16 %v9291
    %v10708 = vunpack.c.h.b16 %v9291
    %v10709 = vunpack.c.l.b16 %v9292
    %v10710 = vunpack.c.h.b16 %v9292
    %v10711 = vunpack.c.l.b16 %v9293
    %v10712 = vunpack.c.h.b16 %v9293
    %v10713 = vunpack.c.l.b16 %v9294
    %v10714 = vunpack.c.h.b16 %v9294
    %v10715 = vunpack.c.l.b16 %v9295
    %v10716 = vunpack.c.h.b16 %v9295
    %v10717 = vunpack.c.l.b16 %v9296
    %v10718 = vunpack.c.h.b16 %v9296
    %v10719 = vunpack.c.l.b16 %v9297
    %v10720 = vunpack.c.h.b16 %v9297
    %v10721 = vunpack.c.l.b16 %v9298
    %v10722 = vunpack.c.h.b16 %v9298
    %v10723 = vunpack.c.l.b16 %v9299
    %v10724 = vunpack.c.h.b16 %v9299
    %v10725 = vunpack.c.l.b16 %v9300
    %v10726 = vunpack.c.h.b16 %v9300
    %v10727 = vunpack.c.l.b16 %v9301
    %v10728 = vunpack.c.h.b16 %v9301
    %v10729 = vunpack.c.l.b16 %v9302
    %v10730 = vunpack.c.h.b16 %v9302
    %v10731 = vunpack.c.l.b16 %v9303
    %v10732 = vunpack.c.h.b16 %v9303
    %v10733 = vunpack.c.l.b16 %v9304
    %v10734 = vunpack.c.h.b16 %v9304
    %v10735 = vunpack.c.l.b16 %v9305
    %v10736 = vunpack.c.h.b16 %v9305
    %v10737 = vunpack.c.l.b16 %v9306
    %v10738 = vunpack.c.h.b16 %v9306
    %v10739 = vunpack.c.l.b16 %v9307
    %v10740 = vunpack.c.h.b16 %v9307
    %v10741 = vunpack.c.l.b16 %v9308
    %v10742 = vunpack.c.h.b16 %v9308
    %v10743 = vunpack.c.l.b16 %v9309
    %v10744 = vunpack.c.h.b16 %v9309
    %v10745 = vunpack.c.l.b16 %v9310
    %v10746 = vunpack.c.h.b16 %v9310
    %v10747 = vunpack.c.l.b16 %v9311
    %v10748 = vunpack.c.h.b16 %v9311
    %v10749 = vunpack.c.l.b16 %v9312
    %v10750 = vunpack.c.h.b16 %v9312
    %v10751 = vunpack.c.l.b16 %v9313
    %v10752 = vunpack.c.h.b16 %v9313
    %v10753 = vunpack.c.l.b16 %v9314
    %v10754 = vunpack.c.h.b16 %v9314
    %v10755 = vunpack.c.l.b16 %v9315
    %v10756 = vunpack.c.h.b16 %v9315
    %v10757 = vunpack.c.l.b16 %v9316
    %v10758 = vunpack.c.h.b16 %v9316
    %v10759 = vunpack.c.l.b16 %v9317
    %v10760 = vunpack.c.h.b16 %v9317
    %v10761 = vunpack.c.l.b16 %v9318
    %v10762 = vunpack.c.h.b16 %v9318
    %v10763 = vunpack.c.l.b16 %v9319
    %v10764 = vunpack.c.h.b16 %v9319
    %v10765 = vunpack.c.l.b16 %v9320
    %v10766 = vunpack.c.h.b16 %v9320
    %v10767 = vunpack.c.l.b16 %v9321
    %v10768 = vunpack.c.h.b16 %v9321
    %v10769 = vunpack.c.l.b16 %v9322
    %v10770 = vunpack.c.h.b16 %v9322
    %v10771 = vunpack.c.l.b16 %v9323
    %v10772 = vunpack.c.h.b16 %v9323
    %v10773 = vunpack.c.l.b16 %v9324
    %v10774 = vunpack.c.h.b16 %v9324
    %v10775 = vunpack.c.l.b16 %v9325
    %v10776 = vunpack.c.h.b16 %v9325
    %v10777 = vunpack.c.l.b16 %v9326
    %v10778 = vunpack.c.h.b16 %v9326
    %v10779 = vunpack.c.l.b16 %v9327
    %v10780 = vunpack.c.h.b16 %v9327
    %v10781 = vunpack.c.l.b16 %v9328
    %v10782 = vunpack.c.h.b16 %v9328
    %v10783 = vunpack.c.l.b16 %v9329
    %v10784 = vunpack.c.h.b16 %v9329
    %v10785 = vunpack.c.l.b16 %v9330
    %v10786 = vunpack.c.h.b16 %v9330
    %v10787 = vunpack.c.l.b16 %v9331
    %v10788 = vunpack.c.h.b16 %v9331
    %v10789 = vunpack.c.l.b16 %v9332
    %v10790 = vunpack.c.h.b16 %v9332
    %v10791 = vunpack.c.l.b16 %v9333
    %v10792 = vunpack.c.h.b16 %v9333
    %v10793 = vunpack.c.l.b16 %v9334
    %v10794 = vunpack.c.h.b16 %v9334
    %v10795 = vunpack.c.l.b16 %v9335
    %v10796 = vunpack.c.h.b16 %v9335
    %v10797 = vunpack.c.l.b16 %v9336
    %v10798 = vunpack.c.h.b16 %v9336
    %v10799 = vunpack.c.l.b16 %v9337
    %v10800 = vunpack.c.h.b16 %v9337
    %v10801 = vunpack.c.l.b16 %v9338
    %v10802 = vunpack.c.h.b16 %v9338
    %v10803 = vunpack.c.l.b16 %v9339
    %v10804 = vunpack.c.h.b16 %v9339
    %v10805 = vunpack.c.l.b16 %v9340
    %v10806 = vunpack.c.h.b16 %v9340
    %v10807 = vunpack.c.l.b16 %v9341
    %v10808 = vunpack.c.h.b16 %v9341
    %v10809 = vunpack.c.l.b16 %v9342
    %v10810 = vunpack.c.h.b16 %v9342
    %v10811 = vunpack.c.l.b16 %v9343
    %v10812 = vunpack.c.h.b16 %v9343
    %v10813 = vunpack.c.l.b16 %v9344
    %v10814 = vunpack.c.h.b16 %v9344
    %v10815 = vunpack.c.l.b16 %v9345
    %v10816 = vunpack.c.h.b16 %v9345
    %v10817 = vunpack.c.l.b16 %v9346
    %v10818 = vunpack.c.h.b16 %v9346
    %v10819 = vunpack.c.l.b16 %v9347
    %v10820 = vunpack.c.h.b16 %v9347
    %v10821 = vunpack.c.l.b16 %v9348
    %v10822 = vunpack.c.h.b16 %v9348
    %v10823 = vunpack.c.l.b16 %v9349
    %v10824 = vunpack.c.h.b16 %v9349
    %v10825 = vunpack.c.l.b16 %v9350
    %v10826 = vunpack.c.h.b16 %v9350
    %v10827 = vunpack.c.l.b16 %v9351
    %v10828 = vunpack.c.h.b16 %v9351
    %v10829 = vunpack.c.l.b16 %v9352
    %v10830 = vunpack.c.h.b16 %v9352
    %v10831 = vunpack.c.l.b16 %v9353
    %v10832 = vunpack.c.h.b16 %v9353
    %v10833 = vunpack.c.l.b16 %v9354
    %v10834 = vunpack.c.h.b16 %v9354
    %v10835 = vunpack.c.l.b16 %v9355
    %v10836 = vunpack.c.h.b16 %v9355
    %v10837 = vunpack.c.l.b16 %v9356
    %v10838 = vunpack.c.h.b16 %v9356
    %v10839 = vunpack.c.l.b16 %v9357
    %v10840 = vunpack.c.h.b16 %v9357
    %v10841 = vunpack.c.l.b16 %v9358
    %v10842 = vunpack.c.h.b16 %v9358
    %v10843 = vunpack.c.l.b16 %v9359
    %v10844 = vunpack.c.h.b16 %v9359
    %v10845 = vunpack.c.l.b16 %v9360
    %v10846 = vunpack.c.h.b16 %v9360
    %v10847 = vunpack.c.l.b16 %v9361
    %v10848 = vunpack.c.h.b16 %v9361
    %v10849 = vunpack.c.l.b16 %v9362
    %v10850 = vunpack.c.h.b16 %v9362
    %v10851 = vunpack.c.l.b16 %v9363
    %v10852 = vunpack.c.h.b16 %v9363
    %v10853 = vunpack.c.l.b16 %v9364
    %v10854 = vunpack.c.h.b16 %v9364
    %v10855 = vunpack.c.l.b16 %v9365
    %v10856 = vunpack.c.h.b16 %v9365
    %v10857 = vunpack.c.l.b16 %v9366
    %v10858 = vunpack.c.h.b16 %v9366
    %v10859 = vunpack.c.l.b16 %v9367
    %v10860 = vunpack.c.h.b16 %v9367
    %v10861 = vunpack.c.l.b16 %v9368
    %v10862 = vunpack.c.h.b16 %v9368
    %v10863 = vunpack.c.l.b16 %v9369
    %v10864 = vunpack.c.h.b16 %v9369
    %v10865 = vunpack.c.l.b16 %v9370
    %v10866 = vunpack.c.h.b16 %v9370
    %v10867 = vunpack.c.l.b16 %v9371
    %v10868 = vunpack.c.h.b16 %v9371
    %v10869 = vunpack.c.l.b16 %v9372
    %v10870 = vunpack.c.h.b16 %v9372
    %v10871 = vunpack.c.l.b16 %v9373
    %v10872 = vunpack.c.h.b16 %v9373
    %v10873 = vunpack.c.l.b16 %v9374
    %v10874 = vunpack.c.h.b16 %v9374
    %v10875 = vunpack.c.l.b16 %v9375
    %v10876 = vunpack.c.h.b16 %v9375
    %v10877 = vunpack.c.l.b16 %v9376
    %v10878 = vunpack.c.h.b16 %v9376
    %v10879 = vunpack.c.l.b16 %v9377
    %v10880 = vunpack.c.h.b16 %v9377
    %v10881 = vunpack.c.l.b16 %v9378
    %v10882 = vunpack.c.h.b16 %v9378
    %v10883 = vunpack.c.l.b16 %v9379
    %v10884 = vunpack.c.h.b16 %v9379
    %v10885 = vunpack.c.l.b16 %v9380
    %v10886 = vunpack.c.h.b16 %v9380
    %v10887 = vunpack.c.l.b16 %v9381
    %v10888 = vunpack.c.h.b16 %v9381
    %v10889 = vunpack.c.l.b16 %v9382
    %v10890 = vunpack.c.h.b16 %v9382
    %v10891 = vunpack.c.l.b16 %v9383
    %v10892 = vunpack.c.h.b16 %v9383
    %v10893 = vunpack.c.l.b16 %v9384
    %v10894 = vunpack.c.h.b16 %v9384
    %v10895 = vunpack.c.l.b16 %v9385
    %v10896 = vunpack.c.h.b16 %v9385
    %v10897 = vunpack.c.l.b16 %v9386
    %v10898 = vunpack.c.h.b16 %v9386
    %v10899 = vunpack.c.l.b16 %v9387
    %v10900 = vunpack.c.h.b16 %v9387
    %v10901 = vunpack.c.l.b16 %v9388
    %v10902 = vunpack.c.h.b16 %v9388
    %v10903 = vunpack.c.l.b16 %v9389
    %v10904 = vunpack.c.h.b16 %v9389
    %v10905 = vunpack.c.l.b16 %v9390
    %v10906 = vunpack.c.h.b16 %v9390
    %v10907 = vunpack.c.l.b16 %v9391
    %v10908 = vunpack.c.h.b16 %v9391
    %v10909 = vunpack.c.l.b16 %v9392
    %v10910 = vunpack.c.h.b16 %v9392
    %v10911 = vunpack.c.l.b16 %v9393
    %v10912 = vunpack.c.h.b16 %v9393
    %v10913 = vunpack.c.l.b16 %v9394
    %v10914 = vunpack.c.h.b16 %v9394
    %v10915 = vunpack.c.l.b16 %v9395
    %v10916 = vunpack.c.h.b16 %v9395
    %v10917 = vunpack.c.l.b16 %v9396
    %v10918 = vunpack.c.h.b16 %v9396
    %v10919 = vunpack.c.l.b16 %v9397
    %v10920 = vunpack.c.h.b16 %v9397
    %v10921 = vunpack.c.l.b16 %v9398
    %v10922 = vunpack.c.h.b16 %v9398
    %v10923 = vunpack.c.l.b16 %v9399
    %v10924 = vunpack.c.h.b16 %v9399
    %v10925 = vunpack.c.l.b16 %v9400
    %v10926 = vunpack.c.h.b16 %v9400
    %v10927 = vunpack.c.l.b16 %v9401
    %v10928 = vunpack.c.h.b16 %v9401
    %v10929 = vunpack.c.l.b16 %v9402
    %v10930 = vunpack.c.h.b16 %v9402
    %v10931 = vunpack.c.l.b16 %v9403
    %v10932 = vunpack.c.h.b16 %v9403
    %v10933 = vunpack.c.l.b16 %v9404
    %v10934 = vunpack.c.h.b16 %v9404
    %v10935 = vunpack.c.l.b16 %v9405
    %v10936 = vunpack.c.h.b16 %v9405
    %v10937 = vunpack.c.l.b16 %v9406
    %v10938 = vunpack.c.h.b16 %v9406
    %v10939 = vunpack.c.l.b16 %v9407
    %v10940 = vunpack.c.h.b16 %v9407
    %v10941 = vunpack.c.l.b16 %v9408
    %v10942 = vunpack.c.h.b16 %v9408
    %v10943 = vunpack.c.l.b16 %v9409
    %v10944 = vunpack.c.h.b16 %v9409
    %v10945 = vunpack.c.l.b16 %v9410
    %v10946 = vunpack.c.h.b16 %v9410
    %v10947 = vunpack.c.l.b16 %v9411
    %v10948 = vunpack.c.h.b16 %v9411
    %v10949 = vunpack.c.l.b16 %v9412
    %v10950 = vunpack.c.h.b16 %v9412
    %v10951 = vunpack.c.l.b16 %v9413
    %v10952 = vunpack.c.h.b16 %v9413
    %v10953 = vunpack.c.l.b16 %v9414
    %v10954 = vunpack.c.h.b16 %v9414
    %v10955 = vunpack.c.l.b16 %v9415
    %v10956 = vunpack.c.h.b16 %v9415
    %v10957 = vunpack.c.l.b16 %v9416
    %v10958 = vunpack.c.h.b16 %v9416
    %v10959 = vunpack.c.l.b16 %v9417
    %v10960 = vunpack.c.h.b16 %v9417
    %v10961 = vunpack.c.l.b16 %v9418
    %v10962 = vunpack.c.h.b16 %v9418
    %v10963 = vunpack.c.l.b16 %v9419
    %v10964 = vunpack.c.h.b16 %v9419
    %v10965 = vunpack.c.l.b16 %v9420
    %v10966 = vunpack.c.h.b16 %v9420
    %v10967 = vunpack.c.l.b16 %v9421
    %v10968 = vunpack.c.h.b16 %v9421
    %v10969 = vunpack.c.l.b16 %v9422
    %v10970 = vunpack.c.h.b16 %v9422
    %v10971 = vunpack.c.l.b16 %v9423
    %v10972 = vunpack.c.h.b16 %v9423
    %v10973 = vunpack.c.l.b16 %v9424
    %v10974 = vunpack.c.h.b16 %v9424
    %v10975 = vunpack.c.l.b16 %v9425
    %v10976 = vunpack.c.h.b16 %v9425
    %v10977 = vunpack.c.l.b16 %v9426
    %v10978 = vunpack.c.h.b16 %v9426
    %v10979 = vunpack.c.l.b16 %v9427
    %v10980 = vunpack.c.h.b16 %v9427
    %v10981 = vunpack.c.l.b16 %v9428
    %v10982 = vunpack.c.h.b16 %v9428
    %v10983 = vunpack.c.l.b16 %v9429
    %v10984 = vunpack.c.h.b16 %v9429
    %v10985 = vunpack.c.l.b16 %v9430
    %v10986 = vunpack.c.h.b16 %v9430
    %v10987 = vunpack.c.l.b16 %v9431
    %v10988 = vunpack.c.h.b16 %v9431
    %v10989 = vunpack.c.l.b16 %v9432
    %v10990 = vunpack.c.h.b16 %v9432
    %v10991 = vpack.c.b16 %v9971, %v9967
    %v10992 = vpack.c.b16 %v9972, %v9968
    %v10993 = vpack.c.b16 %v9973, %v9969
    %v10994 = vpack.c.b16 %v9974, %v9970
    %v10995 = vpack.c.b16 %v9979, %v9975
    %v10996 = vpack.c.b16 %v9980, %v9976
    %v10997 = vpack.c.b16 %v9981, %v9977
    %v10998 = vpack.c.b16 %v9982, %v9978
    %v10999 = vpack.c.b16 %v9987, %v9983
    %v11000 = vpack.c.b16 %v9988, %v9984
    %v11001 = vpack.c.b16 %v9989, %v9985
    %v11002 = vpack.c.b16 %v9990, %v9986
    %v11003 = vpack.c.b16 %v9995, %v9991
    %v11004 = vpack.c.b16 %v9996, %v9992
    %v11005 = vpack.c.b16 %v9997, %v9993
    %v11006 = vpack.c.b16 %v9998, %v9994
    %v11007 = vpack.c.b16 %v10003, %v9999
    %v11008 = vpack.c.b16 %v10004, %v10000
    %v11009 = vpack.c.b16 %v10005, %v10001
    %v11010 = vpack.c.b16 %v10006, %v10002
    %v11011 = vpack.c.b16 %v10011, %v10007
    %v11012 = vpack.c.b16 %v10012, %v10008
    %v11013 = vpack.c.b16 %v10013, %v10009
    %v11014 = vpack.c.b16 %v10014, %v10010
    %v11015 = vpack.c.b16 %v10019, %v10015
    %v11016 = vpack.c.b16 %v10020, %v10016
    %v11017 = vpack.c.b16 %v10021, %v10017
    %v11018 = vpack.c.b16 %v10022, %v10018
    %v11019 = vpack.c.b16 %v10027, %v10023
    %v11020 = vpack.c.b16 %v10028, %v10024
    %v11021 = vpack.c.b16 %v10029, %v10025
    %v11022 = vpack.c.b16 %v10030, %v10026
    %v11023 = vpack.c.b16 %v10035, %v10031
    %v11024 = vpack.c.b16 %v10036, %v10032
    %v11025 = vpack.c.b16 %v10037, %v10033
    %v11026 = vpack.c.b16 %v10038, %v10034
    %v11027 = vpack.c.b16 %v10043, %v10039
    %v11028 = vpack.c.b16 %v10044, %v10040
    %v11029 = vpack.c.b16 %v10045, %v10041
    %v11030 = vpack.c.b16 %v10046, %v10042
    %v11031 = vpack.c.b16 %v10051, %v10047
    %v11032 = vpack.c.b16 %v10052, %v10048
    %v11033 = vpack.c.b16 %v10053, %v10049
    %v11034 = vpack.c.b16 %v10054, %v10050
    %v11035 = vpack.c.b16 %v10059, %v10055
    %v11036 = vpack.c.b16 %v10060, %v10056
    %v11037 = vpack.c.b16 %v10061, %v10057
    %v11038 = vpack.c.b16 %v10062, %v10058
    %v11039 = vpack.c.b16 %v10067, %v10063
    %v11040 = vpack.c.b16 %v10068, %v10064
    %v11041 = vpack.c.b16 %v10069, %v10065
    %v11042 = vpack.c.b16 %v10070, %v10066
    %v11043 = vpack.c.b16 %v10075, %v10071
    %v11044 = vpack.c.b16 %v10076, %v10072
    %v11045 = vpack.c.b16 %v10077, %v10073
    %v11046 = vpack.c.b16 %v10078, %v10074
    %v11047 = vpack.c.b16 %v10083, %v10079
    %v11048 = vpack.c.b16 %v10084, %v10080
    %v11049 = vpack.c.b16 %v10085, %v10081
    %v11050 = vpack.c.b16 %v10086, %v10082
    %v11051 = vpack.c.b16 %v10091, %v10087
    %v11052 = vpack.c.b16 %v10092, %v10088
    %v11053 = vpack.c.b16 %v10093, %v10089
    %v11054 = vpack.c.b16 %v10094, %v10090
    %v11055 = vpack.c.b16 %v10099, %v10095
    %v11056 = vpack.c.b16 %v10100, %v10096
    %v11057 = vpack.c.b16 %v10101, %v10097
    %v11058 = vpack.c.b16 %v10102, %v10098
    %v11059 = vpack.c.b16 %v10107, %v10103
    %v11060 = vpack.c.b16 %v10108, %v10104
    %v11061 = vpack.c.b16 %v10109, %v10105
    %v11062 = vpack.c.b16 %v10110, %v10106
    %v11063 = vpack.c.b16 %v10115, %v10111
    %v11064 = vpack.c.b16 %v10116, %v10112
    %v11065 = vpack.c.b16 %v10117, %v10113
    %v11066 = vpack.c.b16 %v10118, %v10114
    %v11067 = vpack.c.b16 %v10123, %v10119
    %v11068 = vpack.c.b16 %v10124, %v10120
    %v11069 = vpack.c.b16 %v10125, %v10121
    %v11070 = vpack.c.b16 %v10126, %v10122
    %v11071 = vpack.c.b16 %v10131, %v10127
    %v11072 = vpack.c.b16 %v10132, %v10128
    %v11073 = vpack.c.b16 %v10133, %v10129
    %v11074 = vpack.c.b16 %v10134, %v10130
    %v11075 = vpack.c.b16 %v10139, %v10135
    %v11076 = vpack.c.b16 %v10140, %v10136
    %v11077 = vpack.c.b16 %v10141, %v10137
    %v11078 = vpack.c.b16 %v10142, %v10138
    %v11079 = vpack.c.b16 %v10147, %v10143
    %v11080 = vpack.c.b16 %v10148, %v10144
    %v11081 = vpack.c.b16 %v10149, %v10145
    %v11082 = vpack.c.b16 %v10150, %v10146
    %v11083 = vpack.c.b16 %v10155, %v10151
    %v11084 = vpack.c.b16 %v10156, %v10152
    %v11085 = vpack.c.b16 %v10157, %v10153
    %v11086 = vpack.c.b16 %v10158, %v10154
    %v11087 = vpack.c.b16 %v10163, %v10159
    %v11088 = vpack.c.b16 %v10164, %v10160
    %v11089 = vpack.c.b16 %v10165, %v10161
    %v11090 = vpack.c.b16 %v10166, %v10162
    %v11091 = vpack.c.b16 %v10171, %v10167
    %v11092 = vpack.c.b16 %v10172, %v10168
    %v11093 = vpack.c.b16 %v10173, %v10169
    %v11094 = vpack.c.b16 %v10174, %v10170
    %v11095 = vpack.c.b16 %v10179, %v10175
    %v11096 = vpack.c.b16 %v10180, %v10176
    %v11097 = vpack.c.b16 %v10181, %v10177
    %v11098 = vpack.c.b16 %v10182, %v10178
    %v11099 = vpack.c.b16 %v10187, %v10183
    %v11100 = vpack.c.b16 %v10188, %v10184
    %v11101 = vpack.c.b16 %v10189, %v10185
    %v11102 = vpack.c.b16 %v10190, %v10186
    %v11103 = vpack.c.b16 %v10195, %v10191
    %v11104 = vpack.c.b16 %v10196, %v10192
    %v11105 = vpack.c.b16 %v10197, %v10193
    %v11106 = vpack.c.b16 %v10198, %v10194
    %v11107 = vpack.c.b16 %v10203, %v10199
    %v11108 = vpack.c.b16 %v10204, %v10200
    %v11109 = vpack.c.b16 %v10205, %v10201
    %v11110 = vpack.c.b16 %v10206, %v10202
    %v11111 = vpack.c.b16 %v10211, %v10207
    %v11112 = vpack.c.b16 %v10212, %v10208
    %v11113 = vpack.c.b16 %v10213, %v10209
    %v11114 = vpack.c.b16 %v10214, %v10210
    %v11115 = vpack.c.b16 %v10219, %v10215
    %v11116 = vpack.c.b16 %v10220, %v10216
    %v11117 = vpack.c.b16 %v10221, %v10217
    %v11118 = vpack.c.b16 %v10222, %v10218
    %v11119 = vpack.c.b16 %v10227, %v10223
    %v11120 = vpack.c.b16 %v10228, %v10224
    %v11121 = vpack.c.b16 %v10229, %v10225
    %v11122 = vpack.c.b16 %v10230, %v10226
    %v11123 = vpack.c.b16 %v10235, %v10231
    %v11124 = vpack.c.b16 %v10236, %v10232
    %v11125 = vpack.c.b16 %v10237, %v10233
    %v11126 = vpack.c.b16 %v10238, %v10234
    %v11127 = vpack.c.b16 %v10243, %v10239
    %v11128 = vpack.c.b16 %v10244, %v10240
    %v11129 = vpack.c.b16 %v10245, %v10241
    %v11130 = vpack.c.b16 %v10246, %v10242
    %v11131 = vpack.c.b16 %v10251, %v10247
    %v11132 = vpack.c.b16 %v10252, %v10248
    %v11133 = vpack.c.b16 %v10253, %v10249
    %v11134 = vpack.c.b16 %v10254, %v10250
    %v11135 = vpack.c.b16 %v10259, %v10255
    %v11136 = vpack.c.b16 %v10260, %v10256
    %v11137 = vpack.c.b16 %v10261, %v10257
    %v11138 = vpack.c.b16 %v10262, %v10258
    %v11139 = vpack.c.b16 %v10267, %v10263
    %v11140 = vpack.c.b16 %v10268, %v10264
    %v11141 = vpack.c.b16 %v10269, %v10265
    %v11142 = vpack.c.b16 %v10270, %v10266
    %v11143 = vpack.c.b16 %v10275, %v10271
    %v11144 = vpack.c.b16 %v10276, %v10272
    %v11145 = vpack.c.b16 %v10277, %v10273
    %v11146 = vpack.c.b16 %v10278, %v10274
    %v11147 = vpack.c.b16 %v10283, %v10279
    %v11148 = vpack.c.b16 %v10284, %v10280
    %v11149 = vpack.c.b16 %v10285, %v10281
    %v11150 = vpack.c.b16 %v10286, %v10282
    %v11151 = vpack.c.b16 %v10291, %v10287
    %v11152 = vpack.c.b16 %v10292, %v10288
    %v11153 = vpack.c.b16 %v10293, %v10289
    %v11154 = vpack.c.b16 %v10294, %v10290
    %v11155 = vpack.c.b16 %v10299, %v10295
    %v11156 = vpack.c.b16 %v10300, %v10296
    %v11157 = vpack.c.b16 %v10301, %v10297
    %v11158 = vpack.c.b16 %v10302, %v10298
    %v11159 = vpack.c.b16 %v10307, %v10303
    %v11160 = vpack.c.b16 %v10308, %v10304
    %v11161 = vpack.c.b16 %v10309, %v10305
    %v11162 = vpack.c.b16 %v10310, %v10306
    %v11163 = vpack.c.b16 %v10315, %v10311
    %v11164 = vpack.c.b16 %v10316, %v10312
    %v11165 = vpack.c.b16 %v10317, %v10313
    %v11166 = vpack.c.b16 %v10318, %v10314
    %v11167 = vpack.c.b16 %v10323, %v10319
    %v11168 = vpack.c.b16 %v10324, %v10320
    %v11169 = vpack.c.b16 %v10325, %v10321
    %v11170 = vpack.c.b16 %v10326, %v10322
    %v11171 = vpack.c.b16 %v10331, %v10327
    %v11172 = vpack.c.b16 %v10332, %v10328
    %v11173 = vpack.c.b16 %v10333, %v10329
    %v11174 = vpack.c.b16 %v10334, %v10330
    %v11175 = vpack.c.b16 %v10339, %v10335
    %v11176 = vpack.c.b16 %v10340, %v10336
    %v11177 = vpack.c.b16 %v10341, %v10337
    %v11178 = vpack.c.b16 %v10342, %v10338
    %v11179 = vpack.c.b16 %v10347, %v10343
    %v11180 = vpack.c.b16 %v10348, %v10344
    %v11181 = vpack.c.b16 %v10349, %v10345
    %v11182 = vpack.c.b16 %v10350, %v10346
    %v11183 = vpack.c.b16 %v10355, %v10351
    %v11184 = vpack.c.b16 %v10356, %v10352
    %v11185 = vpack.c.b16 %v10357, %v10353
    %v11186 = vpack.c.b16 %v10358, %v10354
    %v11187 = vpack.c.b16 %v10363, %v10359
    %v11188 = vpack.c.b16 %v10364, %v10360
    %v11189 = vpack.c.b16 %v10365, %v10361
    %v11190 = vpack.c.b16 %v10366, %v10362
    %v11191 = vpack.c.b16 %v10371, %v10367
    %v11192 = vpack.c.b16 %v10372, %v10368
    %v11193 = vpack.c.b16 %v10373, %v10369
    %v11194 = vpack.c.b16 %v10374, %v10370
    %v11195 = vpack.c.b16 %v10379, %v10375
    %v11196 = vpack.c.b16 %v10380, %v10376
    %v11197 = vpack.c.b16 %v10381, %v10377
    %v11198 = vpack.c.b16 %v10382, %v10378
    %v11199 = vpack.c.b16 %v10387, %v10383
    %v11200 = vpack.c.b16 %v10388, %v10384
    %v11201 = vpack.c.b16 %v10389, %v10385
    %v11202 = vpack.c.b16 %v10390, %v10386
    %v11203 = vpack.c.b16 %v10395, %v10391
    %v11204 = vpack.c.b16 %v10396, %v10392
    %v11205 = vpack.c.b16 %v10397, %v10393
    %v11206 = vpack.c.b16 %v10398, %v10394
    %v11207 = vpack.c.b16 %v10403, %v10399
    %v11208 = vpack.c.b16 %v10404, %v10400
    %v11209 = vpack.c.b16 %v10405, %v10401
    %v11210 = vpack.c.b16 %v10406, %v10402
    %v11211 = vpack.c.b16 %v10411, %v10407
    %v11212 = vpack.c.b16 %v10412, %v10408
    %v11213 = vpack.c.b16 %v10413, %v10409
    %v11214 = vpack.c.b16 %v10414, %v10410
    %v11215 = vpack.c.b16 %v10419, %v10415
    %v11216 = vpack.c.b16 %v10420, %v10416
    %v11217 = vpack.c.b16 %v10421, %v10417
    %v11218 = vpack.c.b16 %v10422, %v10418
    %v11219 = vpack.c.b16 %v10427, %v10423
    %v11220 = vpack.c.b16 %v10428, %v10424
    %v11221 = vpack.c.b16 %v10429, %v10425
    %v11222 = vpack.c.b16 %v10430, %v10426
    %v11223 = vpack.c.b16 %v10435, %v10431
    %v11224 = vpack.c.b16 %v10436, %v10432
    %v11225 = vpack.c.b16 %v10437, %v10433
    %v11226 = vpack.c.b16 %v10438, %v10434
    %v11227 = vpack.c.b16 %v10443, %v10439
    %v11228 = vpack.c.b16 %v10444, %v10440
    %v11229 = vpack.c.b16 %v10445, %v10441
    %v11230 = vpack.c.b16 %v10446, %v10442
    %v11231 = vpack.c.b16 %v10451, %v10447
    %v11232 = vpack.c.b16 %v10452, %v10448
    %v11233 = vpack.c.b16 %v10453, %v10449
    %v11234 = vpack.c.b16 %v10454, %v10450
    %v11235 = vpack.c.b16 %v10459, %v10455
    %v11236 = vpack.c.b16 %v10460, %v10456
    %v11237 = vpack.c.b16 %v10461, %v10457
    %v11238 = vpack.c.b16 %v10462, %v10458
    %v11239 = vpack.c.b16 %v10467, %v10463
    %v11240 = vpack.c.b16 %v10468, %v10464
    %v11241 = vpack.c.b16 %v10469, %v10465
    %v11242 = vpack.c.b16 %v10470, %v10466
    %v11243 = vpack.c.b16 %v10475, %v10471
    %v11244 = vpack.c.b16 %v10476, %v10472
    %v11245 = vpack.c.b16 %v10477, %v10473
    %v11246 = vpack.c.b16 %v10478, %v10474
    %v11247 = vpack.c.b16 %v10483, %v10479
    %v11248 = vpack.c.b16 %v10484, %v10480
    %v11249 = vpack.c.b16 %v10485, %v10481
    %v11250 = vpack.c.b16 %v10486, %v10482
    %v11251 = vpack.c.b16 %v10491, %v10487
    %v11252 = vpack.c.b16 %v10492, %v10488
    %v11253 = vpack.c.b16 %v10493, %v10489
    %v11254 = vpack.c.b16 %v10494, %v10490
    %v11255 = vpack.c.b16 %v10499, %v10495
    %v11256 = vpack.c.b16 %v10500, %v10496
    %v11257 = vpack.c.b16 %v10501, %v10497
    %v11258 = vpack.c.b16 %v10502, %v10498
    %v11259 = vpack.c.b16 %v10507, %v10503
    %v11260 = vpack.c.b16 %v10508, %v10504
    %v11261 = vpack.c.b16 %v10509, %v10505
    %v11262 = vpack.c.b16 %v10510, %v10506
    %v11263 = vpack.c.b16 %v10515, %v10511
    %v11264 = vpack.c.b16 %v10516, %v10512
    %v11265 = vpack.c.b16 %v10517, %v10513
    %v11266 = vpack.c.b16 %v10518, %v10514
    %v11267 = vpack.c.b16 %v10523, %v10519
    %v11268 = vpack.c.b16 %v10524, %v10520
    %v11269 = vpack.c.b16 %v10525, %v10521
    %v11270 = vpack.c.b16 %v10526, %v10522
    %v11271 = vpack.c.b16 %v10531, %v10527
    %v11272 = vpack.c.b16 %v10532, %v10528
    %v11273 = vpack.c.b16 %v10533, %v10529
    %v11274 = vpack.c.b16 %v10534, %v10530
    %v11275 = vpack.c.b16 %v10539, %v10535
    %v11276 = vpack.c.b16 %v10540, %v10536
    %v11277 = vpack.c.b16 %v10541, %v10537
    %v11278 = vpack.c.b16 %v10542, %v10538
    %v11279 = vpack.c.b16 %v10547, %v10543
    %v11280 = vpack.c.b16 %v10548, %v10544
    %v11281 = vpack.c.b16 %v10549, %v10545
    %v11282 = vpack.c.b16 %v10550, %v10546
    %v11283 = vpack.c.b16 %v10555, %v10551
    %v11284 = vpack.c.b16 %v10556, %v10552
    %v11285 = vpack.c.b16 %v10557, %v10553
    %v11286 = vpack.c.b16 %v10558, %v10554
    %v11287 = vpack.c.b16 %v10563, %v10559
    %v11288 = vpack.c.b16 %v10564, %v10560
    %v11289 = vpack.c.b16 %v10565, %v10561
    %v11290 = vpack.c.b16 %v10566, %v10562
    %v11291 = vpack.c.b16 %v10571, %v10567
    %v11292 = vpack.c.b16 %v10572, %v10568
    %v11293 = vpack.c.b16 %v10573, %v10569
    %v11294 = vpack.c.b16 %v10574, %v10570
    %v11295 = vpack.c.b16 %v10579, %v10575
    %v11296 = vpack.c.b16 %v10580, %v10576
    %v11297 = vpack.c.b16 %v10581, %v10577
    %v11298 = vpack.c.b16 %v10582, %v10578
    %v11299 = vpack.c.b16 %v10587, %v10583
    %v11300 = vpack.c.b16 %v10588, %v10584
    %v11301 = vpack.c.b16 %v10589, %v10585
    %v11302 = vpack.c.b16 %v10590, %v10586
    %v11303 = vpack.c.b16 %v10595, %v10591
    %v11304 = vpack.c.b16 %v10596, %v10592
    %v11305 = vpack.c.b16 %v10597, %v10593
    %v11306 = vpack.c.b16 %v10598, %v10594
    %v11307 = vpack.c.b16 %v10603, %v10599
    %v11308 = vpack.c.b16 %v10604, %v10600
    %v11309 = vpack.c.b16 %v10605, %v10601
    %v11310 = vpack.c.b16 %v10606, %v10602
    %v11311 = vpack.c.b16 %v10611, %v10607
    %v11312 = vpack.c.b16 %v10612, %v10608
    %v11313 = vpack.c.b16 %v10613, %v10609
    %v11314 = vpack.c.b16 %v10614, %v10610
    %v11315 = vpack.c.b16 %v10619, %v10615
    %v11316 = vpack.c.b16 %v10620, %v10616
    %v11317 = vpack.c.b16 %v10621, %v10617
    %v11318 = vpack.c.b16 %v10622, %v10618
    %v11319 = vpack.c.b16 %v10627, %v10623
    %v11320 = vpack.c.b16 %v10628, %v10624
    %v11321 = vpack.c.b16 %v10629, %v10625
    %v11322 = vpack.c.b16 %v10630, %v10626
    %v11323 = vpack.c.b16 %v10635, %v10631
    %v11324 = vpack.c.b16 %v10636, %v10632
    %v11325 = vpack.c.b16 %v10637, %v10633
    %v11326 = vpack.c.b16 %v10638, %v10634
    %v11327 = vpack.c.b16 %v10643, %v10639
    %v11328 = vpack.c.b16 %v10644, %v10640
    %v11329 = vpack.c.b16 %v10645, %v10641
    %v11330 = vpack.c.b16 %v10646, %v10642
    %v11331 = vpack.c.b16 %v10651, %v10647
    %v11332 = vpack.c.b16 %v10652, %v10648
    %v11333 = vpack.c.b16 %v10653, %v10649
    %v11334 = vpack.c.b16 %v10654, %v10650
    %v11335 = vpack.c.b16 %v10659, %v10655
    %v11336 = vpack.c.b16 %v10660, %v10656
    %v11337 = vpack.c.b16 %v10661, %v10657
    %v11338 = vpack.c.b16 %v10662, %v10658
    %v11339 = vpack.c.b16 %v10667, %v10663
    %v11340 = vpack.c.b16 %v10668, %v10664
    %v11341 = vpack.c.b16 %v10669, %v10665
    %v11342 = vpack.c.b16 %v10670, %v10666
    %v11343 = vpack.c.b16 %v10675, %v10671
    %v11344 = vpack.c.b16 %v10676, %v10672
    %v11345 = vpack.c.b16 %v10677, %v10673
    %v11346 = vpack.c.b16 %v10678, %v10674
    %v11347 = vpack.c.b16 %v10683, %v10679
    %v11348 = vpack.c.b16 %v10684, %v10680
    %v11349 = vpack.c.b16 %v10685, %v10681
    %v11350 = vpack.c.b16 %v10686, %v10682
    %v11351 = vpack.c.b16 %v10691, %v10687
    %v11352 = vpack.c.b16 %v10692, %v10688
    %v11353 = vpack.c.b16 %v10693, %v10689
    %v11354 = vpack.c.b16 %v10694, %v10690
    %v11355 = vpack.c.b16 %v10699, %v10695
    %v11356 = vpack.c.b16 %v10700, %v10696
    %v11357 = vpack.c.b16 %v10701, %v10697
    %v11358 = vpack.c.b16 %v10702, %v10698
    %v11359 = vpack.c.b16 %v10707, %v10703
    %v11360 = vpack.c.b16 %v10708, %v10704
    %v11361 = vpack.c.b16 %v10709, %v10705
    %v11362 = vpack.c.b16 %v10710, %v10706
    %v11363 = vpack.c.b16 %v10715, %v10711
    %v11364 = vpack.c.b16 %v10716, %v10712
    %v11365 = vpack.c.b16 %v10717, %v10713
    %v11366 = vpack.c.b16 %v10718, %v10714
    %v11367 = vpack.c.b16 %v10723, %v10719
    %v11368 = vpack.c.b16 %v10724, %v10720
    %v11369 = vpack.c.b16 %v10725, %v10721
    %v11370 = vpack.c.b16 %v10726, %v10722
    %v11371 = vpack.c.b16 %v10731, %v10727
    %v11372 = vpack.c.b16 %v10732, %v10728
    %v11373 = vpack.c.b16 %v10733, %v10729
    %v11374 = vpack.c.b16 %v10734, %v10730
    %v11375 = vpack.c.b16 %v10739, %v10735
    %v11376 = vpack.c.b16 %v10740, %v10736
    %v11377 = vpack.c.b16 %v10741, %v10737
    %v11378 = vpack.c.b16 %v10742, %v10738
    %v11379 = vpack.c.b16 %v10747, %v10743
    %v11380 = vpack.c.b16 %v10748, %v10744
    %v11381 = vpack.c.b16 %v10749, %v10745
    %v11382 = vpack.c.b16 %v10750, %v10746
    %v11383 = vpack.c.b16 %v10755, %v10751
    %v11384 = vpack.c.b16 %v10756, %v10752
    %v11385 = vpack.c.b16 %v10757, %v10753
    %v11386 = vpack.c.b16 %v10758, %v10754
    %v11387 = vpack.c.b16 %v10763, %v10759
    %v11388 = vpack.c.b16 %v10764, %v10760
    %v11389 = vpack.c.b16 %v10765, %v10761
    %v11390 = vpack.c.b16 %v10766, %v10762
    %v11391 = vpack.c.b16 %v10771, %v10767
    %v11392 = vpack.c.b16 %v10772, %v10768
    %v11393 = vpack.c.b16 %v10773, %v10769
    %v11394 = vpack.c.b16 %v10774, %v10770
    %v11395 = vpack.c.b16 %v10779, %v10775
    %v11396 = vpack.c.b16 %v10780, %v10776
    %v11397 = vpack.c.b16 %v10781, %v10777
    %v11398 = vpack.c.b16 %v10782, %v10778
    %v11399 = vpack.c.b16 %v10787, %v10783
    %v11400 = vpack.c.b16 %v10788, %v10784
    %v11401 = vpack.c.b16 %v10789, %v10785
    %v11402 = vpack.c.b16 %v10790, %v10786
    %v11403 = vpack.c.b16 %v10795, %v10791
    %v11404 = vpack.c.b16 %v10796, %v10792
    %v11405 = vpack.c.b16 %v10797, %v10793
    %v11406 = vpack.c.b16 %v10798, %v10794
    %v11407 = vpack.c.b16 %v10803, %v10799
    %v11408 = vpack.c.b16 %v10804, %v10800
    %v11409 = vpack.c.b16 %v10805, %v10801
    %v11410 = vpack.c.b16 %v10806, %v10802
    %v11411 = vpack.c.b16 %v10811, %v10807
    %v11412 = vpack.c.b16 %v10812, %v10808
    %v11413 = vpack.c.b16 %v10813, %v10809
    %v11414 = vpack.c.b16 %v10814, %v10810
    %v11415 = vpack.c.b16 %v10819, %v10815
    %v11416 = vpack.c.b16 %v10820, %v10816
    %v11417 = vpack.c.b16 %v10821, %v10817
    %v11418 = vpack.c.b16 %v10822, %v10818
    %v11419 = vpack.c.b16 %v10827, %v10823
    %v11420 = vpack.c.b16 %v10828, %v10824
    %v11421 = vpack.c.b16 %v10829, %v10825
    %v11422 = vpack.c.b16 %v10830, %v10826
    %v11423 = vpack.c.b16 %v10835, %v10831
    %v11424 = vpack.c.b16 %v10836, %v10832
    %v11425 = vpack.c.b16 %v10837, %v10833
    %v11426 = vpack.c.b16 %v10838, %v10834
    %v11427 = vpack.c.b16 %v10843, %v10839
    %v11428 = vpack.c.b16 %v10844, %v10840
    %v11429 = vpack.c.b16 %v10845, %v10841
    %v11430 = vpack.c.b16 %v10846, %v10842
    %v11431 = vpack.c.b16 %v10851, %v10847
    %v11432 = vpack.c.b16 %v10852, %v10848
    %v11433 = vpack.c.b16 %v10853, %v10849
    %v11434 = vpack.c.b16 %v10854, %v10850
    %v11435 = vpack.c.b16 %v10859, %v10855
    %v11436 = vpack.c.b16 %v10860, %v10856
    %v11437 = vpack.c.b16 %v10861, %v10857
    %v11438 = vpack.c.b16 %v10862, %v10858
    %v11439 = vpack.c.b16 %v10867, %v10863
    %v11440 = vpack.c.b16 %v10868, %v10864
    %v11441 = vpack.c.b16 %v10869, %v10865
    %v11442 = vpack.c.b16 %v10870, %v10866
    %v11443 = vpack.c.b16 %v10875, %v10871
    %v11444 = vpack.c.b16 %v10876, %v10872
    %v11445 = vpack.c.b16 %v10877, %v10873
    %v11446 = vpack.c.b16 %v10878, %v10874
    %v11447 = vpack.c.b16 %v10883, %v10879
    %v11448 = vpack.c.b16 %v10884, %v10880
    %v11449 = vpack.c.b16 %v10885, %v10881
    %v11450 = vpack.c.b16 %v10886, %v10882
    %v11451 = vpack.c.b16 %v10891, %v10887
    %v11452 = vpack.c.b16 %v10892, %v10888
    %v11453 = vpack.c.b16 %v10893, %v10889
    %v11454 = vpack.c.b16 %v10894, %v10890
    %v11455 = vpack.c.b16 %v10899, %v10895
    %v11456 = vpack.c.b16 %v10900, %v10896
    %v11457 = vpack.c.b16 %v10901, %v10897
    %v11458 = vpack.c.b16 %v10902, %v10898
    %v11459 = vpack.c.b16 %v10907, %v10903
    %v11460 = vpack.c.b16 %v10908, %v10904
    %v11461 = vpack.c.b16 %v10909, %v10905
    %v11462 = vpack.c.b16 %v10910, %v10906
    %v11463 = vpack.c.b16 %v10915, %v10911
    %v11464 = vpack.c.b16 %v10916, %v10912
    %v11465 = vpack.c.b16 %v10917, %v10913
    %v11466 = vpack.c.b16 %v10918, %v10914
    %v11467 = vpack.c.b16 %v10923, %v10919
    %v11468 = vpack.c.b16 %v10924, %v10920
    %v11469 = vpack.c.b16 %v10925, %v10921
    %v11470 = vpack.c.b16 %v10926, %v10922
    %v11471 = vpack.c.b16 %v10931, %v10927
    %v11472 = vpack.c.b16 %v10932, %v10928
    %v11473 = vpack.c.b16 %v10933, %v10929
    %v11474 = vpack.c.b16 %v10934, %v10930
    %v11475 = vpack.c.b16 %v10939, %v10935
    %v11476 = vpack.c.b16 %v10940, %v10936
    %v11477 = vpack.c.b16 %v10941, %v10937
    %v11478 = vpack.c.b16 %v10942, %v10938
    %v11479 = vpack.c.b16 %v10947, %v10943
    %v11480 = vpack.c.b16 %v10948, %v10944
    %v11481 = vpack.c.b16 %v10949, %v10945
    %v11482 = vpack.c.b16 %v10950, %v10946
    %v11483 = vpack.c.b16 %v10955, %v10951
    %v11484 = vpack.c.b16 %v10956, %v10952
    %v11485 = vpack.c.b16 %v10957, %v10953
    %v11486 = vpack.c.b16 %v10958, %v10954
    %v11487 = vpack.c.b16 %v10963, %v10959
    %v11488 = vpack.c.b16 %v10964, %v10960
    %v11489 = vpack.c.b16 %v10965, %v10961
    %v11490 = vpack.c.b16 %v10966, %v10962
    %v11491 = vpack.c.b16 %v10971, %v10967
    %v11492 = vpack.c.b16 %v10972, %v10968
    %v11493 = vpack.c.b16 %v10973, %v10969
    %v11494 = vpack.c.b16 %v10974, %v10970
    %v11495 = vpack.c.b16 %v10979, %v10975
    %v11496 = vpack.c.b16 %v10980, %v10976
    %v11497 = vpack.c.b16 %v10981, %v10977
    %v11498 = vpack.c.b16 %v10982, %v10978
    %v11499 = vpack.c.b16 %v10987, %v10983
    %v11500 = vpack.c.b16 %v10988, %v10984
    %v11501 = vpack.c.b16 %v10989, %v10985
    %v11502 = vpack.c.b16 %v10990, %v10986
    %12015 = vmatprep.subr.bf16.mxu0 %v10992
    %12016 = vmatpush1.bf16.msra.mxu0 %v10991
    %12017 = vmatprep.subr.bf16.mxu0 %v10996
    %12018 = vmatpush1.bf16.msra.mxu0 %v10995
    %12019 = vmatprep.subr.bf16.mxu0 %v11000
    %12020 = vmatpush1.bf16.msra.mxu0 %v10999
    %12021 = vmatprep.subr.bf16.mxu0 %v11004
    %12022 = vmatpush1.bf16.msra.mxu0 %v11003
    %12023 = vmatprep.subr.bf16.mxu0 %v11008
    %12024 = vmatpush1.bf16.msra.mxu0 %v11007
    %12025 = vmatprep.subr.bf16.mxu0 %v11012
    %12026 = vmatpush1.bf16.msra.mxu0 %v11011
    %12027 = vmatprep.subr.bf16.mxu0 %v11016
    %12028 = vmatpush1.bf16.msra.mxu0 %v11015
    %12029 = vmatprep.subr.bf16.mxu0 %v11020
    %12030 = vmatpush1.bf16.msra.mxu0 %v11019
    %12031 = vmatprep.subr.bf16.mxu0 %v11024
    %12032 = vmatpush1.bf16.msra.mxu0 %v11023
    %12033 = vmatprep.subr.bf16.mxu0 %v11028
    %12034 = vmatpush1.bf16.msra.mxu0 %v11027
    %12035 = vmatprep.subr.bf16.mxu0 %v11032
    %12036 = vmatpush1.bf16.msra.mxu0 %v11031
    %12037 = vmatprep.subr.bf16.mxu0 %v11036
    %12038 = vmatpush1.bf16.msra.mxu0 %v11035
    %12039 = vmatprep.subr.bf16.mxu0 %v11040
    %12040 = vmatpush1.bf16.msra.mxu0 %v11039
    %12041 = vmatprep.subr.bf16.mxu0 %v11044
    %12042 = vmatpush1.bf16.msra.mxu0 %v11043
    %12043 = vmatprep.subr.bf16.mxu0 %v11048
    %12044 = vmatpush1.bf16.msra.mxu0 %v11047
    %12045 = vmatprep.subr.bf16.mxu0 %v11052
    %12046 = vmatpush1.bf16.msra.mxu0 %v11051
    %12047 = vmatprep.mubr.bf16.mxu0 %v8906
    %12048 = vmatmul.mubr.bf16.gmra.mrb[0].mxu0 %v8905
    %v12049 = vpop.f32.mrb[0].mxu0
    %v12050 = vadd.f32 %v9438, %v12049
    %v12051 = vpop.f32.mrb[0].mxu0
    %v12052 = vadd.f32 %v9442, %v12051
    %v12053 = vpop.f32.mrb[0].mxu0
    %v12054 = vpop.f32.mrb[0].mxu0
    %12055 = vdwg.mxu0
    %12056 = vmatprep.subr.bf16.mxu0 %v11056
    %12057 = vmatpush1.bf16.msra.mxu0 %v11055
    %12058 = vmatprep.subr.bf16.mxu0 %v11060
    %12059 = vmatpush1.bf16.msra.mxu0 %v11059
    %12060 = vmatprep.subr.bf16.mxu0 %v11064
    %12061 = vmatpush1.bf16.msra.mxu0 %v11063
    %12062 = vmatprep.subr.bf16.mxu0 %v11068
    %12063 = vmatpush1.bf16.msra.mxu0 %v11067
    %12064 = vmatprep.subr.bf16.mxu0 %v11072
    %12065 = vmatpush1.bf16.msra.mxu0 %v11071
    %12066 = vmatprep.subr.bf16.mxu0 %v11076
    %12067 = vmatpush1.bf16.msra.mxu0 %v11075
    %12068 = vmatprep.subr.bf16.mxu0 %v11080
    %12069 = vmatpush1.bf16.msra.mxu0 %v11079
    %12070 = vmatprep.subr.bf16.mxu0 %v11084
    %12071 = vmatpush1.bf16.msra.mxu0 %v11083
    %12072 = vmatprep.subr.bf16.mxu0 %v11088
    %12073 = vmatpush1.bf16.msra.mxu0 %v11087
    %12074 = vmatprep.subr.bf16.mxu0 %v11092
    %12075 = vmatpush1.bf16.msra.mxu0 %v11091
    %12076 = vmatprep.subr.bf16.mxu0 %v11096
    %12077 = vmatpush1.bf16.msra.mxu0 %v11095
    %12078 = vmatprep.subr.bf16.mxu0 %v11100
    %12079 = vmatpush1.bf16.msra.mxu0 %v11099
    %12080 = vmatprep.subr.bf16.mxu0 %v11104
    %12081 = vmatpush1.bf16.msra.mxu0 %v11103
    %12082 = vmatprep.subr.bf16.mxu0 %v11108
    %12083 = vmatpush1.bf16.msra.mxu0 %v11107
    %12084 = vmatprep.subr.bf16.mxu0 %v11112
    %12085 = vmatpush1.bf16.msra.mxu0 %v11111
    %12086 = vmatprep.subr.bf16.mxu0 %v11116
    %12087 = vmatpush1.bf16.msra.mxu0 %v11115
    %12088 = vmatprep.mubr.bf16.mxu0 %v8908
    %12089 = vmatmul.mubr.bf16.gmra.mrb[0].mxu0 %v8907
    %v12090 = vpop.f32.mrb[0].mxu0
    %v12091 = vadd.f32 %v12050, %v12090
    %v12092 = vpop.f32.mrb[0].mxu0
    %v12093 = vadd.f32 %v12052, %v12092
    %v12094 = vpop.f32.mrb[0].mxu0
    %v12095 = vpop.f32.mrb[0].mxu0
    %12096 = vdwg.mxu0
    %12097 = vmatprep.subr.bf16.mxu0 %v11120
    %12098 = vmatpush1.bf16.msra.mxu0 %v11119
    %12099 = vmatprep.subr.bf16.mxu0 %v11124
    %12100 = vmatpush1.bf16.msra.mxu0 %v11123
    %12101 = vmatprep.subr.bf16.mxu0 %v11128
    %12102 = vmatpush1.bf16.msra.mxu0 %v11127
    %12103 = vmatprep.subr.bf16.mxu0 %v11132
    %12104 = vmatpush1.bf16.msra.mxu0 %v11131
    %12105 = vmatprep.subr.bf16.mxu0 %v11136
    %12106 = vmatpush1.bf16.msra.mxu0 %v11135
    %12107 = vmatprep.subr.bf16.mxu0 %v11140
    %12108 = vmatpush1.bf16.msra.mxu0 %v11139
    %12109 = vmatprep.subr.bf16.mxu0 %v11144
    %12110 = vmatpush1.bf16.msra.mxu0 %v11143
    %12111 = vmatprep.subr.bf16.mxu0 %v11148
    %12112 = vmatpush1.bf16.msra.mxu0 %v11147
    %12113 = vmatprep.subr.bf16.mxu0 %v11152
    %12114 = vmatpush1.bf16.msra.mxu0 %v11151
    %12115 = vmatprep.subr.bf16.mxu0 %v11156
    %12116 = vmatpush1.bf16.msra.mxu0 %v11155
    %12117 = vmatprep.subr.bf16.mxu0 %v11160
    %12118 = vmatpush1.bf16.msra.mxu0 %v11159
    %12119 = vmatprep.subr.bf16.mxu0 %v11164
    %12120 = vmatpush1.bf16.msra.mxu0 %v11163
    %12121 = vmatprep.subr.bf16.mxu0 %v11168
    %12122 = vmatpush1.bf16.msra.mxu0 %v11167
    %12123 = vmatprep.subr.bf16.mxu0 %v11172
    %12124 = vmatpush1.bf16.msra.mxu0 %v11171
    %12125 = vmatprep.subr.bf16.mxu0 %v11176
    %12126 = vmatpush1.bf16.msra.mxu0 %v11175
    %12127 = vmatprep.subr.bf16.mxu0 %v11180
    %12128 = vmatpush1.bf16.msra.mxu0 %v11179
    %12129 = vmatprep.mubr.bf16.mxu0 %v8910
    %12130 = vmatmul.mubr.bf16.gmra.mrb[0].mxu0 %v8909
    %v12131 = vpop.f32.mrb[0].mxu0
    %v12132 = vadd.f32 %v12091, %v12131
    %v12133 = vpop.f32.mrb[0].mxu0
    %v12134 = vadd.f32 %v12093, %v12133
    %v12135 = vpop.f32.mrb[0].mxu0
    %v12136 = vpop.f32.mrb[0].mxu0
    %12137 = vdwg.mxu0
    %12138 = vmatprep.subr.bf16.mxu0 %v11184
    %12139 = vmatpush1.bf16.msra.mxu0 %v11183
    %12140 = vmatprep.subr.bf16.mxu0 %v11188
    %12141 = vmatpush1.bf16.msra.mxu0 %v11187
    %12142 = vmatprep.subr.bf16.mxu0 %v11192
    %12143 = vmatpush1.bf16.msra.mxu0 %v11191
    %12144 = vmatprep.subr.bf16.mxu0 %v11196
    %12145 = vmatpush1.bf16.msra.mxu0 %v11195
    %12146 = vmatprep.subr.bf16.mxu0 %v11200
    %12147 = vmatpush1.bf16.msra.mxu0 %v11199
    %12148 = vmatprep.subr.bf16.mxu0 %v11204
    %12149 = vmatpush1.bf16.msra.mxu0 %v11203
    %12150 = vmatprep.subr.bf16.mxu0 %v11208
    %12151 = vmatpush1.bf16.msra.mxu0 %v11207
    %12152 = vmatprep.subr.bf16.mxu0 %v11212
    %12153 = vmatpush1.bf16.msra.mxu0 %v11211
    %12154 = vmatprep.subr.bf16.mxu0 %v11216
    %12155 = vmatpush1.bf16.msra.mxu0 %v11215
    %12156 = vmatprep.subr.bf16.mxu0 %v11220
    %12157 = vmatpush1.bf16.msra.mxu0 %v11219
    %12158 = vmatprep.subr.bf16.mxu0 %v11224
    %12159 = vmatpush1.bf16.msra.mxu0 %v11223
    %12160 = vmatprep.subr.bf16.mxu0 %v11228
    %12161 = vmatpush1.bf16.msra.mxu0 %v11227
    %12162 = vmatprep.subr.bf16.mxu0 %v11232
    %12163 = vmatpush1.bf16.msra.mxu0 %v11231
    %12164 = vmatprep.subr.bf16.mxu0 %v11236
    %12165 = vmatpush1.bf16.msra.mxu0 %v11235
    %12166 = vmatprep.subr.bf16.mxu0 %v11240
    %12167 = vmatpush1.bf16.msra.mxu0 %v11239
    %12168 = vmatprep.subr.bf16.mxu0 %v11244
    %12169 = vmatpush1.bf16.msra.mxu0 %v11243
    %12170 = vmatprep.mubr.bf16.mxu0 %v8912
    %12171 = vmatmul.mubr.bf16.gmra.mrb[0].mxu0 %v8911
    %v12172 = vpop.f32.mrb[0].mxu0
    %v12173 = vadd.f32 %v12132, %v12172
    %v12174 = vpop.f32.mrb[0].mxu0
    %v12175 = vadd.f32 %v12134, %v12174
    %v12176 = vpop.f32.mrb[0].mxu0
    %v12177 = vpop.f32.mrb[0].mxu0
    %12178 = vdwg.mxu0
    %12179 = vmatprep.subr.bf16.mxu0 %v11248
    %12180 = vmatpush1.bf16.msra.mxu0 %v11247
    %12181 = vmatprep.subr.bf16.mxu0 %v11252
    %12182 = vmatpush1.bf16.msra.mxu0 %v11251
    %12183 = vmatprep.subr.bf16.mxu0 %v11256
    %12184 = vmatpush1.bf16.msra.mxu0 %v11255
    %12185 = vmatprep.subr.bf16.mxu0 %v11260
    %12186 = vmatpush1.bf16.msra.mxu0 %v11259
    %12187 = vmatprep.subr.bf16.mxu0 %v11264
    %12188 = vmatpush1.bf16.msra.mxu0 %v11263
    %12189 = vmatprep.subr.bf16.mxu0 %v11268
    %12190 = vmatpush1.bf16.msra.mxu0 %v11267
    %12191 = vmatprep.subr.bf16.mxu0 %v11272
    %12192 = vmatpush1.bf16.msra.mxu0 %v11271
    %12193 = vmatprep.subr.bf16.mxu0 %v11276
    %12194 = vmatpush1.bf16.msra.mxu0 %v11275
    %12195 = vmatprep.subr.bf16.mxu0 %v11280
    %12196 = vmatpush1.bf16.msra.mxu0 %v11279
    %12197 = vmatprep.subr.bf16.mxu0 %v11284
    %12198 = vmatpush1.bf16.msra.mxu0 %v11283
    %12199 = vmatprep.subr.bf16.mxu0 %v11288
    %12200 = vmatpush1.bf16.msra.mxu0 %v11287
    %12201 = vmatprep.subr.bf16.mxu0 %v11292
    %12202 = vmatpush1.bf16.msra.mxu0 %v11291
    %12203 = vmatprep.subr.bf16.mxu0 %v11296
    %12204 = vmatpush1.bf16.msra.mxu0 %v11295
    %12205 = vmatprep.subr.bf16.mxu0 %v11300
    %12206 = vmatpush1.bf16.msra.mxu0 %v11299
    %12207 = vmatprep.subr.bf16.mxu0 %v11304
    %12208 = vmatpush1.bf16.msra.mxu0 %v11303
    %12209 = vmatprep.subr.bf16.mxu0 %v11308
    %12210 = vmatpush1.bf16.msra.mxu0 %v11307
    %12211 = vmatprep.mubr.bf16.mxu0 %v8914
    %12212 = vmatmul.mubr.bf16.gmra.mrb[0].mxu0 %v8913
    %v12213 = vpop.f32.mrb[0].mxu0
    %v12214 = vadd.f32 %v12173, %v12213
    %v12215 = vpop.f32.mrb[0].mxu0
    %v12216 = vadd.f32 %v12175, %v12215
    %v12217 = vpop.f32.mrb[0].mxu0
    %v12218 = vpop.f32.mrb[0].mxu0
    %12219 = vdwg.mxu0
    %12220 = vmatprep.subr.bf16.mxu0 %v11312
    %12221 = vmatpush1.bf16.msra.mxu0 %v11311
    %12222 = vmatprep.subr.bf16.mxu0 %v11316
    %12223 = vmatpush1.bf16.msra.mxu0 %v11315
    %12224 = vmatprep.subr.bf16.mxu0 %v11320
    %12225 = vmatpush1.bf16.msra.mxu0 %v11319
    %12226 = vmatprep.subr.bf16.mxu0 %v11324
    %12227 = vmatpush1.bf16.msra.mxu0 %v11323
    %12228 = vmatprep.subr.bf16.mxu0 %v11328
    %12229 = vmatpush1.bf16.msra.mxu0 %v11327
    %12230 = vmatprep.subr.bf16.mxu0 %v11332
    %12231 = vmatpush1.bf16.msra.mxu0 %v11331
    %12232 = vmatprep.subr.bf16.mxu0 %v11336
    %12233 = vmatpush1.bf16.msra.mxu0 %v11335
    %12234 = vmatprep.subr.bf16.mxu0 %v11340
    %12235 = vmatpush1.bf16.msra.mxu0 %v11339
    %12236 = vmatprep.subr.bf16.mxu0 %v11344
    %12237 = vmatpush1.bf16.msra.mxu0 %v11343
    %12238 = vmatprep.subr.bf16.mxu0 %v11348
    %12239 = vmatpush1.bf16.msra.mxu0 %v11347
    %12240 = vmatprep.subr.bf16.mxu0 %v11352
    %12241 = vmatpush1.bf16.msra.mxu0 %v11351
    %12242 = vmatprep.subr.bf16.mxu0 %v11356
    %12243 = vmatpush1.bf16.msra.mxu0 %v11355
    %12244 = vmatprep.subr.bf16.mxu0 %v11360
    %12245 = vmatpush1.bf16.msra.mxu0 %v11359
    %12246 = vmatprep.subr.bf16.mxu0 %v11364
    %12247 = vmatpush1.bf16.msra.mxu0 %v11363
    %12248 = vmatprep.subr.bf16.mxu0 %v11368
    %12249 = vmatpush1.bf16.msra.mxu0 %v11367
    %12250 = vmatprep.subr.bf16.mxu0 %v11372
    %12251 = vmatpush1.bf16.msra.mxu0 %v11371
    %12252 = vmatprep.mubr.bf16.mxu0 %v8916
    %12253 = vmatmul.mubr.bf16.gmra.mrb[0].mxu0 %v8915
    %v12254 = vpop.f32.mrb[0].mxu0
    %v12255 = vadd.f32 %v12214, %v12254
    %v12256 = vpop.f32.mrb[0].mxu0
    %v12257 = vadd.f32 %v12216, %v12256
    %v12258 = vpop.f32.mrb[0].mxu0
    %v12259 = vpop.f32.mrb[0].mxu0
    %12260 = vdwg.mxu0
    %12261 = vmatprep.subr.bf16.mxu0 %v11376
    %12262 = vmatpush1.bf16.msra.mxu0 %v11375
    %12263 = vmatprep.subr.bf16.mxu0 %v11380
    %12264 = vmatpush1.bf16.msra.mxu0 %v11379
    %12265 = vmatprep.subr.bf16.mxu0 %v11384
    %12266 = vmatpush1.bf16.msra.mxu0 %v11383
    %12267 = vmatprep.subr.bf16.mxu0 %v11388
    %12268 = vmatpush1.bf16.msra.mxu0 %v11387
    %12269 = vmatprep.subr.bf16.mxu0 %v11392
    %12270 = vmatpush1.bf16.msra.mxu0 %v11391
    %12271 = vmatprep.subr.bf16.mxu0 %v11396
    %12272 = vmatpush1.bf16.msra.mxu0 %v11395
    %12273 = vmatprep.subr.bf16.mxu0 %v11400
    %12274 = vmatpush1.bf16.msra.mxu0 %v11399
    %12275 = vmatprep.subr.bf16.mxu0 %v11404
    %12276 = vmatpush1.bf16.msra.mxu0 %v11403
    %12277 = vmatprep.subr.bf16.mxu0 %v11408
    %12278 = vmatpush1.bf16.msra.mxu0 %v11407
    %12279 = vmatprep.subr.bf16.mxu0 %v11412
    %12280 = vmatpush1.bf16.msra.mxu0 %v11411
    %12281 = vmatprep.subr.bf16.mxu0 %v11416
    %12282 = vmatpush1.bf16.msra.mxu0 %v11415
    %12283 = vmatprep.subr.bf16.mxu0 %v11420
    %12284 = vmatpush1.bf16.msra.mxu0 %v11419
    %12285 = vmatprep.subr.bf16.mxu0 %v11424
    %12286 = vmatpush1.bf16.msra.mxu0 %v11423
    %12287 = vmatprep.subr.bf16.mxu0 %v11428
    %12288 = vmatpush1.bf16.msra.mxu0 %v11427
    %12289 = vmatprep.subr.bf16.mxu0 %v11432
    %12290 = vmatpush1.bf16.msra.mxu0 %v11431
    %12291 = vmatprep.subr.bf16.mxu0 %v11436
    %12292 = vmatpush1.bf16.msra.mxu0 %v11435
    %12293 = vmatprep.mubr.bf16.mxu0 %v8918
    %12294 = vmatmul.mubr.bf16.gmra.mrb[0].mxu0 %v8917
    %v12295 = vpop.f32.mrb[0].mxu0
    %v12296 = vadd.f32 %v12255, %v12295
    %v12297 = vpop.f32.mrb[0].mxu0
    %v12298 = vadd.f32 %v12257, %v12297
    %v12299 = vpop.f32.mrb[0].mxu0
    %v12300 = vpop.f32.mrb[0].mxu0
    %12301 = vdwg.mxu0
    %12302 = vmatprep.subr.bf16.mxu0 %v11440
    %12303 = vmatpush1.bf16.msra.mxu0 %v11439
    %12304 = vmatprep.subr.bf16.mxu0 %v11444
    %12305 = vmatpush1.bf16.msra.mxu0 %v11443
    %12306 = vmatprep.subr.bf16.mxu0 %v11448
    %12307 = vmatpush1.bf16.msra.mxu0 %v11447
    %12308 = vmatprep.subr.bf16.mxu0 %v11452
    %12309 = vmatpush1.bf16.msra.mxu0 %v11451
    %12310 = vmatprep.subr.bf16.mxu0 %v11456
    %12311 = vmatpush1.bf16.msra.mxu0 %v11455
    %12312 = vmatprep.subr.bf16.mxu0 %v11460
    %12313 = vmatpush1.bf16.msra.mxu0 %v11459
    %12314 = vmatprep.subr.bf16.mxu0 %v11464
    %12315 = vmatpush1.bf16.msra.mxu0 %v11463
    %12316 = vmatprep.subr.bf16.mxu0 %v11468
    %12317 = vmatpush1.bf16.msra.mxu0 %v11467
    %12318 = vmatprep.subr.bf16.mxu0 %v11472
    %12319 = vmatpush1.bf16.msra.mxu0 %v11471
    %12320 = vmatprep.subr.bf16.mxu0 %v11476
    %12321 = vmatpush1.bf16.msra.mxu0 %v11475
    %12322 = vmatprep.subr.bf16.mxu0 %v11480
    %12323 = vmatpush1.bf16.msra.mxu0 %v11479
    %12324 = vmatprep.subr.bf16.mxu0 %v11484
    %12325 = vmatpush1.bf16.msra.mxu0 %v11483
    %12326 = vmatprep.subr.bf16.mxu0 %v11488
    %12327 = vmatpush1.bf16.msra.mxu0 %v11487
    %12328 = vmatprep.subr.bf16.mxu0 %v11492
    %12329 = vmatpush1.bf16.msra.mxu0 %v11491
    %12330 = vmatprep.subr.bf16.mxu0 %v11496
    %12331 = vmatpush1.bf16.msra.mxu0 %v11495
    %12332 = vmatprep.subr.bf16.mxu0 %v11500
    %12333 = vmatpush1.bf16.msra.mxu0 %v11499
    %12334 = vmatprep.mubr.bf16.mxu0 %v8920
    %12335 = vmatmul.mubr.bf16.gmra.mrb[0].mxu0 %v8919
    %v12336 = vpop.f32.mrb[0].mxu0
    %v12337 = vadd.f32 %v12296, %v12336
    %v12338 = vpop.f32.mrb[0].mxu0
    %v12339 = vadd.f32 %v12298, %v12338
    %v12340 = vpop.f32.mrb[0].mxu0
    %v12341 = vpop.f32.mrb[0].mxu0
    %12342 = vdwg.mxu0
    %12343 = vmatprep.subr.bf16.mxu0 %v10994
    %12344 = vmatpush1.bf16.msra.mxu0 %v10993
    %12345 = vmatprep.subr.bf16.mxu0 %v10998
    %12346 = vmatpush1.bf16.msra.mxu0 %v10997
    %12347 = vmatprep.subr.bf16.mxu0 %v11002
    %12348 = vmatpush1.bf16.msra.mxu0 %v11001
    %12349 = vmatprep.subr.bf16.mxu0 %v11006
    %12350 = vmatpush1.bf16.msra.mxu0 %v11005
    %12351 = vmatprep.subr.bf16.mxu0 %v11010
    %12352 = vmatpush1.bf16.msra.mxu0 %v11009
    %12353 = vmatprep.subr.bf16.mxu0 %v11014
    %12354 = vmatpush1.bf16.msra.mxu0 %v11013
    %12355 = vmatprep.subr.bf16.mxu0 %v11018
    %12356 = vmatpush1.bf16.msra.mxu0 %v11017
    %12357 = vmatprep.subr.bf16.mxu0 %v11022
    %12358 = vmatpush1.bf16.msra.mxu0 %v11021
    %12359 = vmatprep.subr.bf16.mxu0 %v11026
    %12360 = vmatpush1.bf16.msra.mxu0 %v11025
    %12361 = vmatprep.subr.bf16.mxu0 %v11030
    %12362 = vmatpush1.bf16.msra.mxu0 %v11029
    %12363 = vmatprep.subr.bf16.mxu0 %v11034
    %12364 = vmatpush1.bf16.msra.mxu0 %v11033
    %12365 = vmatprep.subr.bf16.mxu0 %v11038
    %12366 = vmatpush1.bf16.msra.mxu0 %v11037
    %12367 = vmatprep.subr.bf16.mxu0 %v11042
    %12368 = vmatpush1.bf16.msra.mxu0 %v11041
    %12369 = vmatprep.subr.bf16.mxu0 %v11046
    %12370 = vmatpush1.bf16.msra.mxu0 %v11045
    %12371 = vmatprep.subr.bf16.mxu0 %v11050
    %12372 = vmatpush1.bf16.msra.mxu0 %v11049
    %12373 = vmatprep.subr.bf16.mxu0 %v11054
    %12374 = vmatpush1.bf16.msra.mxu0 %v11053
    %12375 = vmatprep.mubr.bf16.mxu0 %v8906
    %12376 = vmatmul.mubr.bf16.gmra.mrb[0].mxu0 %v8905
    %v12377 = vpop.f32.mrb[0].mxu0
    %v12378 = vadd.f32 %v9446, %v12377
    %v12379 = vpop.f32.mrb[0].mxu0
    %v12380 = vadd.f32 %v9450, %v12379
    %v12381 = vpop.f32.mrb[0].mxu0
    %v12382 = vpop.f32.mrb[0].mxu0
    %12383 = vdwg.mxu0
    %12384 = vmatprep.subr.bf16.mxu0 %v11058
    %12385 = vmatpush1.bf16.msra.mxu0 %v11057
    %12386 = vmatprep.subr.bf16.mxu0 %v11062
    %12387 = vmatpush1.bf16.msra.mxu0 %v11061
    %12388 = vmatprep.subr.bf16.mxu0 %v11066
    %12389 = vmatpush1.bf16.msra.mxu0 %v11065
    %12390 = vmatprep.subr.bf16.mxu0 %v11070
    %12391 = vmatpush1.bf16.msra.mxu0 %v11069
    %12392 = vmatprep.subr.bf16.mxu0 %v11074
    %12393 = vmatpush1.bf16.msra.mxu0 %v11073
    %12394 = vmatprep.subr.bf16.mxu0 %v11078
    %12395 = vmatpush1.bf16.msra.mxu0 %v11077
    %12396 = vmatprep.subr.bf16.mxu0 %v11082
    %12397 = vmatpush1.bf16.msra.mxu0 %v11081
    %12398 = vmatprep.subr.bf16.mxu0 %v11086
    %12399 = vmatpush1.bf16.msra.mxu0 %v11085
    %12400 = vmatprep.subr.bf16.mxu0 %v11090
    %12401 = vmatpush1.bf16.msra.mxu0 %v11089
    %12402 = vmatprep.subr.bf16.mxu0 %v11094
    %12403 = vmatpush1.bf16.msra.mxu0 %v11093
    %12404 = vmatprep.subr.bf16.mxu0 %v11098
    %12405 = vmatpush1.bf16.msra.mxu0 %v11097
    %12406 = vmatprep.subr.bf16.mxu0 %v11102
    %12407 = vmatpush1.bf16.msra.mxu0 %v11101
    %12408 = vmatprep.subr.bf16.mxu0 %v11106
    %12409 = vmatpush1.bf16.msra.mxu0 %v11105
    %12410 = vmatprep.subr.bf16.mxu0 %v11110
    %12411 = vmatpush1.bf16.msra.mxu0 %v11109
    %12412 = vmatprep.subr.bf16.mxu0 %v11114
    %12413 = vmatpush1.bf16.msra.mxu0 %v11113
    %12414 = vmatprep.subr.bf16.mxu0 %v11118
    %12415 = vmatpush1.bf16.msra.mxu0 %v11117
    %12416 = vmatprep.mubr.bf16.mxu0 %v8908
    %12417 = vmatmul.mubr.bf16.gmra.mrb[0].mxu0 %v8907
    %v12418 = vpop.f32.mrb[0].mxu0
    %v12419 = vadd.f32 %v12378, %v12418
    %v12420 = vpop.f32.mrb[0].mxu0
    %v12421 = vadd.f32 %v12380, %v12420
    %v12422 = vpop.f32.mrb[0].mxu0
    %v12423 = vpop.f32.mrb[0].mxu0
    %12424 = vdwg.mxu0
    %12425 = vmatprep.subr.bf16.mxu0 %v11122
    %12426 = vmatpush1.bf16.msra.mxu0 %v11121
    %12427 = vmatprep.subr.bf16.mxu0 %v11126
    %12428 = vmatpush1.bf16.msra.mxu0 %v11125
    %12429 = vmatprep.subr.bf16.mxu0 %v11130
    %12430 = vmatpush1.bf16.msra.mxu0 %v11129
    %12431 = vmatprep.subr.bf16.mxu0 %v11134
    %12432 = vmatpush1.bf16.msra.mxu0 %v11133
    %12433 = vmatprep.subr.bf16.mxu0 %v11138
    %12434 = vmatpush1.bf16.msra.mxu0 %v11137
    %12435 = vmatprep.subr.bf16.mxu0 %v11142
    %12436 = vmatpush1.bf16.msra.mxu0 %v11141
    %12437 = vmatprep.subr.bf16.mxu0 %v11146
    %12438 = vmatpush1.bf16.msra.mxu0 %v11145
    %12439 = vmatprep.subr.bf16.mxu0 %v11150
    %12440 = vmatpush1.bf16.msra.mxu0 %v11149
    %12441 = vmatprep.subr.bf16.mxu0 %v11154
    %12442 = vmatpush1.bf16.msra.mxu0 %v11153
    %12443 = vmatprep.subr.bf16.mxu0 %v11158
    %12444 = vmatpush1.bf16.msra.mxu0 %v11157
    %12445 = vmatprep.subr.bf16.mxu0 %v11162
    %12446 = vmatpush1.bf16.msra.mxu0 %v11161
    %12447 = vmatprep.subr.bf16.mxu0 %v11166
    %12448 = vmatpush1.bf16.msra.mxu0 %v11165
    %12449 = vmatprep.subr.bf16.mxu0 %v11170
    %12450 = vmatpush1.bf16.msra.mxu0 %v11169
    %12451 = vmatprep.subr.bf16.mxu0 %v11174
    %12452 = vmatpush1.bf16.msra.mxu0 %v11173
    %12453 = vmatprep.subr.bf16.mxu0 %v11178
    %12454 = vmatpush1.bf16.msra.mxu0 %v11177
    %12455 = vmatprep.subr.bf16.mxu0 %v11182
    %12456 = vmatpush1.bf16.msra.mxu0 %v11181
    %12457 = vmatprep.mubr.bf16.mxu0 %v8910
    %12458 = vmatmul.mubr.bf16.gmra.mrb[0].mxu0 %v8909
    %v12459 = vpop.f32.mrb[0].mxu0
    %v12460 = vadd.f32 %v12419, %v12459
    %v12461 = vpop.f32.mrb[0].mxu0
    %v12462 = vadd.f32 %v12421, %v12461
    %v12463 = vpop.f32.mrb[0].mxu0
    %v12464 = vpop.f32.mrb[0].mxu0
    %12465 = vdwg.mxu0
    %12466 = vmatprep.subr.bf16.mxu0 %v11186
    %12467 = vmatpush1.bf16.msra.mxu0 %v11185
    %12468 = vmatprep.subr.bf16.mxu0 %v11190
    %12469 = vmatpush1.bf16.msra.mxu0 %v11189
    %12470 = vmatprep.subr.bf16.mxu0 %v11194
    %12471 = vmatpush1.bf16.msra.mxu0 %v11193
    %12472 = vmatprep.subr.bf16.mxu0 %v11198
    %12473 = vmatpush1.bf16.msra.mxu0 %v11197
    %12474 = vmatprep.subr.bf16.mxu0 %v11202
    %12475 = vmatpush1.bf16.msra.mxu0 %v11201
    %12476 = vmatprep.subr.bf16.mxu0 %v11206
    %12477 = vmatpush1.bf16.msra.mxu0 %v11205
    %12478 = vmatprep.subr.bf16.mxu0 %v11210
    %12479 = vmatpush1.bf16.msra.mxu0 %v11209
    %12480 = vmatprep.subr.bf16.mxu0 %v11214
    %12481 = vmatpush1.bf16.msra.mxu0 %v11213
    %12482 = vmatprep.subr.bf16.mxu0 %v11218
    %12483 = vmatpush1.bf16.msra.mxu0 %v11217
    %12484 = vmatprep.subr.bf16.mxu0 %v11222
    %12485 = vmatpush1.bf16.msra.mxu0 %v11221
    %12486 = vmatprep.subr.bf16.mxu0 %v11226
    %12487 = vmatpush1.bf16.msra.mxu0 %v11225
    %12488 = vmatprep.subr.bf16.mxu0 %v11230
    %12489 = vmatpush1.bf16.msra.mxu0 %v11229
    %12490 = vmatprep.subr.bf16.mxu0 %v11234
    %12491 = vmatpush1.bf16.msra.mxu0 %v11233
    %12492 = vmatprep.subr.bf16.mxu0 %v11238
    %12493 = vmatpush1.bf16.msra.mxu0 %v11237
    %12494 = vmatprep.subr.bf16.mxu0 %v11242
    %12495 = vmatpush1.bf16.msra.mxu0 %v11241
    %12496 = vmatprep.subr.bf16.mxu0 %v11246
    %12497 = vmatpush1.bf16.msra.mxu0 %v11245
    %12498 = vmatprep.mubr.bf16.mxu0 %v8912
    %12499 = vmatmul.mubr.bf16.gmra.mrb[0].mxu0 %v8911
    %v12500 = vpop.f32.mrb[0].mxu0
    %v12501 = vadd.f32 %v12460, %v12500
    %v12502 = vpop.f32.mrb[0].mxu0
    %v12503 = vadd.f32 %v12462, %v12502
    %v12504 = vpop.f32.mrb[0].mxu0
    %v12505 = vpop.f32.mrb[0].mxu0
    %12506 = vdwg.mxu0
    %12507 = vmatprep.subr.bf16.mxu0 %v11250
    %12508 = vmatpush1.bf16.msra.mxu0 %v11249
    %12509 = vmatprep.subr.bf16.mxu0 %v11254
    %12510 = vmatpush1.bf16.msra.mxu0 %v11253
    %12511 = vmatprep.subr.bf16.mxu0 %v11258
    %12512 = vmatpush1.bf16.msra.mxu0 %v11257
    %12513 = vmatprep.subr.bf16.mxu0 %v11262
    %12514 = vmatpush1.bf16.msra.mxu0 %v11261
    %12515 = vmatprep.subr.bf16.mxu0 %v11266
    %12516 = vmatpush1.bf16.msra.mxu0 %v11265
    %12517 = vmatprep.subr.bf16.mxu0 %v11270
    %12518 = vmatpush1.bf16.msra.mxu0 %v11269
    %12519 = vmatprep.subr.bf16.mxu0 %v11274
    %12520 = vmatpush1.bf16.msra.mxu0 %v11273
    %12521 = vmatprep.subr.bf16.mxu0 %v11278
    %12522 = vmatpush1.bf16.msra.mxu0 %v11277
    %12523 = vmatprep.subr.bf16.mxu0 %v11282
    %12524 = vmatpush1.bf16.msra.mxu0 %v11281
    %12525 = vmatprep.subr.bf16.mxu0 %v11286
    %12526 = vmatpush1.bf16.msra.mxu0 %v11285
    %12527 = vmatprep.subr.bf16.mxu0 %v11290
    %12528 = vmatpush1.bf16.msra.mxu0 %v11289
    %12529 = vmatprep.subr.bf16.mxu0 %v11294
    %12530 = vmatpush1.bf16.msra.mxu0 %v11293
    %12531 = vmatprep.subr.bf16.mxu0 %v11298
    %12532 = vmatpush1.bf16.msra.mxu0 %v11297
    %12533 = vmatprep.subr.bf16.mxu0 %v11302
    %12534 = vmatpush1.bf16.msra.mxu0 %v11301
    %12535 = vmatprep.subr.bf16.mxu0 %v11306
    %12536 = vmatpush1.bf16.msra.mxu0 %v11305
    %12537 = vmatprep.subr.bf16.mxu0 %v11310
    %12538 = vmatpush1.bf16.msra.mxu0 %v11309
    %12539 = vmatprep.mubr.bf16.mxu0 %v8914
    %12540 = vmatmul.mubr.bf16.gmra.mrb[0].mxu0 %v8913
    %v12541 = vpop.f32.mrb[0].mxu0
    %v12542 = vadd.f32 %v12501, %v12541
    %v12543 = vpop.f32.mrb[0].mxu0
    %v12544 = vadd.f32 %v12503, %v12543
    %v12545 = vpop.f32.mrb[0].mxu0
    %v12546 = vpop.f32.mrb[0].mxu0
    %12547 = vdwg.mxu0
    %12548 = vmatprep.subr.bf16.mxu0 %v11314
    %12549 = vmatpush1.bf16.msra.mxu0 %v11313
    %12550 = vmatprep.subr.bf16.mxu0 %v11318
    %12551 = vmatpush1.bf16.msra.mxu0 %v11317
    %12552 = vmatprep.subr.bf16.mxu0 %v11322
    %12553 = vmatpush1.bf16.msra.mxu0 %v11321
    %12554 = vmatprep.subr.bf16.mxu0 %v11326
    %12555 = vmatpush1.bf16.msra.mxu0 %v11325
    %12556 = vmatprep.subr.bf16.mxu0 %v11330
    %12557 = vmatpush1.bf16.msra.mxu0 %v11329
    %12558 = vmatprep.subr.bf16.mxu0 %v11334
    %12559 = vmatpush1.bf16.msra.mxu0 %v11333
    %12560 = vmatprep.subr.bf16.mxu0 %v11338
    %12561 = vmatpush1.bf16.msra.mxu0 %v11337
    %12562 = vmatprep.subr.bf16.mxu0 %v11342
    %12563 = vmatpush1.bf16.msra.mxu0 %v11341
    %12564 = vmatprep.subr.bf16.mxu0 %v11346
    %12565 = vmatpush1.bf16.msra.mxu0 %v11345
    %12566 = vmatprep.subr.bf16.mxu0 %v11350
    %12567 = vmatpush1.bf16.msra.mxu0 %v11349
    %12568 = vmatprep.subr.bf16.mxu0 %v11354
    %12569 = vmatpush1.bf16.msra.mxu0 %v11353
    %12570 = vmatprep.subr.bf16.mxu0 %v11358
    %12571 = vmatpush1.bf16.msra.mxu0 %v11357
    %12572 = vmatprep.subr.bf16.mxu0 %v11362
    %12573 = vmatpush1.bf16.msra.mxu0 %v11361
    %12574 = vmatprep.subr.bf16.mxu0 %v11366
    %12575 = vmatpush1.bf16.msra.mxu0 %v11365
    %12576 = vmatprep.subr.bf16.mxu0 %v11370
    %12577 = vmatpush1.bf16.msra.mxu0 %v11369
    %12578 = vmatprep.subr.bf16.mxu0 %v11374
    %12579 = vmatpush1.bf16.msra.mxu0 %v11373
    %12580 = vmatprep.mubr.bf16.mxu0 %v8916
    %12581 = vmatmul.mubr.bf16.gmra.mrb[0].mxu0 %v8915
    %v12582 = vpop.f32.mrb[0].mxu0
    %v12583 = vadd.f32 %v12542, %v12582
    %v12584 = vpop.f32.mrb[0].mxu0
    %v12585 = vadd.f32 %v12544, %v12584
    %v12586 = vpop.f32.mrb[0].mxu0
    %v12587 = vpop.f32.mrb[0].mxu0
    %12588 = vdwg.mxu0
    %12589 = vmatprep.subr.bf16.mxu0 %v11378
    %12590 = vmatpush1.bf16.msra.mxu0 %v11377
    %12591 = vmatprep.subr.bf16.mxu0 %v11382
    %12592 = vmatpush1.bf16.msra.mxu0 %v11381
    %12593 = vmatprep.subr.bf16.mxu0 %v11386
    %12594 = vmatpush1.bf16.msra.mxu0 %v11385
    %12595 = vmatprep.subr.bf16.mxu0 %v11390
    %12596 = vmatpush1.bf16.msra.mxu0 %v11389
    %12597 = vmatprep.subr.bf16.mxu0 %v11394
    %12598 = vmatpush1.bf16.msra.mxu0 %v11393
    %12599 = vmatprep.subr.bf16.mxu0 %v11398
    %12600 = vmatpush1.bf16.msra.mxu0 %v11397
    %12601 = vmatprep.subr.bf16.mxu0 %v11402
    %12602 = vmatpush1.bf16.msra.mxu0 %v11401
    %12603 = vmatprep.subr.bf16.mxu0 %v11406
    %12604 = vmatpush1.bf16.msra.mxu0 %v11405
    %12605 = vmatprep.subr.bf16.mxu0 %v11410
    %12606 = vmatpush1.bf16.msra.mxu0 %v11409
    %12607 = vmatprep.subr.bf16.mxu0 %v11414
    %12608 = vmatpush1.bf16.msra.mxu0 %v11413
    %12609 = vmatprep.subr.bf16.mxu0 %v11418
    %12610 = vmatpush1.bf16.msra.mxu0 %v11417
    %12611 = vmatprep.subr.bf16.mxu0 %v11422
    %12612 = vmatpush1.bf16.msra.mxu0 %v11421
    %12613 = vmatprep.subr.bf16.mxu0 %v11426
    %12614 = vmatpush1.bf16.msra.mxu0 %v11425
    %12615 = vmatprep.subr.bf16.mxu0 %v11430
    %12616 = vmatpush1.bf16.msra.mxu0 %v11429
    %12617 = vmatprep.subr.bf16.mxu0 %v11434
    %12618 = vmatpush1.bf16.msra.mxu0 %v11433
    %12619 = vmatprep.subr.bf16.mxu0 %v11438
    %12620 = vmatpush1.bf16.msra.mxu0 %v11437
    %12621 = vmatprep.mubr.bf16.mxu0 %v8918
    %12622 = vmatmul.mubr.bf16.gmra.mrb[0].mxu0 %v8917
    %v12623 = vpop.f32.mrb[0].mxu0
    %v12624 = vadd.f32 %v12583, %v12623
    %v12625 = vpop.f32.mrb[0].mxu0
    %v12626 = vadd.f32 %v12585, %v12625
    %v12627 = vpop.f32.mrb[0].mxu0
    %v12628 = vpop.f32.mrb[0].mxu0
    %12629 = vdwg.mxu0
    %12630 = vmatprep.subr.bf16.mxu0 %v11442
    %12631 = vmatpush1.bf16.msra.mxu0 %v11441
    %12632 = vmatprep.subr.bf16.mxu0 %v11446
    %12633 = vmatpush1.bf16.msra.mxu0 %v11445
    %12634 = vmatprep.subr.bf16.mxu0 %v11450
    %12635 = vmatpush1.bf16.msra.mxu0 %v11449
    %12636 = vmatprep.subr.bf16.mxu0 %v11454
    %12637 = vmatpush1.bf16.msra.mxu0 %v11453
    %12638 = vmatprep.subr.bf16.mxu0 %v11458
    %12639 = vmatpush1.bf16.msra.mxu0 %v11457
    %12640 = vmatprep.subr.bf16.mxu0 %v11462
    %12641 = vmatpush1.bf16.msra.mxu0 %v11461
    %12642 = vmatprep.subr.bf16.mxu0 %v11466
    %12643 = vmatpush1.bf16.msra.mxu0 %v11465
    %12644 = vmatprep.subr.bf16.mxu0 %v11470
    %12645 = vmatpush1.bf16.msra.mxu0 %v11469
    %12646 = vmatprep.subr.bf16.mxu0 %v11474
    %12647 = vmatpush1.bf16.msra.mxu0 %v11473
    %12648 = vmatprep.subr.bf16.mxu0 %v11478
    %12649 = vmatpush1.bf16.msra.mxu0 %v11477
    %12650 = vmatprep.subr.bf16.mxu0 %v11482
    %12651 = vmatpush1.bf16.msra.mxu0 %v11481
    %12652 = vmatprep.subr.bf16.mxu0 %v11486
    %12653 = vmatpush1.bf16.msra.mxu0 %v11485
    %12654 = vmatprep.subr.bf16.mxu0 %v11490
    %12655 = vmatpush1.bf16.msra.mxu0 %v11489
    %12656 = vmatprep.subr.bf16.mxu0 %v11494
    %12657 = vmatpush1.bf16.msra.mxu0 %v11493
    %12658 = vmatprep.subr.bf16.mxu0 %v11498
    %12659 = vmatpush1.bf16.msra.mxu0 %v11497
    %12660 = vmatprep.subr.bf16.mxu0 %v11502
    %12661 = vmatpush1.bf16.msra.mxu0 %v11501
    %12662 = vmatprep.mubr.bf16.mxu0 %v8920
    %12663 = vmatmul.mubr.bf16.gmra.mrb[0].mxu0 %v8919
    %v12664 = vpop.f32.mrb[0].mxu0
    %v12665 = vadd.f32 %v12624, %v12664
    %v12666 = vpop.f32.mrb[0].mxu0
    %v12667 = vadd.f32 %v12626, %v12666
    %v12668 = vpop.f32.mrb[0].mxu0
    %v12669 = vpop.f32.mrb[0].mxu0
    %12670 = vdwg.mxu0
    %vm12671 = vcmp.ge.f32.partialorder %v12337, 0.0
    %vm12672 = vcmp.ge.f32.partialorder %v12339, 0.0
    %vm12673 = vcmp.ge.f32.partialorder %v12665, 0.0
    %vm12674 = vcmp.ge.f32.partialorder %v12667, 0.0
    %v12675 = vmul.f32 %v12337, 0.2
    %v12676 = vmul.f32 %v12339, 0.2
    %v12677 = vmul.f32 %v12665, 0.2
    %v12678 = vmul.f32 %v12667, 0.2
    %v12679 = vsel %vm12671, %v12337, %v12675
    %v12680 = vsel %vm12672, %v12339, %v12676
    %v12681 = vsel %vm12673, %v12665, %v12677
    %v12682 = vsel %vm12674, %v12667, %v12678
    %v12683 = vpack.c.bf16 %v12679, %v12679
    %v12684 = vpack.c.bf16 %v12680, %v12680
    %v12685 = vpack.c.bf16 %v12681, %v12681
    %v12686 = vpack.c.bf16 %v12682, %v12682
    %v12687 = vld [vmem:[#allocation17] sm:$0xf]
    %v12688 = vld [vmem:[#allocation17 + $0x4] sm:$0xf]
    %v12689 = vld [vmem:[#allocation17 + $0x8] sm:$0xf]
    %v12690 = vld [vmem:[#allocation17 + $0xc] sm:$0xf]
    %v12691 = vld [vmem:[#allocation17 + $0x10] sm:$0xf]
    %v12692 = vld [vmem:[#allocation17 + $0x14] sm:$0xf]
    %v12693 = vld [vmem:[#allocation17 + $0x18] sm:$0xf]
    %v12694 = vld [vmem:[#allocation17 + $0x1c] sm:$0xf]
    %v12695 = vld [vmem:[#allocation17 + $0x20] sm:$0xf]
    %v12696 = vld [vmem:[#allocation17 + $0x24] sm:$0xf]
    %v12697 = vld [vmem:[#allocation17 + $0x28] sm:$0xf]
    %v12698 = vld [vmem:[#allocation17 + $0x2c] sm:$0xf]
    %v12699 = vld [vmem:[#allocation17 + $0x30] sm:$0xf]
    %v12700 = vld [vmem:[#allocation17 + $0x34] sm:$0xf]
    %v12701 = vld [vmem:[#allocation17 + $0x38] sm:$0xf]
    %v12702 = vld [vmem:[#allocation17 + $0x3c] sm:$0xf]
    %v12703 = vld [vmem:[#allocation17 + $0x40] sm:$0xf]
    %v12704 = vld [vmem:[#allocation17 + $0x44] sm:$0xf]
    %v12705 = vld [vmem:[#allocation17 + $0x48] sm:$0xf]
    %v12706 = vld [vmem:[#allocation17 + $0x4c] sm:$0xf]
    %v12707 = vld [vmem:[#allocation17 + $0x50] sm:$0xf]
    %v12708 = vld [vmem:[#allocation17 + $0x54] sm:$0xf]
    %v12709 = vld [vmem:[#allocation17 + $0x58] sm:$0xf]
    %v12710 = vld [vmem:[#allocation17 + $0x5c] sm:$0xf]
    %v12711 = vld [vmem:[#allocation17 + $0x60] sm:$0xf]
    %v12712 = vld [vmem:[#allocation17 + $0x64] sm:$0xf]
    %v12713 = vld [vmem:[#allocation17 + $0x68] sm:$0xf]
    %v12714 = vld [vmem:[#allocation17 + $0x6c] sm:$0xf]
    %v12715 = vld [vmem:[#allocation17 + $0x70] sm:$0xf]
    %v12716 = vld [vmem:[#allocation17 + $0x74] sm:$0xf]
    %v12717 = vld [vmem:[#allocation17 + $0x78] sm:$0xf]
    %v12718 = vld [vmem:[#allocation17 + $0x7c] sm:$0xf]
    %v12719 = vld [vmem:[#allocation17 + $0x80] sm:$0xf]
    %v12720 = vld [vmem:[#allocation17 + $0x84] sm:$0xf]
    %v12721 = vld [vmem:[#allocation17 + $0x88] sm:$0xf]
    %v12722 = vld [vmem:[#allocation17 + $0x8c] sm:$0xf]
    %v12723 = vld [vmem:[#allocation17 + $0x90] sm:$0xf]
    %v12724 = vld [vmem:[#allocation17 + $0x94] sm:$0xf]
    %v12725 = vld [vmem:[#allocation17 + $0x98] sm:$0xf]
    %v12726 = vld [vmem:[#allocation17 + $0x9c] sm:$0xf]
    %v12727 = vld [vmem:[#allocation17 + $0xa0] sm:$0xf]
    %v12728 = vld [vmem:[#allocation17 + $0xa4] sm:$0xf]
    %v12729 = vld [vmem:[#allocation17 + $0xa8] sm:$0xf]
    %v12730 = vld [vmem:[#allocation17 + $0xac] sm:$0xf]
    %v12731 = vld [vmem:[#allocation17 + $0xb0] sm:$0xf]
    %v12732 = vld [vmem:[#allocation17 + $0xb4] sm:$0xf]
    %v12733 = vld [vmem:[#allocation17 + $0xb8] sm:$0xf]
    %v12734 = vld [vmem:[#allocation17 + $0xbc] sm:$0xf]
    %v12735 = vld [vmem:[#allocation17 + $0xc0] sm:$0xf]
    %v12736 = vld [vmem:[#allocation17 + $0xc4] sm:$0xf]
    %v12737 = vld [vmem:[#allocation17 + $0xc8] sm:$0xf]
    %v12738 = vld [vmem:[#allocation17 + $0xcc] sm:$0xf]
    %v12739 = vld [vmem:[#allocation17 + $0xd0] sm:$0xf]
    %v12740 = vld [vmem:[#allocation17 + $0xd4] sm:$0xf]
    %v12741 = vld [vmem:[#allocation17 + $0xd8] sm:$0xf]
    %v12742 = vld [vmem:[#allocation17 + $0xdc] sm:$0xf]
    %v12743 = vld [vmem:[#allocation17 + $0xe0] sm:$0xf]
    %v12744 = vld [vmem:[#allocation17 + $0xe4] sm:$0xf]
    %v12745 = vld [vmem:[#allocation17 + $0xe8] sm:$0xf]
    %v12746 = vld [vmem:[#allocation17 + $0xec] sm:$0xf]
    %v12747 = vld [vmem:[#allocation17 + $0xf0] sm:$0xf]
    %v12748 = vld [vmem:[#allocation17 + $0xf4] sm:$0xf]
    %v12749 = vld [vmem:[#allocation17 + $0xf8] sm:$0xf]
    %v12750 = vld [vmem:[#allocation17 + $0xfc] sm:$0xf]
    %v12751 = vld [vmem:[#allocation19] sm:$0x1]
    %v12753 = vlaneseq
    %v12754 = vshrl.u32 %v12753, 7
    %v12755 = vsub.s32 0, %v12754
    %v12756 = vrot.slane %v12751, %v12755
    %v12822 = vunpack.c.l.b16 %v12687
    %v12823 = vunpack.c.l.b16 %v12688
    %v12824 = vunpack.c.l.b16 %v12689
    %v12825 = vunpack.c.l.b16 %v12690
    %v12826 = vunpack.c.l.b16 %v12691
    %v12827 = vunpack.c.l.b16 %v12692
    %v12828 = vunpack.c.l.b16 %v12693
    %v12829 = vunpack.c.l.b16 %v12694
    %v12830 = vunpack.c.l.b16 %v12695
    %v12831 = vunpack.c.l.b16 %v12696
    %v12832 = vunpack.c.l.b16 %v12697
    %v12833 = vunpack.c.l.b16 %v12698
    %v12834 = vunpack.c.l.b16 %v12699
    %v12835 = vunpack.c.l.b16 %v12700
    %v12836 = vunpack.c.l.b16 %v12701
    %v12837 = vunpack.c.l.b16 %v12702
    %v12838 = vunpack.c.l.b16 %v12703
    %v12839 = vunpack.c.l.b16 %v12704
    %v12840 = vunpack.c.l.b16 %v12705
    %v12841 = vunpack.c.l.b16 %v12706
    %v12842 = vunpack.c.l.b16 %v12707
    %v12843 = vunpack.c.l.b16 %v12708
    %v12844 = vunpack.c.l.b16 %v12709
    %v12845 = vunpack.c.l.b16 %v12710
    %v12846 = vunpack.c.l.b16 %v12711
    %v12847 = vunpack.c.l.b16 %v12712
    %v12848 = vunpack.c.l.b16 %v12713
    %v12849 = vunpack.c.l.b16 %v12714
    %v12850 = vunpack.c.l.b16 %v12715
    %v12851 = vunpack.c.l.b16 %v12716
    %v12852 = vunpack.c.l.b16 %v12717
    %v12853 = vunpack.c.l.b16 %v12718
    %v12854 = vunpack.c.l.b16 %v12719
    %v12855 = vunpack.c.l.b16 %v12720
    %v12856 = vunpack.c.l.b16 %v12721
    %v12857 = vunpack.c.l.b16 %v12722
    %v12858 = vunpack.c.l.b16 %v12723
    %v12859 = vunpack.c.l.b16 %v12724
    %v12860 = vunpack.c.l.b16 %v12725
    %v12861 = vunpack.c.l.b16 %v12726
    %v12862 = vunpack.c.l.b16 %v12727
    %v12863 = vunpack.c.l.b16 %v12728
    %v12864 = vunpack.c.l.b16 %v12729
    %v12865 = vunpack.c.l.b16 %v12730
    %v12866 = vunpack.c.l.b16 %v12731
    %v12867 = vunpack.c.l.b16 %v12732
    %v12868 = vunpack.c.l.b16 %v12733
    %v12869 = vunpack.c.l.b16 %v12734
    %v12870 = vunpack.c.l.b16 %v12735
    %v12871 = vunpack.c.l.b16 %v12736
    %v12872 = vunpack.c.l.b16 %v12737
    %v12873 = vunpack.c.l.b16 %v12738
    %v12874 = vunpack.c.l.b16 %v12739
    %v12875 = vunpack.c.l.b16 %v12740
    %v12876 = vunpack.c.l.b16 %v12741
    %v12877 = vunpack.c.l.b16 %v12742
    %v12878 = vunpack.c.l.b16 %v12743
    %v12879 = vunpack.c.l.b16 %v12744
    %v12880 = vunpack.c.l.b16 %v12745
    %v12881 = vunpack.c.l.b16 %v12746
    %v12882 = vunpack.c.l.b16 %v12747
    %v12883 = vunpack.c.l.b16 %v12748
    %v12884 = vunpack.c.l.b16 %v12749
    %v12885 = vunpack.c.l.b16 %v12750
    %v12886 = vpack.c.b16 %v12823, %v12822
    %v12887 = vpack.c.b16 %v12825, %v12824
    %v12888 = vpack.c.b16 %v12827, %v12826
    %v12889 = vpack.c.b16 %v12829, %v12828
    %v12890 = vpack.c.b16 %v12831, %v12830
    %v12891 = vpack.c.b16 %v12833, %v12832
    %v12892 = vpack.c.b16 %v12835, %v12834
    %v12893 = vpack.c.b16 %v12837, %v12836
    %v12894 = vpack.c.b16 %v12839, %v12838
    %v12895 = vpack.c.b16 %v12841, %v12840
    %v12896 = vpack.c.b16 %v12843, %v12842
    %v12897 = vpack.c.b16 %v12845, %v12844
    %v12898 = vpack.c.b16 %v12847, %v12846
    %v12899 = vpack.c.b16 %v12849, %v12848
    %v12900 = vpack.c.b16 %v12851, %v12850
    %v12901 = vpack.c.b16 %v12853, %v12852
    %v12902 = vpack.c.b16 %v12855, %v12854
    %v12903 = vpack.c.b16 %v12857, %v12856
    %v12904 = vpack.c.b16 %v12859, %v12858
    %v12905 = vpack.c.b16 %v12861, %v12860
    %v12906 = vpack.c.b16 %v12863, %v12862
    %v12907 = vpack.c.b16 %v12865, %v12864
    %v12908 = vpack.c.b16 %v12867, %v12866
    %v12909 = vpack.c.b16 %v12869, %v12868
    %v12910 = vpack.c.b16 %v12871, %v12870
    %v12911 = vpack.c.b16 %v12873, %v12872
    %v12912 = vpack.c.b16 %v12875, %v12874
    %v12913 = vpack.c.b16 %v12877, %v12876
    %v12914 = vpack.c.b16 %v12879, %v12878
    %v12915 = vpack.c.b16 %v12881, %v12880
    %v12916 = vpack.c.b16 %v12883, %v12882
    %v12917 = vpack.c.b16 %v12885, %v12884
    %12950 = vmatprep.subr.bf16.mxu0 0
    %12951 = vmatpush1.bf16.msra.mxu0 %v12886
    %12952 = vmatprep.subr.bf16.mxu0 0
    %12953 = vmatpush1.bf16.msra.mxu0 %v12887
    %12954 = vmatprep.subr.bf16.mxu0 0
    %12955 = vmatpush1.bf16.msra.mxu0 %v12888
    %12956 = vmatprep.subr.bf16.mxu0 0
    %12957 = vmatpush1.bf16.msra.mxu0 %v12889
    %12958 = vmatprep.subr.bf16.mxu0 0
    %12959 = vmatpush1.bf16.msra.mxu0 %v12890
    %12960 = vmatprep.subr.bf16.mxu0 0
    %12961 = vmatpush1.bf16.msra.mxu0 %v12891
    %12962 = vmatprep.subr.bf16.mxu0 0
    %12963 = vmatpush1.bf16.msra.mxu0 %v12892
    %12964 = vmatprep.subr.bf16.mxu0 0
    %12965 = vmatpush1.bf16.msra.mxu0 %v12893
    %12966 = vmatprep.subr.bf16.mxu0 0
    %12967 = vmatpush1.bf16.msra.mxu0 %v12894
    %12968 = vmatprep.subr.bf16.mxu0 0
    %12969 = vmatpush1.bf16.msra.mxu0 %v12895
    %12970 = vmatprep.subr.bf16.mxu0 0
    %12971 = vmatpush1.bf16.msra.mxu0 %v12896
    %12972 = vmatprep.subr.bf16.mxu0 0
    %12973 = vmatpush1.bf16.msra.mxu0 %v12897
    %12974 = vmatprep.subr.bf16.mxu0 0
    %12975 = vmatpush1.bf16.msra.mxu0 %v12898
    %12976 = vmatprep.subr.bf16.mxu0 0
    %12977 = vmatpush1.bf16.msra.mxu0 %v12899
    %12978 = vmatprep.subr.bf16.mxu0 0
    %12979 = vmatpush1.bf16.msra.mxu0 %v12900
    %12980 = vmatprep.subr.bf16.mxu0 0
    %12981 = vmatpush1.bf16.msra.mxu0 %v12901
    %12982 = vmatprep.mubr.bf16.mxu0 %v12684
    %12983 = vmatmul.mubr.bf16.gmra.mrb[0].mxu0 %v12683
    %v12984 = vpop.f32.mrb[0].mxu0
    %v12985 = vadd.f32 %v12756, %v12984
    %v12986 = vpop.f32.mrb[0].mxu0
    %v12987 = vpop.f32.mrb[0].mxu0
    %v12988 = vpop.f32.mrb[0].mxu0
    %12989 = vdwg.mxu0
    %12990 = vmatprep.subr.bf16.mxu0 0
    %12991 = vmatpush1.bf16.msra.mxu0 %v12902
    %12992 = vmatprep.subr.bf16.mxu0 0
    %12993 = vmatpush1.bf16.msra.mxu0 %v12903
    %12994 = vmatprep.subr.bf16.mxu0 0
    %12995 = vmatpush1.bf16.msra.mxu0 %v12904
    %12996 = vmatprep.subr.bf16.mxu0 0
    %12997 = vmatpush1.bf16.msra.mxu0 %v12905
    %12998 = vmatprep.subr.bf16.mxu0 0
    %12999 = vmatpush1.bf16.msra.mxu0 %v12906
    %13000 = vmatprep.subr.bf16.mxu0 0
    %13001 = vmatpush1.bf16.msra.mxu0 %v12907
    %13002 = vmatprep.subr.bf16.mxu0 0
    %13003 = vmatpush1.bf16.msra.mxu0 %v12908
    %13004 = vmatprep.subr.bf16.mxu0 0
    %13005 = vmatpush1.bf16.msra.mxu0 %v12909
    %13006 = vmatprep.subr.bf16.mxu0 0
    %13007 = vmatpush1.bf16.msra.mxu0 %v12910
    %13008 = vmatprep.subr.bf16.mxu0 0
    %13009 = vmatpush1.bf16.msra.mxu0 %v12911
    %13010 = vmatprep.subr.bf16.mxu0 0
    %13011 = vmatpush1.bf16.msra.mxu0 %v12912
    %13012 = vmatprep.subr.bf16.mxu0 0
    %13013 = vmatpush1.bf16.msra.mxu0 %v12913
    %13014 = vmatprep.subr.bf16.mxu0 0
    %13015 = vmatpush1.bf16.msra.mxu0 %v12914
    %13016 = vmatprep.subr.bf16.mxu0 0
    %13017 = vmatpush1.bf16.msra.mxu0 %v12915
    %13018 = vmatprep.subr.bf16.mxu0 0
    %13019 = vmatpush1.bf16.msra.mxu0 %v12916
    %13020 = vmatprep.subr.bf16.mxu0 0
    %13021 = vmatpush1.bf16.msra.mxu0 %v12917
    %13022 = vmatprep.mubr.bf16.mxu0 %v12686
    %13023 = vmatmul.mubr.bf16.gmra.mrb[0].mxu0 %v12685
    %v13024 = vpop.f32.mrb[0].mxu0
    %v13025 = vadd.f32 %v12985, %v13024
    %v13026 = vpop.f32.mrb[0].mxu0
    %v13027 = vpop.f32.mrb[0].mxu0
    %v13028 = vpop.f32.mrb[0].mxu0
    %13029 = vdwg.mxu0
    %v13030 = vtanh.pop %v13025
    %13031 = vst [vmem:[#allocation20] sm:$0x3] %v13030
    // Predicated region
    $region98: #{forward_pallas.1} parent=1 // pred_check
      _
    $region99: #{forward_pallas.1} parent=1 // pred_check_branch
      %13033 = sbr.rel (0) target = $region101
    $region100: #{forward_pallas.1} parent=1 // pred_region
      %s13035 = ssub.s32 32, 32
      %13036 = vsyncadd [#allocation4], %s13035
      %s13038 = sshll.u32 [#allocation20], 4
      %s13039 = int_to_ptr.vmem [resolvable:$true] %s13038
      %13041 = dma.vmem_to_hbm [thread:$0]  %s13039, 32, %s13, [#allocation4]
    $region101: #{forward_pallas.1} parent=1 // pred_fallthru
      _
    // Predicated region
    $region102: #{forward_pallas.1} parent=1 // pred_check
      _
    $region103: #{forward_pallas.1} parent=1 // pred_check_branch
      %13043 = sbr.rel (0) target = $region105
    $region104: #{forward_pallas.1} parent=1 // pred_region
      %13044 = dma.done [#allocation4], 32
    $region105: #{forward_pallas.1} parent=1 // pred_fallthru
      _
    %13045 = vsyncpa [#allocation3], 1
    %13046 = vsyncpa [#allocation6], 1
    %13047 = vsyncpa [#allocation9], 1
    %13048 = vsyncpa [#allocation12], 1
    %13049 = vsyncpa [#allocation15], 1
    %13050 = vsyncpa [#allocation18], 1
    %13051 = vsyncpa [#allocation4], 1

</llo_original>
